<compile_context>
chip_gen: v7x
topology: tpu7x:2x2x1
jax: 0.10.0
libtpu: 0.0.40
codegen_flags: <defaults>
</compile_context>

<pallas_src>
import functools

import jax
import jax.numpy as jnp
from jax.experimental import pallas as pl
from jax.experimental.pallas import tpu as pltpu

LANE = 128


def _round_up(v, m):
    return (v + m - 1) // m * m


def _relu6(v):
    return jnp.clip(v, 0.0, 6.0)


# ----------------------------------------------------------------------------
# Pallas kernel: one grid step processes one batch element end-to-end.
# ----------------------------------------------------------------------------
def _core_cnn_block_kernel(x_ref, w1m_ref, w2_ref, w3_ref, wse1_ref, wse2_ref,
                           aff_ref, mask_ref, o_ref, pad_ref, *, H, W, Wp, Cp):
    L = H * Wp                                  # padded-domain rows (no halo planes)

    aff = aff_ref[...]                          # (8, Cp): s1,t1,s2,t2,s3,t3,sm,tm
    s1, t1 = aff[0:1, :], aff[1:2, :]
    s2, t2 = aff[2:3, :], aff[3:4, :]
    s3, t3 = aff[4:5, :], aff[5:6, :]
    sm, tm = aff[6:7, :], aff[7:8, :]
    mask = mask_ref[...]                        # (L, 1): 1 on real pixels, 0 on gap cols

    # ---- conv1 (1x1) + match_channels (1x1) fused into one bf16 MXU matmul --
    # x is already in the padded domain (gap rows are zero from the host pad).
    x = x_ref[0]                                              # (L, C_in) bf16
    h1m = jnp.dot(x, w1m_ref[...], preferred_element_type=jnp.float32)
    h1 = _relu6(h1m[:, :Cp] * s1 + t1) * mask                 # gap cols -> 0
    match = h1m[:, Cp:] * sm + tm                             # gap rows garbage, sliced off

    # ---- zero the halo planes; interior written with one full-slab store ----
    zero_plane = jnp.zeros((Wp, Cp), jnp.float32)
    pad_ref[0:Wp, :] = zero_plane                             # top halo plane
    pad_ref[(H + 1) * Wp:(H + 2) * Wp, :] = zero_plane        # bottom halo plane
    pad_ref[Wp:Wp + L, :] = h1                                # aligned (Wp % 8 == 0)

    def shifted(slab, dx):
        # column shift by dx-1; roll wrap rows land on zero halo/gap entries
        # (guaranteed because Wp >= W + 2 and gap columns are kept at zero).
        if dx == 1:
            return slab
        return pltpu.roll(slab, (1 - dx) % L, 0)

    # ---- conv2: 3x3 depthwise + BN2 + ReLU6 (pure VPU, f32) -----------------
    acc2 = None
    for dy in range(3):
        slab = pad_ref[dy * Wp:dy * Wp + L, :]                # sublane aligned
        for dx in range(3):
            k = dy * 3 + dx
            term = shifted(slab, dx) * w2_ref[k:k + 1, :]
            acc2 = term if acc2 is None else acc2 + term
    h2 = _relu6(acc2 * s2 + t2) * mask                        # gap cols -> 0
    pad_ref[Wp:Wp + L, :] = h2                                # one full-slab store

    # ---- conv3: dense 3x3 as 3 dy-grouped (L, 3*Cp) x (3*Cp, Cp) bf16 matmuls
    acc3 = None
    for dy in range(3):
        slab = pad_ref[dy * Wp:dy * Wp + L, :]
        lhs = jnp.concatenate(
            [shifted(slab, dx).astype(jnp.bfloat16) for dx in range(3)], axis=1)
        part = jnp.dot(lhs, w3_ref[dy * 3 * Cp:(dy + 1) * 3 * Cp, :],
                       preferred_element_type=jnp.float32)
        acc3 = part if acc3 is None else acc3 + part
    h3 = acc3 * s3 + t3                                       # gap rows garbage (unused)

    # ---- SE block: module computes x * squeeze(x) == h3 * (h3 * gate) -------
    m = jnp.sum(h3 * mask, axis=0, keepdims=True) * (1.0 / (H * W))
    z = jnp.maximum(
        jnp.dot(m.astype(jnp.bfloat16), wse1_ref[...],
                preferred_element_type=jnp.float32), 0.0)
    g = jax.nn.sigmoid(
        jnp.dot(z.astype(jnp.bfloat16), wse2_ref[...],
                preferred_element_type=jnp.float32))
    y = h3 * (h3 * g)

    # ---- residual + final ReLU6, lane-dense unmasked bf16 store -------------
    o_ref[0] = _relu6(y + match).astype(o_ref.dtype)


# ----------------------------------------------------------------------------
# Host-side glue
# ----------------------------------------------------------------------------
def core_cnn_block_forward(x_nchw, p):
    B, C_in, H, W = x_nchw.shape
    C_out = p['w1'].shape[1]
    C_r = p['wse1'].shape[1]
    Cp = _round_up(C_out, LANE)           # lane-dense channel axis
    Crp = _round_up(C_r, LANE)
    Wp = _round_up(W + 2, 8)              # width + halo, sublane aligned
    assert Wp >= W + 2                    # roll-wrap correctness relies on this
    L = H * Wp

    def pad_to(a, shape):
        return jnp.pad(a, [(0, s - d) for s, d in zip(shape, a.shape)])

    # NCHW -> NHWC -> width-pad to Wp (zero gap columns) -> (B, L, C_in) bf16
    x_nhwc = jnp.transpose(x_nchw, (0, 2, 3, 1))
    x_flat = (jnp.pad(x_nhwc, ((0, 0), (0, 0), (0, Wp - W), (0, 0)))
              .reshape(B, L, C_in).astype(jnp.bfloat16))

    # conv1 and match_channels weights fused along the output-channel axis
    w1m = jnp.concatenate(
        [pad_to(p['w1'], (C_in, Cp)), pad_to(p['wm'], (C_in, Cp))],
        axis=1).astype(jnp.bfloat16)                          # (C_in, 2*Cp)
    w2 = pad_to(p['w2'], (9, Cp)).astype(jnp.float32)         # depthwise taps
    w3 = pad_to(p['w3'], (9, Cp, Cp)).reshape(9 * Cp, Cp).astype(jnp.bfloat16)
    wse1 = pad_to(p['wse1'], (Cp, Crp)).astype(jnp.bfloat16)
    wse2 = pad_to(p['wse2'], (Crp, Cp)).astype(jnp.bfloat16)
    aff = jnp.stack([pad_to(p[k], (Cp,)) for k in
                     ('s1', 't1', 's2', 't2', 's3', 't3', 'sm', 'tm')],
                    axis=0).astype(jnp.float32)               # (8, Cp)

    # (L, 1) validity mask: 1 where the padded column index is a real pixel.
    col_valid = (jnp.arange(Wp) < W).astype(jnp.float32)
    mask = jnp.tile(col_valid, H).reshape(L, 1)

    kernel = functools.partial(_core_cnn_block_kernel, H=H, W=W, Wp=Wp, Cp=Cp)

    def rep(shape):
        return pl.BlockSpec(shape, lambda b, n=len(shape): (0,) * n)

    out_flat = pl.pallas_call(
        kernel,
        out_shape=jax.ShapeDtypeStruct((B, L, Cp), jnp.bfloat16),
        grid_spec=pltpu.PrefetchScalarGridSpec(
            num_scalar_prefetch=0,
            grid=(B,),
            in_specs=[
                pl.BlockSpec((1, L, C_in), lambda b: (b, 0, 0)),  # x (bf16, padded domain)
                rep((C_in, 2 * Cp)),                               # [w1 | wm]
                rep((9, Cp)),                                      # depthwise taps
                rep((9 * Cp, Cp)),                                 # dense 3x3, flattened
                rep((Cp, Crp)),                                    # SE fc1
                rep((Crp, Cp)),                                    # SE fc2
                rep((8, Cp)),                                      # folded BN affines
                rep((L, 1)),                                       # validity mask
            ],
            out_specs=pl.BlockSpec((1, L, Cp), lambda b: (b, 0, 0)),
            scratch_shapes=[pltpu.VMEM(((H + 2) * Wp, Cp), jnp.float32)],
        ),
        compiler_params=pltpu.CompilerParams(
            dimension_semantics=("parallel",),
            vmem_limit_bytes=32 * 1024 * 1024),
    )(x_flat, w1m, w2, w3, wse1, wse2, aff, mask)

    # padded (B, L, Cp) bf16 -> (B, H, W, C_out) f32 -> NCHW
    out = (out_flat.reshape(B, H, Wp, Cp)[:, :, :W, :C_out]
           .astype(jnp.float32))
    return jnp.transpose(out, (0, 3, 1, 2))


# ----------------------------------------------------------------------------
# Pure-JAX reference (same math, mirrors the kernel's bf16 MXU quantization).
# ----------------------------------------------------------------------------
def reference_forward(x_nchw, p):
    f32 = jnp.float32
    q = lambda a: a.astype(jnp.bfloat16).astype(f32)          # emulate bf16 MXU operands
    hp = jax.lax.Precision.HIGHEST
    relu6 = lambda v: jnp.clip(v, 0.0, 6.0)

    x = jnp.transpose(x_nchw, (0, 2, 3, 1)).astype(f32)
    B, H, W, _ = x.shape
    xq = q(x)

    conv1x1 = lambda v, w: jnp.einsum('bhwc,cd->bhwd', v, w, precision=hp)

    def taps(v):
        vp = jnp.pad(v, ((0, 0), (1, 1), (1, 1), (0, 0)))
        return [vp[:, dy:dy + H, dx:dx + W, :] for dy in range(3) for dx in range(3)]

    h1 = relu6(conv1x1(xq, q(p['w1'])) * p['s1'] + p['t1'])
    acc2 = sum(t * p['w2'][k] for k, t in enumerate(taps(h1)))
    h2 = relu6(acc2 * p['s2'] + p['t2'])
    acc3 = sum(jnp.einsum('bhwc,cd->bhwd', q(t), q(p['w3'][k]), precision=hp)
               for k, t in enumerate(taps(h2)))
    h3 = acc3 * p['s3'] + p['t3']

    m = jnp.mean(h3, axis=(1, 2))
    z = jnp.maximum(jnp.dot(q(m), q(p['wse1']), precision=hp), 0.0)
    g = jax.nn.sigmoid(jnp.dot(q(z), q(p['wse2']), precision=hp))
    y = h3 * (h3 * g[:, None, None, :])

    match = conv1x1(xq, q(p['wm'])) * p['sm'] + p['tm']
    return jnp.transpose(relu6(y + match), (0, 3, 1, 2))


# ----------------------------------------------------------------------------
# Deterministic synthetic parameters (eval-mode BN folded to scale/bias)
# ----------------------------------------------------------------------------
def make_params(key, C_in, C_out):
    C_r = C_out // 16                     # SE reduction=16 (requires C_out >= 16)
    ks = jax.random.split(key, 16)
    nrm = lambda k, shape, s=0.1: s * jax.random.normal(k, shape, jnp.float32)

    w1 = nrm(ks[0], (C_in, C_out));   b1 = nrm(ks[1], (C_out,))
    w2 = nrm(ks[2], (9, C_out));      b2 = nrm(ks[3], (C_out,))
    w3 = nrm(ks[4], (9, C_out, C_out), 0.05); b3 = nrm(ks[5], (C_out,))
    wm = nrm(ks[6], (C_in, C_out))
    wse1 = nrm(ks[7], (C_out, C_r), 0.3)
    wse2 = nrm(ks[8], (C_r, C_out), 0.3)

    eps = 1e-5
    def fold_bn(k, conv_bias):
        k1, k2, k3, k4 = jax.random.split(k, 4)
        gamma = 1.0 + 0.1 * jax.random.normal(k1, (C_out,), jnp.float32)
        beta = 0.1 * jax.random.normal(k2, (C_out,), jnp.float32)
        mean = 0.1 * jax.random.normal(k3, (C_out,), jnp.float32)
        var = 1.0 + 0.1 * jax.random.uniform(k4, (C_out,), jnp.float32)
        s = gamma / jnp.sqrt(var + eps)
        t = (conv_bias - mean) * s + beta
        return s, t

    s1, t1 = fold_bn(ks[9], b1)
    s2, t2 = fold_bn(ks[10], b2)
    s3, t3 = fold_bn(ks[11], b3)
    sm, tm = fold_bn(ks[12], jnp.zeros((C_out,), jnp.float32))  # match conv has no bias

    return dict(w1=w1, w2=w2, w3=w3, wm=wm, wse1=wse1, wse2=wse2,
                s1=s1, t1=t1, s2=s2, t2=t2, s3=s3, t3=t3, sm=sm, tm=tm)


if __name__ == "__main__":
    B, C_in, C_out, H, W = 2, 16, 32, 16, 16
    key = jax.random.PRNGKey(0)
    kx, kp = jax.random.split(key)

    params = make_params(kp, C_in, C_out)
    x = jax.random.normal(kx, (B, C_in, H, W), jnp.float32)    # NCHW like PyTorch

    out = jax.block_until_ready(core_cnn_block_forward(x, params))
    ref = reference_forward(x, params)

    assert out.shape == (B, C_out, H, W), out.shape
    # Kernel output is bf16 (half-ulp at the ReLU6 ceiling of 6.0 is ~0.016),
    # so the comparison tolerance covers output quantization + bf16 MXU noise.
    max_err = float(jnp.max(jnp.abs(out - ref)))
    assert max_err < 5e-2, f"kernel/reference mismatch: {max_err}"

    print("KERNEL_OK")
</pallas_src>

<mosaic_0001>
module attributes {stable_mosaic.version = 11 : i64} {
  func.func @_core_cnn_block_kernel(%arg0: i32, %arg1: memref<1x384x16xbf16, #tpu.memory_space<vmem>>, %arg2: memref<16x256xbf16, #tpu.memory_space<vmem>>, %arg3: memref<9x128xf32, #tpu.memory_space<vmem>>, %arg4: memref<1152x128xbf16, #tpu.memory_space<vmem>>, %arg5: memref<128x128xbf16, #tpu.memory_space<vmem>>, %arg6: memref<128x128xbf16, #tpu.memory_space<vmem>>, %arg7: memref<8x128xf32, #tpu.memory_space<vmem>>, %arg8: memref<384x1xf32, #tpu.memory_space<vmem>>, %arg9: memref<1x384x128xbf16, #tpu.memory_space<vmem>>, %arg10: memref<432x128xf32, #tpu.memory_space<vmem>>) attributes {dimension_semantics = [#tpu.dimension_semantics<parallel>], iteration_bounds = array<i64: 2>, scalar_prefetch = 0 : i64, scratch_operands = 1 : i64, tpu.core_type = #tpu.core_type<tc>, window_params = [{transform_indices = @transform_0, window_bounds = array<i64: 1, 384, 16>}, {pipeline_mode = #tpu.pipeline_mode<synchronous>, transform_indices = @transform_1, window_bounds = array<i64: 16, 256>}, {pipeline_mode = #tpu.pipeline_mode<synchronous>, transform_indices = @transform_2, window_bounds = array<i64: 9, 128>}, {pipeline_mode = #tpu.pipeline_mode<synchronous>, transform_indices = @transform_3, window_bounds = array<i64: 1152, 128>}, {pipeline_mode = #tpu.pipeline_mode<synchronous>, transform_indices = @transform_4, window_bounds = array<i64: 128, 128>}, {pipeline_mode = #tpu.pipeline_mode<synchronous>, transform_indices = @transform_5, window_bounds = array<i64: 128, 128>}, {pipeline_mode = #tpu.pipeline_mode<synchronous>, transform_indices = @transform_6, window_bounds = array<i64: 8, 128>}, {pipeline_mode = #tpu.pipeline_mode<synchronous>, transform_indices = @transform_7, window_bounds = array<i64: 384, 1>}, {transform_indices = @transform_8, window_bounds = array<i64: 1, 384, 128>}]} {
    %c0 = arith.constant 0 : index
    %c0_0 = arith.constant 0 : index
    %0 = vector.load %arg7[%c0, %c0_0] : memref<8x128xf32, #tpu.memory_space<vmem>>, vector<8x128xf32>
    %1 = vector.extract_strided_slice %0 {offsets = [0, 0], sizes = [1, 128], strides = [1, 1]} : vector<8x128xf32> to vector<1x128xf32>
    %2 = vector.extract_strided_slice %0 {offsets = [1, 0], sizes = [1, 128], strides = [1, 1]} : vector<8x128xf32> to vector<1x128xf32>
    %3 = vector.extract_strided_slice %0 {offsets = [2, 0], sizes = [1, 128], strides = [1, 1]} : vector<8x128xf32> to vector<1x128xf32>
    %4 = vector.extract_strided_slice %0 {offsets = [3, 0], sizes = [1, 128], strides = [1, 1]} : vector<8x128xf32> to vector<1x128xf32>
    %5 = vector.extract_strided_slice %0 {offsets = [4, 0], sizes = [1, 128], strides = [1, 1]} : vector<8x128xf32> to vector<1x128xf32>
    %6 = vector.extract_strided_slice %0 {offsets = [5, 0], sizes = [1, 128], strides = [1, 1]} : vector<8x128xf32> to vector<1x128xf32>
    %7 = vector.extract_strided_slice %0 {offsets = [6, 0], sizes = [1, 128], strides = [1, 1]} : vector<8x128xf32> to vector<1x128xf32>
    %8 = vector.extract_strided_slice %0 {offsets = [7, 0], sizes = [1, 128], strides = [1, 1]} : vector<8x128xf32> to vector<1x128xf32>
    %c0_1 = arith.constant 0 : index
    %c0_2 = arith.constant 0 : index
    %9 = vector.load %arg8[%c0_1, %c0_2] : memref<384x1xf32, #tpu.memory_space<vmem>>, vector<384x1xf32>
    %c0_3 = arith.constant 0 : index
    %c0_4 = arith.constant 0 : index
    %c0_5 = arith.constant 0 : index
    %10 = vector.load %arg1[%c0_3, %c0_4, %c0_5] : memref<1x384x16xbf16, #tpu.memory_space<vmem>>, vector<1x384x16xbf16>
    %11 = vector.shape_cast %10 : vector<1x384x16xbf16> to vector<384x16xbf16>
    %c0_6 = arith.constant 0 : index
    %c0_7 = arith.constant 0 : index
    %12 = vector.load %arg2[%c0_6, %c0_7] : memref<16x256xbf16, #tpu.memory_space<vmem>>, vector<16x256xbf16>
    %cst = arith.constant dense<0.000000e+00> : vector<384x256xf32>
    %13 = tpu.matmul %11, %12, %cst {dimension_numbers = #tpu.dot_dimension_numbers<[1], [0], [0], [1], [0, 0, 1, 1], [], []>} : vector<384x16xbf16>, vector<16x256xbf16>, vector<384x256xf32> -> vector<384x256xf32>
    %14 = vector.extract_strided_slice %13 {offsets = [0, 0], sizes = [384, 128], strides = [1, 1]} : vector<384x256xf32> to vector<384x128xf32>
    %15 = vector.broadcast %1 : vector<1x128xf32> to vector<384x128xf32>
    %16 = arith.mulf %14, %15 : vector<384x128xf32>
    %17 = vector.broadcast %2 : vector<1x128xf32> to vector<384x128xf32>
    %18 = arith.addf %16, %17 : vector<384x128xf32>
    %cst_8 = arith.constant 0.000000e+00 : f32
    %cst_9 = arith.constant 6.000000e+00 : f32
    %19 = vector.broadcast %cst_8 : f32 to vector<384x128xf32>
    %20 = arith.maximumf %19, %18 : vector<384x128xf32>
    %21 = vector.broadcast %cst_9 : f32 to vector<384x128xf32>
    %22 = arith.minimumf %21, %20 : vector<384x128xf32>
    %23 = vector.broadcast %9 : vector<384x1xf32> to vector<384x128xf32>
    %24 = arith.mulf %22, %23 : vector<384x128xf32>
    %25 = vector.extract_strided_slice %13 {offsets = [0, 128], sizes = [384, 128], strides = [1, 1]} : vector<384x256xf32> to vector<384x128xf32>
    %26 = vector.broadcast %7 : vector<1x128xf32> to vector<384x128xf32>
    %27 = arith.mulf %25, %26 : vector<384x128xf32>
    %28 = vector.broadcast %8 : vector<1x128xf32> to vector<384x128xf32>
    %29 = arith.addf %27, %28 : vector<384x128xf32>
    %cst_10 = arith.constant 0.000000e+00 : f32
    %30 = vector.broadcast %cst_10 : f32 to vector<24x128xf32>
    %c0_11 = arith.constant 0 : index
    %c0_12 = arith.constant 0 : index
    %31 = vector.load %arg10[%c0_11, %c0_12] : memref<432x128xf32, #tpu.memory_space<vmem>>, vector<24x128xf32>
    tpu.vector_store %arg10[%c0_11, %c0_12], %30 {strides = array<i32>} : memref<432x128xf32, #tpu.memory_space<vmem>>, vector<24x128xf32>,
    %c408 = arith.constant 408 : index
    %c0_13 = arith.constant 0 : index
    %32 = vector.load %arg10[%c408, %c0_13] : memref<432x128xf32, #tpu.memory_space<vmem>>, vector<24x128xf32>
    tpu.vector_store %arg10[%c408, %c0_13], %30 {strides = array<i32>} : memref<432x128xf32, #tpu.memory_space<vmem>>, vector<24x128xf32>,
    %c24 = arith.constant 24 : index
    %c0_14 = arith.constant 0 : index
    %33 = vector.load %arg10[%c24, %c0_14] : memref<432x128xf32, #tpu.memory_space<vmem>>, vector<384x128xf32>
    tpu.vector_store %arg10[%c24, %c0_14], %24 {strides = array<i32>} : memref<432x128xf32, #tpu.memory_space<vmem>>, vector<384x128xf32>,
    %c0_15 = arith.constant 0 : index
    %c0_16 = arith.constant 0 : index
    %34 = vector.load %arg10[%c0_15, %c0_16] : memref<432x128xf32, #tpu.memory_space<vmem>>, vector<384x128xf32>
    %c1_i32 = arith.constant 1 : i32
    %35 = tpu.dynamic_rotate %34 by %c1_i32 dim 0 : vector<384x128xf32>, i32 -> vector<384x128xf32>
    %c0_17 = arith.constant 0 : index
    %c0_18 = arith.constant 0 : index
    %36 = vector.load %arg3[%c0_17, %c0_18] : memref<9x128xf32, #tpu.memory_space<vmem>>, vector<1x128xf32>
    %37 = vector.broadcast %36 : vector<1x128xf32> to vector<384x128xf32>
    %38 = arith.mulf %35, %37 : vector<384x128xf32>
    %c1 = arith.constant 1 : index
    %c0_19 = arith.constant 0 : index
    %39 = vector.load %arg3[%c1, %c0_19] : memref<9x128xf32, #tpu.memory_space<vmem>>, vector<1x128xf32>
    %40 = vector.broadcast %39 : vector<1x128xf32> to vector<384x128xf32>
    %41 = arith.mulf %34, %40 : vector<384x128xf32>
    %42 = arith.addf %38, %41 : vector<384x128xf32>
    %c383_i32 = arith.constant 383 : i32
    %43 = tpu.dynamic_rotate %34 by %c383_i32 dim 0 : vector<384x128xf32>, i32 -> vector<384x128xf32>
    %c2 = arith.constant 2 : index
    %c0_20 = arith.constant 0 : index
    %44 = vector.load %arg3[%c2, %c0_20] : memref<9x128xf32, #tpu.memory_space<vmem>>, vector<1x128xf32>
    %45 = vector.broadcast %44 : vector<1x128xf32> to vector<384x128xf32>
    %46 = arith.mulf %43, %45 : vector<384x128xf32>
    %47 = arith.addf %42, %46 : vector<384x128xf32>
    %c24_21 = arith.constant 24 : index
    %c0_22 = arith.constant 0 : index
    %48 = vector.load %arg10[%c24_21, %c0_22] : memref<432x128xf32, #tpu.memory_space<vmem>>, vector<384x128xf32>
    %c1_i32_23 = arith.constant 1 : i32
    %49 = tpu.dynamic_rotate %48 by %c1_i32_23 dim 0 : vector<384x128xf32>, i32 -> vector<384x128xf32>
    %c3 = arith.constant 3 : index
    %c0_24 = arith.constant 0 : index
    %50 = vector.load %arg3[%c3, %c0_24] : memref<9x128xf32, #tpu.memory_space<vmem>>, vector<1x128xf32>
    %51 = vector.broadcast %50 : vector<1x128xf32> to vector<384x128xf32>
    %52 = arith.mulf %49, %51 : vector<384x128xf32>
    %53 = arith.addf %47, %52 : vector<384x128xf32>
    %c4 = arith.constant 4 : index
    %c0_25 = arith.constant 0 : index
    %54 = vector.load %arg3[%c4, %c0_25] : memref<9x128xf32, #tpu.memory_space<vmem>>, vector<1x128xf32>
    %55 = vector.broadcast %54 : vector<1x128xf32> to vector<384x128xf32>
    %56 = arith.mulf %48, %55 : vector<384x128xf32>
    %57 = arith.addf %53, %56 : vector<384x128xf32>
    %c383_i32_26 = arith.constant 383 : i32
    %58 = tpu.dynamic_rotate %48 by %c383_i32_26 dim 0 : vector<384x128xf32>, i32 -> vector<384x128xf32>
    %c5 = arith.constant 5 : index
    %c0_27 = arith.constant 0 : index
    %59 = vector.load %arg3[%c5, %c0_27] : memref<9x128xf32, #tpu.memory_space<vmem>>, vector<1x128xf32>
    %60 = vector.broadcast %59 : vector<1x128xf32> to vector<384x128xf32>
    %61 = arith.mulf %58, %60 : vector<384x128xf32>
    %62 = arith.addf %57, %61 : vector<384x128xf32>
    %c48 = arith.constant 48 : index
    %c0_28 = arith.constant 0 : index
    %63 = vector.load %arg10[%c48, %c0_28] : memref<432x128xf32, #tpu.memory_space<vmem>>, vector<384x128xf32>
    %c1_i32_29 = arith.constant 1 : i32
    %64 = tpu.dynamic_rotate %63 by %c1_i32_29 dim 0 : vector<384x128xf32>, i32 -> vector<384x128xf32>
    %c6 = arith.constant 6 : index
    %c0_30 = arith.constant 0 : index
    %65 = vector.load %arg3[%c6, %c0_30] : memref<9x128xf32, #tpu.memory_space<vmem>>, vector<1x128xf32>
    %66 = vector.broadcast %65 : vector<1x128xf32> to vector<384x128xf32>
    %67 = arith.mulf %64, %66 : vector<384x128xf32>
    %68 = arith.addf %62, %67 : vector<384x128xf32>
    %c7 = arith.constant 7 : index
    %c0_31 = arith.constant 0 : index
    %69 = vector.load %arg3[%c7, %c0_31] : memref<9x128xf32, #tpu.memory_space<vmem>>, vector<1x128xf32>
    %70 = vector.broadcast %69 : vector<1x128xf32> to vector<384x128xf32>
    %71 = arith.mulf %63, %70 : vector<384x128xf32>
    %72 = arith.addf %68, %71 : vector<384x128xf32>
    %c383_i32_32 = arith.constant 383 : i32
    %73 = tpu.dynamic_rotate %63 by %c383_i32_32 dim 0 : vector<384x128xf32>, i32 -> vector<384x128xf32>
    %c8 = arith.constant 8 : index
    %c0_33 = arith.constant 0 : index
    %74 = vector.load %arg3[%c8, %c0_33] : memref<9x128xf32, #tpu.memory_space<vmem>>, vector<1x128xf32>
    %75 = vector.broadcast %74 : vector<1x128xf32> to vector<384x128xf32>
    %76 = arith.mulf %73, %75 : vector<384x128xf32>
    %77 = arith.addf %72, %76 : vector<384x128xf32>
    %78 = vector.broadcast %3 : vector<1x128xf32> to vector<384x128xf32>
    %79 = arith.mulf %77, %78 : vector<384x128xf32>
    %80 = vector.broadcast %4 : vector<1x128xf32> to vector<384x128xf32>
    %81 = arith.addf %79, %80 : vector<384x128xf32>
    %cst_34 = arith.constant 0.000000e+00 : f32
    %cst_35 = arith.constant 6.000000e+00 : f32
    %82 = vector.broadcast %cst_34 : f32 to vector<384x128xf32>
    %83 = arith.maximumf %82, %81 : vector<384x128xf32>
    %84 = vector.broadcast %cst_35 : f32 to vector<384x128xf32>
    %85 = arith.minimumf %84, %83 : vector<384x128xf32>
    %86 = vector.broadcast %9 : vector<384x1xf32> to vector<384x128xf32>
    %87 = arith.mulf %85, %86 : vector<384x128xf32>
    %c24_36 = arith.constant 24 : index
    %c0_37 = arith.constant 0 : index
    %88 = vector.load %arg10[%c24_36, %c0_37] : memref<432x128xf32, #tpu.memory_space<vmem>>, vector<384x128xf32>
    tpu.vector_store %arg10[%c24_36, %c0_37], %87 {strides = array<i32>} : memref<432x128xf32, #tpu.memory_space<vmem>>, vector<384x128xf32>,
    %c0_38 = arith.constant 0 : index
    %c0_39 = arith.constant 0 : index
    %89 = vector.load %arg10[%c0_38, %c0_39] : memref<432x128xf32, #tpu.memory_space<vmem>>, vector<384x128xf32>
    %c1_i32_40 = arith.constant 1 : i32
    %90 = tpu.dynamic_rotate %89 by %c1_i32_40 dim 0 : vector<384x128xf32>, i32 -> vector<384x128xf32>
    %91 = arith.truncf %90 : vector<384x128xf32> to vector<384x128xbf16>
    %92 = arith.truncf %89 : vector<384x128xf32> to vector<384x128xbf16>
    %c383_i32_41 = arith.constant 383 : i32
    %93 = tpu.dynamic_rotate %89 by %c383_i32_41 dim 0 : vector<384x128xf32>, i32 -> vector<384x128xf32>
    %94 = arith.truncf %93 : vector<384x128xf32> to vector<384x128xbf16>
    %95 = tpu.concatenate %91, %92, %94 in 1 : vector<384x128xbf16>, vector<384x128xbf16>, vector<384x128xbf16> -> vector<384x384xbf16>
    %c0_42 = arith.constant 0 : index
    %c0_43 = arith.constant 0 : index
    %96 = vector.load %arg4[%c0_42, %c0_43] : memref<1152x128xbf16, #tpu.memory_space<vmem>>, vector<384x128xbf16>
    %cst_44 = arith.constant dense<0.000000e+00> : vector<384x128xf32>
    %97 = tpu.matmul %95, %96, %cst_44 {dimension_numbers = #tpu.dot_dimension_numbers<[1], [0], [0], [1], [0, 0, 1, 1], [], []>} : vector<384x384xbf16>, vector<384x128xbf16>, vector<384x128xf32> -> vector<384x128xf32>
    %c24_45 = arith.constant 24 : index
    %c0_46 = arith.constant 0 : index
    %98 = vector.load %arg10[%c24_45, %c0_46] : memref<432x128xf32, #tpu.memory_space<vmem>>, vector<384x128xf32>
    %c1_i32_47 = arith.constant 1 : i32
    %99 = tpu.dynamic_rotate %98 by %c1_i32_47 dim 0 : vector<384x128xf32>, i32 -> vector<384x128xf32>
    %100 = arith.truncf %99 : vector<384x128xf32> to vector<384x128xbf16>
    %101 = arith.truncf %98 : vector<384x128xf32> to vector<384x128xbf16>
    %c383_i32_48 = arith.constant 383 : i32
    %102 = tpu.dynamic_rotate %98 by %c383_i32_48 dim 0 : vector<384x128xf32>, i32 -> vector<384x128xf32>
    %103 = arith.truncf %102 : vector<384x128xf32> to vector<384x128xbf16>
    %104 = tpu.concatenate %100, %101, %103 in 1 : vector<384x128xbf16>, vector<384x128xbf16>, vector<384x128xbf16> -> vector<384x384xbf16>
    %c384 = arith.constant 384 : index
    %c0_49 = arith.constant 0 : index
    %105 = vector.load %arg4[%c384, %c0_49] : memref<1152x128xbf16, #tpu.memory_space<vmem>>, vector<384x128xbf16>
    %cst_50 = arith.constant dense<0.000000e+00> : vector<384x128xf32>
    %106 = tpu.matmul %104, %105, %cst_50 {dimension_numbers = #tpu.dot_dimension_numbers<[1], [0], [0], [1], [0, 0, 1, 1], [], []>} : vector<384x384xbf16>, vector<384x128xbf16>, vector<384x128xf32> -> vector<384x128xf32>
    %107 = arith.addf %97, %106 : vector<384x128xf32>
    %c48_51 = arith.constant 48 : index
    %c0_52 = arith.constant 0 : index
    %108 = vector.load %arg10[%c48_51, %c0_52] : memref<432x128xf32, #tpu.memory_space<vmem>>, vector<384x128xf32>
    %c1_i32_53 = arith.constant 1 : i32
    %109 = tpu.dynamic_rotate %108 by %c1_i32_53 dim 0 : vector<384x128xf32>, i32 -> vector<384x128xf32>
    %110 = arith.truncf %109 : vector<384x128xf32> to vector<384x128xbf16>
    %111 = arith.truncf %108 : vector<384x128xf32> to vector<384x128xbf16>
    %c383_i32_54 = arith.constant 383 : i32
    %112 = tpu.dynamic_rotate %108 by %c383_i32_54 dim 0 : vector<384x128xf32>, i32 -> vector<384x128xf32>
    %113 = arith.truncf %112 : vector<384x128xf32> to vector<384x128xbf16>
    %114 = tpu.concatenate %110, %111, %113 in 1 : vector<384x128xbf16>, vector<384x128xbf16>, vector<384x128xbf16> -> vector<384x384xbf16>
    %c768 = arith.constant 768 : index
    %c0_55 = arith.constant 0 : index
    %115 = vector.load %arg4[%c768, %c0_55] : memref<1152x128xbf16, #tpu.memory_space<vmem>>, vector<384x128xbf16>
    %cst_56 = arith.constant dense<0.000000e+00> : vector<384x128xf32>
    %116 = tpu.matmul %114, %115, %cst_56 {dimension_numbers = #tpu.dot_dimension_numbers<[1], [0], [0], [1], [0, 0, 1, 1], [], []>} : vector<384x384xbf16>, vector<384x128xbf16>, vector<384x128xf32> -> vector<384x128xf32>
    %117 = arith.addf %107, %116 : vector<384x128xf32>
    %118 = vector.broadcast %5 : vector<1x128xf32> to vector<384x128xf32>
    %119 = arith.mulf %117, %118 : vector<384x128xf32>
    %120 = vector.broadcast %6 : vector<1x128xf32> to vector<384x128xf32>
    %121 = arith.addf %119, %120 : vector<384x128xf32>
    %122 = vector.broadcast %9 : vector<384x1xf32> to vector<384x128xf32>
    %123 = arith.mulf %121, %122 : vector<384x128xf32>
    %cst_57 = arith.constant dense<0.000000e+00> : vector<128xf32>
    %124 = vector.multi_reduction <add>, %123, %cst_57 [0] : vector<384x128xf32> to vector<128xf32>
    %125 = vector.shape_cast %124 : vector<128xf32> to vector<1x128xf32>
    %cst_58 = arith.constant 3.906250e-03 : f32
    %126 = vector.broadcast %cst_58 : f32 to vector<1x128xf32>
    %127 = arith.mulf %125, %126 : vector<1x128xf32>
    %128 = arith.truncf %127 : vector<1x128xf32> to vector<1x128xbf16>
    %c0_59 = arith.constant 0 : index
    %c0_60 = arith.constant 0 : index
    %129 = vector.load %arg5[%c0_59, %c0_60] : memref<128x128xbf16, #tpu.memory_space<vmem>>, vector<128x128xbf16>
    %cst_61 = arith.constant dense<0.000000e+00> : vector<1x128xf32>
    %130 = tpu.matmul %128, %129, %cst_61 {dimension_numbers = #tpu.dot_dimension_numbers<[1], [0], [0], [1], [0, 0, 1, 1], [], []>} : vector<1x128xbf16>, vector<128x128xbf16>, vector<1x128xf32> -> vector<1x128xf32>
    %cst_62 = arith.constant 0.000000e+00 : f32
    %131 = vector.broadcast %cst_62 : f32 to vector<1x128xf32>
    %132 = arith.maximumf %130, %131 : vector<1x128xf32>
    %133 = arith.truncf %132 : vector<1x128xf32> to vector<1x128xbf16>
    %c0_63 = arith.constant 0 : index
    %c0_64 = arith.constant 0 : index
    %134 = vector.load %arg6[%c0_63, %c0_64] : memref<128x128xbf16, #tpu.memory_space<vmem>>, vector<128x128xbf16>
    %cst_65 = arith.constant dense<0.000000e+00> : vector<1x128xf32>
    %135 = tpu.matmul %133, %134, %cst_65 {dimension_numbers = #tpu.dot_dimension_numbers<[1], [0], [0], [1], [0, 0, 1, 1], [], []>} : vector<1x128xbf16>, vector<128x128xbf16>, vector<1x128xf32> -> vector<1x128xf32>
    %136 = arith.negf %135 : vector<1x128xf32>
    %137 = math.exp %136 : vector<1x128xf32>
    %cst_66 = arith.constant 1.000000e+00 : f32
    %138 = vector.broadcast %cst_66 : f32 to vector<1x128xf32>
    %139 = arith.addf %138, %137 : vector<1x128xf32>
    %140 = arith.divf %138, %139 : vector<1x128xf32>
    %141 = vector.broadcast %140 : vector<1x128xf32> to vector<384x128xf32>
    %142 = arith.mulf %121, %141 : vector<384x128xf32>
    %143 = arith.mulf %121, %142 : vector<384x128xf32>
    %144 = arith.addf %143, %29 : vector<384x128xf32>
    %cst_67 = arith.constant 0.000000e+00 : f32
    %cst_68 = arith.constant 6.000000e+00 : f32
    %145 = vector.broadcast %cst_67 : f32 to vector<384x128xf32>
    %146 = arith.maximumf %145, %144 : vector<384x128xf32>
    %147 = vector.broadcast %cst_68 : f32 to vector<384x128xf32>
    %148 = arith.minimumf %147, %146 : vector<384x128xf32>
    %149 = arith.truncf %148 : vector<384x128xf32> to vector<384x128xbf16>
    %c0_69 = arith.constant 0 : index
    %c0_70 = arith.constant 0 : index
    %c0_71 = arith.constant 0 : index
    %150 = vector.load %arg9[%c0_69, %c0_70, %c0_71] : memref<1x384x128xbf16, #tpu.memory_space<vmem>>, vector<1x384x128xbf16>
    %151 = vector.shape_cast %150 : vector<1x384x128xbf16> to vector<384x128xbf16>
    %152 = vector.shape_cast %149 : vector<384x128xbf16> to vector<1x384x128xbf16>
    tpu.vector_store %arg9[%c0_69, %c0_70, %c0_71], %152 {strides = array<i32>} : memref<1x384x128xbf16, #tpu.memory_space<vmem>>, vector<1x384x128xbf16>,
    return
  }
  func.func @transform_0(%arg0: i32) -> (i32, i32, i32) {
    %c0_i32 = arith.constant 0 : i32
    %c0_i32_0 = arith.constant 0 : i32
    %c0_i32_1 = arith.constant 0 : i32
    return %arg0, %c0_i32, %c0_i32_0 : i32, i32, i32
  }
  func.func @transform_1(%arg0: i32) -> (i32, i32) {
    %c0_i32 = arith.constant 0 : i32
    %c0_i32_0 = arith.constant 0 : i32
    %c0_i32_1 = arith.constant 0 : i32
    return %c0_i32, %c0_i32_0 : i32, i32
  }
  func.func @transform_2(%arg0: i32) -> (i32, i32) {
    %c0_i32 = arith.constant 0 : i32
    %c0_i32_0 = arith.constant 0 : i32
    %c0_i32_1 = arith.constant 0 : i32
    return %c0_i32, %c0_i32_0 : i32, i32
  }
  func.func @transform_3(%arg0: i32) -> (i32, i32) {
    %c0_i32 = arith.constant 0 : i32
    %c0_i32_0 = arith.constant 0 : i32
    %c0_i32_1 = arith.constant 0 : i32
    return %c0_i32, %c0_i32_0 : i32, i32
  }
  func.func @transform_4(%arg0: i32) -> (i32, i32) {
    %c0_i32 = arith.constant 0 : i32
    %c0_i32_0 = arith.constant 0 : i32
    %c0_i32_1 = arith.constant 0 : i32
    return %c0_i32, %c0_i32_0 : i32, i32
  }
  func.func @transform_5(%arg0: i32) -> (i32, i32) {
    %c0_i32 = arith.constant 0 : i32
    %c0_i32_0 = arith.constant 0 : i32
    %c0_i32_1 = arith.constant 0 : i32
    return %c0_i32, %c0_i32_0 : i32, i32
  }
  func.func @transform_6(%arg0: i32) -> (i32, i32) {
    %c0_i32 = arith.constant 0 : i32
    %c0_i32_0 = arith.constant 0 : i32
    %c0_i32_1 = arith.constant 0 : i32
    return %c0_i32, %c0_i32_0 : i32, i32
  }
  func.func @transform_7(%arg0: i32) -> (i32, i32) {
    %c0_i32 = arith.constant 0 : i32
    %c0_i32_0 = arith.constant 0 : i32
    %c0_i32_1 = arith.constant 0 : i32
    return %c0_i32, %c0_i32_0 : i32, i32
  }
  func.func @transform_8(%arg0: i32) -> (i32, i32, i32) {
    %c0_i32 = arith.constant 0 : i32
    %c0_i32_0 = arith.constant 0 : i32
    %c0_i32_1 = arith.constant 0 : i32
    return %arg0, %c0_i32, %c0_i32_0 : i32, i32, i32
  }
}

</mosaic_0001>

<llo_original>
// kernel: tpu_custom_call.1
$region0: #{tpu_custom_call.1}
  #allocation0 [shape = 'u32[]', space=smem, size = 0x4, offset = 0x4, fixed_abs, tag = 'smem constant byte address 0x4 - core index']
  #allocation1 [shape = 'u32[144,128]{1,0:T(1,128)}', space=vmem, size = 0x12000, scoped, tag = 'internal scratch']
  #allocation2 [shape = 'f32[432,128]{1,0:T(8,128)}', space=vmem, size = 0x36000, scoped, tag = 'scratch operand']
  %s0 = inlined_call_operand.vmem [shape: bf16[2,384,16], index: 0, kind: input, shape index: {}]
  %s1 = inlined_call_operand.vmem [shape: bf16[16,256], index: 1, kind: input, shape index: {}]
  %s2 = inlined_call_operand.vmem [shape: f32[9,128], index: 2, kind: input, shape index: {}]
  %s3 = inlined_call_operand.vmem [shape: bf16[1152,128], index: 3, kind: input, shape index: {}]
  %s4 = inlined_call_operand.vmem [shape: bf16[128,128], index: 4, kind: input, shape index: {}]
  %s5 = inlined_call_operand.vmem [shape: bf16[128,128], index: 5, kind: input, shape index: {}]
  %s6 = inlined_call_operand.vmem [shape: f32[8,128], index: 6, kind: input, shape index: {}]
  %s7 = inlined_call_operand.vmem [shape: f32[384,1], index: 7, kind: input, shape index: {}]
  %s8 = inlined_call_operand.hbm [shape: bf16[2,384,128], index: 8, kind: output, shape index: {}]
  %s9 = sld [smem:[#allocation0]]
  $region65: #{tpu_custom_call.1} parent=0
    _
  %s11 = ssub.s32 1, %s9
  %s12 = scalar_select 0, %s11, %s9
  $region1: #{tpu_custom_call.1} parent=0
    #allocation3 [shape = 'u8[196608]{0}', space=vmem, size = 0x30000, scoped, tag = 'output window, operand 0']
    #allocation4 [shape = 's32[2]{0}', space=sflag, size = 0x8, scoped, tag = 'scoped memory for tpu_custom_call.1']
    %13 = vsyncpa [#allocation4], 0
    %s14 = scalar_lea.sflag [#allocation4], 1
    %15 = vsyncpa %s14, 0
    loop: start=0, step=1, limit=4
    $region2: #{tpu_custom_call.1} parent=1 // loop_pre_header
      _
    $region3: #{tpu_custom_call.1} parent=1 // loop_header
      %s17 = sphi 0, %s21
      %p18 = scmp.ge.s32.totalorder %s17, 4
      %s27 = sphi 0, %s29
      %s30 = sphi 0, %s27
      %s31 = sphi 0, %s30
      %s47 = sphi 0, %s31
      %s51 = sphi 0, %s51
      %s53 = sphi 0, %s51
      %s54 = sphi 0, %s53
      %s68 = sphi 0, %s54
      %s72 = sphi 0, %s72
      %s74 = sphi 0, %s72
      %s75 = sphi 0, %s74
      %s89 = sphi 0, %s75
      %s93 = sphi 0, %s93
      %s95 = sphi 0, %s93
      %s96 = sphi 0, %s95
      %s110 = sphi 0, %s96
      %s114 = sphi 0, %s114
      %s116 = sphi 0, %s114
      %s117 = sphi 0, %s116
      %s131 = sphi 0, %s117
      %s135 = sphi 0, %s135
      %s137 = sphi 0, %s135
      %s138 = sphi 0, %s137
      %s152 = sphi 0, %s138
      %s156 = sphi 0, %s156
      %s158 = sphi 0, %s156
      %s159 = sphi 0, %s158
      %s173 = sphi 0, %s159
      %s177 = sphi 0, %s177
      %s179 = sphi 0, %s177
      %s180 = sphi 0, %s179
      %s194 = sphi 0, %s180
      %s200 = sphi 0, %s202
      %s203 = sphi 0, %s200
      %s204 = sphi 0, %s203
      %s220 = sphi 0, %s204
    $region4: #{tpu_custom_call.1} parent=1 // loop_header_branch
      %20 = sbr.rel (%p18) target = $region8
    $region5: #{tpu_custom_call.1} parent=1 // loop_body
      %s22 = ssub.s32 %s17, 1
      %s23 = ssub.s32 %s17, 2
      %s24 = sadd.s32 %s17, 1
      %s25 = ssub.s32 %s17, %s24
      %p26 = scmp.eq.s32.totalorder %s25, 0
      %s28 = sadd.s32 %s27, 1
      %s29 = scalar_select %p26, %s27, %s28
      %p32 = pneg %p26
      %p33 = scmp.eq.s32.totalorder %s17, 1
      %p34 = por %p32, %p33
      %p35 = scmp.ne.s32.totalorder %s27, %s30
      %p36 = scmp.eq.s32.totalorder %s17, 0
      %p37 = por %p35, %p36
      %p38 = scmp.ne.s32.totalorder %s27, %s30
      %p39 = scmp.eq.s32.totalorder %s22, 1
      %p40 = por %p38, %p39
      %p41 = scmp.ne.s32.totalorder %s30, %s31
      %p42 = scmp.eq.s32.totalorder %s22, 0
      %p43 = por %p41, %p42
      %p44 = scmp.ne.s32.totalorder %s30, %s31
      %p45 = scmp.eq.s32.totalorder %s23, 1
      %p46 = por %p44, %p45
      %p48 = scmp.ne.s32.totalorder %s31, %s47
      %p49 = scmp.eq.s32.totalorder %s23, 0
      %p50 = por %p48, %p49
      %s52 = sadd.s32 %s51, 1
      %p55 = scmp.eq.s32.totalorder %s17, 1
      %p56 = scmp.ne.s32.totalorder %s51, %s53
      %p57 = scmp.eq.s32.totalorder %s17, 0
      %p58 = por %p56, %p57
      %p59 = scmp.ne.s32.totalorder %s51, %s53
      %p60 = scmp.eq.s32.totalorder %s22, 1
      %p61 = por %p59, %p60
      %p62 = scmp.ne.s32.totalorder %s53, %s54
      %p63 = scmp.eq.s32.totalorder %s22, 0
      %p64 = por %p62, %p63
      %p65 = scmp.ne.s32.totalorder %s53, %s54
      %p66 = scmp.eq.s32.totalorder %s23, 1
      %p67 = por %p65, %p66
      %p69 = scmp.ne.s32.totalorder %s54, %s68
      %p70 = scmp.eq.s32.totalorder %s23, 0
      %p71 = por %p69, %p70
      %s73 = sadd.s32 %s72, 1
      %p76 = scmp.eq.s32.totalorder %s17, 1
      %p77 = scmp.ne.s32.totalorder %s72, %s74
      %p78 = scmp.eq.s32.totalorder %s17, 0
      %p79 = por %p77, %p78
      %p80 = scmp.ne.s32.totalorder %s72, %s74
      %p81 = scmp.eq.s32.totalorder %s22, 1
      %p82 = por %p80, %p81
      %p83 = scmp.ne.s32.totalorder %s74, %s75
      %p84 = scmp.eq.s32.totalorder %s22, 0
      %p85 = por %p83, %p84
      %p86 = scmp.ne.s32.totalorder %s74, %s75
      %p87 = scmp.eq.s32.totalorder %s23, 1
      %p88 = por %p86, %p87
      %p90 = scmp.ne.s32.totalorder %s75, %s89
      %p91 = scmp.eq.s32.totalorder %s23, 0
      %p92 = por %p90, %p91
      %s94 = sadd.s32 %s93, 1
      %p97 = scmp.eq.s32.totalorder %s17, 1
      %p98 = scmp.ne.s32.totalorder %s93, %s95
      %p99 = scmp.eq.s32.totalorder %s17, 0
      %p100 = por %p98, %p99
      %p101 = scmp.ne.s32.totalorder %s93, %s95
      %p102 = scmp.eq.s32.totalorder %s22, 1
      %p103 = por %p101, %p102
      %p104 = scmp.ne.s32.totalorder %s95, %s96
      %p105 = scmp.eq.s32.totalorder %s22, 0
      %p106 = por %p104, %p105
      %p107 = scmp.ne.s32.totalorder %s95, %s96
      %p108 = scmp.eq.s32.totalorder %s23, 1
      %p109 = por %p107, %p108
      %p111 = scmp.ne.s32.totalorder %s96, %s110
      %p112 = scmp.eq.s32.totalorder %s23, 0
      %p113 = por %p111, %p112
      %s115 = sadd.s32 %s114, 1
      %p118 = scmp.eq.s32.totalorder %s17, 1
      %p119 = scmp.ne.s32.totalorder %s114, %s116
      %p120 = scmp.eq.s32.totalorder %s17, 0
      %p121 = por %p119, %p120
      %p122 = scmp.ne.s32.totalorder %s114, %s116
      %p123 = scmp.eq.s32.totalorder %s22, 1
      %p124 = por %p122, %p123
      %p125 = scmp.ne.s32.totalorder %s116, %s117
      %p126 = scmp.eq.s32.totalorder %s22, 0
      %p127 = por %p125, %p126
      %p128 = scmp.ne.s32.totalorder %s116, %s117
      %p129 = scmp.eq.s32.totalorder %s23, 1
      %p130 = por %p128, %p129
      %p132 = scmp.ne.s32.totalorder %s117, %s131
      %p133 = scmp.eq.s32.totalorder %s23, 0
      %p134 = por %p132, %p133
      %s136 = sadd.s32 %s135, 1
      %p139 = scmp.eq.s32.totalorder %s17, 1
      %p140 = scmp.ne.s32.totalorder %s135, %s137
      %p141 = scmp.eq.s32.totalorder %s17, 0
      %p142 = por %p140, %p141
      %p143 = scmp.ne.s32.totalorder %s135, %s137
      %p144 = scmp.eq.s32.totalorder %s22, 1
      %p145 = por %p143, %p144
      %p146 = scmp.ne.s32.totalorder %s137, %s138
      %p147 = scmp.eq.s32.totalorder %s22, 0
      %p148 = por %p146, %p147
      %p149 = scmp.ne.s32.totalorder %s137, %s138
      %p150 = scmp.eq.s32.totalorder %s23, 1
      %p151 = por %p149, %p150
      %p153 = scmp.ne.s32.totalorder %s138, %s152
      %p154 = scmp.eq.s32.totalorder %s23, 0
      %p155 = por %p153, %p154
      %s157 = sadd.s32 %s156, 1
      %p160 = scmp.eq.s32.totalorder %s17, 1
      %p161 = scmp.ne.s32.totalorder %s156, %s158
      %p162 = scmp.eq.s32.totalorder %s17, 0
      %p163 = por %p161, %p162
      %p164 = scmp.ne.s32.totalorder %s156, %s158
      %p165 = scmp.eq.s32.totalorder %s22, 1
      %p166 = por %p164, %p165
      %p167 = scmp.ne.s32.totalorder %s158, %s159
      %p168 = scmp.eq.s32.totalorder %s22, 0
      %p169 = por %p167, %p168
      %p170 = scmp.ne.s32.totalorder %s158, %s159
      %p171 = scmp.eq.s32.totalorder %s23, 1
      %p172 = por %p170, %p171
      %p174 = scmp.ne.s32.totalorder %s159, %s173
      %p175 = scmp.eq.s32.totalorder %s23, 0
      %p176 = por %p174, %p175
      %s178 = sadd.s32 %s177, 1
      %p181 = scmp.eq.s32.totalorder %s17, 1
      %p182 = scmp.ne.s32.totalorder %s177, %s179
      %p183 = scmp.eq.s32.totalorder %s17, 0
      %p184 = por %p182, %p183
      %p185 = scmp.ne.s32.totalorder %s177, %s179
      %p186 = scmp.eq.s32.totalorder %s22, 1
      %p187 = por %p185, %p186
      %p188 = scmp.ne.s32.totalorder %s179, %s180
      %p189 = scmp.eq.s32.totalorder %s22, 0
      %p190 = por %p188, %p189
      %p191 = scmp.ne.s32.totalorder %s179, %s180
      %p192 = scmp.eq.s32.totalorder %s23, 1
      %p193 = por %p191, %p192
      %p195 = scmp.ne.s32.totalorder %s180, %s194
      %p196 = scmp.eq.s32.totalorder %s23, 0
      %p197 = por %p195, %p196
      %s198 = ssub.s32 %s17, %s24
      %p199 = scmp.eq.s32.totalorder %s198, 0
      %s201 = sadd.s32 %s200, 1
      %s202 = scalar_select %p199, %s200, %s201
      %p205 = pneg %p199
      %p206 = scmp.eq.s32.totalorder %s17, 1
      %p207 = por %p205, %p206
      %p208 = scmp.ne.s32.totalorder %s200, %s203
      %p209 = scmp.eq.s32.totalorder %s17, 0
      %p210 = por %p208, %p209
      %p211 = scmp.ne.s32.totalorder %s200, %s203
      %p212 = scmp.eq.s32.totalorder %s22, 1
      %p213 = por %p211, %p212
      %p214 = scmp.ne.s32.totalorder %s203, %s204
      %p215 = scmp.eq.s32.totalorder %s22, 0
      %p216 = por %p214, %p215
      %p217 = scmp.ne.s32.totalorder %s203, %s204
      %p218 = scmp.eq.s32.totalorder %s23, 1
      %p219 = por %p217, %p218
      %p221 = scmp.ne.s32.totalorder %s204, %s220
      %p222 = scmp.eq.s32.totalorder %s23, 0
      %p223 = por %p221, %p222
      %p224 = scmp.le.s32.totalorder 1, %s17
      %p225 = scmp.lt.s32.totalorder %s17, 3
      %p226 = pnand %p224, %p225
      %p227 = pneg %p226
      // Predicated region
      $region9: #{tpu_custom_call.1} parent=5 // pred_check
        _
      $region10: #{tpu_custom_call.1} parent=5 // pred_check_branch
        %229 = sbr.rel (%p226) target = $region12
      $region11: #{tpu_custom_call.1} parent=5 // pred_region
        %s230 = ssub.s32 %s17, 1
        // Predicated region
        $region13: #{tpu_custom_call.1} parent=11 // pred_check
          %p231 = pneg %p64
        $region14: #{tpu_custom_call.1} parent=11 // pred_check_branch
          %233 = sbr.rel (%p231) target = $region16
        $region15: #{tpu_custom_call.1} parent=11 // pred_region
          _
        $region16: #{tpu_custom_call.1} parent=11 // pred_fallthru
          _
        // Predicated region
        $region17: #{tpu_custom_call.1} parent=11 // pred_check
          %p234 = pneg %p85
        $region18: #{tpu_custom_call.1} parent=11 // pred_check_branch
          %236 = sbr.rel (%p234) target = $region20
        $region19: #{tpu_custom_call.1} parent=11 // pred_region
          _
        $region20: #{tpu_custom_call.1} parent=11 // pred_fallthru
          _
        // Predicated region
        $region21: #{tpu_custom_call.1} parent=11 // pred_check
          %p237 = pneg %p106
        $region22: #{tpu_custom_call.1} parent=11 // pred_check_branch
          %239 = sbr.rel (%p237) target = $region24
        $region23: #{tpu_custom_call.1} parent=11 // pred_region
          _
        $region24: #{tpu_custom_call.1} parent=11 // pred_fallthru
          _
        // Predicated region
        $region25: #{tpu_custom_call.1} parent=11 // pred_check
          %p240 = pneg %p127
        $region26: #{tpu_custom_call.1} parent=11 // pred_check_branch
          %242 = sbr.rel (%p240) target = $region28
        $region27: #{tpu_custom_call.1} parent=11 // pred_region
          _
        $region28: #{tpu_custom_call.1} parent=11 // pred_fallthru
          _
        // Predicated region
        $region29: #{tpu_custom_call.1} parent=11 // pred_check
          %p243 = pneg %p148
        $region30: #{tpu_custom_call.1} parent=11 // pred_check_branch
          %245 = sbr.rel (%p243) target = $region32
        $region31: #{tpu_custom_call.1} parent=11 // pred_region
          _
        $region32: #{tpu_custom_call.1} parent=11 // pred_fallthru
          _
        // Predicated region
        $region33: #{tpu_custom_call.1} parent=11 // pred_check
          %p246 = pneg %p169
        $region34: #{tpu_custom_call.1} parent=11 // pred_check_branch
          %248 = sbr.rel (%p246) target = $region36
        $region35: #{tpu_custom_call.1} parent=11 // pred_region
          _
        $region36: #{tpu_custom_call.1} parent=11 // pred_fallthru
          _
        // Predicated region
        $region37: #{tpu_custom_call.1} parent=11 // pred_check
          %p249 = pneg %p190
        $region38: #{tpu_custom_call.1} parent=11 // pred_check_branch
          %251 = sbr.rel (%p249) target = $region40
        $region39: #{tpu_custom_call.1} parent=11 // pred_region
          _
        $region40: #{tpu_custom_call.1} parent=11 // pred_fallthru
          _
      $region12: #{tpu_custom_call.1} parent=5 // pred_fallthru
        _
      %p252 = scmp.lt.s32.totalorder %s17, 2
      // Predicated region
      $region41: #{tpu_custom_call.1} parent=5 // pred_check
        %p253 = pneg %p252
      $region42: #{tpu_custom_call.1} parent=5 // pred_check_branch
        %255 = sbr.rel (%p253) target = $region44
      $region43: #{tpu_custom_call.1} parent=5 // pred_region
        // Predicated region
        $region45: #{tpu_custom_call.1} parent=43 // pred_check
          %p256 = pneg %p37
        $region46: #{tpu_custom_call.1} parent=43 // pred_check_branch
          %258 = sbr.rel (%p256) target = $region48
        $region47: #{tpu_custom_call.1} parent=43 // pred_region
          %p259 = scmp.lt.s32.totalorder %s17, 1
          %s260 = scalar_select %p259, %s17, 1
          %s261 = smul.addr %s260, 48
          %s262 = smul.addr %s261, 4
          %s263 = scalar_lea.vmem %s0, %s262
        $region48: #{tpu_custom_call.1} parent=43 // pred_fallthru
          _
      $region44: #{tpu_custom_call.1} parent=5 // pred_fallthru
        _
      %p264 = scmp.le.s32.totalorder 1, %s17
      %p265 = scmp.lt.s32.totalorder %s17, 3
      %p266 = pnand %p264, %p265
      %p267 = pneg %p266
      // Predicated region
      $region49: #{tpu_custom_call.1} parent=5 // pred_check
        _
      $region50: #{tpu_custom_call.1} parent=5 // pred_check_branch
        %269 = sbr.rel (%p266) target = $region52
      $region51: #{tpu_custom_call.1} parent=5 // pred_region
        %s270 = ssub.s32 %s17, 1
        %p271 = scmp.lt.s32.totalorder %s22, 1
        %s272 = scalar_select %p271, %s22, 1
        %s273 = smul.addr %s272, 48
        %s274 = smul.addr %s273, 4
        %s275 = scalar_lea.vmem %s0, %s274
        %p276 = pneg %p43
        %p277 = pneg %p40
        %p278 = pneg %p64
        %p279 = pneg %p61
        %p280 = pneg %p85
        %p281 = pneg %p82
        %p282 = pneg %p106
        %p283 = pneg %p103
        %p284 = pneg %p127
        %p285 = pneg %p124
        %p286 = pneg %p148
        %p287 = pneg %p145
        %p288 = pneg %p169
        %p289 = pneg %p166
        %p290 = pneg %p190
        %p291 = pneg %p187
        %p292 = pneg %p216
        %p293 = pneg %p213
        %s294 = sand.u32 %s203, 1
        %s295 = scalar_lea.sflag [#allocation4], %s294
        %s296 = sand.u32 %s203, 1
        %s297 = smul.addr %s296, 192
        %s298 = scalar_lea.vmem [#allocation3], %s297
        %p299 = scmp.lt.s32.totalorder %s22, 1
        %s300 = scalar_select %p299, %s22, 1
        %s301 = smul.addr %s300, 48
        %s302 = smul.addr %s301, 4
        %s303 = scalar_lea.vmem %s0, %s302
        %v305 = vld [vmem:[%s6] sm:$0xff]
        %v306 = vld [vmem:[%s7] sm:$0xff]
        %v307 = vld [vmem:[%s7 + $0x8] sm:$0xff]
        %v308 = vld [vmem:[%s7 + $0x10] sm:$0xff]
        %v309 = vld [vmem:[%s7 + $0x18] sm:$0xff]
        %v310 = vld [vmem:[%s7 + $0x20] sm:$0xff]
        %v311 = vld [vmem:[%s7 + $0x28] sm:$0xff]
        %v312 = vld [vmem:[%s7 + $0x30] sm:$0xff]
        %v313 = vld [vmem:[%s7 + $0x38] sm:$0xff]
        %v314 = vld [vmem:[%s7 + $0x40] sm:$0xff]
        %v315 = vld [vmem:[%s7 + $0x48] sm:$0xff]
        %v316 = vld [vmem:[%s7 + $0x50] sm:$0xff]
        %v317 = vld [vmem:[%s7 + $0x58] sm:$0xff]
        %v318 = vld [vmem:[%s7 + $0x60] sm:$0xff]
        %v319 = vld [vmem:[%s7 + $0x68] sm:$0xff]
        %v320 = vld [vmem:[%s7 + $0x70] sm:$0xff]
        %v321 = vld [vmem:[%s7 + $0x78] sm:$0xff]
        %v322 = vld [vmem:[%s7 + $0x80] sm:$0xff]
        %v323 = vld [vmem:[%s7 + $0x88] sm:$0xff]
        %v324 = vld [vmem:[%s7 + $0x90] sm:$0xff]
        %v325 = vld [vmem:[%s7 + $0x98] sm:$0xff]
        %v326 = vld [vmem:[%s7 + $0xa0] sm:$0xff]
        %v327 = vld [vmem:[%s7 + $0xa8] sm:$0xff]
        %v328 = vld [vmem:[%s7 + $0xb0] sm:$0xff]
        %v329 = vld [vmem:[%s7 + $0xb8] sm:$0xff]
        %v330 = vld [vmem:[%s7 + $0xc0] sm:$0xff]
        %v331 = vld [vmem:[%s7 + $0xc8] sm:$0xff]
        %v332 = vld [vmem:[%s7 + $0xd0] sm:$0xff]
        %v333 = vld [vmem:[%s7 + $0xd8] sm:$0xff]
        %v334 = vld [vmem:[%s7 + $0xe0] sm:$0xff]
        %v335 = vld [vmem:[%s7 + $0xe8] sm:$0xff]
        %v336 = vld [vmem:[%s7 + $0xf0] sm:$0xff]
        %v337 = vld [vmem:[%s7 + $0xf8] sm:$0xff]
        %v338 = vld [vmem:[%s7 + $0x100] sm:$0xff]
        %v339 = vld [vmem:[%s7 + $0x108] sm:$0xff]
        %v340 = vld [vmem:[%s7 + $0x110] sm:$0xff]
        %v341 = vld [vmem:[%s7 + $0x118] sm:$0xff]
        %v342 = vld [vmem:[%s7 + $0x120] sm:$0xff]
        %v343 = vld [vmem:[%s7 + $0x128] sm:$0xff]
        %v344 = vld [vmem:[%s7 + $0x130] sm:$0xff]
        %v345 = vld [vmem:[%s7 + $0x138] sm:$0xff]
        %v346 = vld [vmem:[%s7 + $0x140] sm:$0xff]
        %v347 = vld [vmem:[%s7 + $0x148] sm:$0xff]
        %v348 = vld [vmem:[%s7 + $0x150] sm:$0xff]
        %v349 = vld [vmem:[%s7 + $0x158] sm:$0xff]
        %v350 = vld [vmem:[%s7 + $0x160] sm:$0xff]
        %v351 = vld [vmem:[%s7 + $0x168] sm:$0xff]
        %v352 = vld [vmem:[%s7 + $0x170] sm:$0xff]
        %v353 = vld [vmem:[%s7 + $0x178] sm:$0xff]
        %v354 = vld [vmem:[%s303] sm:$0xf]
        %v355 = vld [vmem:[%s303 + $0x4] sm:$0xf]
        %v356 = vld [vmem:[%s303 + $0x8] sm:$0xf]
        %v357 = vld [vmem:[%s303 + $0xc] sm:$0xf]
        %v358 = vld [vmem:[%s303 + $0x10] sm:$0xf]
        %v359 = vld [vmem:[%s303 + $0x14] sm:$0xf]
        %v360 = vld [vmem:[%s303 + $0x18] sm:$0xf]
        %v361 = vld [vmem:[%s303 + $0x1c] sm:$0xf]
        %v362 = vld [vmem:[%s303 + $0x20] sm:$0xf]
        %v363 = vld [vmem:[%s303 + $0x24] sm:$0xf]
        %v364 = vld [vmem:[%s303 + $0x28] sm:$0xf]
        %v365 = vld [vmem:[%s303 + $0x2c] sm:$0xf]
        %v366 = vld [vmem:[%s303 + $0x30] sm:$0xf]
        %v367 = vld [vmem:[%s303 + $0x34] sm:$0xf]
        %v368 = vld [vmem:[%s303 + $0x38] sm:$0xf]
        %v369 = vld [vmem:[%s303 + $0x3c] sm:$0xf]
        %v370 = vld [vmem:[%s303 + $0x40] sm:$0xf]
        %v371 = vld [vmem:[%s303 + $0x44] sm:$0xf]
        %v372 = vld [vmem:[%s303 + $0x48] sm:$0xf]
        %v373 = vld [vmem:[%s303 + $0x4c] sm:$0xf]
        %v374 = vld [vmem:[%s303 + $0x50] sm:$0xf]
        %v375 = vld [vmem:[%s303 + $0x54] sm:$0xf]
        %v376 = vld [vmem:[%s303 + $0x58] sm:$0xf]
        %v377 = vld [vmem:[%s303 + $0x5c] sm:$0xf]
        %v378 = vld [vmem:[%s303 + $0x60] sm:$0xf]
        %v379 = vld [vmem:[%s303 + $0x64] sm:$0xf]
        %v380 = vld [vmem:[%s303 + $0x68] sm:$0xf]
        %v381 = vld [vmem:[%s303 + $0x6c] sm:$0xf]
        %v382 = vld [vmem:[%s303 + $0x70] sm:$0xf]
        %v383 = vld [vmem:[%s303 + $0x74] sm:$0xf]
        %v384 = vld [vmem:[%s303 + $0x78] sm:$0xf]
        %v385 = vld [vmem:[%s303 + $0x7c] sm:$0xf]
        %v386 = vld [vmem:[%s303 + $0x80] sm:$0xf]
        %v387 = vld [vmem:[%s303 + $0x84] sm:$0xf]
        %v388 = vld [vmem:[%s303 + $0x88] sm:$0xf]
        %v389 = vld [vmem:[%s303 + $0x8c] sm:$0xf]
        %v390 = vld [vmem:[%s303 + $0x90] sm:$0xf]
        %v391 = vld [vmem:[%s303 + $0x94] sm:$0xf]
        %v392 = vld [vmem:[%s303 + $0x98] sm:$0xf]
        %v393 = vld [vmem:[%s303 + $0x9c] sm:$0xf]
        %v394 = vld [vmem:[%s303 + $0xa0] sm:$0xf]
        %v395 = vld [vmem:[%s303 + $0xa4] sm:$0xf]
        %v396 = vld [vmem:[%s303 + $0xa8] sm:$0xf]
        %v397 = vld [vmem:[%s303 + $0xac] sm:$0xf]
        %v398 = vld [vmem:[%s303 + $0xb0] sm:$0xf]
        %v399 = vld [vmem:[%s303 + $0xb4] sm:$0xf]
        %v400 = vld [vmem:[%s303 + $0xb8] sm:$0xf]
        %v401 = vld [vmem:[%s303 + $0xbc] sm:$0xf]
        %v402 = vld [vmem:[%s1] sm:$0xff]
        %v403 = vld [vmem:[%s1 + $0x8] sm:$0xff]
        %v452 = vunpack.c.l.b16 %v354
        %v453 = vunpack.c.l.b16 %v355
        %v454 = vunpack.c.l.b16 %v356
        %v455 = vunpack.c.l.b16 %v357
        %v456 = vunpack.c.l.b16 %v358
        %v457 = vunpack.c.l.b16 %v359
        %v458 = vunpack.c.l.b16 %v360
        %v459 = vunpack.c.l.b16 %v361
        %v460 = vunpack.c.l.b16 %v362
        %v461 = vunpack.c.l.b16 %v363
        %v462 = vunpack.c.l.b16 %v364
        %v463 = vunpack.c.l.b16 %v365
        %v464 = vunpack.c.l.b16 %v366
        %v465 = vunpack.c.l.b16 %v367
        %v466 = vunpack.c.l.b16 %v368
        %v467 = vunpack.c.l.b16 %v369
        %v468 = vunpack.c.l.b16 %v370
        %v469 = vunpack.c.l.b16 %v371
        %v470 = vunpack.c.l.b16 %v372
        %v471 = vunpack.c.l.b16 %v373
        %v472 = vunpack.c.l.b16 %v374
        %v473 = vunpack.c.l.b16 %v375
        %v474 = vunpack.c.l.b16 %v376
        %v475 = vunpack.c.l.b16 %v377
        %v476 = vunpack.c.l.b16 %v378
        %v477 = vunpack.c.l.b16 %v379
        %v478 = vunpack.c.l.b16 %v380
        %v479 = vunpack.c.l.b16 %v381
        %v480 = vunpack.c.l.b16 %v382
        %v481 = vunpack.c.l.b16 %v383
        %v482 = vunpack.c.l.b16 %v384
        %v483 = vunpack.c.l.b16 %v385
        %v484 = vunpack.c.l.b16 %v386
        %v485 = vunpack.c.l.b16 %v387
        %v486 = vunpack.c.l.b16 %v388
        %v487 = vunpack.c.l.b16 %v389
        %v488 = vunpack.c.l.b16 %v390
        %v489 = vunpack.c.l.b16 %v391
        %v490 = vunpack.c.l.b16 %v392
        %v491 = vunpack.c.l.b16 %v393
        %v492 = vunpack.c.l.b16 %v394
        %v493 = vunpack.c.l.b16 %v395
        %v494 = vunpack.c.l.b16 %v396
        %v495 = vunpack.c.l.b16 %v397
        %v496 = vunpack.c.l.b16 %v398
        %v497 = vunpack.c.l.b16 %v399
        %v498 = vunpack.c.l.b16 %v400
        %v499 = vunpack.c.l.b16 %v401
        %v500 = vpack.c.b16 %v453, %v452
        %v501 = vpack.c.b16 %v455, %v454
        %v502 = vpack.c.b16 %v457, %v456
        %v503 = vpack.c.b16 %v459, %v458
        %v504 = vpack.c.b16 %v461, %v460
        %v505 = vpack.c.b16 %v463, %v462
        %v506 = vpack.c.b16 %v465, %v464
        %v507 = vpack.c.b16 %v467, %v466
        %v508 = vpack.c.b16 %v469, %v468
        %v509 = vpack.c.b16 %v471, %v470
        %v510 = vpack.c.b16 %v473, %v472
        %v511 = vpack.c.b16 %v475, %v474
        %v512 = vpack.c.b16 %v477, %v476
        %v513 = vpack.c.b16 %v479, %v478
        %v514 = vpack.c.b16 %v481, %v480
        %v515 = vpack.c.b16 %v483, %v482
        %v516 = vpack.c.b16 %v485, %v484
        %v517 = vpack.c.b16 %v487, %v486
        %v518 = vpack.c.b16 %v489, %v488
        %v519 = vpack.c.b16 %v491, %v490
        %v520 = vpack.c.b16 %v493, %v492
        %v521 = vpack.c.b16 %v495, %v494
        %v522 = vpack.c.b16 %v497, %v496
        %v523 = vpack.c.b16 %v499, %v498
        %v526 = vunpack.c.l.b16 %v402
        %v527 = vunpack.c.h.b16 %v402
        %v528 = vunpack.c.l.b16 %v403
        %v529 = vunpack.c.h.b16 %v403
        %v530 = vpack.c.b16 %v528, %v526
        %v531 = vpack.c.b16 %v529, %v527
        %vm534 = vcmask 130048
        %v536 = vsel %vm534, %v500, 0
        %v539 = vsel %vm534, %v501, 0
        %v542 = vsel %vm534, %v502, 0
        %v545 = vsel %vm534, %v503, 0
        %v548 = vsel %vm534, %v504, 0
        %v551 = vsel %vm534, %v505, 0
        %v554 = vsel %vm534, %v506, 0
        %v557 = vsel %vm534, %v507, 0
        %v560 = vsel %vm534, %v508, 0
        %v563 = vsel %vm534, %v509, 0
        %v566 = vsel %vm534, %v510, 0
        %v569 = vsel %vm534, %v511, 0
        %v572 = vsel %vm534, %v512, 0
        %v575 = vsel %vm534, %v513, 0
        %v578 = vsel %vm534, %v514, 0
        %v581 = vsel %vm534, %v515, 0
        %v584 = vsel %vm534, %v516, 0
        %v587 = vsel %vm534, %v517, 0
        %v590 = vsel %vm534, %v518, 0
        %v593 = vsel %vm534, %v519, 0
        %v596 = vsel %vm534, %v520, 0
        %v599 = vsel %vm534, %v521, 0
        %v602 = vsel %vm534, %v522, 0
        %v605 = vsel %vm534, %v523, 0
        %607 = vmatprep.subr.bf16.mxu0 %v531
        %608 = vmatpush1.bf16.msra.mxu0 %v530
        %609 = vmatprep.subr.bf16.mxu0 0
        %610 = vmatpush1.bf16.msra.mxu0 0
        %611 = vmatprep.subr.bf16.mxu0 0
        %612 = vmatpush1.bf16.msra.mxu0 0
        %613 = vmatprep.subr.bf16.mxu0 0
        %614 = vmatpush1.bf16.msra.mxu0 0
        %615 = vmatprep.subr.bf16.mxu0 0
        %616 = vmatpush1.bf16.msra.mxu0 0
        %617 = vmatprep.subr.bf16.mxu0 0
        %618 = vmatpush1.bf16.msra.mxu0 0
        %619 = vmatprep.subr.bf16.mxu0 0
        %620 = vmatpush1.bf16.msra.mxu0 0
        %621 = vmatprep.subr.bf16.mxu0 0
        %622 = vmatpush1.bf16.msra.mxu0 0
        %623 = vmatprep.subr.bf16.mxu0 0
        %624 = vmatpush1.bf16.msra.mxu0 0
        %625 = vmatprep.subr.bf16.mxu0 0
        %626 = vmatpush1.bf16.msra.mxu0 0
        %627 = vmatprep.subr.bf16.mxu0 0
        %628 = vmatpush1.bf16.msra.mxu0 0
        %629 = vmatprep.subr.bf16.mxu0 0
        %630 = vmatpush1.bf16.msra.mxu0 0
        %631 = vmatprep.subr.bf16.mxu0 0
        %632 = vmatpush1.bf16.msra.mxu0 0
        %633 = vmatprep.subr.bf16.mxu0 0
        %634 = vmatpush1.bf16.msra.mxu0 0
        %635 = vmatprep.subr.bf16.mxu0 0
        %636 = vmatpush1.bf16.msra.mxu0 0
        %637 = vmatprep.subr.bf16.mxu0 0
        %638 = vmatpush1.bf16.msra.mxu0 0
        %639 = vmatprep.mubr.bf16.mxu0 0
        %640 = vmatmul.mubr.bf16.gmra.mrb[0].mxu0 %v536
        %v641 = vpop.f32.mrb[0].mxu0
        %v642 = vadd.f32 0.0, %v641
        %v643 = vpop.f32.mrb[0].mxu0
        %v644 = vadd.f32 0.0, %v643
        %v645 = vpop.f32.mrb[0].mxu0
        %v646 = vadd.f32 0.0, %v645
        %v647 = vpop.f32.mrb[0].mxu0
        %v648 = vadd.f32 0.0, %v647
        %649 = vmatprep.mubr.bf16.mxu0 0
        %650 = vmatmul.mubr.bf16.gmra.mrb[0].mxu0 %v539
        %v651 = vpop.f32.mrb[0].mxu0
        %v652 = vadd.f32 0.0, %v651
        %v653 = vpop.f32.mrb[0].mxu0
        %v654 = vadd.f32 0.0, %v653
        %v655 = vpop.f32.mrb[0].mxu0
        %v656 = vadd.f32 0.0, %v655
        %v657 = vpop.f32.mrb[0].mxu0
        %v658 = vadd.f32 0.0, %v657
        %659 = vmatprep.mubr.bf16.mxu0 0
        %660 = vmatmul.mubr.bf16.gmra.mrb[0].mxu0 %v542
        %v661 = vpop.f32.mrb[0].mxu0
        %v662 = vadd.f32 0.0, %v661
        %v663 = vpop.f32.mrb[0].mxu0
        %v664 = vadd.f32 0.0, %v663
        %v665 = vpop.f32.mrb[0].mxu0
        %v666 = vadd.f32 0.0, %v665
        %v667 = vpop.f32.mrb[0].mxu0
        %v668 = vadd.f32 0.0, %v667
        %669 = vmatprep.mubr.bf16.mxu0 0
        %670 = vmatmul.mubr.bf16.gmra.mrb[0].mxu0 %v545
        %v671 = vpop.f32.mrb[0].mxu0
        %v672 = vadd.f32 0.0, %v671
        %v673 = vpop.f32.mrb[0].mxu0
        %v674 = vadd.f32 0.0, %v673
        %v675 = vpop.f32.mrb[0].mxu0
        %v676 = vadd.f32 0.0, %v675
        %v677 = vpop.f32.mrb[0].mxu0
        %v678 = vadd.f32 0.0, %v677
        %679 = vmatprep.mubr.bf16.mxu0 0
        %680 = vmatmul.mubr.bf16.gmra.mrb[0].mxu0 %v548
        %v681 = vpop.f32.mrb[0].mxu0
        %v682 = vadd.f32 0.0, %v681
        %v683 = vpop.f32.mrb[0].mxu0
        %v684 = vadd.f32 0.0, %v683
        %v685 = vpop.f32.mrb[0].mxu0
        %v686 = vadd.f32 0.0, %v685
        %v687 = vpop.f32.mrb[0].mxu0
        %v688 = vadd.f32 0.0, %v687
        %689 = vmatprep.mubr.bf16.mxu0 0
        %690 = vmatmul.mubr.bf16.gmra.mrb[0].mxu0 %v551
        %v691 = vpop.f32.mrb[0].mxu0
        %v692 = vadd.f32 0.0, %v691
        %v693 = vpop.f32.mrb[0].mxu0
        %v694 = vadd.f32 0.0, %v693
        %v695 = vpop.f32.mrb[0].mxu0
        %v696 = vadd.f32 0.0, %v695
        %v697 = vpop.f32.mrb[0].mxu0
        %v698 = vadd.f32 0.0, %v697
        %699 = vmatprep.mubr.bf16.mxu0 0
        %700 = vmatmul.mubr.bf16.gmra.mrb[0].mxu0 %v554
        %v701 = vpop.f32.mrb[0].mxu0
        %v702 = vadd.f32 0.0, %v701
        %v703 = vpop.f32.mrb[0].mxu0
        %v704 = vadd.f32 0.0, %v703
        %v705 = vpop.f32.mrb[0].mxu0
        %v706 = vadd.f32 0.0, %v705
        %v707 = vpop.f32.mrb[0].mxu0
        %v708 = vadd.f32 0.0, %v707
        %709 = vmatprep.mubr.bf16.mxu0 0
        %710 = vmatmul.mubr.bf16.gmra.mrb[0].mxu0 %v557
        %v711 = vpop.f32.mrb[0].mxu0
        %v712 = vadd.f32 0.0, %v711
        %v713 = vpop.f32.mrb[0].mxu0
        %v714 = vadd.f32 0.0, %v713
        %v715 = vpop.f32.mrb[0].mxu0
        %v716 = vadd.f32 0.0, %v715
        %v717 = vpop.f32.mrb[0].mxu0
        %v718 = vadd.f32 0.0, %v717
        %719 = vmatprep.mubr.bf16.mxu0 0
        %720 = vmatmul.mubr.bf16.gmra.mrb[0].mxu0 %v560
        %v721 = vpop.f32.mrb[0].mxu0
        %v722 = vadd.f32 0.0, %v721
        %v723 = vpop.f32.mrb[0].mxu0
        %v724 = vadd.f32 0.0, %v723
        %v725 = vpop.f32.mrb[0].mxu0
        %v726 = vadd.f32 0.0, %v725
        %v727 = vpop.f32.mrb[0].mxu0
        %v728 = vadd.f32 0.0, %v727
        %729 = vmatprep.mubr.bf16.mxu0 0
        %730 = vmatmul.mubr.bf16.gmra.mrb[0].mxu0 %v563
        %v731 = vpop.f32.mrb[0].mxu0
        %v732 = vadd.f32 0.0, %v731
        %v733 = vpop.f32.mrb[0].mxu0
        %v734 = vadd.f32 0.0, %v733
        %v735 = vpop.f32.mrb[0].mxu0
        %v736 = vadd.f32 0.0, %v735
        %v737 = vpop.f32.mrb[0].mxu0
        %v738 = vadd.f32 0.0, %v737
        %739 = vmatprep.mubr.bf16.mxu0 0
        %740 = vmatmul.mubr.bf16.gmra.mrb[0].mxu0 %v566
        %v741 = vpop.f32.mrb[0].mxu0
        %v742 = vadd.f32 0.0, %v741
        %v743 = vpop.f32.mrb[0].mxu0
        %v744 = vadd.f32 0.0, %v743
        %v745 = vpop.f32.mrb[0].mxu0
        %v746 = vadd.f32 0.0, %v745
        %v747 = vpop.f32.mrb[0].mxu0
        %v748 = vadd.f32 0.0, %v747
        %749 = vmatprep.mubr.bf16.mxu0 0
        %750 = vmatmul.mubr.bf16.gmra.mrb[0].mxu0 %v569
        %v751 = vpop.f32.mrb[0].mxu0
        %v752 = vadd.f32 0.0, %v751
        %v753 = vpop.f32.mrb[0].mxu0
        %v754 = vadd.f32 0.0, %v753
        %v755 = vpop.f32.mrb[0].mxu0
        %v756 = vadd.f32 0.0, %v755
        %v757 = vpop.f32.mrb[0].mxu0
        %v758 = vadd.f32 0.0, %v757
        %759 = vmatprep.mubr.bf16.mxu0 0
        %760 = vmatmul.mubr.bf16.gmra.mrb[0].mxu0 %v572
        %v761 = vpop.f32.mrb[0].mxu0
        %v762 = vadd.f32 0.0, %v761
        %v763 = vpop.f32.mrb[0].mxu0
        %v764 = vadd.f32 0.0, %v763
        %v765 = vpop.f32.mrb[0].mxu0
        %v766 = vadd.f32 0.0, %v765
        %v767 = vpop.f32.mrb[0].mxu0
        %v768 = vadd.f32 0.0, %v767
        %769 = vmatprep.mubr.bf16.mxu0 0
        %770 = vmatmul.mubr.bf16.gmra.mrb[0].mxu0 %v575
        %v771 = vpop.f32.mrb[0].mxu0
        %v772 = vadd.f32 0.0, %v771
        %v773 = vpop.f32.mrb[0].mxu0
        %v774 = vadd.f32 0.0, %v773
        %v775 = vpop.f32.mrb[0].mxu0
        %v776 = vadd.f32 0.0, %v775
        %v777 = vpop.f32.mrb[0].mxu0
        %v778 = vadd.f32 0.0, %v777
        %779 = vmatprep.mubr.bf16.mxu0 0
        %780 = vmatmul.mubr.bf16.gmra.mrb[0].mxu0 %v578
        %v781 = vpop.f32.mrb[0].mxu0
        %v782 = vadd.f32 0.0, %v781
        %v783 = vpop.f32.mrb[0].mxu0
        %v784 = vadd.f32 0.0, %v783
        %v785 = vpop.f32.mrb[0].mxu0
        %v786 = vadd.f32 0.0, %v785
        %v787 = vpop.f32.mrb[0].mxu0
        %v788 = vadd.f32 0.0, %v787
        %789 = vmatprep.mubr.bf16.mxu0 0
        %790 = vmatmul.mubr.bf16.gmra.mrb[0].mxu0 %v581
        %v791 = vpop.f32.mrb[0].mxu0
        %v792 = vadd.f32 0.0, %v791
        %v793 = vpop.f32.mrb[0].mxu0
        %v794 = vadd.f32 0.0, %v793
        %v795 = vpop.f32.mrb[0].mxu0
        %v796 = vadd.f32 0.0, %v795
        %v797 = vpop.f32.mrb[0].mxu0
        %v798 = vadd.f32 0.0, %v797
        %799 = vmatprep.mubr.bf16.mxu0 0
        %800 = vmatmul.mubr.bf16.gmra.mrb[0].mxu0 %v584
        %v801 = vpop.f32.mrb[0].mxu0
        %v802 = vadd.f32 0.0, %v801
        %v803 = vpop.f32.mrb[0].mxu0
        %v804 = vadd.f32 0.0, %v803
        %v805 = vpop.f32.mrb[0].mxu0
        %v806 = vadd.f32 0.0, %v805
        %v807 = vpop.f32.mrb[0].mxu0
        %v808 = vadd.f32 0.0, %v807
        %809 = vmatprep.mubr.bf16.mxu0 0
        %810 = vmatmul.mubr.bf16.gmra.mrb[0].mxu0 %v587
        %v811 = vpop.f32.mrb[0].mxu0
        %v812 = vadd.f32 0.0, %v811
        %v813 = vpop.f32.mrb[0].mxu0
        %v814 = vadd.f32 0.0, %v813
        %v815 = vpop.f32.mrb[0].mxu0
        %v816 = vadd.f32 0.0, %v815
        %v817 = vpop.f32.mrb[0].mxu0
        %v818 = vadd.f32 0.0, %v817
        %819 = vmatprep.mubr.bf16.mxu0 0
        %820 = vmatmul.mubr.bf16.gmra.mrb[0].mxu0 %v590
        %v821 = vpop.f32.mrb[0].mxu0
        %v822 = vadd.f32 0.0, %v821
        %v823 = vpop.f32.mrb[0].mxu0
        %v824 = vadd.f32 0.0, %v823
        %v825 = vpop.f32.mrb[0].mxu0
        %v826 = vadd.f32 0.0, %v825
        %v827 = vpop.f32.mrb[0].mxu0
        %v828 = vadd.f32 0.0, %v827
        %829 = vmatprep.mubr.bf16.mxu0 0
        %830 = vmatmul.mubr.bf16.gmra.mrb[0].mxu0 %v593
        %v831 = vpop.f32.mrb[0].mxu0
        %v832 = vadd.f32 0.0, %v831
        %v833 = vpop.f32.mrb[0].mxu0
        %v834 = vadd.f32 0.0, %v833
        %v835 = vpop.f32.mrb[0].mxu0
        %v836 = vadd.f32 0.0, %v835
        %v837 = vpop.f32.mrb[0].mxu0
        %v838 = vadd.f32 0.0, %v837
        %839 = vmatprep.mubr.bf16.mxu0 0
        %840 = vmatmul.mubr.bf16.gmra.mrb[0].mxu0 %v596
        %v841 = vpop.f32.mrb[0].mxu0
        %v842 = vadd.f32 0.0, %v841
        %v843 = vpop.f32.mrb[0].mxu0
        %v844 = vadd.f32 0.0, %v843
        %v845 = vpop.f32.mrb[0].mxu0
        %v846 = vadd.f32 0.0, %v845
        %v847 = vpop.f32.mrb[0].mxu0
        %v848 = vadd.f32 0.0, %v847
        %849 = vmatprep.mubr.bf16.mxu0 0
        %850 = vmatmul.mubr.bf16.gmra.mrb[0].mxu0 %v599
        %v851 = vpop.f32.mrb[0].mxu0
        %v852 = vadd.f32 0.0, %v851
        %v853 = vpop.f32.mrb[0].mxu0
        %v854 = vadd.f32 0.0, %v853
        %v855 = vpop.f32.mrb[0].mxu0
        %v856 = vadd.f32 0.0, %v855
        %v857 = vpop.f32.mrb[0].mxu0
        %v858 = vadd.f32 0.0, %v857
        %859 = vmatprep.mubr.bf16.mxu0 0
        %860 = vmatmul.mubr.bf16.gmra.mrb[0].mxu0 %v602
        %v861 = vpop.f32.mrb[0].mxu0
        %v862 = vadd.f32 0.0, %v861
        %v863 = vpop.f32.mrb[0].mxu0
        %v864 = vadd.f32 0.0, %v863
        %v865 = vpop.f32.mrb[0].mxu0
        %v866 = vadd.f32 0.0, %v865
        %v867 = vpop.f32.mrb[0].mxu0
        %v868 = vadd.f32 0.0, %v867
        %869 = vmatprep.mubr.bf16.mxu0 0
        %870 = vmatmul.mubr.bf16.gmra.mrb[0].mxu0 %v605
        %v871 = vpop.f32.mrb[0].mxu0
        %v872 = vadd.f32 0.0, %v871
        %v873 = vpop.f32.mrb[0].mxu0
        %v874 = vadd.f32 0.0, %v873
        %v875 = vpop.f32.mrb[0].mxu0
        %v876 = vadd.f32 0.0, %v875
        %v877 = vpop.f32.mrb[0].mxu0
        %v878 = vadd.f32 0.0, %v877
        %879 = vdwg.mxu0
        %v880 = vlaneseq
        %v881 = vshrl.u32 %v880, 7
        %v882 = vsub.s32 0, %v881
        %v883 = vrot.slane %v305, %v882
        %v884 = vmul.f32 %v642, %v883
        %v885 = vmul.f32 %v646, %v883
        %v886 = vmul.f32 %v652, %v883
        %v887 = vmul.f32 %v656, %v883
        %v888 = vmul.f32 %v662, %v883
        %v889 = vmul.f32 %v666, %v883
        %v890 = vmul.f32 %v672, %v883
        %v891 = vmul.f32 %v676, %v883
        %v892 = vmul.f32 %v682, %v883
        %v893 = vmul.f32 %v686, %v883
        %v894 = vmul.f32 %v692, %v883
        %v895 = vmul.f32 %v696, %v883
        %v896 = vmul.f32 %v702, %v883
        %v897 = vmul.f32 %v706, %v883
        %v898 = vmul.f32 %v712, %v883
        %v899 = vmul.f32 %v716, %v883
        %v900 = vmul.f32 %v722, %v883
        %v901 = vmul.f32 %v726, %v883
        %v902 = vmul.f32 %v732, %v883
        %v903 = vmul.f32 %v736, %v883
        %v904 = vmul.f32 %v742, %v883
        %v905 = vmul.f32 %v746, %v883
        %v906 = vmul.f32 %v752, %v883
        %v907 = vmul.f32 %v756, %v883
        %v908 = vmul.f32 %v762, %v883
        %v909 = vmul.f32 %v766, %v883
        %v910 = vmul.f32 %v772, %v883
        %v911 = vmul.f32 %v776, %v883
        %v912 = vmul.f32 %v782, %v883
        %v913 = vmul.f32 %v786, %v883
        %v914 = vmul.f32 %v792, %v883
        %v915 = vmul.f32 %v796, %v883
        %v916 = vmul.f32 %v802, %v883
        %v917 = vmul.f32 %v806, %v883
        %v918 = vmul.f32 %v812, %v883
        %v919 = vmul.f32 %v816, %v883
        %v920 = vmul.f32 %v822, %v883
        %v921 = vmul.f32 %v826, %v883
        %v922 = vmul.f32 %v832, %v883
        %v923 = vmul.f32 %v836, %v883
        %v924 = vmul.f32 %v842, %v883
        %v925 = vmul.f32 %v846, %v883
        %v926 = vmul.f32 %v852, %v883
        %v927 = vmul.f32 %v856, %v883
        %v928 = vmul.f32 %v862, %v883
        %v929 = vmul.f32 %v866, %v883
        %v930 = vmul.f32 %v872, %v883
        %v931 = vmul.f32 %v876, %v883
        %v932 = vlaneseq
        %v933 = vshrl.u32 %v932, 7
        %v934 = vsub.s32 1, %v933
        %v935 = vrot.slane %v305, %v934
        %v936 = vadd.f32 %v884, %v935
        %v937 = vadd.f32 %v885, %v935
        %v938 = vadd.f32 %v886, %v935
        %v939 = vadd.f32 %v887, %v935
        %v940 = vadd.f32 %v888, %v935
        %v941 = vadd.f32 %v889, %v935
        %v942 = vadd.f32 %v890, %v935
        %v943 = vadd.f32 %v891, %v935
        %v944 = vadd.f32 %v892, %v935
        %v945 = vadd.f32 %v893, %v935
        %v946 = vadd.f32 %v894, %v935
        %v947 = vadd.f32 %v895, %v935
        %v948 = vadd.f32 %v896, %v935
        %v949 = vadd.f32 %v897, %v935
        %v950 = vadd.f32 %v898, %v935
        %v951 = vadd.f32 %v899, %v935
        %v952 = vadd.f32 %v900, %v935
        %v953 = vadd.f32 %v901, %v935
        %v954 = vadd.f32 %v902, %v935
        %v955 = vadd.f32 %v903, %v935
        %v956 = vadd.f32 %v904, %v935
        %v957 = vadd.f32 %v905, %v935
        %v958 = vadd.f32 %v906, %v935
        %v959 = vadd.f32 %v907, %v935
        %v960 = vadd.f32 %v908, %v935
        %v961 = vadd.f32 %v909, %v935
        %v962 = vadd.f32 %v910, %v935
        %v963 = vadd.f32 %v911, %v935
        %v964 = vadd.f32 %v912, %v935
        %v965 = vadd.f32 %v913, %v935
        %v966 = vadd.f32 %v914, %v935
        %v967 = vadd.f32 %v915, %v935
        %v968 = vadd.f32 %v916, %v935
        %v969 = vadd.f32 %v917, %v935
        %v970 = vadd.f32 %v918, %v935
        %v971 = vadd.f32 %v919, %v935
        %v972 = vadd.f32 %v920, %v935
        %v973 = vadd.f32 %v921, %v935
        %v974 = vadd.f32 %v922, %v935
        %v975 = vadd.f32 %v923, %v935
        %v976 = vadd.f32 %v924, %v935
        %v977 = vadd.f32 %v925, %v935
        %v978 = vadd.f32 %v926, %v935
        %v979 = vadd.f32 %v927, %v935
        %v980 = vadd.f32 %v928, %v935
        %v981 = vadd.f32 %v929, %v935
        %v982 = vadd.f32 %v930, %v935
        %v983 = vadd.f32 %v931, %v935
        %v984 = vmax.f32 %v936, 0.0
        %v985 = vmax.f32 %v937, 0.0
        %v986 = vmax.f32 %v938, 0.0
        %v987 = vmax.f32 %v939, 0.0
        %v988 = vmax.f32 %v940, 0.0
        %v989 = vmax.f32 %v941, 0.0
        %v990 = vmax.f32 %v942, 0.0
        %v991 = vmax.f32 %v943, 0.0
        %v992 = vmax.f32 %v944, 0.0
        %v993 = vmax.f32 %v945, 0.0
        %v994 = vmax.f32 %v946, 0.0
        %v995 = vmax.f32 %v947, 0.0
        %v996 = vmax.f32 %v948, 0.0
        %v997 = vmax.f32 %v949, 0.0
        %v998 = vmax.f32 %v950, 0.0
        %v999 = vmax.f32 %v951, 0.0
        %v1000 = vmax.f32 %v952, 0.0
        %v1001 = vmax.f32 %v953, 0.0
        %v1002 = vmax.f32 %v954, 0.0
        %v1003 = vmax.f32 %v955, 0.0
        %v1004 = vmax.f32 %v956, 0.0
        %v1005 = vmax.f32 %v957, 0.0
        %v1006 = vmax.f32 %v958, 0.0
        %v1007 = vmax.f32 %v959, 0.0
        %v1008 = vmax.f32 %v960, 0.0
        %v1009 = vmax.f32 %v961, 0.0
        %v1010 = vmax.f32 %v962, 0.0
        %v1011 = vmax.f32 %v963, 0.0
        %v1012 = vmax.f32 %v964, 0.0
        %v1013 = vmax.f32 %v965, 0.0
        %v1014 = vmax.f32 %v966, 0.0
        %v1015 = vmax.f32 %v967, 0.0
        %v1016 = vmax.f32 %v968, 0.0
        %v1017 = vmax.f32 %v969, 0.0
        %v1018 = vmax.f32 %v970, 0.0
        %v1019 = vmax.f32 %v971, 0.0
        %v1020 = vmax.f32 %v972, 0.0
        %v1021 = vmax.f32 %v973, 0.0
        %v1022 = vmax.f32 %v974, 0.0
        %v1023 = vmax.f32 %v975, 0.0
        %v1024 = vmax.f32 %v976, 0.0
        %v1025 = vmax.f32 %v977, 0.0
        %v1026 = vmax.f32 %v978, 0.0
        %v1027 = vmax.f32 %v979, 0.0
        %v1028 = vmax.f32 %v980, 0.0
        %v1029 = vmax.f32 %v981, 0.0
        %v1030 = vmax.f32 %v982, 0.0
        %v1031 = vmax.f32 %v983, 0.0
        %v1032 = vmin.f32 %v984, 6.0
        %v1033 = vmin.f32 %v985, 6.0
        %v1034 = vmin.f32 %v986, 6.0
        %v1035 = vmin.f32 %v987, 6.0
        %v1036 = vmin.f32 %v988, 6.0
        %v1037 = vmin.f32 %v989, 6.0
        %v1038 = vmin.f32 %v990, 6.0
        %v1039 = vmin.f32 %v991, 6.0
        %v1040 = vmin.f32 %v992, 6.0
        %v1041 = vmin.f32 %v993, 6.0
        %v1042 = vmin.f32 %v994, 6.0
        %v1043 = vmin.f32 %v995, 6.0
        %v1044 = vmin.f32 %v996, 6.0
        %v1045 = vmin.f32 %v997, 6.0
        %v1046 = vmin.f32 %v998, 6.0
        %v1047 = vmin.f32 %v999, 6.0
        %v1048 = vmin.f32 %v1000, 6.0
        %v1049 = vmin.f32 %v1001, 6.0
        %v1050 = vmin.f32 %v1002, 6.0
        %v1051 = vmin.f32 %v1003, 6.0
        %v1052 = vmin.f32 %v1004, 6.0
        %v1053 = vmin.f32 %v1005, 6.0
        %v1054 = vmin.f32 %v1006, 6.0
        %v1055 = vmin.f32 %v1007, 6.0
        %v1056 = vmin.f32 %v1008, 6.0
        %v1057 = vmin.f32 %v1009, 6.0
        %v1058 = vmin.f32 %v1010, 6.0
        %v1059 = vmin.f32 %v1011, 6.0
        %v1060 = vmin.f32 %v1012, 6.0
        %v1061 = vmin.f32 %v1013, 6.0
        %v1062 = vmin.f32 %v1014, 6.0
        %v1063 = vmin.f32 %v1015, 6.0
        %v1064 = vmin.f32 %v1016, 6.0
        %v1065 = vmin.f32 %v1017, 6.0
        %v1066 = vmin.f32 %v1018, 6.0
        %v1067 = vmin.f32 %v1019, 6.0
        %v1068 = vmin.f32 %v1020, 6.0
        %v1069 = vmin.f32 %v1021, 6.0
        %v1070 = vmin.f32 %v1022, 6.0
        %v1071 = vmin.f32 %v1023, 6.0
        %v1072 = vmin.f32 %v1024, 6.0
        %v1073 = vmin.f32 %v1025, 6.0
        %v1074 = vmin.f32 %v1026, 6.0
        %v1075 = vmin.f32 %v1027, 6.0
        %v1076 = vmin.f32 %v1028, 6.0
        %v1077 = vmin.f32 %v1029, 6.0
        %v1078 = vmin.f32 %v1030, 6.0
        %v1079 = vmin.f32 %v1031, 6.0
        %1081 = vset.pattern.permute.xlu0 0
        %1082 = vperm.xlu0 %1081, %v306
        %v1083 = vpop.permute.xlu0 %1082
        %1086 = vset.pattern.permute.xlu0 0
        %1087 = vperm.xlu0 %1086, %v307
        %v1088 = vpop.permute.xlu0 %1087
        %1091 = vset.pattern.permute.xlu0 0
        %1092 = vperm.xlu0 %1091, %v308
        %v1093 = vpop.permute.xlu0 %1092
        %1096 = vset.pattern.permute.xlu0 0
        %1097 = vperm.xlu0 %1096, %v309
        %v1098 = vpop.permute.xlu0 %1097
        %1101 = vset.pattern.permute.xlu0 0
        %1102 = vperm.xlu0 %1101, %v310
        %v1103 = vpop.permute.xlu0 %1102
        %1106 = vset.pattern.permute.xlu0 0
        %1107 = vperm.xlu0 %1106, %v311
        %v1108 = vpop.permute.xlu0 %1107
        %1111 = vset.pattern.permute.xlu0 0
        %1112 = vperm.xlu0 %1111, %v312
        %v1113 = vpop.permute.xlu0 %1112
        %1116 = vset.pattern.permute.xlu0 0
        %1117 = vperm.xlu0 %1116, %v313
        %v1118 = vpop.permute.xlu0 %1117
        %1121 = vset.pattern.permute.xlu0 0
        %1122 = vperm.xlu0 %1121, %v314
        %v1123 = vpop.permute.xlu0 %1122
        %1126 = vset.pattern.permute.xlu0 0
        %1127 = vperm.xlu0 %1126, %v315
        %v1128 = vpop.permute.xlu0 %1127
        %1131 = vset.pattern.permute.xlu0 0
        %1132 = vperm.xlu0 %1131, %v316
        %v1133 = vpop.permute.xlu0 %1132
        %1136 = vset.pattern.permute.xlu0 0
        %1137 = vperm.xlu0 %1136, %v317
        %v1138 = vpop.permute.xlu0 %1137
        %1141 = vset.pattern.permute.xlu0 0
        %1142 = vperm.xlu0 %1141, %v318
        %v1143 = vpop.permute.xlu0 %1142
        %1146 = vset.pattern.permute.xlu0 0
        %1147 = vperm.xlu0 %1146, %v319
        %v1148 = vpop.permute.xlu0 %1147
        %1151 = vset.pattern.permute.xlu0 0
        %1152 = vperm.xlu0 %1151, %v320
        %v1153 = vpop.permute.xlu0 %1152
        %1156 = vset.pattern.permute.xlu0 0
        %1157 = vperm.xlu0 %1156, %v321
        %v1158 = vpop.permute.xlu0 %1157
        %1161 = vset.pattern.permute.xlu0 0
        %1162 = vperm.xlu0 %1161, %v322
        %v1163 = vpop.permute.xlu0 %1162
        %1166 = vset.pattern.permute.xlu0 0
        %1167 = vperm.xlu0 %1166, %v323
        %v1168 = vpop.permute.xlu0 %1167
        %1171 = vset.pattern.permute.xlu0 0
        %1172 = vperm.xlu0 %1171, %v324
        %v1173 = vpop.permute.xlu0 %1172
        %1176 = vset.pattern.permute.xlu0 0
        %1177 = vperm.xlu0 %1176, %v325
        %v1178 = vpop.permute.xlu0 %1177
        %1181 = vset.pattern.permute.xlu0 0
        %1182 = vperm.xlu0 %1181, %v326
        %v1183 = vpop.permute.xlu0 %1182
        %1186 = vset.pattern.permute.xlu0 0
        %1187 = vperm.xlu0 %1186, %v327
        %v1188 = vpop.permute.xlu0 %1187
        %1191 = vset.pattern.permute.xlu0 0
        %1192 = vperm.xlu0 %1191, %v328
        %v1193 = vpop.permute.xlu0 %1192
        %1196 = vset.pattern.permute.xlu0 0
        %1197 = vperm.xlu0 %1196, %v329
        %v1198 = vpop.permute.xlu0 %1197
        %1201 = vset.pattern.permute.xlu0 0
        %1202 = vperm.xlu0 %1201, %v330
        %v1203 = vpop.permute.xlu0 %1202
        %1206 = vset.pattern.permute.xlu0 0
        %1207 = vperm.xlu0 %1206, %v331
        %v1208 = vpop.permute.xlu0 %1207
        %1211 = vset.pattern.permute.xlu0 0
        %1212 = vperm.xlu0 %1211, %v332
        %v1213 = vpop.permute.xlu0 %1212
        %1216 = vset.pattern.permute.xlu0 0
        %1217 = vperm.xlu0 %1216, %v333
        %v1218 = vpop.permute.xlu0 %1217
        %1221 = vset.pattern.permute.xlu0 0
        %1222 = vperm.xlu0 %1221, %v334
        %v1223 = vpop.permute.xlu0 %1222
        %1226 = vset.pattern.permute.xlu0 0
        %1227 = vperm.xlu0 %1226, %v335
        %v1228 = vpop.permute.xlu0 %1227
        %1231 = vset.pattern.permute.xlu0 0
        %1232 = vperm.xlu0 %1231, %v336
        %v1233 = vpop.permute.xlu0 %1232
        %1236 = vset.pattern.permute.xlu0 0
        %1237 = vperm.xlu0 %1236, %v337
        %v1238 = vpop.permute.xlu0 %1237
        %1241 = vset.pattern.permute.xlu0 0
        %1242 = vperm.xlu0 %1241, %v338
        %v1243 = vpop.permute.xlu0 %1242
        %1246 = vset.pattern.permute.xlu0 0
        %1247 = vperm.xlu0 %1246, %v339
        %v1248 = vpop.permute.xlu0 %1247
        %1251 = vset.pattern.permute.xlu0 0
        %1252 = vperm.xlu0 %1251, %v340
        %v1253 = vpop.permute.xlu0 %1252
        %1256 = vset.pattern.permute.xlu0 0
        %1257 = vperm.xlu0 %1256, %v341
        %v1258 = vpop.permute.xlu0 %1257
        %1261 = vset.pattern.permute.xlu0 0
        %1262 = vperm.xlu0 %1261, %v342
        %v1263 = vpop.permute.xlu0 %1262
        %1266 = vset.pattern.permute.xlu0 0
        %1267 = vperm.xlu0 %1266, %v343
        %v1268 = vpop.permute.xlu0 %1267
        %1271 = vset.pattern.permute.xlu0 0
        %1272 = vperm.xlu0 %1271, %v344
        %v1273 = vpop.permute.xlu0 %1272
        %1276 = vset.pattern.permute.xlu0 0
        %1277 = vperm.xlu0 %1276, %v345
        %v1278 = vpop.permute.xlu0 %1277
        %1281 = vset.pattern.permute.xlu0 0
        %1282 = vperm.xlu0 %1281, %v346
        %v1283 = vpop.permute.xlu0 %1282
        %1286 = vset.pattern.permute.xlu0 0
        %1287 = vperm.xlu0 %1286, %v347
        %v1288 = vpop.permute.xlu0 %1287
        %1291 = vset.pattern.permute.xlu0 0
        %1292 = vperm.xlu0 %1291, %v348
        %v1293 = vpop.permute.xlu0 %1292
        %1296 = vset.pattern.permute.xlu0 0
        %1297 = vperm.xlu0 %1296, %v349
        %v1298 = vpop.permute.xlu0 %1297
        %1301 = vset.pattern.permute.xlu0 0
        %1302 = vperm.xlu0 %1301, %v350
        %v1303 = vpop.permute.xlu0 %1302
        %1306 = vset.pattern.permute.xlu0 0
        %1307 = vperm.xlu0 %1306, %v351
        %v1308 = vpop.permute.xlu0 %1307
        %1311 = vset.pattern.permute.xlu0 0
        %1312 = vperm.xlu0 %1311, %v352
        %v1313 = vpop.permute.xlu0 %1312
        %1316 = vset.pattern.permute.xlu0 0
        %1317 = vperm.xlu0 %1316, %v353
        %v1318 = vpop.permute.xlu0 %1317
        %v1320 = vmul.f32 %v1032, %v1083
        %v1321 = vmul.f32 %v1033, %v1088
        %v1322 = vmul.f32 %v1034, %v1093
        %v1323 = vmul.f32 %v1035, %v1098
        %v1324 = vmul.f32 %v1036, %v1103
        %v1325 = vmul.f32 %v1037, %v1108
        %v1326 = vmul.f32 %v1038, %v1113
        %v1327 = vmul.f32 %v1039, %v1118
        %v1328 = vmul.f32 %v1040, %v1123
        %v1329 = vmul.f32 %v1041, %v1128
        %v1330 = vmul.f32 %v1042, %v1133
        %v1331 = vmul.f32 %v1043, %v1138
        %v1332 = vmul.f32 %v1044, %v1143
        %v1333 = vmul.f32 %v1045, %v1148
        %v1334 = vmul.f32 %v1046, %v1153
        %v1335 = vmul.f32 %v1047, %v1158
        %v1336 = vmul.f32 %v1048, %v1163
        %v1337 = vmul.f32 %v1049, %v1168
        %v1338 = vmul.f32 %v1050, %v1173
        %v1339 = vmul.f32 %v1051, %v1178
        %v1340 = vmul.f32 %v1052, %v1183
        %v1341 = vmul.f32 %v1053, %v1188
        %v1342 = vmul.f32 %v1054, %v1193
        %v1343 = vmul.f32 %v1055, %v1198
        %v1344 = vmul.f32 %v1056, %v1203
        %v1345 = vmul.f32 %v1057, %v1208
        %v1346 = vmul.f32 %v1058, %v1213
        %v1347 = vmul.f32 %v1059, %v1218
        %v1348 = vmul.f32 %v1060, %v1223
        %v1349 = vmul.f32 %v1061, %v1228
        %v1350 = vmul.f32 %v1062, %v1233
        %v1351 = vmul.f32 %v1063, %v1238
        %v1352 = vmul.f32 %v1064, %v1243
        %v1353 = vmul.f32 %v1065, %v1248
        %v1354 = vmul.f32 %v1066, %v1253
        %v1355 = vmul.f32 %v1067, %v1258
        %v1356 = vmul.f32 %v1068, %v1263
        %v1357 = vmul.f32 %v1069, %v1268
        %v1358 = vmul.f32 %v1070, %v1273
        %v1359 = vmul.f32 %v1071, %v1278
        %v1360 = vmul.f32 %v1072, %v1283
        %v1361 = vmul.f32 %v1073, %v1288
        %v1362 = vmul.f32 %v1074, %v1293
        %v1363 = vmul.f32 %v1075, %v1298
        %v1364 = vmul.f32 %v1076, %v1303
        %v1365 = vmul.f32 %v1077, %v1308
        %v1366 = vmul.f32 %v1078, %v1313
        %v1367 = vmul.f32 %v1079, %v1318
        %v1368 = vlaneseq
        %v1369 = vshrl.u32 %v1368, 7
        %v1370 = vsub.s32 6, %v1369
        %v1371 = vrot.slane %v305, %v1370
        %v1372 = vmul.f32 %v644, %v1371
        %v1373 = vmul.f32 %v648, %v1371
        %v1374 = vmul.f32 %v654, %v1371
        %v1375 = vmul.f32 %v658, %v1371
        %v1376 = vmul.f32 %v664, %v1371
        %v1377 = vmul.f32 %v668, %v1371
        %v1378 = vmul.f32 %v674, %v1371
        %v1379 = vmul.f32 %v678, %v1371
        %v1380 = vmul.f32 %v684, %v1371
        %v1381 = vmul.f32 %v688, %v1371
        %v1382 = vmul.f32 %v694, %v1371
        %v1383 = vmul.f32 %v698, %v1371
        %v1384 = vmul.f32 %v704, %v1371
        %v1385 = vmul.f32 %v708, %v1371
        %v1386 = vmul.f32 %v714, %v1371
        %v1387 = vmul.f32 %v718, %v1371
        %v1388 = vmul.f32 %v724, %v1371
        %v1389 = vmul.f32 %v728, %v1371
        %v1390 = vmul.f32 %v734, %v1371
        %v1391 = vmul.f32 %v738, %v1371
        %v1392 = vmul.f32 %v744, %v1371
        %v1393 = vmul.f32 %v748, %v1371
        %v1394 = vmul.f32 %v754, %v1371
        %v1395 = vmul.f32 %v758, %v1371
        %v1396 = vmul.f32 %v764, %v1371
        %v1397 = vmul.f32 %v768, %v1371
        %v1398 = vmul.f32 %v774, %v1371
        %v1399 = vmul.f32 %v778, %v1371
        %v1400 = vmul.f32 %v784, %v1371
        %v1401 = vmul.f32 %v788, %v1371
        %v1402 = vmul.f32 %v794, %v1371
        %v1403 = vmul.f32 %v798, %v1371
        %v1404 = vmul.f32 %v804, %v1371
        %v1405 = vmul.f32 %v808, %v1371
        %v1406 = vmul.f32 %v814, %v1371
        %v1407 = vmul.f32 %v818, %v1371
        %v1408 = vmul.f32 %v824, %v1371
        %v1409 = vmul.f32 %v828, %v1371
        %v1410 = vmul.f32 %v834, %v1371
        %v1411 = vmul.f32 %v838, %v1371
        %v1412 = vmul.f32 %v844, %v1371
        %v1413 = vmul.f32 %v848, %v1371
        %v1414 = vmul.f32 %v854, %v1371
        %v1415 = vmul.f32 %v858, %v1371
        %v1416 = vmul.f32 %v864, %v1371
        %v1417 = vmul.f32 %v868, %v1371
        %v1418 = vmul.f32 %v874, %v1371
        %v1419 = vmul.f32 %v878, %v1371
        %v1420 = vlaneseq
        %v1421 = vshrl.u32 %v1420, 7
        %v1422 = vsub.s32 7, %v1421
        %v1423 = vrot.slane %v305, %v1422
        %v1424 = vadd.f32 %v1372, %v1423
        %v1425 = vadd.f32 %v1373, %v1423
        %v1426 = vadd.f32 %v1374, %v1423
        %v1427 = vadd.f32 %v1375, %v1423
        %v1428 = vadd.f32 %v1376, %v1423
        %v1429 = vadd.f32 %v1377, %v1423
        %v1430 = vadd.f32 %v1378, %v1423
        %v1431 = vadd.f32 %v1379, %v1423
        %v1432 = vadd.f32 %v1380, %v1423
        %v1433 = vadd.f32 %v1381, %v1423
        %v1434 = vadd.f32 %v1382, %v1423
        %v1435 = vadd.f32 %v1383, %v1423
        %v1436 = vadd.f32 %v1384, %v1423
        %v1437 = vadd.f32 %v1385, %v1423
        %v1438 = vadd.f32 %v1386, %v1423
        %v1439 = vadd.f32 %v1387, %v1423
        %v1440 = vadd.f32 %v1388, %v1423
        %v1441 = vadd.f32 %v1389, %v1423
        %v1442 = vadd.f32 %v1390, %v1423
        %v1443 = vadd.f32 %v1391, %v1423
        %v1444 = vadd.f32 %v1392, %v1423
        %v1445 = vadd.f32 %v1393, %v1423
        %v1446 = vadd.f32 %v1394, %v1423
        %v1447 = vadd.f32 %v1395, %v1423
        %v1448 = vadd.f32 %v1396, %v1423
        %v1449 = vadd.f32 %v1397, %v1423
        %v1450 = vadd.f32 %v1398, %v1423
        %v1451 = vadd.f32 %v1399, %v1423
        %v1452 = vadd.f32 %v1400, %v1423
        %v1453 = vadd.f32 %v1401, %v1423
        %v1454 = vadd.f32 %v1402, %v1423
        %v1455 = vadd.f32 %v1403, %v1423
        %v1456 = vadd.f32 %v1404, %v1423
        %v1457 = vadd.f32 %v1405, %v1423
        %v1458 = vadd.f32 %v1406, %v1423
        %v1459 = vadd.f32 %v1407, %v1423
        %v1460 = vadd.f32 %v1408, %v1423
        %v1461 = vadd.f32 %v1409, %v1423
        %v1462 = vadd.f32 %v1410, %v1423
        %v1463 = vadd.f32 %v1411, %v1423
        %v1464 = vadd.f32 %v1412, %v1423
        %v1465 = vadd.f32 %v1413, %v1423
        %v1466 = vadd.f32 %v1414, %v1423
        %v1467 = vadd.f32 %v1415, %v1423
        %v1468 = vadd.f32 %v1416, %v1423
        %v1469 = vadd.f32 %v1417, %v1423
        %v1470 = vadd.f32 %v1418, %v1423
        %v1471 = vadd.f32 %v1419, %v1423
        %1472 = vst [vmem:[#allocation2] sm:$0xff] 0.0
        %1473 = vst [vmem:[#allocation2 + $0x8] sm:$0xff] 0.0
        %1474 = vst [vmem:[#allocation2 + $0x10] sm:$0xff] 0.0
        %1475 = vst [vmem:[#allocation2 + $0x198] sm:$0xff] 0.0
        %1476 = vst [vmem:[#allocation2 + $0x1a0] sm:$0xff] 0.0
        %1477 = vst [vmem:[#allocation2 + $0x1a8] sm:$0xff] 0.0
        %1478 = vst [vmem:[#allocation2 + $0x18] sm:$0xff] %v1320
        %1479 = vst [vmem:[#allocation2 + $0x20] sm:$0xff] %v1321
        %1480 = vst [vmem:[#allocation2 + $0x28] sm:$0xff] %v1322
        %1481 = vst [vmem:[#allocation2 + $0x30] sm:$0xff] %v1323
        %1482 = vst [vmem:[#allocation2 + $0x38] sm:$0xff] %v1324
        %1483 = vst [vmem:[#allocation2 + $0x40] sm:$0xff] %v1325
        %1484 = vst [vmem:[#allocation2 + $0x48] sm:$0xff] %v1326
        %1485 = vst [vmem:[#allocation2 + $0x50] sm:$0xff] %v1327
        %1486 = vst [vmem:[#allocation2 + $0x58] sm:$0xff] %v1328
        %1487 = vst [vmem:[#allocation2 + $0x60] sm:$0xff] %v1329
        %1488 = vst [vmem:[#allocation2 + $0x68] sm:$0xff] %v1330
        %1489 = vst [vmem:[#allocation2 + $0x70] sm:$0xff] %v1331
        %1490 = vst [vmem:[#allocation2 + $0x78] sm:$0xff] %v1332
        %1491 = vst [vmem:[#allocation2 + $0x80] sm:$0xff] %v1333
        %1492 = vst [vmem:[#allocation2 + $0x88] sm:$0xff] %v1334
        %1493 = vst [vmem:[#allocation2 + $0x90] sm:$0xff] %v1335
        %1494 = vst [vmem:[#allocation2 + $0x98] sm:$0xff] %v1336
        %1495 = vst [vmem:[#allocation2 + $0xa0] sm:$0xff] %v1337
        %1496 = vst [vmem:[#allocation2 + $0xa8] sm:$0xff] %v1338
        %1497 = vst [vmem:[#allocation2 + $0xb0] sm:$0xff] %v1339
        %1498 = vst [vmem:[#allocation2 + $0xb8] sm:$0xff] %v1340
        %1499 = vst [vmem:[#allocation2 + $0xc0] sm:$0xff] %v1341
        %1500 = vst [vmem:[#allocation2 + $0xc8] sm:$0xff] %v1342
        %1501 = vst [vmem:[#allocation2 + $0xd0] sm:$0xff] %v1343
        %1502 = vst [vmem:[#allocation2 + $0xd8] sm:$0xff] %v1344
        %1503 = vst [vmem:[#allocation2 + $0xe0] sm:$0xff] %v1345
        %1504 = vst [vmem:[#allocation2 + $0xe8] sm:$0xff] %v1346
        %1505 = vst [vmem:[#allocation2 + $0xf0] sm:$0xff] %v1347
        %1506 = vst [vmem:[#allocation2 + $0xf8] sm:$0xff] %v1348
        %1507 = vst [vmem:[#allocation2 + $0x100] sm:$0xff] %v1349
        %1508 = vst [vmem:[#allocation2 + $0x108] sm:$0xff] %v1350
        %1509 = vst [vmem:[#allocation2 + $0x110] sm:$0xff] %v1351
        %1510 = vst [vmem:[#allocation2 + $0x118] sm:$0xff] %v1352
        %1511 = vst [vmem:[#allocation2 + $0x120] sm:$0xff] %v1353
        %1512 = vst [vmem:[#allocation2 + $0x128] sm:$0xff] %v1354
        %1513 = vst [vmem:[#allocation2 + $0x130] sm:$0xff] %v1355
        %1514 = vst [vmem:[#allocation2 + $0x138] sm:$0xff] %v1356
        %1515 = vst [vmem:[#allocation2 + $0x140] sm:$0xff] %v1357
        %1516 = vst [vmem:[#allocation2 + $0x148] sm:$0xff] %v1358
        %1517 = vst [vmem:[#allocation2 + $0x150] sm:$0xff] %v1359
        %1518 = vst [vmem:[#allocation2 + $0x158] sm:$0xff] %v1360
        %1519 = vst [vmem:[#allocation2 + $0x160] sm:$0xff] %v1361
        %1520 = vst [vmem:[#allocation2 + $0x168] sm:$0xff] %v1362
        %1521 = vst [vmem:[#allocation2 + $0x170] sm:$0xff] %v1363
        %1522 = vst [vmem:[#allocation2 + $0x178] sm:$0xff] %v1364
        %1523 = vst [vmem:[#allocation2 + $0x180] sm:$0xff] %v1365
        %1524 = vst [vmem:[#allocation2 + $0x188] sm:$0xff] %v1366
        %1525 = vst [vmem:[#allocation2 + $0x190] sm:$0xff] %v1367
        %v1526 = vld [vmem:[#allocation2] sm:$0xff]
        %v1527 = vld [vmem:[#allocation2 + $0x8] sm:$0xff]
        %v1528 = vld [vmem:[#allocation2 + $0x10] sm:$0xff]
        %v1529 = vld [vmem:[#allocation2 + $0x18] sm:$0xff]
        %v1530 = vld [vmem:[#allocation2 + $0x20] sm:$0xff]
        %v1531 = vld [vmem:[#allocation2 + $0x28] sm:$0xff]
        %v1532 = vld [vmem:[#allocation2 + $0x30] sm:$0xff]
        %v1533 = vld [vmem:[#allocation2 + $0x38] sm:$0xff]
        %v1534 = vld [vmem:[#allocation2 + $0x40] sm:$0xff]
        %v1535 = vld [vmem:[#allocation2 + $0x48] sm:$0xff]
        %v1536 = vld [vmem:[#allocation2 + $0x50] sm:$0xff]
        %v1537 = vld [vmem:[#allocation2 + $0x58] sm:$0xff]
        %v1538 = vld [vmem:[#allocation2 + $0x60] sm:$0xff]
        %v1539 = vld [vmem:[#allocation2 + $0x68] sm:$0xff]
        %v1540 = vld [vmem:[#allocation2 + $0x70] sm:$0xff]
        %v1541 = vld [vmem:[#allocation2 + $0x78] sm:$0xff]
        %v1542 = vld [vmem:[#allocation2 + $0x80] sm:$0xff]
        %v1543 = vld [vmem:[#allocation2 + $0x88] sm:$0xff]
        %v1544 = vld [vmem:[#allocation2 + $0x90] sm:$0xff]
        %v1545 = vld [vmem:[#allocation2 + $0x98] sm:$0xff]
        %v1546 = vld [vmem:[#allocation2 + $0xa0] sm:$0xff]
        %v1547 = vld [vmem:[#allocation2 + $0xa8] sm:$0xff]
        %v1548 = vld [vmem:[#allocation2 + $0xb0] sm:$0xff]
        %v1549 = vld [vmem:[#allocation2 + $0xb8] sm:$0xff]
        %v1550 = vld [vmem:[#allocation2 + $0xc0] sm:$0xff]
        %v1551 = vld [vmem:[#allocation2 + $0xc8] sm:$0xff]
        %v1552 = vld [vmem:[#allocation2 + $0xd0] sm:$0xff]
        %v1553 = vld [vmem:[#allocation2 + $0xd8] sm:$0xff]
        %v1554 = vld [vmem:[#allocation2 + $0xe0] sm:$0xff]
        %v1555 = vld [vmem:[#allocation2 + $0xe8] sm:$0xff]
        %v1556 = vld [vmem:[#allocation2 + $0xf0] sm:$0xff]
        %v1557 = vld [vmem:[#allocation2 + $0xf8] sm:$0xff]
        %v1558 = vld [vmem:[#allocation2 + $0x100] sm:$0xff]
        %v1559 = vld [vmem:[#allocation2 + $0x108] sm:$0xff]
        %v1560 = vld [vmem:[#allocation2 + $0x110] sm:$0xff]
        %v1561 = vld [vmem:[#allocation2 + $0x118] sm:$0xff]
        %v1562 = vld [vmem:[#allocation2 + $0x120] sm:$0xff]
        %v1563 = vld [vmem:[#allocation2 + $0x128] sm:$0xff]
        %v1564 = vld [vmem:[#allocation2 + $0x130] sm:$0xff]
        %v1565 = vld [vmem:[#allocation2 + $0x138] sm:$0xff]
        %v1566 = vld [vmem:[#allocation2 + $0x140] sm:$0xff]
        %v1567 = vld [vmem:[#allocation2 + $0x148] sm:$0xff]
        %v1568 = vld [vmem:[#allocation2 + $0x150] sm:$0xff]
        %v1569 = vld [vmem:[#allocation2 + $0x158] sm:$0xff]
        %v1570 = vld [vmem:[#allocation2 + $0x160] sm:$0xff]
        %v1571 = vld [vmem:[#allocation2 + $0x168] sm:$0xff]
        %v1572 = vld [vmem:[#allocation2 + $0x170] sm:$0xff]
        %v1573 = vld [vmem:[#allocation2 + $0x178] sm:$0xff]
        %v1574 = vrot.slane %v1526, 7
        %v1575 = vrot.slane %v1527, 7
        %v1576 = vrot.slane %v1528, 7
        %v1577 = vrot.slane %v1529, 7
        %v1578 = vrot.slane %v1530, 7
        %v1579 = vrot.slane %v1531, 7
        %v1580 = vrot.slane %v1532, 7
        %v1581 = vrot.slane %v1533, 7
        %v1582 = vrot.slane %v1534, 7
        %v1583 = vrot.slane %v1535, 7
        %v1584 = vrot.slane %v1536, 7
        %v1585 = vrot.slane %v1537, 7
        %v1586 = vrot.slane %v1538, 7
        %v1587 = vrot.slane %v1539, 7
        %v1588 = vrot.slane %v1540, 7
        %v1589 = vrot.slane %v1541, 7
        %v1590 = vrot.slane %v1542, 7
        %v1591 = vrot.slane %v1543, 7
        %v1592 = vrot.slane %v1544, 7
        %v1593 = vrot.slane %v1545, 7
        %v1594 = vrot.slane %v1546, 7
        %v1595 = vrot.slane %v1547, 7
        %v1596 = vrot.slane %v1548, 7
        %v1597 = vrot.slane %v1549, 7
        %v1598 = vrot.slane %v1550, 7
        %v1599 = vrot.slane %v1551, 7
        %v1600 = vrot.slane %v1552, 7
        %v1601 = vrot.slane %v1553, 7
        %v1602 = vrot.slane %v1554, 7
        %v1603 = vrot.slane %v1555, 7
        %v1604 = vrot.slane %v1556, 7
        %v1605 = vrot.slane %v1557, 7
        %v1606 = vrot.slane %v1558, 7
        %v1607 = vrot.slane %v1559, 7
        %v1608 = vrot.slane %v1560, 7
        %v1609 = vrot.slane %v1561, 7
        %v1610 = vrot.slane %v1562, 7
        %v1611 = vrot.slane %v1563, 7
        %v1612 = vrot.slane %v1564, 7
        %v1613 = vrot.slane %v1565, 7
        %v1614 = vrot.slane %v1566, 7
        %v1615 = vrot.slane %v1567, 7
        %v1616 = vrot.slane %v1568, 7
        %v1617 = vrot.slane %v1569, 7
        %v1618 = vrot.slane %v1570, 7
        %v1619 = vrot.slane %v1571, 7
        %v1620 = vrot.slane %v1572, 7
        %v1621 = vrot.slane %v1573, 7
        %v1622 = vlaneseq
        %v1623 = vshrl.u32 %v1622, 7
        %vm1624 = vcmp.lt.s32.totalorder %v1623, 1
        %v1625 = vsel %vm1624, %v1620, %v1621
        %v1626 = vsel %vm1624, %v1619, %v1620
        %v1627 = vsel %vm1624, %v1618, %v1619
        %v1628 = vsel %vm1624, %v1617, %v1618
        %v1629 = vsel %vm1624, %v1616, %v1617
        %v1630 = vsel %vm1624, %v1615, %v1616
        %v1631 = vsel %vm1624, %v1614, %v1615
        %v1632 = vsel %vm1624, %v1613, %v1614
        %v1633 = vsel %vm1624, %v1612, %v1613
        %v1634 = vsel %vm1624, %v1611, %v1612
        %v1635 = vsel %vm1624, %v1610, %v1611
        %v1636 = vsel %vm1624, %v1609, %v1610
        %v1637 = vsel %vm1624, %v1608, %v1609
        %v1638 = vsel %vm1624, %v1607, %v1608
        %v1639 = vsel %vm1624, %v1606, %v1607
        %v1640 = vsel %vm1624, %v1605, %v1606
        %v1641 = vsel %vm1624, %v1604, %v1605
        %v1642 = vsel %vm1624, %v1603, %v1604
        %v1643 = vsel %vm1624, %v1602, %v1603
        %v1644 = vsel %vm1624, %v1601, %v1602
        %v1645 = vsel %vm1624, %v1600, %v1601
        %v1646 = vsel %vm1624, %v1599, %v1600
        %v1647 = vsel %vm1624, %v1598, %v1599
        %v1648 = vsel %vm1624, %v1597, %v1598
        %v1649 = vsel %vm1624, %v1596, %v1597
        %v1650 = vsel %vm1624, %v1595, %v1596
        %v1651 = vsel %vm1624, %v1594, %v1595
        %v1652 = vsel %vm1624, %v1593, %v1594
        %v1653 = vsel %vm1624, %v1592, %v1593
        %v1654 = vsel %vm1624, %v1591, %v1592
        %v1655 = vsel %vm1624, %v1590, %v1591
        %v1656 = vsel %vm1624, %v1589, %v1590
        %v1657 = vsel %vm1624, %v1588, %v1589
        %v1658 = vsel %vm1624, %v1587, %v1588
        %v1659 = vsel %vm1624, %v1586, %v1587
        %v1660 = vsel %vm1624, %v1585, %v1586
        %v1661 = vsel %vm1624, %v1584, %v1585
        %v1662 = vsel %vm1624, %v1583, %v1584
        %v1663 = vsel %vm1624, %v1582, %v1583
        %v1664 = vsel %vm1624, %v1581, %v1582
        %v1665 = vsel %vm1624, %v1580, %v1581
        %v1666 = vsel %vm1624, %v1579, %v1580
        %v1667 = vsel %vm1624, %v1578, %v1579
        %v1668 = vsel %vm1624, %v1577, %v1578
        %v1669 = vsel %vm1624, %v1576, %v1577
        %v1670 = vsel %vm1624, %v1575, %v1576
        %v1671 = vsel %vm1624, %v1574, %v1575
        %v1672 = vsel %vm1624, %v1621, %v1574
        %v1673 = vld [vmem:[%s2] sm:$0x1]
        %v1674 = vlaneseq
        %v1675 = vshrl.u32 %v1674, 7
        %v1676 = vsub.s32 0, %v1675
        %v1677 = vrot.slane %v1673, %v1676
        %v1678 = vmul.f32 %v1672, %v1677
        %v1679 = vmul.f32 %v1671, %v1677
        %v1680 = vmul.f32 %v1670, %v1677
        %v1681 = vmul.f32 %v1669, %v1677
        %v1682 = vmul.f32 %v1668, %v1677
        %v1683 = vmul.f32 %v1667, %v1677
        %v1684 = vmul.f32 %v1666, %v1677
        %v1685 = vmul.f32 %v1665, %v1677
        %v1686 = vmul.f32 %v1664, %v1677
        %v1687 = vmul.f32 %v1663, %v1677
        %v1688 = vmul.f32 %v1662, %v1677
        %v1689 = vmul.f32 %v1661, %v1677
        %v1690 = vmul.f32 %v1660, %v1677
        %v1691 = vmul.f32 %v1659, %v1677
        %v1692 = vmul.f32 %v1658, %v1677
        %v1693 = vmul.f32 %v1657, %v1677
        %v1694 = vmul.f32 %v1656, %v1677
        %v1695 = vmul.f32 %v1655, %v1677
        %v1696 = vmul.f32 %v1654, %v1677
        %v1697 = vmul.f32 %v1653, %v1677
        %v1698 = vmul.f32 %v1652, %v1677
        %v1699 = vmul.f32 %v1651, %v1677
        %v1700 = vmul.f32 %v1650, %v1677
        %v1701 = vmul.f32 %v1649, %v1677
        %v1702 = vmul.f32 %v1648, %v1677
        %v1703 = vmul.f32 %v1647, %v1677
        %v1704 = vmul.f32 %v1646, %v1677
        %v1705 = vmul.f32 %v1645, %v1677
        %v1706 = vmul.f32 %v1644, %v1677
        %v1707 = vmul.f32 %v1643, %v1677
        %v1708 = vmul.f32 %v1642, %v1677
        %v1709 = vmul.f32 %v1641, %v1677
        %v1710 = vmul.f32 %v1640, %v1677
        %v1711 = vmul.f32 %v1639, %v1677
        %v1712 = vmul.f32 %v1638, %v1677
        %v1713 = vmul.f32 %v1637, %v1677
        %v1714 = vmul.f32 %v1636, %v1677
        %v1715 = vmul.f32 %v1635, %v1677
        %v1716 = vmul.f32 %v1634, %v1677
        %v1717 = vmul.f32 %v1633, %v1677
        %v1718 = vmul.f32 %v1632, %v1677
        %v1719 = vmul.f32 %v1631, %v1677
        %v1720 = vmul.f32 %v1630, %v1677
        %v1721 = vmul.f32 %v1629, %v1677
        %v1722 = vmul.f32 %v1628, %v1677
        %v1723 = vmul.f32 %v1627, %v1677
        %v1724 = vmul.f32 %v1626, %v1677
        %v1725 = vmul.f32 %v1625, %v1677
        %v1726 = vld [vmem:[%s2 + $0x1] sm:$0x1]
        %v1727 = vlaneseq
        %v1728 = vshrl.u32 %v1727, 7
        %v1729 = vsub.s32 0, %v1728
        %v1730 = vrot.slane %v1726, %v1729
        %v1731 = vmul.f32 %v1526, %v1730
        %v1732 = vmul.f32 %v1527, %v1730
        %v1733 = vmul.f32 %v1528, %v1730
        %v1734 = vmul.f32 %v1529, %v1730
        %v1735 = vmul.f32 %v1530, %v1730
        %v1736 = vmul.f32 %v1531, %v1730
        %v1737 = vmul.f32 %v1532, %v1730
        %v1738 = vmul.f32 %v1533, %v1730
        %v1739 = vmul.f32 %v1534, %v1730
        %v1740 = vmul.f32 %v1535, %v1730
        %v1741 = vmul.f32 %v1536, %v1730
        %v1742 = vmul.f32 %v1537, %v1730
        %v1743 = vmul.f32 %v1538, %v1730
        %v1744 = vmul.f32 %v1539, %v1730
        %v1745 = vmul.f32 %v1540, %v1730
        %v1746 = vmul.f32 %v1541, %v1730
        %v1747 = vmul.f32 %v1542, %v1730
        %v1748 = vmul.f32 %v1543, %v1730
        %v1749 = vmul.f32 %v1544, %v1730
        %v1750 = vmul.f32 %v1545, %v1730
        %v1751 = vmul.f32 %v1546, %v1730
        %v1752 = vmul.f32 %v1547, %v1730
        %v1753 = vmul.f32 %v1548, %v1730
        %v1754 = vmul.f32 %v1549, %v1730
        %v1755 = vmul.f32 %v1550, %v1730
        %v1756 = vmul.f32 %v1551, %v1730
        %v1757 = vmul.f32 %v1552, %v1730
        %v1758 = vmul.f32 %v1553, %v1730
        %v1759 = vmul.f32 %v1554, %v1730
        %v1760 = vmul.f32 %v1555, %v1730
        %v1761 = vmul.f32 %v1556, %v1730
        %v1762 = vmul.f32 %v1557, %v1730
        %v1763 = vmul.f32 %v1558, %v1730
        %v1764 = vmul.f32 %v1559, %v1730
        %v1765 = vmul.f32 %v1560, %v1730
        %v1766 = vmul.f32 %v1561, %v1730
        %v1767 = vmul.f32 %v1562, %v1730
        %v1768 = vmul.f32 %v1563, %v1730
        %v1769 = vmul.f32 %v1564, %v1730
        %v1770 = vmul.f32 %v1565, %v1730
        %v1771 = vmul.f32 %v1566, %v1730
        %v1772 = vmul.f32 %v1567, %v1730
        %v1773 = vmul.f32 %v1568, %v1730
        %v1774 = vmul.f32 %v1569, %v1730
        %v1775 = vmul.f32 %v1570, %v1730
        %v1776 = vmul.f32 %v1571, %v1730
        %v1777 = vmul.f32 %v1572, %v1730
        %v1778 = vmul.f32 %v1573, %v1730
        %v1779 = vadd.f32 %v1678, %v1731
        %v1780 = vadd.f32 %v1679, %v1732
        %v1781 = vadd.f32 %v1680, %v1733
        %v1782 = vadd.f32 %v1681, %v1734
        %v1783 = vadd.f32 %v1682, %v1735
        %v1784 = vadd.f32 %v1683, %v1736
        %v1785 = vadd.f32 %v1684, %v1737
        %v1786 = vadd.f32 %v1685, %v1738
        %v1787 = vadd.f32 %v1686, %v1739
        %v1788 = vadd.f32 %v1687, %v1740
        %v1789 = vadd.f32 %v1688, %v1741
        %v1790 = vadd.f32 %v1689, %v1742
        %v1791 = vadd.f32 %v1690, %v1743
        %v1792 = vadd.f32 %v1691, %v1744
        %v1793 = vadd.f32 %v1692, %v1745
        %v1794 = vadd.f32 %v1693, %v1746
        %v1795 = vadd.f32 %v1694, %v1747
        %v1796 = vadd.f32 %v1695, %v1748
        %v1797 = vadd.f32 %v1696, %v1749
        %v1798 = vadd.f32 %v1697, %v1750
        %v1799 = vadd.f32 %v1698, %v1751
        %v1800 = vadd.f32 %v1699, %v1752
        %v1801 = vadd.f32 %v1700, %v1753
        %v1802 = vadd.f32 %v1701, %v1754
        %v1803 = vadd.f32 %v1702, %v1755
        %v1804 = vadd.f32 %v1703, %v1756
        %v1805 = vadd.f32 %v1704, %v1757
        %v1806 = vadd.f32 %v1705, %v1758
        %v1807 = vadd.f32 %v1706, %v1759
        %v1808 = vadd.f32 %v1707, %v1760
        %v1809 = vadd.f32 %v1708, %v1761
        %v1810 = vadd.f32 %v1709, %v1762
        %v1811 = vadd.f32 %v1710, %v1763
        %v1812 = vadd.f32 %v1711, %v1764
        %v1813 = vadd.f32 %v1712, %v1765
        %v1814 = vadd.f32 %v1713, %v1766
        %v1815 = vadd.f32 %v1714, %v1767
        %v1816 = vadd.f32 %v1715, %v1768
        %v1817 = vadd.f32 %v1716, %v1769
        %v1818 = vadd.f32 %v1717, %v1770
        %v1819 = vadd.f32 %v1718, %v1771
        %v1820 = vadd.f32 %v1719, %v1772
        %v1821 = vadd.f32 %v1720, %v1773
        %v1822 = vadd.f32 %v1721, %v1774
        %v1823 = vadd.f32 %v1722, %v1775
        %v1824 = vadd.f32 %v1723, %v1776
        %v1825 = vadd.f32 %v1724, %v1777
        %v1826 = vadd.f32 %v1725, %v1778
        %v1827 = vrot.slane %v1526, 1
        %v1828 = vrot.slane %v1527, 1
        %v1829 = vrot.slane %v1528, 1
        %v1830 = vrot.slane %v1529, 1
        %v1831 = vrot.slane %v1530, 1
        %v1832 = vrot.slane %v1531, 1
        %v1833 = vrot.slane %v1532, 1
        %v1834 = vrot.slane %v1533, 1
        %v1835 = vrot.slane %v1534, 1
        %v1836 = vrot.slane %v1535, 1
        %v1837 = vrot.slane %v1536, 1
        %v1838 = vrot.slane %v1537, 1
        %v1839 = vrot.slane %v1538, 1
        %v1840 = vrot.slane %v1539, 1
        %v1841 = vrot.slane %v1540, 1
        %v1842 = vrot.slane %v1541, 1
        %v1843 = vrot.slane %v1542, 1
        %v1844 = vrot.slane %v1543, 1
        %v1845 = vrot.slane %v1544, 1
        %v1846 = vrot.slane %v1545, 1
        %v1847 = vrot.slane %v1546, 1
        %v1848 = vrot.slane %v1547, 1
        %v1849 = vrot.slane %v1548, 1
        %v1850 = vrot.slane %v1549, 1
        %v1851 = vrot.slane %v1550, 1
        %v1852 = vrot.slane %v1551, 1
        %v1853 = vrot.slane %v1552, 1
        %v1854 = vrot.slane %v1553, 1
        %v1855 = vrot.slane %v1554, 1
        %v1856 = vrot.slane %v1555, 1
        %v1857 = vrot.slane %v1556, 1
        %v1858 = vrot.slane %v1557, 1
        %v1859 = vrot.slane %v1558, 1
        %v1860 = vrot.slane %v1559, 1
        %v1861 = vrot.slane %v1560, 1
        %v1862 = vrot.slane %v1561, 1
        %v1863 = vrot.slane %v1562, 1
        %v1864 = vrot.slane %v1563, 1
        %v1865 = vrot.slane %v1564, 1
        %v1866 = vrot.slane %v1565, 1
        %v1867 = vrot.slane %v1566, 1
        %v1868 = vrot.slane %v1567, 1
        %v1869 = vrot.slane %v1568, 1
        %v1870 = vrot.slane %v1569, 1
        %v1871 = vrot.slane %v1570, 1
        %v1872 = vrot.slane %v1571, 1
        %v1873 = vrot.slane %v1572, 1
        %v1874 = vrot.slane %v1573, 1
        %vm1875 = vcmp.lt.s32.totalorder %v1623, 7
        %v1876 = vsel %vm1875, %v1873, %v1874
        %v1877 = vsel %vm1875, %v1872, %v1873
        %v1878 = vsel %vm1875, %v1871, %v1872
        %v1879 = vsel %vm1875, %v1870, %v1871
        %v1880 = vsel %vm1875, %v1869, %v1870
        %v1881 = vsel %vm1875, %v1868, %v1869
        %v1882 = vsel %vm1875, %v1867, %v1868
        %v1883 = vsel %vm1875, %v1866, %v1867
        %v1884 = vsel %vm1875, %v1865, %v1866
        %v1885 = vsel %vm1875, %v1864, %v1865
        %v1886 = vsel %vm1875, %v1863, %v1864
        %v1887 = vsel %vm1875, %v1862, %v1863
        %v1888 = vsel %vm1875, %v1861, %v1862
        %v1889 = vsel %vm1875, %v1860, %v1861
        %v1890 = vsel %vm1875, %v1859, %v1860
        %v1891 = vsel %vm1875, %v1858, %v1859
        %v1892 = vsel %vm1875, %v1857, %v1858
        %v1893 = vsel %vm1875, %v1856, %v1857
        %v1894 = vsel %vm1875, %v1855, %v1856
        %v1895 = vsel %vm1875, %v1854, %v1855
        %v1896 = vsel %vm1875, %v1853, %v1854
        %v1897 = vsel %vm1875, %v1852, %v1853
        %v1898 = vsel %vm1875, %v1851, %v1852
        %v1899 = vsel %vm1875, %v1850, %v1851
        %v1900 = vsel %vm1875, %v1849, %v1850
        %v1901 = vsel %vm1875, %v1848, %v1849
        %v1902 = vsel %vm1875, %v1847, %v1848
        %v1903 = vsel %vm1875, %v1846, %v1847
        %v1904 = vsel %vm1875, %v1845, %v1846
        %v1905 = vsel %vm1875, %v1844, %v1845
        %v1906 = vsel %vm1875, %v1843, %v1844
        %v1907 = vsel %vm1875, %v1842, %v1843
        %v1908 = vsel %vm1875, %v1841, %v1842
        %v1909 = vsel %vm1875, %v1840, %v1841
        %v1910 = vsel %vm1875, %v1839, %v1840
        %v1911 = vsel %vm1875, %v1838, %v1839
        %v1912 = vsel %vm1875, %v1837, %v1838
        %v1913 = vsel %vm1875, %v1836, %v1837
        %v1914 = vsel %vm1875, %v1835, %v1836
        %v1915 = vsel %vm1875, %v1834, %v1835
        %v1916 = vsel %vm1875, %v1833, %v1834
        %v1917 = vsel %vm1875, %v1832, %v1833
        %v1918 = vsel %vm1875, %v1831, %v1832
        %v1919 = vsel %vm1875, %v1830, %v1831
        %v1920 = vsel %vm1875, %v1829, %v1830
        %v1921 = vsel %vm1875, %v1828, %v1829
        %v1922 = vsel %vm1875, %v1827, %v1828
        %v1923 = vsel %vm1875, %v1874, %v1827
        %v1924 = vld [vmem:[%s2 + $0x2] sm:$0x1]
        %v1925 = vlaneseq
        %v1926 = vshrl.u32 %v1925, 7
        %v1927 = vsub.s32 0, %v1926
        %v1928 = vrot.slane %v1924, %v1927
        %v1929 = vmul.f32 %v1922, %v1928
        %v1930 = vmul.f32 %v1921, %v1928
        %v1931 = vmul.f32 %v1920, %v1928
        %v1932 = vmul.f32 %v1919, %v1928
        %v1933 = vmul.f32 %v1918, %v1928
        %v1934 = vmul.f32 %v1917, %v1928
        %v1935 = vmul.f32 %v1916, %v1928
        %v1936 = vmul.f32 %v1915, %v1928
        %v1937 = vmul.f32 %v1914, %v1928
        %v1938 = vmul.f32 %v1913, %v1928
        %v1939 = vmul.f32 %v1912, %v1928
        %v1940 = vmul.f32 %v1911, %v1928
        %v1941 = vmul.f32 %v1910, %v1928
        %v1942 = vmul.f32 %v1909, %v1928
        %v1943 = vmul.f32 %v1908, %v1928
        %v1944 = vmul.f32 %v1907, %v1928
        %v1945 = vmul.f32 %v1906, %v1928
        %v1946 = vmul.f32 %v1905, %v1928
        %v1947 = vmul.f32 %v1904, %v1928
        %v1948 = vmul.f32 %v1903, %v1928
        %v1949 = vmul.f32 %v1902, %v1928
        %v1950 = vmul.f32 %v1901, %v1928
        %v1951 = vmul.f32 %v1900, %v1928
        %v1952 = vmul.f32 %v1899, %v1928
        %v1953 = vmul.f32 %v1898, %v1928
        %v1954 = vmul.f32 %v1897, %v1928
        %v1955 = vmul.f32 %v1896, %v1928
        %v1956 = vmul.f32 %v1895, %v1928
        %v1957 = vmul.f32 %v1894, %v1928
        %v1958 = vmul.f32 %v1893, %v1928
        %v1959 = vmul.f32 %v1892, %v1928
        %v1960 = vmul.f32 %v1891, %v1928
        %v1961 = vmul.f32 %v1890, %v1928
        %v1962 = vmul.f32 %v1889, %v1928
        %v1963 = vmul.f32 %v1888, %v1928
        %v1964 = vmul.f32 %v1887, %v1928
        %v1965 = vmul.f32 %v1886, %v1928
        %v1966 = vmul.f32 %v1885, %v1928
        %v1967 = vmul.f32 %v1884, %v1928
        %v1968 = vmul.f32 %v1883, %v1928
        %v1969 = vmul.f32 %v1882, %v1928
        %v1970 = vmul.f32 %v1881, %v1928
        %v1971 = vmul.f32 %v1880, %v1928
        %v1972 = vmul.f32 %v1879, %v1928
        %v1973 = vmul.f32 %v1878, %v1928
        %v1974 = vmul.f32 %v1877, %v1928
        %v1975 = vmul.f32 %v1876, %v1928
        %v1976 = vmul.f32 %v1923, %v1928
        %v1977 = vadd.f32 %v1779, %v1929
        %v1978 = vadd.f32 %v1780, %v1930
        %v1979 = vadd.f32 %v1781, %v1931
        %v1980 = vadd.f32 %v1782, %v1932
        %v1981 = vadd.f32 %v1783, %v1933
        %v1982 = vadd.f32 %v1784, %v1934
        %v1983 = vadd.f32 %v1785, %v1935
        %v1984 = vadd.f32 %v1786, %v1936
        %v1985 = vadd.f32 %v1787, %v1937
        %v1986 = vadd.f32 %v1788, %v1938
        %v1987 = vadd.f32 %v1789, %v1939
        %v1988 = vadd.f32 %v1790, %v1940
        %v1989 = vadd.f32 %v1791, %v1941
        %v1990 = vadd.f32 %v1792, %v1942
        %v1991 = vadd.f32 %v1793, %v1943
        %v1992 = vadd.f32 %v1794, %v1944
        %v1993 = vadd.f32 %v1795, %v1945
        %v1994 = vadd.f32 %v1796, %v1946
        %v1995 = vadd.f32 %v1797, %v1947
        %v1996 = vadd.f32 %v1798, %v1948
        %v1997 = vadd.f32 %v1799, %v1949
        %v1998 = vadd.f32 %v1800, %v1950
        %v1999 = vadd.f32 %v1801, %v1951
        %v2000 = vadd.f32 %v1802, %v1952
        %v2001 = vadd.f32 %v1803, %v1953
        %v2002 = vadd.f32 %v1804, %v1954
        %v2003 = vadd.f32 %v1805, %v1955
        %v2004 = vadd.f32 %v1806, %v1956
        %v2005 = vadd.f32 %v1807, %v1957
        %v2006 = vadd.f32 %v1808, %v1958
        %v2007 = vadd.f32 %v1809, %v1959
        %v2008 = vadd.f32 %v1810, %v1960
        %v2009 = vadd.f32 %v1811, %v1961
        %v2010 = vadd.f32 %v1812, %v1962
        %v2011 = vadd.f32 %v1813, %v1963
        %v2012 = vadd.f32 %v1814, %v1964
        %v2013 = vadd.f32 %v1815, %v1965
        %v2014 = vadd.f32 %v1816, %v1966
        %v2015 = vadd.f32 %v1817, %v1967
        %v2016 = vadd.f32 %v1818, %v1968
        %v2017 = vadd.f32 %v1819, %v1969
        %v2018 = vadd.f32 %v1820, %v1970
        %v2019 = vadd.f32 %v1821, %v1971
        %v2020 = vadd.f32 %v1822, %v1972
        %v2021 = vadd.f32 %v1823, %v1973
        %v2022 = vadd.f32 %v1824, %v1974
        %v2023 = vadd.f32 %v1825, %v1975
        %v2024 = vadd.f32 %v1826, %v1976
        %v2025 = vld [vmem:[#allocation2 + $0x18] sm:$0xff]
        %v2026 = vld [vmem:[#allocation2 + $0x20] sm:$0xff]
        %v2027 = vld [vmem:[#allocation2 + $0x28] sm:$0xff]
        %v2028 = vld [vmem:[#allocation2 + $0x30] sm:$0xff]
        %v2029 = vld [vmem:[#allocation2 + $0x38] sm:$0xff]
        %v2030 = vld [vmem:[#allocation2 + $0x40] sm:$0xff]
        %v2031 = vld [vmem:[#allocation2 + $0x48] sm:$0xff]
        %v2032 = vld [vmem:[#allocation2 + $0x50] sm:$0xff]
        %v2033 = vld [vmem:[#allocation2 + $0x58] sm:$0xff]
        %v2034 = vld [vmem:[#allocation2 + $0x60] sm:$0xff]
        %v2035 = vld [vmem:[#allocation2 + $0x68] sm:$0xff]
        %v2036 = vld [vmem:[#allocation2 + $0x70] sm:$0xff]
        %v2037 = vld [vmem:[#allocation2 + $0x78] sm:$0xff]
        %v2038 = vld [vmem:[#allocation2 + $0x80] sm:$0xff]
        %v2039 = vld [vmem:[#allocation2 + $0x88] sm:$0xff]
        %v2040 = vld [vmem:[#allocation2 + $0x90] sm:$0xff]
        %v2041 = vld [vmem:[#allocation2 + $0x98] sm:$0xff]
        %v2042 = vld [vmem:[#allocation2 + $0xa0] sm:$0xff]
        %v2043 = vld [vmem:[#allocation2 + $0xa8] sm:$0xff]
        %v2044 = vld [vmem:[#allocation2 + $0xb0] sm:$0xff]
        %v2045 = vld [vmem:[#allocation2 + $0xb8] sm:$0xff]
        %v2046 = vld [vmem:[#allocation2 + $0xc0] sm:$0xff]
        %v2047 = vld [vmem:[#allocation2 + $0xc8] sm:$0xff]
        %v2048 = vld [vmem:[#allocation2 + $0xd0] sm:$0xff]
        %v2049 = vld [vmem:[#allocation2 + $0xd8] sm:$0xff]
        %v2050 = vld [vmem:[#allocation2 + $0xe0] sm:$0xff]
        %v2051 = vld [vmem:[#allocation2 + $0xe8] sm:$0xff]
        %v2052 = vld [vmem:[#allocation2 + $0xf0] sm:$0xff]
        %v2053 = vld [vmem:[#allocation2 + $0xf8] sm:$0xff]
        %v2054 = vld [vmem:[#allocation2 + $0x100] sm:$0xff]
        %v2055 = vld [vmem:[#allocation2 + $0x108] sm:$0xff]
        %v2056 = vld [vmem:[#allocation2 + $0x110] sm:$0xff]
        %v2057 = vld [vmem:[#allocation2 + $0x118] sm:$0xff]
        %v2058 = vld [vmem:[#allocation2 + $0x120] sm:$0xff]
        %v2059 = vld [vmem:[#allocation2 + $0x128] sm:$0xff]
        %v2060 = vld [vmem:[#allocation2 + $0x130] sm:$0xff]
        %v2061 = vld [vmem:[#allocation2 + $0x138] sm:$0xff]
        %v2062 = vld [vmem:[#allocation2 + $0x140] sm:$0xff]
        %v2063 = vld [vmem:[#allocation2 + $0x148] sm:$0xff]
        %v2064 = vld [vmem:[#allocation2 + $0x150] sm:$0xff]
        %v2065 = vld [vmem:[#allocation2 + $0x158] sm:$0xff]
        %v2066 = vld [vmem:[#allocation2 + $0x160] sm:$0xff]
        %v2067 = vld [vmem:[#allocation2 + $0x168] sm:$0xff]
        %v2068 = vld [vmem:[#allocation2 + $0x170] sm:$0xff]
        %v2069 = vld [vmem:[#allocation2 + $0x178] sm:$0xff]
        %v2070 = vld [vmem:[#allocation2 + $0x180] sm:$0xff]
        %v2071 = vld [vmem:[#allocation2 + $0x188] sm:$0xff]
        %v2072 = vld [vmem:[#allocation2 + $0x190] sm:$0xff]
        %v2073 = vrot.slane %v2025, 7
        %v2074 = vrot.slane %v2026, 7
        %v2075 = vrot.slane %v2027, 7
        %v2076 = vrot.slane %v2028, 7
        %v2077 = vrot.slane %v2029, 7
        %v2078 = vrot.slane %v2030, 7
        %v2079 = vrot.slane %v2031, 7
        %v2080 = vrot.slane %v2032, 7
        %v2081 = vrot.slane %v2033, 7
        %v2082 = vrot.slane %v2034, 7
        %v2083 = vrot.slane %v2035, 7
        %v2084 = vrot.slane %v2036, 7
        %v2085 = vrot.slane %v2037, 7
        %v2086 = vrot.slane %v2038, 7
        %v2087 = vrot.slane %v2039, 7
        %v2088 = vrot.slane %v2040, 7
        %v2089 = vrot.slane %v2041, 7
        %v2090 = vrot.slane %v2042, 7
        %v2091 = vrot.slane %v2043, 7
        %v2092 = vrot.slane %v2044, 7
        %v2093 = vrot.slane %v2045, 7
        %v2094 = vrot.slane %v2046, 7
        %v2095 = vrot.slane %v2047, 7
        %v2096 = vrot.slane %v2048, 7
        %v2097 = vrot.slane %v2049, 7
        %v2098 = vrot.slane %v2050, 7
        %v2099 = vrot.slane %v2051, 7
        %v2100 = vrot.slane %v2052, 7
        %v2101 = vrot.slane %v2053, 7
        %v2102 = vrot.slane %v2054, 7
        %v2103 = vrot.slane %v2055, 7
        %v2104 = vrot.slane %v2056, 7
        %v2105 = vrot.slane %v2057, 7
        %v2106 = vrot.slane %v2058, 7
        %v2107 = vrot.slane %v2059, 7
        %v2108 = vrot.slane %v2060, 7
        %v2109 = vrot.slane %v2061, 7
        %v2110 = vrot.slane %v2062, 7
        %v2111 = vrot.slane %v2063, 7
        %v2112 = vrot.slane %v2064, 7
        %v2113 = vrot.slane %v2065, 7
        %v2114 = vrot.slane %v2066, 7
        %v2115 = vrot.slane %v2067, 7
        %v2116 = vrot.slane %v2068, 7
        %v2117 = vrot.slane %v2069, 7
        %v2118 = vrot.slane %v2070, 7
        %v2119 = vrot.slane %v2071, 7
        %v2120 = vrot.slane %v2072, 7
        %v2121 = vsel %vm1624, %v2119, %v2120
        %v2122 = vsel %vm1624, %v2118, %v2119
        %v2123 = vsel %vm1624, %v2117, %v2118
        %v2124 = vsel %vm1624, %v2116, %v2117
        %v2125 = vsel %vm1624, %v2115, %v2116
        %v2126 = vsel %vm1624, %v2114, %v2115
        %v2127 = vsel %vm1624, %v2113, %v2114
        %v2128 = vsel %vm1624, %v2112, %v2113
        %v2129 = vsel %vm1624, %v2111, %v2112
        %v2130 = vsel %vm1624, %v2110, %v2111
        %v2131 = vsel %vm1624, %v2109, %v2110
        %v2132 = vsel %vm1624, %v2108, %v2109
        %v2133 = vsel %vm1624, %v2107, %v2108
        %v2134 = vsel %vm1624, %v2106, %v2107
        %v2135 = vsel %vm1624, %v2105, %v2106
        %v2136 = vsel %vm1624, %v2104, %v2105
        %v2137 = vsel %vm1624, %v2103, %v2104
        %v2138 = vsel %vm1624, %v2102, %v2103
        %v2139 = vsel %vm1624, %v2101, %v2102
        %v2140 = vsel %vm1624, %v2100, %v2101
        %v2141 = vsel %vm1624, %v2099, %v2100
        %v2142 = vsel %vm1624, %v2098, %v2099
        %v2143 = vsel %vm1624, %v2097, %v2098
        %v2144 = vsel %vm1624, %v2096, %v2097
        %v2145 = vsel %vm1624, %v2095, %v2096
        %v2146 = vsel %vm1624, %v2094, %v2095
        %v2147 = vsel %vm1624, %v2093, %v2094
        %v2148 = vsel %vm1624, %v2092, %v2093
        %v2149 = vsel %vm1624, %v2091, %v2092
        %v2150 = vsel %vm1624, %v2090, %v2091
        %v2151 = vsel %vm1624, %v2089, %v2090
        %v2152 = vsel %vm1624, %v2088, %v2089
        %v2153 = vsel %vm1624, %v2087, %v2088
        %v2154 = vsel %vm1624, %v2086, %v2087
        %v2155 = vsel %vm1624, %v2085, %v2086
        %v2156 = vsel %vm1624, %v2084, %v2085
        %v2157 = vsel %vm1624, %v2083, %v2084
        %v2158 = vsel %vm1624, %v2082, %v2083
        %v2159 = vsel %vm1624, %v2081, %v2082
        %v2160 = vsel %vm1624, %v2080, %v2081
        %v2161 = vsel %vm1624, %v2079, %v2080
        %v2162 = vsel %vm1624, %v2078, %v2079
        %v2163 = vsel %vm1624, %v2077, %v2078
        %v2164 = vsel %vm1624, %v2076, %v2077
        %v2165 = vsel %vm1624, %v2075, %v2076
        %v2166 = vsel %vm1624, %v2074, %v2075
        %v2167 = vsel %vm1624, %v2073, %v2074
        %v2168 = vsel %vm1624, %v2120, %v2073
        %v2169 = vld [vmem:[%s2 + $0x3] sm:$0x1]
        %v2170 = vlaneseq
        %v2171 = vshrl.u32 %v2170, 7
        %v2172 = vsub.s32 0, %v2171
        %v2173 = vrot.slane %v2169, %v2172
        %v2174 = vmul.f32 %v2168, %v2173
        %v2175 = vmul.f32 %v2167, %v2173
        %v2176 = vmul.f32 %v2166, %v2173
        %v2177 = vmul.f32 %v2165, %v2173
        %v2178 = vmul.f32 %v2164, %v2173
        %v2179 = vmul.f32 %v2163, %v2173
        %v2180 = vmul.f32 %v2162, %v2173
        %v2181 = vmul.f32 %v2161, %v2173
        %v2182 = vmul.f32 %v2160, %v2173
        %v2183 = vmul.f32 %v2159, %v2173
        %v2184 = vmul.f32 %v2158, %v2173
        %v2185 = vmul.f32 %v2157, %v2173
        %v2186 = vmul.f32 %v2156, %v2173
        %v2187 = vmul.f32 %v2155, %v2173
        %v2188 = vmul.f32 %v2154, %v2173
        %v2189 = vmul.f32 %v2153, %v2173
        %v2190 = vmul.f32 %v2152, %v2173
        %v2191 = vmul.f32 %v2151, %v2173
        %v2192 = vmul.f32 %v2150, %v2173
        %v2193 = vmul.f32 %v2149, %v2173
        %v2194 = vmul.f32 %v2148, %v2173
        %v2195 = vmul.f32 %v2147, %v2173
        %v2196 = vmul.f32 %v2146, %v2173
        %v2197 = vmul.f32 %v2145, %v2173
        %v2198 = vmul.f32 %v2144, %v2173
        %v2199 = vmul.f32 %v2143, %v2173
        %v2200 = vmul.f32 %v2142, %v2173
        %v2201 = vmul.f32 %v2141, %v2173
        %v2202 = vmul.f32 %v2140, %v2173
        %v2203 = vmul.f32 %v2139, %v2173
        %v2204 = vmul.f32 %v2138, %v2173
        %v2205 = vmul.f32 %v2137, %v2173
        %v2206 = vmul.f32 %v2136, %v2173
        %v2207 = vmul.f32 %v2135, %v2173
        %v2208 = vmul.f32 %v2134, %v2173
        %v2209 = vmul.f32 %v2133, %v2173
        %v2210 = vmul.f32 %v2132, %v2173
        %v2211 = vmul.f32 %v2131, %v2173
        %v2212 = vmul.f32 %v2130, %v2173
        %v2213 = vmul.f32 %v2129, %v2173
        %v2214 = vmul.f32 %v2128, %v2173
        %v2215 = vmul.f32 %v2127, %v2173
        %v2216 = vmul.f32 %v2126, %v2173
        %v2217 = vmul.f32 %v2125, %v2173
        %v2218 = vmul.f32 %v2124, %v2173
        %v2219 = vmul.f32 %v2123, %v2173
        %v2220 = vmul.f32 %v2122, %v2173
        %v2221 = vmul.f32 %v2121, %v2173
        %v2222 = vadd.f32 %v1977, %v2174
        %v2223 = vadd.f32 %v1978, %v2175
        %v2224 = vadd.f32 %v1979, %v2176
        %v2225 = vadd.f32 %v1980, %v2177
        %v2226 = vadd.f32 %v1981, %v2178
        %v2227 = vadd.f32 %v1982, %v2179
        %v2228 = vadd.f32 %v1983, %v2180
        %v2229 = vadd.f32 %v1984, %v2181
        %v2230 = vadd.f32 %v1985, %v2182
        %v2231 = vadd.f32 %v1986, %v2183
        %v2232 = vadd.f32 %v1987, %v2184
        %v2233 = vadd.f32 %v1988, %v2185
        %v2234 = vadd.f32 %v1989, %v2186
        %v2235 = vadd.f32 %v1990, %v2187
        %v2236 = vadd.f32 %v1991, %v2188
        %v2237 = vadd.f32 %v1992, %v2189
        %v2238 = vadd.f32 %v1993, %v2190
        %v2239 = vadd.f32 %v1994, %v2191
        %v2240 = vadd.f32 %v1995, %v2192
        %v2241 = vadd.f32 %v1996, %v2193
        %v2242 = vadd.f32 %v1997, %v2194
        %v2243 = vadd.f32 %v1998, %v2195
        %v2244 = vadd.f32 %v1999, %v2196
        %v2245 = vadd.f32 %v2000, %v2197
        %v2246 = vadd.f32 %v2001, %v2198
        %v2247 = vadd.f32 %v2002, %v2199
        %v2248 = vadd.f32 %v2003, %v2200
        %v2249 = vadd.f32 %v2004, %v2201
        %v2250 = vadd.f32 %v2005, %v2202
        %v2251 = vadd.f32 %v2006, %v2203
        %v2252 = vadd.f32 %v2007, %v2204
        %v2253 = vadd.f32 %v2008, %v2205
        %v2254 = vadd.f32 %v2009, %v2206
        %v2255 = vadd.f32 %v2010, %v2207
        %v2256 = vadd.f32 %v2011, %v2208
        %v2257 = vadd.f32 %v2012, %v2209
        %v2258 = vadd.f32 %v2013, %v2210
        %v2259 = vadd.f32 %v2014, %v2211
        %v2260 = vadd.f32 %v2015, %v2212
        %v2261 = vadd.f32 %v2016, %v2213
        %v2262 = vadd.f32 %v2017, %v2214
        %v2263 = vadd.f32 %v2018, %v2215
        %v2264 = vadd.f32 %v2019, %v2216
        %v2265 = vadd.f32 %v2020, %v2217
        %v2266 = vadd.f32 %v2021, %v2218
        %v2267 = vadd.f32 %v2022, %v2219
        %v2268 = vadd.f32 %v2023, %v2220
        %v2269 = vadd.f32 %v2024, %v2221
        %v2270 = vld [vmem:[%s2 + $0x4] sm:$0x1]
        %v2271 = vlaneseq
        %v2272 = vshrl.u32 %v2271, 7
        %v2273 = vsub.s32 0, %v2272
        %v2274 = vrot.slane %v2270, %v2273
        %v2275 = vmul.f32 %v2025, %v2274
        %v2276 = vmul.f32 %v2026, %v2274
        %v2277 = vmul.f32 %v2027, %v2274
        %v2278 = vmul.f32 %v2028, %v2274
        %v2279 = vmul.f32 %v2029, %v2274
        %v2280 = vmul.f32 %v2030, %v2274
        %v2281 = vmul.f32 %v2031, %v2274
        %v2282 = vmul.f32 %v2032, %v2274
        %v2283 = vmul.f32 %v2033, %v2274
        %v2284 = vmul.f32 %v2034, %v2274
        %v2285 = vmul.f32 %v2035, %v2274
        %v2286 = vmul.f32 %v2036, %v2274
        %v2287 = vmul.f32 %v2037, %v2274
        %v2288 = vmul.f32 %v2038, %v2274
        %v2289 = vmul.f32 %v2039, %v2274
        %v2290 = vmul.f32 %v2040, %v2274
        %v2291 = vmul.f32 %v2041, %v2274
        %v2292 = vmul.f32 %v2042, %v2274
        %v2293 = vmul.f32 %v2043, %v2274
        %v2294 = vmul.f32 %v2044, %v2274
        %v2295 = vmul.f32 %v2045, %v2274
        %v2296 = vmul.f32 %v2046, %v2274
        %v2297 = vmul.f32 %v2047, %v2274
        %v2298 = vmul.f32 %v2048, %v2274
        %v2299 = vmul.f32 %v2049, %v2274
        %v2300 = vmul.f32 %v2050, %v2274
        %v2301 = vmul.f32 %v2051, %v2274
        %v2302 = vmul.f32 %v2052, %v2274
        %v2303 = vmul.f32 %v2053, %v2274
        %v2304 = vmul.f32 %v2054, %v2274
        %v2305 = vmul.f32 %v2055, %v2274
        %v2306 = vmul.f32 %v2056, %v2274
        %v2307 = vmul.f32 %v2057, %v2274
        %v2308 = vmul.f32 %v2058, %v2274
        %v2309 = vmul.f32 %v2059, %v2274
        %v2310 = vmul.f32 %v2060, %v2274
        %v2311 = vmul.f32 %v2061, %v2274
        %v2312 = vmul.f32 %v2062, %v2274
        %v2313 = vmul.f32 %v2063, %v2274
        %v2314 = vmul.f32 %v2064, %v2274
        %v2315 = vmul.f32 %v2065, %v2274
        %v2316 = vmul.f32 %v2066, %v2274
        %v2317 = vmul.f32 %v2067, %v2274
        %v2318 = vmul.f32 %v2068, %v2274
        %v2319 = vmul.f32 %v2069, %v2274
        %v2320 = vmul.f32 %v2070, %v2274
        %v2321 = vmul.f32 %v2071, %v2274
        %v2322 = vmul.f32 %v2072, %v2274
        %v2323 = vadd.f32 %v2222, %v2275
        %v2324 = vadd.f32 %v2223, %v2276
        %v2325 = vadd.f32 %v2224, %v2277
        %v2326 = vadd.f32 %v2225, %v2278
        %v2327 = vadd.f32 %v2226, %v2279
        %v2328 = vadd.f32 %v2227, %v2280
        %v2329 = vadd.f32 %v2228, %v2281
        %v2330 = vadd.f32 %v2229, %v2282
        %v2331 = vadd.f32 %v2230, %v2283
        %v2332 = vadd.f32 %v2231, %v2284
        %v2333 = vadd.f32 %v2232, %v2285
        %v2334 = vadd.f32 %v2233, %v2286
        %v2335 = vadd.f32 %v2234, %v2287
        %v2336 = vadd.f32 %v2235, %v2288
        %v2337 = vadd.f32 %v2236, %v2289
        %v2338 = vadd.f32 %v2237, %v2290
        %v2339 = vadd.f32 %v2238, %v2291
        %v2340 = vadd.f32 %v2239, %v2292
        %v2341 = vadd.f32 %v2240, %v2293
        %v2342 = vadd.f32 %v2241, %v2294
        %v2343 = vadd.f32 %v2242, %v2295
        %v2344 = vadd.f32 %v2243, %v2296
        %v2345 = vadd.f32 %v2244, %v2297
        %v2346 = vadd.f32 %v2245, %v2298
        %v2347 = vadd.f32 %v2246, %v2299
        %v2348 = vadd.f32 %v2247, %v2300
        %v2349 = vadd.f32 %v2248, %v2301
        %v2350 = vadd.f32 %v2249, %v2302
        %v2351 = vadd.f32 %v2250, %v2303
        %v2352 = vadd.f32 %v2251, %v2304
        %v2353 = vadd.f32 %v2252, %v2305
        %v2354 = vadd.f32 %v2253, %v2306
        %v2355 = vadd.f32 %v2254, %v2307
        %v2356 = vadd.f32 %v2255, %v2308
        %v2357 = vadd.f32 %v2256, %v2309
        %v2358 = vadd.f32 %v2257, %v2310
        %v2359 = vadd.f32 %v2258, %v2311
        %v2360 = vadd.f32 %v2259, %v2312
        %v2361 = vadd.f32 %v2260, %v2313
        %v2362 = vadd.f32 %v2261, %v2314
        %v2363 = vadd.f32 %v2262, %v2315
        %v2364 = vadd.f32 %v2263, %v2316
        %v2365 = vadd.f32 %v2264, %v2317
        %v2366 = vadd.f32 %v2265, %v2318
        %v2367 = vadd.f32 %v2266, %v2319
        %v2368 = vadd.f32 %v2267, %v2320
        %v2369 = vadd.f32 %v2268, %v2321
        %v2370 = vadd.f32 %v2269, %v2322
        %v2371 = vrot.slane %v2025, 1
        %v2372 = vrot.slane %v2026, 1
        %v2373 = vrot.slane %v2027, 1
        %v2374 = vrot.slane %v2028, 1
        %v2375 = vrot.slane %v2029, 1
        %v2376 = vrot.slane %v2030, 1
        %v2377 = vrot.slane %v2031, 1
        %v2378 = vrot.slane %v2032, 1
        %v2379 = vrot.slane %v2033, 1
        %v2380 = vrot.slane %v2034, 1
        %v2381 = vrot.slane %v2035, 1
        %v2382 = vrot.slane %v2036, 1
        %v2383 = vrot.slane %v2037, 1
        %v2384 = vrot.slane %v2038, 1
        %v2385 = vrot.slane %v2039, 1
        %v2386 = vrot.slane %v2040, 1
        %v2387 = vrot.slane %v2041, 1
        %v2388 = vrot.slane %v2042, 1
        %v2389 = vrot.slane %v2043, 1
        %v2390 = vrot.slane %v2044, 1
        %v2391 = vrot.slane %v2045, 1
        %v2392 = vrot.slane %v2046, 1
        %v2393 = vrot.slane %v2047, 1
        %v2394 = vrot.slane %v2048, 1
        %v2395 = vrot.slane %v2049, 1
        %v2396 = vrot.slane %v2050, 1
        %v2397 = vrot.slane %v2051, 1
        %v2398 = vrot.slane %v2052, 1
        %v2399 = vrot.slane %v2053, 1
        %v2400 = vrot.slane %v2054, 1
        %v2401 = vrot.slane %v2055, 1
        %v2402 = vrot.slane %v2056, 1
        %v2403 = vrot.slane %v2057, 1
        %v2404 = vrot.slane %v2058, 1
        %v2405 = vrot.slane %v2059, 1
        %v2406 = vrot.slane %v2060, 1
        %v2407 = vrot.slane %v2061, 1
        %v2408 = vrot.slane %v2062, 1
        %v2409 = vrot.slane %v2063, 1
        %v2410 = vrot.slane %v2064, 1
        %v2411 = vrot.slane %v2065, 1
        %v2412 = vrot.slane %v2066, 1
        %v2413 = vrot.slane %v2067, 1
        %v2414 = vrot.slane %v2068, 1
        %v2415 = vrot.slane %v2069, 1
        %v2416 = vrot.slane %v2070, 1
        %v2417 = vrot.slane %v2071, 1
        %v2418 = vrot.slane %v2072, 1
        %v2419 = vsel %vm1875, %v2417, %v2418
        %v2420 = vsel %vm1875, %v2416, %v2417
        %v2421 = vsel %vm1875, %v2415, %v2416
        %v2422 = vsel %vm1875, %v2414, %v2415
        %v2423 = vsel %vm1875, %v2413, %v2414
        %v2424 = vsel %vm1875, %v2412, %v2413
        %v2425 = vsel %vm1875, %v2411, %v2412
        %v2426 = vsel %vm1875, %v2410, %v2411
        %v2427 = vsel %vm1875, %v2409, %v2410
        %v2428 = vsel %vm1875, %v2408, %v2409
        %v2429 = vsel %vm1875, %v2407, %v2408
        %v2430 = vsel %vm1875, %v2406, %v2407
        %v2431 = vsel %vm1875, %v2405, %v2406
        %v2432 = vsel %vm1875, %v2404, %v2405
        %v2433 = vsel %vm1875, %v2403, %v2404
        %v2434 = vsel %vm1875, %v2402, %v2403
        %v2435 = vsel %vm1875, %v2401, %v2402
        %v2436 = vsel %vm1875, %v2400, %v2401
        %v2437 = vsel %vm1875, %v2399, %v2400
        %v2438 = vsel %vm1875, %v2398, %v2399
        %v2439 = vsel %vm1875, %v2397, %v2398
        %v2440 = vsel %vm1875, %v2396, %v2397
        %v2441 = vsel %vm1875, %v2395, %v2396
        %v2442 = vsel %vm1875, %v2394, %v2395
        %v2443 = vsel %vm1875, %v2393, %v2394
        %v2444 = vsel %vm1875, %v2392, %v2393
        %v2445 = vsel %vm1875, %v2391, %v2392
        %v2446 = vsel %vm1875, %v2390, %v2391
        %v2447 = vsel %vm1875, %v2389, %v2390
        %v2448 = vsel %vm1875, %v2388, %v2389
        %v2449 = vsel %vm1875, %v2387, %v2388
        %v2450 = vsel %vm1875, %v2386, %v2387
        %v2451 = vsel %vm1875, %v2385, %v2386
        %v2452 = vsel %vm1875, %v2384, %v2385
        %v2453 = vsel %vm1875, %v2383, %v2384
        %v2454 = vsel %vm1875, %v2382, %v2383
        %v2455 = vsel %vm1875, %v2381, %v2382
        %v2456 = vsel %vm1875, %v2380, %v2381
        %v2457 = vsel %vm1875, %v2379, %v2380
        %v2458 = vsel %vm1875, %v2378, %v2379
        %v2459 = vsel %vm1875, %v2377, %v2378
        %v2460 = vsel %vm1875, %v2376, %v2377
        %v2461 = vsel %vm1875, %v2375, %v2376
        %v2462 = vsel %vm1875, %v2374, %v2375
        %v2463 = vsel %vm1875, %v2373, %v2374
        %v2464 = vsel %vm1875, %v2372, %v2373
        %v2465 = vsel %vm1875, %v2371, %v2372
        %v2466 = vsel %vm1875, %v2418, %v2371
        %v2467 = vld [vmem:[%s2 + $0x5] sm:$0x1]
        %v2468 = vlaneseq
        %v2469 = vshrl.u32 %v2468, 7
        %v2470 = vsub.s32 0, %v2469
        %v2471 = vrot.slane %v2467, %v2470
        %v2472 = vmul.f32 %v2465, %v2471
        %v2473 = vmul.f32 %v2464, %v2471
        %v2474 = vmul.f32 %v2463, %v2471
        %v2475 = vmul.f32 %v2462, %v2471
        %v2476 = vmul.f32 %v2461, %v2471
        %v2477 = vmul.f32 %v2460, %v2471
        %v2478 = vmul.f32 %v2459, %v2471
        %v2479 = vmul.f32 %v2458, %v2471
        %v2480 = vmul.f32 %v2457, %v2471
        %v2481 = vmul.f32 %v2456, %v2471
        %v2482 = vmul.f32 %v2455, %v2471
        %v2483 = vmul.f32 %v2454, %v2471
        %v2484 = vmul.f32 %v2453, %v2471
        %v2485 = vmul.f32 %v2452, %v2471
        %v2486 = vmul.f32 %v2451, %v2471
        %v2487 = vmul.f32 %v2450, %v2471
        %v2488 = vmul.f32 %v2449, %v2471
        %v2489 = vmul.f32 %v2448, %v2471
        %v2490 = vmul.f32 %v2447, %v2471
        %v2491 = vmul.f32 %v2446, %v2471
        %v2492 = vmul.f32 %v2445, %v2471
        %v2493 = vmul.f32 %v2444, %v2471
        %v2494 = vmul.f32 %v2443, %v2471
        %v2495 = vmul.f32 %v2442, %v2471
        %v2496 = vmul.f32 %v2441, %v2471
        %v2497 = vmul.f32 %v2440, %v2471
        %v2498 = vmul.f32 %v2439, %v2471
        %v2499 = vmul.f32 %v2438, %v2471
        %v2500 = vmul.f32 %v2437, %v2471
        %v2501 = vmul.f32 %v2436, %v2471
        %v2502 = vmul.f32 %v2435, %v2471
        %v2503 = vmul.f32 %v2434, %v2471
        %v2504 = vmul.f32 %v2433, %v2471
        %v2505 = vmul.f32 %v2432, %v2471
        %v2506 = vmul.f32 %v2431, %v2471
        %v2507 = vmul.f32 %v2430, %v2471
        %v2508 = vmul.f32 %v2429, %v2471
        %v2509 = vmul.f32 %v2428, %v2471
        %v2510 = vmul.f32 %v2427, %v2471
        %v2511 = vmul.f32 %v2426, %v2471
        %v2512 = vmul.f32 %v2425, %v2471
        %v2513 = vmul.f32 %v2424, %v2471
        %v2514 = vmul.f32 %v2423, %v2471
        %v2515 = vmul.f32 %v2422, %v2471
        %v2516 = vmul.f32 %v2421, %v2471
        %v2517 = vmul.f32 %v2420, %v2471
        %v2518 = vmul.f32 %v2419, %v2471
        %v2519 = vmul.f32 %v2466, %v2471
        %v2520 = vadd.f32 %v2323, %v2472
        %v2521 = vadd.f32 %v2324, %v2473
        %v2522 = vadd.f32 %v2325, %v2474
        %v2523 = vadd.f32 %v2326, %v2475
        %v2524 = vadd.f32 %v2327, %v2476
        %v2525 = vadd.f32 %v2328, %v2477
        %v2526 = vadd.f32 %v2329, %v2478
        %v2527 = vadd.f32 %v2330, %v2479
        %v2528 = vadd.f32 %v2331, %v2480
        %v2529 = vadd.f32 %v2332, %v2481
        %v2530 = vadd.f32 %v2333, %v2482
        %v2531 = vadd.f32 %v2334, %v2483
        %v2532 = vadd.f32 %v2335, %v2484
        %v2533 = vadd.f32 %v2336, %v2485
        %v2534 = vadd.f32 %v2337, %v2486
        %v2535 = vadd.f32 %v2338, %v2487
        %v2536 = vadd.f32 %v2339, %v2488
        %v2537 = vadd.f32 %v2340, %v2489
        %v2538 = vadd.f32 %v2341, %v2490
        %v2539 = vadd.f32 %v2342, %v2491
        %v2540 = vadd.f32 %v2343, %v2492
        %v2541 = vadd.f32 %v2344, %v2493
        %v2542 = vadd.f32 %v2345, %v2494
        %v2543 = vadd.f32 %v2346, %v2495
        %v2544 = vadd.f32 %v2347, %v2496
        %v2545 = vadd.f32 %v2348, %v2497
        %v2546 = vadd.f32 %v2349, %v2498
        %v2547 = vadd.f32 %v2350, %v2499
        %v2548 = vadd.f32 %v2351, %v2500
        %v2549 = vadd.f32 %v2352, %v2501
        %v2550 = vadd.f32 %v2353, %v2502
        %v2551 = vadd.f32 %v2354, %v2503
        %v2552 = vadd.f32 %v2355, %v2504
        %v2553 = vadd.f32 %v2356, %v2505
        %v2554 = vadd.f32 %v2357, %v2506
        %v2555 = vadd.f32 %v2358, %v2507
        %v2556 = vadd.f32 %v2359, %v2508
        %v2557 = vadd.f32 %v2360, %v2509
        %v2558 = vadd.f32 %v2361, %v2510
        %v2559 = vadd.f32 %v2362, %v2511
        %v2560 = vadd.f32 %v2363, %v2512
        %v2561 = vadd.f32 %v2364, %v2513
        %v2562 = vadd.f32 %v2365, %v2514
        %v2563 = vadd.f32 %v2366, %v2515
        %v2564 = vadd.f32 %v2367, %v2516
        %v2565 = vadd.f32 %v2368, %v2517
        %v2566 = vadd.f32 %v2369, %v2518
        %v2567 = vadd.f32 %v2370, %v2519
        %v2568 = vld [vmem:[#allocation2 + $0x30] sm:$0xff]
        %v2569 = vld [vmem:[#allocation2 + $0x38] sm:$0xff]
        %v2570 = vld [vmem:[#allocation2 + $0x40] sm:$0xff]
        %v2571 = vld [vmem:[#allocation2 + $0x48] sm:$0xff]
        %v2572 = vld [vmem:[#allocation2 + $0x50] sm:$0xff]
        %v2573 = vld [vmem:[#allocation2 + $0x58] sm:$0xff]
        %v2574 = vld [vmem:[#allocation2 + $0x60] sm:$0xff]
        %v2575 = vld [vmem:[#allocation2 + $0x68] sm:$0xff]
        %v2576 = vld [vmem:[#allocation2 + $0x70] sm:$0xff]
        %v2577 = vld [vmem:[#allocation2 + $0x78] sm:$0xff]
        %v2578 = vld [vmem:[#allocation2 + $0x80] sm:$0xff]
        %v2579 = vld [vmem:[#allocation2 + $0x88] sm:$0xff]
        %v2580 = vld [vmem:[#allocation2 + $0x90] sm:$0xff]
        %v2581 = vld [vmem:[#allocation2 + $0x98] sm:$0xff]
        %v2582 = vld [vmem:[#allocation2 + $0xa0] sm:$0xff]
        %v2583 = vld [vmem:[#allocation2 + $0xa8] sm:$0xff]
        %v2584 = vld [vmem:[#allocation2 + $0xb0] sm:$0xff]
        %v2585 = vld [vmem:[#allocation2 + $0xb8] sm:$0xff]
        %v2586 = vld [vmem:[#allocation2 + $0xc0] sm:$0xff]
        %v2587 = vld [vmem:[#allocation2 + $0xc8] sm:$0xff]
        %v2588 = vld [vmem:[#allocation2 + $0xd0] sm:$0xff]
        %v2589 = vld [vmem:[#allocation2 + $0xd8] sm:$0xff]
        %v2590 = vld [vmem:[#allocation2 + $0xe0] sm:$0xff]
        %v2591 = vld [vmem:[#allocation2 + $0xe8] sm:$0xff]
        %v2592 = vld [vmem:[#allocation2 + $0xf0] sm:$0xff]
        %v2593 = vld [vmem:[#allocation2 + $0xf8] sm:$0xff]
        %v2594 = vld [vmem:[#allocation2 + $0x100] sm:$0xff]
        %v2595 = vld [vmem:[#allocation2 + $0x108] sm:$0xff]
        %v2596 = vld [vmem:[#allocation2 + $0x110] sm:$0xff]
        %v2597 = vld [vmem:[#allocation2 + $0x118] sm:$0xff]
        %v2598 = vld [vmem:[#allocation2 + $0x120] sm:$0xff]
        %v2599 = vld [vmem:[#allocation2 + $0x128] sm:$0xff]
        %v2600 = vld [vmem:[#allocation2 + $0x130] sm:$0xff]
        %v2601 = vld [vmem:[#allocation2 + $0x138] sm:$0xff]
        %v2602 = vld [vmem:[#allocation2 + $0x140] sm:$0xff]
        %v2603 = vld [vmem:[#allocation2 + $0x148] sm:$0xff]
        %v2604 = vld [vmem:[#allocation2 + $0x150] sm:$0xff]
        %v2605 = vld [vmem:[#allocation2 + $0x158] sm:$0xff]
        %v2606 = vld [vmem:[#allocation2 + $0x160] sm:$0xff]
        %v2607 = vld [vmem:[#allocation2 + $0x168] sm:$0xff]
        %v2608 = vld [vmem:[#allocation2 + $0x170] sm:$0xff]
        %v2609 = vld [vmem:[#allocation2 + $0x178] sm:$0xff]
        %v2610 = vld [vmem:[#allocation2 + $0x180] sm:$0xff]
        %v2611 = vld [vmem:[#allocation2 + $0x188] sm:$0xff]
        %v2612 = vld [vmem:[#allocation2 + $0x190] sm:$0xff]
        %v2613 = vld [vmem:[#allocation2 + $0x198] sm:$0xff]
        %v2614 = vld [vmem:[#allocation2 + $0x1a0] sm:$0xff]
        %v2615 = vld [vmem:[#allocation2 + $0x1a8] sm:$0xff]
        %v2616 = vrot.slane %v2568, 7
        %v2617 = vrot.slane %v2569, 7
        %v2618 = vrot.slane %v2570, 7
        %v2619 = vrot.slane %v2571, 7
        %v2620 = vrot.slane %v2572, 7
        %v2621 = vrot.slane %v2573, 7
        %v2622 = vrot.slane %v2574, 7
        %v2623 = vrot.slane %v2575, 7
        %v2624 = vrot.slane %v2576, 7
        %v2625 = vrot.slane %v2577, 7
        %v2626 = vrot.slane %v2578, 7
        %v2627 = vrot.slane %v2579, 7
        %v2628 = vrot.slane %v2580, 7
        %v2629 = vrot.slane %v2581, 7
        %v2630 = vrot.slane %v2582, 7
        %v2631 = vrot.slane %v2583, 7
        %v2632 = vrot.slane %v2584, 7
        %v2633 = vrot.slane %v2585, 7
        %v2634 = vrot.slane %v2586, 7
        %v2635 = vrot.slane %v2587, 7
        %v2636 = vrot.slane %v2588, 7
        %v2637 = vrot.slane %v2589, 7
        %v2638 = vrot.slane %v2590, 7
        %v2639 = vrot.slane %v2591, 7
        %v2640 = vrot.slane %v2592, 7
        %v2641 = vrot.slane %v2593, 7
        %v2642 = vrot.slane %v2594, 7
        %v2643 = vrot.slane %v2595, 7
        %v2644 = vrot.slane %v2596, 7
        %v2645 = vrot.slane %v2597, 7
        %v2646 = vrot.slane %v2598, 7
        %v2647 = vrot.slane %v2599, 7
        %v2648 = vrot.slane %v2600, 7
        %v2649 = vrot.slane %v2601, 7
        %v2650 = vrot.slane %v2602, 7
        %v2651 = vrot.slane %v2603, 7
        %v2652 = vrot.slane %v2604, 7
        %v2653 = vrot.slane %v2605, 7
        %v2654 = vrot.slane %v2606, 7
        %v2655 = vrot.slane %v2607, 7
        %v2656 = vrot.slane %v2608, 7
        %v2657 = vrot.slane %v2609, 7
        %v2658 = vrot.slane %v2610, 7
        %v2659 = vrot.slane %v2611, 7
        %v2660 = vrot.slane %v2612, 7
        %v2661 = vrot.slane %v2613, 7
        %v2662 = vrot.slane %v2614, 7
        %v2663 = vrot.slane %v2615, 7
        %v2664 = vsel %vm1624, %v2662, %v2663
        %v2665 = vsel %vm1624, %v2661, %v2662
        %v2666 = vsel %vm1624, %v2660, %v2661
        %v2667 = vsel %vm1624, %v2659, %v2660
        %v2668 = vsel %vm1624, %v2658, %v2659
        %v2669 = vsel %vm1624, %v2657, %v2658
        %v2670 = vsel %vm1624, %v2656, %v2657
        %v2671 = vsel %vm1624, %v2655, %v2656
        %v2672 = vsel %vm1624, %v2654, %v2655
        %v2673 = vsel %vm1624, %v2653, %v2654
        %v2674 = vsel %vm1624, %v2652, %v2653
        %v2675 = vsel %vm1624, %v2651, %v2652
        %v2676 = vsel %vm1624, %v2650, %v2651
        %v2677 = vsel %vm1624, %v2649, %v2650
        %v2678 = vsel %vm1624, %v2648, %v2649
        %v2679 = vsel %vm1624, %v2647, %v2648
        %v2680 = vsel %vm1624, %v2646, %v2647
        %v2681 = vsel %vm1624, %v2645, %v2646
        %v2682 = vsel %vm1624, %v2644, %v2645
        %v2683 = vsel %vm1624, %v2643, %v2644
        %v2684 = vsel %vm1624, %v2642, %v2643
        %v2685 = vsel %vm1624, %v2641, %v2642
        %v2686 = vsel %vm1624, %v2640, %v2641
        %v2687 = vsel %vm1624, %v2639, %v2640
        %v2688 = vsel %vm1624, %v2638, %v2639
        %v2689 = vsel %vm1624, %v2637, %v2638
        %v2690 = vsel %vm1624, %v2636, %v2637
        %v2691 = vsel %vm1624, %v2635, %v2636
        %v2692 = vsel %vm1624, %v2634, %v2635
        %v2693 = vsel %vm1624, %v2633, %v2634
        %v2694 = vsel %vm1624, %v2632, %v2633
        %v2695 = vsel %vm1624, %v2631, %v2632
        %v2696 = vsel %vm1624, %v2630, %v2631
        %v2697 = vsel %vm1624, %v2629, %v2630
        %v2698 = vsel %vm1624, %v2628, %v2629
        %v2699 = vsel %vm1624, %v2627, %v2628
        %v2700 = vsel %vm1624, %v2626, %v2627
        %v2701 = vsel %vm1624, %v2625, %v2626
        %v2702 = vsel %vm1624, %v2624, %v2625
        %v2703 = vsel %vm1624, %v2623, %v2624
        %v2704 = vsel %vm1624, %v2622, %v2623
        %v2705 = vsel %vm1624, %v2621, %v2622
        %v2706 = vsel %vm1624, %v2620, %v2621
        %v2707 = vsel %vm1624, %v2619, %v2620
        %v2708 = vsel %vm1624, %v2618, %v2619
        %v2709 = vsel %vm1624, %v2617, %v2618
        %v2710 = vsel %vm1624, %v2616, %v2617
        %v2711 = vsel %vm1624, %v2663, %v2616
        %v2712 = vld [vmem:[%s2 + $0x6] sm:$0x1]
        %v2713 = vlaneseq
        %v2714 = vshrl.u32 %v2713, 7
        %v2715 = vsub.s32 0, %v2714
        %v2716 = vrot.slane %v2712, %v2715
        %v2717 = vmul.f32 %v2711, %v2716
        %v2718 = vmul.f32 %v2710, %v2716
        %v2719 = vmul.f32 %v2709, %v2716
        %v2720 = vmul.f32 %v2708, %v2716
        %v2721 = vmul.f32 %v2707, %v2716
        %v2722 = vmul.f32 %v2706, %v2716
        %v2723 = vmul.f32 %v2705, %v2716
        %v2724 = vmul.f32 %v2704, %v2716
        %v2725 = vmul.f32 %v2703, %v2716
        %v2726 = vmul.f32 %v2702, %v2716
        %v2727 = vmul.f32 %v2701, %v2716
        %v2728 = vmul.f32 %v2700, %v2716
        %v2729 = vmul.f32 %v2699, %v2716
        %v2730 = vmul.f32 %v2698, %v2716
        %v2731 = vmul.f32 %v2697, %v2716
        %v2732 = vmul.f32 %v2696, %v2716
        %v2733 = vmul.f32 %v2695, %v2716
        %v2734 = vmul.f32 %v2694, %v2716
        %v2735 = vmul.f32 %v2693, %v2716
        %v2736 = vmul.f32 %v2692, %v2716
        %v2737 = vmul.f32 %v2691, %v2716
        %v2738 = vmul.f32 %v2690, %v2716
        %v2739 = vmul.f32 %v2689, %v2716
        %v2740 = vmul.f32 %v2688, %v2716
        %v2741 = vmul.f32 %v2687, %v2716
        %v2742 = vmul.f32 %v2686, %v2716
        %v2743 = vmul.f32 %v2685, %v2716
        %v2744 = vmul.f32 %v2684, %v2716
        %v2745 = vmul.f32 %v2683, %v2716
        %v2746 = vmul.f32 %v2682, %v2716
        %v2747 = vmul.f32 %v2681, %v2716
        %v2748 = vmul.f32 %v2680, %v2716
        %v2749 = vmul.f32 %v2679, %v2716
        %v2750 = vmul.f32 %v2678, %v2716
        %v2751 = vmul.f32 %v2677, %v2716
        %v2752 = vmul.f32 %v2676, %v2716
        %v2753 = vmul.f32 %v2675, %v2716
        %v2754 = vmul.f32 %v2674, %v2716
        %v2755 = vmul.f32 %v2673, %v2716
        %v2756 = vmul.f32 %v2672, %v2716
        %v2757 = vmul.f32 %v2671, %v2716
        %v2758 = vmul.f32 %v2670, %v2716
        %v2759 = vmul.f32 %v2669, %v2716
        %v2760 = vmul.f32 %v2668, %v2716
        %v2761 = vmul.f32 %v2667, %v2716
        %v2762 = vmul.f32 %v2666, %v2716
        %v2763 = vmul.f32 %v2665, %v2716
        %v2764 = vmul.f32 %v2664, %v2716
        %v2765 = vadd.f32 %v2520, %v2717
        %v2766 = vadd.f32 %v2521, %v2718
        %v2767 = vadd.f32 %v2522, %v2719
        %v2768 = vadd.f32 %v2523, %v2720
        %v2769 = vadd.f32 %v2524, %v2721
        %v2770 = vadd.f32 %v2525, %v2722
        %v2771 = vadd.f32 %v2526, %v2723
        %v2772 = vadd.f32 %v2527, %v2724
        %v2773 = vadd.f32 %v2528, %v2725
        %v2774 = vadd.f32 %v2529, %v2726
        %v2775 = vadd.f32 %v2530, %v2727
        %v2776 = vadd.f32 %v2531, %v2728
        %v2777 = vadd.f32 %v2532, %v2729
        %v2778 = vadd.f32 %v2533, %v2730
        %v2779 = vadd.f32 %v2534, %v2731
        %v2780 = vadd.f32 %v2535, %v2732
        %v2781 = vadd.f32 %v2536, %v2733
        %v2782 = vadd.f32 %v2537, %v2734
        %v2783 = vadd.f32 %v2538, %v2735
        %v2784 = vadd.f32 %v2539, %v2736
        %v2785 = vadd.f32 %v2540, %v2737
        %v2786 = vadd.f32 %v2541, %v2738
        %v2787 = vadd.f32 %v2542, %v2739
        %v2788 = vadd.f32 %v2543, %v2740
        %v2789 = vadd.f32 %v2544, %v2741
        %v2790 = vadd.f32 %v2545, %v2742
        %v2791 = vadd.f32 %v2546, %v2743
        %v2792 = vadd.f32 %v2547, %v2744
        %v2793 = vadd.f32 %v2548, %v2745
        %v2794 = vadd.f32 %v2549, %v2746
        %v2795 = vadd.f32 %v2550, %v2747
        %v2796 = vadd.f32 %v2551, %v2748
        %v2797 = vadd.f32 %v2552, %v2749
        %v2798 = vadd.f32 %v2553, %v2750
        %v2799 = vadd.f32 %v2554, %v2751
        %v2800 = vadd.f32 %v2555, %v2752
        %v2801 = vadd.f32 %v2556, %v2753
        %v2802 = vadd.f32 %v2557, %v2754
        %v2803 = vadd.f32 %v2558, %v2755
        %v2804 = vadd.f32 %v2559, %v2756
        %v2805 = vadd.f32 %v2560, %v2757
        %v2806 = vadd.f32 %v2561, %v2758
        %v2807 = vadd.f32 %v2562, %v2759
        %v2808 = vadd.f32 %v2563, %v2760
        %v2809 = vadd.f32 %v2564, %v2761
        %v2810 = vadd.f32 %v2565, %v2762
        %v2811 = vadd.f32 %v2566, %v2763
        %v2812 = vadd.f32 %v2567, %v2764
        %v2813 = vld [vmem:[%s2 + $0x7] sm:$0x1]
        %v2814 = vlaneseq
        %v2815 = vshrl.u32 %v2814, 7
        %v2816 = vsub.s32 0, %v2815
        %v2817 = vrot.slane %v2813, %v2816
        %v2818 = vmul.f32 %v2568, %v2817
        %v2819 = vmul.f32 %v2569, %v2817
        %v2820 = vmul.f32 %v2570, %v2817
        %v2821 = vmul.f32 %v2571, %v2817
        %v2822 = vmul.f32 %v2572, %v2817
        %v2823 = vmul.f32 %v2573, %v2817
        %v2824 = vmul.f32 %v2574, %v2817
        %v2825 = vmul.f32 %v2575, %v2817
        %v2826 = vmul.f32 %v2576, %v2817
        %v2827 = vmul.f32 %v2577, %v2817
        %v2828 = vmul.f32 %v2578, %v2817
        %v2829 = vmul.f32 %v2579, %v2817
        %v2830 = vmul.f32 %v2580, %v2817
        %v2831 = vmul.f32 %v2581, %v2817
        %v2832 = vmul.f32 %v2582, %v2817
        %v2833 = vmul.f32 %v2583, %v2817
        %v2834 = vmul.f32 %v2584, %v2817
        %v2835 = vmul.f32 %v2585, %v2817
        %v2836 = vmul.f32 %v2586, %v2817
        %v2837 = vmul.f32 %v2587, %v2817
        %v2838 = vmul.f32 %v2588, %v2817
        %v2839 = vmul.f32 %v2589, %v2817
        %v2840 = vmul.f32 %v2590, %v2817
        %v2841 = vmul.f32 %v2591, %v2817
        %v2842 = vmul.f32 %v2592, %v2817
        %v2843 = vmul.f32 %v2593, %v2817
        %v2844 = vmul.f32 %v2594, %v2817
        %v2845 = vmul.f32 %v2595, %v2817
        %v2846 = vmul.f32 %v2596, %v2817
        %v2847 = vmul.f32 %v2597, %v2817
        %v2848 = vmul.f32 %v2598, %v2817
        %v2849 = vmul.f32 %v2599, %v2817
        %v2850 = vmul.f32 %v2600, %v2817
        %v2851 = vmul.f32 %v2601, %v2817
        %v2852 = vmul.f32 %v2602, %v2817
        %v2853 = vmul.f32 %v2603, %v2817
        %v2854 = vmul.f32 %v2604, %v2817
        %v2855 = vmul.f32 %v2605, %v2817
        %v2856 = vmul.f32 %v2606, %v2817
        %v2857 = vmul.f32 %v2607, %v2817
        %v2858 = vmul.f32 %v2608, %v2817
        %v2859 = vmul.f32 %v2609, %v2817
        %v2860 = vmul.f32 %v2610, %v2817
        %v2861 = vmul.f32 %v2611, %v2817
        %v2862 = vmul.f32 %v2612, %v2817
        %v2863 = vmul.f32 %v2613, %v2817
        %v2864 = vmul.f32 %v2614, %v2817
        %v2865 = vmul.f32 %v2615, %v2817
        %v2866 = vadd.f32 %v2765, %v2818
        %v2867 = vadd.f32 %v2766, %v2819
        %v2868 = vadd.f32 %v2767, %v2820
        %v2869 = vadd.f32 %v2768, %v2821
        %v2870 = vadd.f32 %v2769, %v2822
        %v2871 = vadd.f32 %v2770, %v2823
        %v2872 = vadd.f32 %v2771, %v2824
        %v2873 = vadd.f32 %v2772, %v2825
        %v2874 = vadd.f32 %v2773, %v2826
        %v2875 = vadd.f32 %v2774, %v2827
        %v2876 = vadd.f32 %v2775, %v2828
        %v2877 = vadd.f32 %v2776, %v2829
        %v2878 = vadd.f32 %v2777, %v2830
        %v2879 = vadd.f32 %v2778, %v2831
        %v2880 = vadd.f32 %v2779, %v2832
        %v2881 = vadd.f32 %v2780, %v2833
        %v2882 = vadd.f32 %v2781, %v2834
        %v2883 = vadd.f32 %v2782, %v2835
        %v2884 = vadd.f32 %v2783, %v2836
        %v2885 = vadd.f32 %v2784, %v2837
        %v2886 = vadd.f32 %v2785, %v2838
        %v2887 = vadd.f32 %v2786, %v2839
        %v2888 = vadd.f32 %v2787, %v2840
        %v2889 = vadd.f32 %v2788, %v2841
        %v2890 = vadd.f32 %v2789, %v2842
        %v2891 = vadd.f32 %v2790, %v2843
        %v2892 = vadd.f32 %v2791, %v2844
        %v2893 = vadd.f32 %v2792, %v2845
        %v2894 = vadd.f32 %v2793, %v2846
        %v2895 = vadd.f32 %v2794, %v2847
        %v2896 = vadd.f32 %v2795, %v2848
        %v2897 = vadd.f32 %v2796, %v2849
        %v2898 = vadd.f32 %v2797, %v2850
        %v2899 = vadd.f32 %v2798, %v2851
        %v2900 = vadd.f32 %v2799, %v2852
        %v2901 = vadd.f32 %v2800, %v2853
        %v2902 = vadd.f32 %v2801, %v2854
        %v2903 = vadd.f32 %v2802, %v2855
        %v2904 = vadd.f32 %v2803, %v2856
        %v2905 = vadd.f32 %v2804, %v2857
        %v2906 = vadd.f32 %v2805, %v2858
        %v2907 = vadd.f32 %v2806, %v2859
        %v2908 = vadd.f32 %v2807, %v2860
        %v2909 = vadd.f32 %v2808, %v2861
        %v2910 = vadd.f32 %v2809, %v2862
        %v2911 = vadd.f32 %v2810, %v2863
        %v2912 = vadd.f32 %v2811, %v2864
        %v2913 = vadd.f32 %v2812, %v2865
        %v2914 = vrot.slane %v2568, 1
        %v2915 = vrot.slane %v2569, 1
        %v2916 = vrot.slane %v2570, 1
        %v2917 = vrot.slane %v2571, 1
        %v2918 = vrot.slane %v2572, 1
        %v2919 = vrot.slane %v2573, 1
        %v2920 = vrot.slane %v2574, 1
        %v2921 = vrot.slane %v2575, 1
        %v2922 = vrot.slane %v2576, 1
        %v2923 = vrot.slane %v2577, 1
        %v2924 = vrot.slane %v2578, 1
        %v2925 = vrot.slane %v2579, 1
        %v2926 = vrot.slane %v2580, 1
        %v2927 = vrot.slane %v2581, 1
        %v2928 = vrot.slane %v2582, 1
        %v2929 = vrot.slane %v2583, 1
        %v2930 = vrot.slane %v2584, 1
        %v2931 = vrot.slane %v2585, 1
        %v2932 = vrot.slane %v2586, 1
        %v2933 = vrot.slane %v2587, 1
        %v2934 = vrot.slane %v2588, 1
        %v2935 = vrot.slane %v2589, 1
        %v2936 = vrot.slane %v2590, 1
        %v2937 = vrot.slane %v2591, 1
        %v2938 = vrot.slane %v2592, 1
        %v2939 = vrot.slane %v2593, 1
        %v2940 = vrot.slane %v2594, 1
        %v2941 = vrot.slane %v2595, 1
        %v2942 = vrot.slane %v2596, 1
        %v2943 = vrot.slane %v2597, 1
        %v2944 = vrot.slane %v2598, 1
        %v2945 = vrot.slane %v2599, 1
        %v2946 = vrot.slane %v2600, 1
        %v2947 = vrot.slane %v2601, 1
        %v2948 = vrot.slane %v2602, 1
        %v2949 = vrot.slane %v2603, 1
        %v2950 = vrot.slane %v2604, 1
        %v2951 = vrot.slane %v2605, 1
        %v2952 = vrot.slane %v2606, 1
        %v2953 = vrot.slane %v2607, 1
        %v2954 = vrot.slane %v2608, 1
        %v2955 = vrot.slane %v2609, 1
        %v2956 = vrot.slane %v2610, 1
        %v2957 = vrot.slane %v2611, 1
        %v2958 = vrot.slane %v2612, 1
        %v2959 = vrot.slane %v2613, 1
        %v2960 = vrot.slane %v2614, 1
        %v2961 = vrot.slane %v2615, 1
        %v2962 = vsel %vm1875, %v2960, %v2961
        %v2963 = vsel %vm1875, %v2959, %v2960
        %v2964 = vsel %vm1875, %v2958, %v2959
        %v2965 = vsel %vm1875, %v2957, %v2958
        %v2966 = vsel %vm1875, %v2956, %v2957
        %v2967 = vsel %vm1875, %v2955, %v2956
        %v2968 = vsel %vm1875, %v2954, %v2955
        %v2969 = vsel %vm1875, %v2953, %v2954
        %v2970 = vsel %vm1875, %v2952, %v2953
        %v2971 = vsel %vm1875, %v2951, %v2952
        %v2972 = vsel %vm1875, %v2950, %v2951
        %v2973 = vsel %vm1875, %v2949, %v2950
        %v2974 = vsel %vm1875, %v2948, %v2949
        %v2975 = vsel %vm1875, %v2947, %v2948
        %v2976 = vsel %vm1875, %v2946, %v2947
        %v2977 = vsel %vm1875, %v2945, %v2946
        %v2978 = vsel %vm1875, %v2944, %v2945
        %v2979 = vsel %vm1875, %v2943, %v2944
        %v2980 = vsel %vm1875, %v2942, %v2943
        %v2981 = vsel %vm1875, %v2941, %v2942
        %v2982 = vsel %vm1875, %v2940, %v2941
        %v2983 = vsel %vm1875, %v2939, %v2940
        %v2984 = vsel %vm1875, %v2938, %v2939
        %v2985 = vsel %vm1875, %v2937, %v2938
        %v2986 = vsel %vm1875, %v2936, %v2937
        %v2987 = vsel %vm1875, %v2935, %v2936
        %v2988 = vsel %vm1875, %v2934, %v2935
        %v2989 = vsel %vm1875, %v2933, %v2934
        %v2990 = vsel %vm1875, %v2932, %v2933
        %v2991 = vsel %vm1875, %v2931, %v2932
        %v2992 = vsel %vm1875, %v2930, %v2931
        %v2993 = vsel %vm1875, %v2929, %v2930
        %v2994 = vsel %vm1875, %v2928, %v2929
        %v2995 = vsel %vm1875, %v2927, %v2928
        %v2996 = vsel %vm1875, %v2926, %v2927
        %v2997 = vsel %vm1875, %v2925, %v2926
        %v2998 = vsel %vm1875, %v2924, %v2925
        %v2999 = vsel %vm1875, %v2923, %v2924
        %v3000 = vsel %vm1875, %v2922, %v2923
        %v3001 = vsel %vm1875, %v2921, %v2922
        %v3002 = vsel %vm1875, %v2920, %v2921
        %v3003 = vsel %vm1875, %v2919, %v2920
        %v3004 = vsel %vm1875, %v2918, %v2919
        %v3005 = vsel %vm1875, %v2917, %v2918
        %v3006 = vsel %vm1875, %v2916, %v2917
        %v3007 = vsel %vm1875, %v2915, %v2916
        %v3008 = vsel %vm1875, %v2914, %v2915
        %v3009 = vsel %vm1875, %v2961, %v2914
        %v3010 = vld [vmem:[%s2 + $0x8] sm:$0x1]
        %v3011 = vlaneseq
        %v3012 = vshrl.u32 %v3011, 7
        %v3013 = vsub.s32 0, %v3012
        %v3014 = vrot.slane %v3010, %v3013
        %v3015 = vmul.f32 %v3008, %v3014
        %v3016 = vmul.f32 %v3007, %v3014
        %v3017 = vmul.f32 %v3006, %v3014
        %v3018 = vmul.f32 %v3005, %v3014
        %v3019 = vmul.f32 %v3004, %v3014
        %v3020 = vmul.f32 %v3003, %v3014
        %v3021 = vmul.f32 %v3002, %v3014
        %v3022 = vmul.f32 %v3001, %v3014
        %v3023 = vmul.f32 %v3000, %v3014
        %v3024 = vmul.f32 %v2999, %v3014
        %v3025 = vmul.f32 %v2998, %v3014
        %v3026 = vmul.f32 %v2997, %v3014
        %v3027 = vmul.f32 %v2996, %v3014
        %v3028 = vmul.f32 %v2995, %v3014
        %v3029 = vmul.f32 %v2994, %v3014
        %v3030 = vmul.f32 %v2993, %v3014
        %v3031 = vmul.f32 %v2992, %v3014
        %v3032 = vmul.f32 %v2991, %v3014
        %v3033 = vmul.f32 %v2990, %v3014
        %v3034 = vmul.f32 %v2989, %v3014
        %v3035 = vmul.f32 %v2988, %v3014
        %v3036 = vmul.f32 %v2987, %v3014
        %v3037 = vmul.f32 %v2986, %v3014
        %v3038 = vmul.f32 %v2985, %v3014
        %v3039 = vmul.f32 %v2984, %v3014
        %v3040 = vmul.f32 %v2983, %v3014
        %v3041 = vmul.f32 %v2982, %v3014
        %v3042 = vmul.f32 %v2981, %v3014
        %v3043 = vmul.f32 %v2980, %v3014
        %v3044 = vmul.f32 %v2979, %v3014
        %v3045 = vmul.f32 %v2978, %v3014
        %v3046 = vmul.f32 %v2977, %v3014
        %v3047 = vmul.f32 %v2976, %v3014
        %v3048 = vmul.f32 %v2975, %v3014
        %v3049 = vmul.f32 %v2974, %v3014
        %v3050 = vmul.f32 %v2973, %v3014
        %v3051 = vmul.f32 %v2972, %v3014
        %v3052 = vmul.f32 %v2971, %v3014
        %v3053 = vmul.f32 %v2970, %v3014
        %v3054 = vmul.f32 %v2969, %v3014
        %v3055 = vmul.f32 %v2968, %v3014
        %v3056 = vmul.f32 %v2967, %v3014
        %v3057 = vmul.f32 %v2966, %v3014
        %v3058 = vmul.f32 %v2965, %v3014
        %v3059 = vmul.f32 %v2964, %v3014
        %v3060 = vmul.f32 %v2963, %v3014
        %v3061 = vmul.f32 %v2962, %v3014
        %v3062 = vmul.f32 %v3009, %v3014
        %v3063 = vadd.f32 %v2866, %v3015
        %v3064 = vadd.f32 %v2867, %v3016
        %v3065 = vadd.f32 %v2868, %v3017
        %v3066 = vadd.f32 %v2869, %v3018
        %v3067 = vadd.f32 %v2870, %v3019
        %v3068 = vadd.f32 %v2871, %v3020
        %v3069 = vadd.f32 %v2872, %v3021
        %v3070 = vadd.f32 %v2873, %v3022
        %v3071 = vadd.f32 %v2874, %v3023
        %v3072 = vadd.f32 %v2875, %v3024
        %v3073 = vadd.f32 %v2876, %v3025
        %v3074 = vadd.f32 %v2877, %v3026
        %v3075 = vadd.f32 %v2878, %v3027
        %v3076 = vadd.f32 %v2879, %v3028
        %v3077 = vadd.f32 %v2880, %v3029
        %v3078 = vadd.f32 %v2881, %v3030
        %v3079 = vadd.f32 %v2882, %v3031
        %v3080 = vadd.f32 %v2883, %v3032
        %v3081 = vadd.f32 %v2884, %v3033
        %v3082 = vadd.f32 %v2885, %v3034
        %v3083 = vadd.f32 %v2886, %v3035
        %v3084 = vadd.f32 %v2887, %v3036
        %v3085 = vadd.f32 %v2888, %v3037
        %v3086 = vadd.f32 %v2889, %v3038
        %v3087 = vadd.f32 %v2890, %v3039
        %v3088 = vadd.f32 %v2891, %v3040
        %v3089 = vadd.f32 %v2892, %v3041
        %v3090 = vadd.f32 %v2893, %v3042
        %v3091 = vadd.f32 %v2894, %v3043
        %v3092 = vadd.f32 %v2895, %v3044
        %v3093 = vadd.f32 %v2896, %v3045
        %v3094 = vadd.f32 %v2897, %v3046
        %v3095 = vadd.f32 %v2898, %v3047
        %v3096 = vadd.f32 %v2899, %v3048
        %v3097 = vadd.f32 %v2900, %v3049
        %v3098 = vadd.f32 %v2901, %v3050
        %v3099 = vadd.f32 %v2902, %v3051
        %v3100 = vadd.f32 %v2903, %v3052
        %v3101 = vadd.f32 %v2904, %v3053
        %v3102 = vadd.f32 %v2905, %v3054
        %v3103 = vadd.f32 %v2906, %v3055
        %v3104 = vadd.f32 %v2907, %v3056
        %v3105 = vadd.f32 %v2908, %v3057
        %v3106 = vadd.f32 %v2909, %v3058
        %v3107 = vadd.f32 %v2910, %v3059
        %v3108 = vadd.f32 %v2911, %v3060
        %v3109 = vadd.f32 %v2912, %v3061
        %v3110 = vadd.f32 %v2913, %v3062
        %v3111 = vlaneseq
        %v3112 = vshrl.u32 %v3111, 7
        %v3113 = vsub.s32 2, %v3112
        %v3114 = vrot.slane %v305, %v3113
        %v3115 = vmul.f32 %v3063, %v3114
        %v3116 = vmul.f32 %v3064, %v3114
        %v3117 = vmul.f32 %v3065, %v3114
        %v3118 = vmul.f32 %v3066, %v3114
        %v3119 = vmul.f32 %v3067, %v3114
        %v3120 = vmul.f32 %v3068, %v3114
        %v3121 = vmul.f32 %v3069, %v3114
        %v3122 = vmul.f32 %v3070, %v3114
        %v3123 = vmul.f32 %v3071, %v3114
        %v3124 = vmul.f32 %v3072, %v3114
        %v3125 = vmul.f32 %v3073, %v3114
        %v3126 = vmul.f32 %v3074, %v3114
        %v3127 = vmul.f32 %v3075, %v3114
        %v3128 = vmul.f32 %v3076, %v3114
        %v3129 = vmul.f32 %v3077, %v3114
        %v3130 = vmul.f32 %v3078, %v3114
        %v3131 = vmul.f32 %v3079, %v3114
        %v3132 = vmul.f32 %v3080, %v3114
        %v3133 = vmul.f32 %v3081, %v3114
        %v3134 = vmul.f32 %v3082, %v3114
        %v3135 = vmul.f32 %v3083, %v3114
        %v3136 = vmul.f32 %v3084, %v3114
        %v3137 = vmul.f32 %v3085, %v3114
        %v3138 = vmul.f32 %v3086, %v3114
        %v3139 = vmul.f32 %v3087, %v3114
        %v3140 = vmul.f32 %v3088, %v3114
        %v3141 = vmul.f32 %v3089, %v3114
        %v3142 = vmul.f32 %v3090, %v3114
        %v3143 = vmul.f32 %v3091, %v3114
        %v3144 = vmul.f32 %v3092, %v3114
        %v3145 = vmul.f32 %v3093, %v3114
        %v3146 = vmul.f32 %v3094, %v3114
        %v3147 = vmul.f32 %v3095, %v3114
        %v3148 = vmul.f32 %v3096, %v3114
        %v3149 = vmul.f32 %v3097, %v3114
        %v3150 = vmul.f32 %v3098, %v3114
        %v3151 = vmul.f32 %v3099, %v3114
        %v3152 = vmul.f32 %v3100, %v3114
        %v3153 = vmul.f32 %v3101, %v3114
        %v3154 = vmul.f32 %v3102, %v3114
        %v3155 = vmul.f32 %v3103, %v3114
        %v3156 = vmul.f32 %v3104, %v3114
        %v3157 = vmul.f32 %v3105, %v3114
        %v3158 = vmul.f32 %v3106, %v3114
        %v3159 = vmul.f32 %v3107, %v3114
        %v3160 = vmul.f32 %v3108, %v3114
        %v3161 = vmul.f32 %v3109, %v3114
        %v3162 = vmul.f32 %v3110, %v3114
        %v3163 = vlaneseq
        %v3164 = vshrl.u32 %v3163, 7
        %v3165 = vsub.s32 3, %v3164
        %v3166 = vrot.slane %v305, %v3165
        %v3167 = vadd.f32 %v3115, %v3166
        %v3168 = vadd.f32 %v3116, %v3166
        %v3169 = vadd.f32 %v3117, %v3166
        %v3170 = vadd.f32 %v3118, %v3166
        %v3171 = vadd.f32 %v3119, %v3166
        %v3172 = vadd.f32 %v3120, %v3166
        %v3173 = vadd.f32 %v3121, %v3166
        %v3174 = vadd.f32 %v3122, %v3166
        %v3175 = vadd.f32 %v3123, %v3166
        %v3176 = vadd.f32 %v3124, %v3166
        %v3177 = vadd.f32 %v3125, %v3166
        %v3178 = vadd.f32 %v3126, %v3166
        %v3179 = vadd.f32 %v3127, %v3166
        %v3180 = vadd.f32 %v3128, %v3166
        %v3181 = vadd.f32 %v3129, %v3166
        %v3182 = vadd.f32 %v3130, %v3166
        %v3183 = vadd.f32 %v3131, %v3166
        %v3184 = vadd.f32 %v3132, %v3166
        %v3185 = vadd.f32 %v3133, %v3166
        %v3186 = vadd.f32 %v3134, %v3166
        %v3187 = vadd.f32 %v3135, %v3166
        %v3188 = vadd.f32 %v3136, %v3166
        %v3189 = vadd.f32 %v3137, %v3166
        %v3190 = vadd.f32 %v3138, %v3166
        %v3191 = vadd.f32 %v3139, %v3166
        %v3192 = vadd.f32 %v3140, %v3166
        %v3193 = vadd.f32 %v3141, %v3166
        %v3194 = vadd.f32 %v3142, %v3166
        %v3195 = vadd.f32 %v3143, %v3166
        %v3196 = vadd.f32 %v3144, %v3166
        %v3197 = vadd.f32 %v3145, %v3166
        %v3198 = vadd.f32 %v3146, %v3166
        %v3199 = vadd.f32 %v3147, %v3166
        %v3200 = vadd.f32 %v3148, %v3166
        %v3201 = vadd.f32 %v3149, %v3166
        %v3202 = vadd.f32 %v3150, %v3166
        %v3203 = vadd.f32 %v3151, %v3166
        %v3204 = vadd.f32 %v3152, %v3166
        %v3205 = vadd.f32 %v3153, %v3166
        %v3206 = vadd.f32 %v3154, %v3166
        %v3207 = vadd.f32 %v3155, %v3166
        %v3208 = vadd.f32 %v3156, %v3166
        %v3209 = vadd.f32 %v3157, %v3166
        %v3210 = vadd.f32 %v3158, %v3166
        %v3211 = vadd.f32 %v3159, %v3166
        %v3212 = vadd.f32 %v3160, %v3166
        %v3213 = vadd.f32 %v3161, %v3166
        %v3214 = vadd.f32 %v3162, %v3166
        %v3215 = vmax.f32 %v3167, 0.0
        %v3216 = vmax.f32 %v3168, 0.0
        %v3217 = vmax.f32 %v3169, 0.0
        %v3218 = vmax.f32 %v3170, 0.0
        %v3219 = vmax.f32 %v3171, 0.0
        %v3220 = vmax.f32 %v3172, 0.0
        %v3221 = vmax.f32 %v3173, 0.0
        %v3222 = vmax.f32 %v3174, 0.0
        %v3223 = vmax.f32 %v3175, 0.0
        %v3224 = vmax.f32 %v3176, 0.0
        %v3225 = vmax.f32 %v3177, 0.0
        %v3226 = vmax.f32 %v3178, 0.0
        %v3227 = vmax.f32 %v3179, 0.0
        %v3228 = vmax.f32 %v3180, 0.0
        %v3229 = vmax.f32 %v3181, 0.0
        %v3230 = vmax.f32 %v3182, 0.0
        %v3231 = vmax.f32 %v3183, 0.0
        %v3232 = vmax.f32 %v3184, 0.0
        %v3233 = vmax.f32 %v3185, 0.0
        %v3234 = vmax.f32 %v3186, 0.0
        %v3235 = vmax.f32 %v3187, 0.0
        %v3236 = vmax.f32 %v3188, 0.0
        %v3237 = vmax.f32 %v3189, 0.0
        %v3238 = vmax.f32 %v3190, 0.0
        %v3239 = vmax.f32 %v3191, 0.0
        %v3240 = vmax.f32 %v3192, 0.0
        %v3241 = vmax.f32 %v3193, 0.0
        %v3242 = vmax.f32 %v3194, 0.0
        %v3243 = vmax.f32 %v3195, 0.0
        %v3244 = vmax.f32 %v3196, 0.0
        %v3245 = vmax.f32 %v3197, 0.0
        %v3246 = vmax.f32 %v3198, 0.0
        %v3247 = vmax.f32 %v3199, 0.0
        %v3248 = vmax.f32 %v3200, 0.0
        %v3249 = vmax.f32 %v3201, 0.0
        %v3250 = vmax.f32 %v3202, 0.0
        %v3251 = vmax.f32 %v3203, 0.0
        %v3252 = vmax.f32 %v3204, 0.0
        %v3253 = vmax.f32 %v3205, 0.0
        %v3254 = vmax.f32 %v3206, 0.0
        %v3255 = vmax.f32 %v3207, 0.0
        %v3256 = vmax.f32 %v3208, 0.0
        %v3257 = vmax.f32 %v3209, 0.0
        %v3258 = vmax.f32 %v3210, 0.0
        %v3259 = vmax.f32 %v3211, 0.0
        %v3260 = vmax.f32 %v3212, 0.0
        %v3261 = vmax.f32 %v3213, 0.0
        %v3262 = vmax.f32 %v3214, 0.0
        %v3263 = vmin.f32 %v3215, 6.0
        %v3264 = vmin.f32 %v3216, 6.0
        %v3265 = vmin.f32 %v3217, 6.0
        %v3266 = vmin.f32 %v3218, 6.0
        %v3267 = vmin.f32 %v3219, 6.0
        %v3268 = vmin.f32 %v3220, 6.0
        %v3269 = vmin.f32 %v3221, 6.0
        %v3270 = vmin.f32 %v3222, 6.0
        %v3271 = vmin.f32 %v3223, 6.0
        %v3272 = vmin.f32 %v3224, 6.0
        %v3273 = vmin.f32 %v3225, 6.0
        %v3274 = vmin.f32 %v3226, 6.0
        %v3275 = vmin.f32 %v3227, 6.0
        %v3276 = vmin.f32 %v3228, 6.0
        %v3277 = vmin.f32 %v3229, 6.0
        %v3278 = vmin.f32 %v3230, 6.0
        %v3279 = vmin.f32 %v3231, 6.0
        %v3280 = vmin.f32 %v3232, 6.0
        %v3281 = vmin.f32 %v3233, 6.0
        %v3282 = vmin.f32 %v3234, 6.0
        %v3283 = vmin.f32 %v3235, 6.0
        %v3284 = vmin.f32 %v3236, 6.0
        %v3285 = vmin.f32 %v3237, 6.0
        %v3286 = vmin.f32 %v3238, 6.0
        %v3287 = vmin.f32 %v3239, 6.0
        %v3288 = vmin.f32 %v3240, 6.0
        %v3289 = vmin.f32 %v3241, 6.0
        %v3290 = vmin.f32 %v3242, 6.0
        %v3291 = vmin.f32 %v3243, 6.0
        %v3292 = vmin.f32 %v3244, 6.0
        %v3293 = vmin.f32 %v3245, 6.0
        %v3294 = vmin.f32 %v3246, 6.0
        %v3295 = vmin.f32 %v3247, 6.0
        %v3296 = vmin.f32 %v3248, 6.0
        %v3297 = vmin.f32 %v3249, 6.0
        %v3298 = vmin.f32 %v3250, 6.0
        %v3299 = vmin.f32 %v3251, 6.0
        %v3300 = vmin.f32 %v3252, 6.0
        %v3301 = vmin.f32 %v3253, 6.0
        %v3302 = vmin.f32 %v3254, 6.0
        %v3303 = vmin.f32 %v3255, 6.0
        %v3304 = vmin.f32 %v3256, 6.0
        %v3305 = vmin.f32 %v3257, 6.0
        %v3306 = vmin.f32 %v3258, 6.0
        %v3307 = vmin.f32 %v3259, 6.0
        %v3308 = vmin.f32 %v3260, 6.0
        %v3309 = vmin.f32 %v3261, 6.0
        %v3310 = vmin.f32 %v3262, 6.0
        %v3311 = vmul.f32 %v3263, %v1083
        %v3312 = vmul.f32 %v3264, %v1088
        %v3313 = vmul.f32 %v3265, %v1093
        %v3314 = vmul.f32 %v3266, %v1098
        %v3315 = vmul.f32 %v3267, %v1103
        %v3316 = vmul.f32 %v3268, %v1108
        %v3317 = vmul.f32 %v3269, %v1113
        %v3318 = vmul.f32 %v3270, %v1118
        %v3319 = vmul.f32 %v3271, %v1123
        %v3320 = vmul.f32 %v3272, %v1128
        %v3321 = vmul.f32 %v3273, %v1133
        %v3322 = vmul.f32 %v3274, %v1138
        %v3323 = vmul.f32 %v3275, %v1143
        %v3324 = vmul.f32 %v3276, %v1148
        %v3325 = vmul.f32 %v3277, %v1153
        %v3326 = vmul.f32 %v3278, %v1158
        %v3327 = vmul.f32 %v3279, %v1163
        %v3328 = vmul.f32 %v3280, %v1168
        %v3329 = vmul.f32 %v3281, %v1173
        %v3330 = vmul.f32 %v3282, %v1178
        %v3331 = vmul.f32 %v3283, %v1183
        %v3332 = vmul.f32 %v3284, %v1188
        %v3333 = vmul.f32 %v3285, %v1193
        %v3334 = vmul.f32 %v3286, %v1198
        %v3335 = vmul.f32 %v3287, %v1203
        %v3336 = vmul.f32 %v3288, %v1208
        %v3337 = vmul.f32 %v3289, %v1213
        %v3338 = vmul.f32 %v3290, %v1218
        %v3339 = vmul.f32 %v3291, %v1223
        %v3340 = vmul.f32 %v3292, %v1228
        %v3341 = vmul.f32 %v3293, %v1233
        %v3342 = vmul.f32 %v3294, %v1238
        %v3343 = vmul.f32 %v3295, %v1243
        %v3344 = vmul.f32 %v3296, %v1248
        %v3345 = vmul.f32 %v3297, %v1253
        %v3346 = vmul.f32 %v3298, %v1258
        %v3347 = vmul.f32 %v3299, %v1263
        %v3348 = vmul.f32 %v3300, %v1268
        %v3349 = vmul.f32 %v3301, %v1273
        %v3350 = vmul.f32 %v3302, %v1278
        %v3351 = vmul.f32 %v3303, %v1283
        %v3352 = vmul.f32 %v3304, %v1288
        %v3353 = vmul.f32 %v3305, %v1293
        %v3354 = vmul.f32 %v3306, %v1298
        %v3355 = vmul.f32 %v3307, %v1303
        %v3356 = vmul.f32 %v3308, %v1308
        %v3357 = vmul.f32 %v3309, %v1313
        %v3358 = vmul.f32 %v3310, %v1318
        %3359 = vst [vmem:[#allocation2 + $0x18] sm:$0xff] %v3311
        %3360 = vst [vmem:[#allocation2 + $0x20] sm:$0xff] %v3312
        %3361 = vst [vmem:[#allocation2 + $0x28] sm:$0xff] %v3313
        %3362 = vst [vmem:[#allocation2 + $0x30] sm:$0xff] %v3314
        %3363 = vst [vmem:[#allocation2 + $0x38] sm:$0xff] %v3315
        %3364 = vst [vmem:[#allocation2 + $0x40] sm:$0xff] %v3316
        %3365 = vst [vmem:[#allocation2 + $0x48] sm:$0xff] %v3317
        %3366 = vst [vmem:[#allocation2 + $0x50] sm:$0xff] %v3318
        %3367 = vst [vmem:[#allocation2 + $0x58] sm:$0xff] %v3319
        %3368 = vst [vmem:[#allocation2 + $0x60] sm:$0xff] %v3320
        %3369 = vst [vmem:[#allocation2 + $0x68] sm:$0xff] %v3321
        %3370 = vst [vmem:[#allocation2 + $0x70] sm:$0xff] %v3322
        %3371 = vst [vmem:[#allocation2 + $0x78] sm:$0xff] %v3323
        %3372 = vst [vmem:[#allocation2 + $0x80] sm:$0xff] %v3324
        %3373 = vst [vmem:[#allocation2 + $0x88] sm:$0xff] %v3325
        %3374 = vst [vmem:[#allocation2 + $0x90] sm:$0xff] %v3326
        %3375 = vst [vmem:[#allocation2 + $0x98] sm:$0xff] %v3327
        %3376 = vst [vmem:[#allocation2 + $0xa0] sm:$0xff] %v3328
        %3377 = vst [vmem:[#allocation2 + $0xa8] sm:$0xff] %v3329
        %3378 = vst [vmem:[#allocation2 + $0xb0] sm:$0xff] %v3330
        %3379 = vst [vmem:[#allocation2 + $0xb8] sm:$0xff] %v3331
        %3380 = vst [vmem:[#allocation2 + $0xc0] sm:$0xff] %v3332
        %3381 = vst [vmem:[#allocation2 + $0xc8] sm:$0xff] %v3333
        %3382 = vst [vmem:[#allocation2 + $0xd0] sm:$0xff] %v3334
        %3383 = vst [vmem:[#allocation2 + $0xd8] sm:$0xff] %v3335
        %3384 = vst [vmem:[#allocation2 + $0xe0] sm:$0xff] %v3336
        %3385 = vst [vmem:[#allocation2 + $0xe8] sm:$0xff] %v3337
        %3386 = vst [vmem:[#allocation2 + $0xf0] sm:$0xff] %v3338
        %3387 = vst [vmem:[#allocation2 + $0xf8] sm:$0xff] %v3339
        %3388 = vst [vmem:[#allocation2 + $0x100] sm:$0xff] %v3340
        %3389 = vst [vmem:[#allocation2 + $0x108] sm:$0xff] %v3341
        %3390 = vst [vmem:[#allocation2 + $0x110] sm:$0xff] %v3342
        %3391 = vst [vmem:[#allocation2 + $0x118] sm:$0xff] %v3343
        %3392 = vst [vmem:[#allocation2 + $0x120] sm:$0xff] %v3344
        %3393 = vst [vmem:[#allocation2 + $0x128] sm:$0xff] %v3345
        %3394 = vst [vmem:[#allocation2 + $0x130] sm:$0xff] %v3346
        %3395 = vst [vmem:[#allocation2 + $0x138] sm:$0xff] %v3347
        %3396 = vst [vmem:[#allocation2 + $0x140] sm:$0xff] %v3348
        %3397 = vst [vmem:[#allocation2 + $0x148] sm:$0xff] %v3349
        %3398 = vst [vmem:[#allocation2 + $0x150] sm:$0xff] %v3350
        %3399 = vst [vmem:[#allocation2 + $0x158] sm:$0xff] %v3351
        %3400 = vst [vmem:[#allocation2 + $0x160] sm:$0xff] %v3352
        %3401 = vst [vmem:[#allocation2 + $0x168] sm:$0xff] %v3353
        %3402 = vst [vmem:[#allocation2 + $0x170] sm:$0xff] %v3354
        %3403 = vst [vmem:[#allocation2 + $0x178] sm:$0xff] %v3355
        %3404 = vst [vmem:[#allocation2 + $0x180] sm:$0xff] %v3356
        %3405 = vst [vmem:[#allocation2 + $0x188] sm:$0xff] %v3357
        %3406 = vst [vmem:[#allocation2 + $0x190] sm:$0xff] %v3358
        %v3407 = vld [vmem:[#allocation2] sm:$0xff]
        %v3408 = vld [vmem:[#allocation2 + $0x8] sm:$0xff]
        %v3409 = vld [vmem:[#allocation2 + $0x10] sm:$0xff]
        %v3410 = vld [vmem:[#allocation2 + $0x18] sm:$0xff]
        %v3411 = vld [vmem:[#allocation2 + $0x20] sm:$0xff]
        %v3412 = vld [vmem:[#allocation2 + $0x28] sm:$0xff]
        %v3413 = vld [vmem:[#allocation2 + $0x30] sm:$0xff]
        %v3414 = vld [vmem:[#allocation2 + $0x38] sm:$0xff]
        %v3415 = vld [vmem:[#allocation2 + $0x40] sm:$0xff]
        %v3416 = vld [vmem:[#allocation2 + $0x48] sm:$0xff]
        %v3417 = vld [vmem:[#allocation2 + $0x50] sm:$0xff]
        %v3418 = vld [vmem:[#allocation2 + $0x58] sm:$0xff]
        %v3419 = vld [vmem:[#allocation2 + $0x60] sm:$0xff]
        %v3420 = vld [vmem:[#allocation2 + $0x68] sm:$0xff]
        %v3421 = vld [vmem:[#allocation2 + $0x70] sm:$0xff]
        %v3422 = vld [vmem:[#allocation2 + $0x78] sm:$0xff]
        %v3423 = vld [vmem:[#allocation2 + $0x80] sm:$0xff]
        %v3424 = vld [vmem:[#allocation2 + $0x88] sm:$0xff]
        %v3425 = vld [vmem:[#allocation2 + $0x90] sm:$0xff]
        %v3426 = vld [vmem:[#allocation2 + $0x98] sm:$0xff]
        %v3427 = vld [vmem:[#allocation2 + $0xa0] sm:$0xff]
        %v3428 = vld [vmem:[#allocation2 + $0xa8] sm:$0xff]
        %v3429 = vld [vmem:[#allocation2 + $0xb0] sm:$0xff]
        %v3430 = vld [vmem:[#allocation2 + $0xb8] sm:$0xff]
        %v3431 = vld [vmem:[#allocation2 + $0xc0] sm:$0xff]
        %v3432 = vld [vmem:[#allocation2 + $0xc8] sm:$0xff]
        %v3433 = vld [vmem:[#allocation2 + $0xd0] sm:$0xff]
        %v3434 = vld [vmem:[#allocation2 + $0xd8] sm:$0xff]
        %v3435 = vld [vmem:[#allocation2 + $0xe0] sm:$0xff]
        %v3436 = vld [vmem:[#allocation2 + $0xe8] sm:$0xff]
        %v3437 = vld [vmem:[#allocation2 + $0xf0] sm:$0xff]
        %v3438 = vld [vmem:[#allocation2 + $0xf8] sm:$0xff]
        %v3439 = vld [vmem:[#allocation2 + $0x100] sm:$0xff]
        %v3440 = vld [vmem:[#allocation2 + $0x108] sm:$0xff]
        %v3441 = vld [vmem:[#allocation2 + $0x110] sm:$0xff]
        %v3442 = vld [vmem:[#allocation2 + $0x118] sm:$0xff]
        %v3443 = vld [vmem:[#allocation2 + $0x120] sm:$0xff]
        %v3444 = vld [vmem:[#allocation2 + $0x128] sm:$0xff]
        %v3445 = vld [vmem:[#allocation2 + $0x130] sm:$0xff]
        %v3446 = vld [vmem:[#allocation2 + $0x138] sm:$0xff]
        %v3447 = vld [vmem:[#allocation2 + $0x140] sm:$0xff]
        %v3448 = vld [vmem:[#allocation2 + $0x148] sm:$0xff]
        %v3449 = vld [vmem:[#allocation2 + $0x150] sm:$0xff]
        %v3450 = vld [vmem:[#allocation2 + $0x158] sm:$0xff]
        %v3451 = vld [vmem:[#allocation2 + $0x160] sm:$0xff]
        %v3452 = vld [vmem:[#allocation2 + $0x168] sm:$0xff]
        %v3453 = vld [vmem:[#allocation2 + $0x170] sm:$0xff]
        %v3454 = vld [vmem:[#allocation2 + $0x178] sm:$0xff]
        %v3455 = vrot.slane %v3407, 7
        %v3456 = vrot.slane %v3408, 7
        %v3457 = vrot.slane %v3409, 7
        %v3458 = vrot.slane %v3410, 7
        %v3459 = vrot.slane %v3411, 7
        %v3460 = vrot.slane %v3412, 7
        %v3461 = vrot.slane %v3413, 7
        %v3462 = vrot.slane %v3414, 7
        %v3463 = vrot.slane %v3415, 7
        %v3464 = vrot.slane %v3416, 7
        %v3465 = vrot.slane %v3417, 7
        %v3466 = vrot.slane %v3418, 7
        %v3467 = vrot.slane %v3419, 7
        %v3468 = vrot.slane %v3420, 7
        %v3469 = vrot.slane %v3421, 7
        %v3470 = vrot.slane %v3422, 7
        %v3471 = vrot.slane %v3423, 7
        %v3472 = vrot.slane %v3424, 7
        %v3473 = vrot.slane %v3425, 7
        %v3474 = vrot.slane %v3426, 7
        %v3475 = vrot.slane %v3427, 7
        %v3476 = vrot.slane %v3428, 7
        %v3477 = vrot.slane %v3429, 7
        %v3478 = vrot.slane %v3430, 7
        %v3479 = vrot.slane %v3431, 7
        %v3480 = vrot.slane %v3432, 7
        %v3481 = vrot.slane %v3433, 7
        %v3482 = vrot.slane %v3434, 7
        %v3483 = vrot.slane %v3435, 7
        %v3484 = vrot.slane %v3436, 7
        %v3485 = vrot.slane %v3437, 7
        %v3486 = vrot.slane %v3438, 7
        %v3487 = vrot.slane %v3439, 7
        %v3488 = vrot.slane %v3440, 7
        %v3489 = vrot.slane %v3441, 7
        %v3490 = vrot.slane %v3442, 7
        %v3491 = vrot.slane %v3443, 7
        %v3492 = vrot.slane %v3444, 7
        %v3493 = vrot.slane %v3445, 7
        %v3494 = vrot.slane %v3446, 7
        %v3495 = vrot.slane %v3447, 7
        %v3496 = vrot.slane %v3448, 7
        %v3497 = vrot.slane %v3449, 7
        %v3498 = vrot.slane %v3450, 7
        %v3499 = vrot.slane %v3451, 7
        %v3500 = vrot.slane %v3452, 7
        %v3501 = vrot.slane %v3453, 7
        %v3502 = vrot.slane %v3454, 7
        %v3503 = vsel %vm1624, %v3501, %v3502
        %v3504 = vsel %vm1624, %v3500, %v3501
        %v3505 = vsel %vm1624, %v3499, %v3500
        %v3506 = vsel %vm1624, %v3498, %v3499
        %v3507 = vsel %vm1624, %v3497, %v3498
        %v3508 = vsel %vm1624, %v3496, %v3497
        %v3509 = vsel %vm1624, %v3495, %v3496
        %v3510 = vsel %vm1624, %v3494, %v3495
        %v3511 = vsel %vm1624, %v3493, %v3494
        %v3512 = vsel %vm1624, %v3492, %v3493
        %v3513 = vsel %vm1624, %v3491, %v3492
        %v3514 = vsel %vm1624, %v3490, %v3491
        %v3515 = vsel %vm1624, %v3489, %v3490
        %v3516 = vsel %vm1624, %v3488, %v3489
        %v3517 = vsel %vm1624, %v3487, %v3488
        %v3518 = vsel %vm1624, %v3486, %v3487
        %v3519 = vsel %vm1624, %v3485, %v3486
        %v3520 = vsel %vm1624, %v3484, %v3485
        %v3521 = vsel %vm1624, %v3483, %v3484
        %v3522 = vsel %vm1624, %v3482, %v3483
        %v3523 = vsel %vm1624, %v3481, %v3482
        %v3524 = vsel %vm1624, %v3480, %v3481
        %v3525 = vsel %vm1624, %v3479, %v3480
        %v3526 = vsel %vm1624, %v3478, %v3479
        %v3527 = vsel %vm1624, %v3477, %v3478
        %v3528 = vsel %vm1624, %v3476, %v3477
        %v3529 = vsel %vm1624, %v3475, %v3476
        %v3530 = vsel %vm1624, %v3474, %v3475
        %v3531 = vsel %vm1624, %v3473, %v3474
        %v3532 = vsel %vm1624, %v3472, %v3473
        %v3533 = vsel %vm1624, %v3471, %v3472
        %v3534 = vsel %vm1624, %v3470, %v3471
        %v3535 = vsel %vm1624, %v3469, %v3470
        %v3536 = vsel %vm1624, %v3468, %v3469
        %v3537 = vsel %vm1624, %v3467, %v3468
        %v3538 = vsel %vm1624, %v3466, %v3467
        %v3539 = vsel %vm1624, %v3465, %v3466
        %v3540 = vsel %vm1624, %v3464, %v3465
        %v3541 = vsel %vm1624, %v3463, %v3464
        %v3542 = vsel %vm1624, %v3462, %v3463
        %v3543 = vsel %vm1624, %v3461, %v3462
        %v3544 = vsel %vm1624, %v3460, %v3461
        %v3545 = vsel %vm1624, %v3459, %v3460
        %v3546 = vsel %vm1624, %v3458, %v3459
        %v3547 = vsel %vm1624, %v3457, %v3458
        %v3548 = vsel %vm1624, %v3456, %v3457
        %v3549 = vsel %vm1624, %v3455, %v3456
        %v3550 = vsel %vm1624, %v3502, %v3455
        %v3551 = vpack.c.bf16 %v3549, %v3550
        %v3552 = vpack.c.bf16 %v3547, %v3548
        %v3553 = vpack.c.bf16 %v3545, %v3546
        %v3554 = vpack.c.bf16 %v3543, %v3544
        %v3555 = vpack.c.bf16 %v3541, %v3542
        %v3556 = vpack.c.bf16 %v3539, %v3540
        %v3557 = vpack.c.bf16 %v3537, %v3538
        %v3558 = vpack.c.bf16 %v3535, %v3536
        %v3559 = vpack.c.bf16 %v3533, %v3534
        %v3560 = vpack.c.bf16 %v3531, %v3532
        %v3561 = vpack.c.bf16 %v3529, %v3530
        %v3562 = vpack.c.bf16 %v3527, %v3528
        %v3563 = vpack.c.bf16 %v3525, %v3526
        %v3564 = vpack.c.bf16 %v3523, %v3524
        %v3565 = vpack.c.bf16 %v3521, %v3522
        %v3566 = vpack.c.bf16 %v3519, %v3520
        %v3567 = vpack.c.bf16 %v3517, %v3518
        %v3568 = vpack.c.bf16 %v3515, %v3516
        %v3569 = vpack.c.bf16 %v3513, %v3514
        %v3570 = vpack.c.bf16 %v3511, %v3512
        %v3571 = vpack.c.bf16 %v3509, %v3510
        %v3572 = vpack.c.bf16 %v3507, %v3508
        %v3573 = vpack.c.bf16 %v3505, %v3506
        %v3574 = vpack.c.bf16 %v3503, %v3504
        %v3575 = vpack.c.bf16 %v3408, %v3407
        %v3576 = vpack.c.bf16 %v3410, %v3409
        %v3577 = vpack.c.bf16 %v3412, %v3411
        %v3578 = vpack.c.bf16 %v3414, %v3413
        %v3579 = vpack.c.bf16 %v3416, %v3415
        %v3580 = vpack.c.bf16 %v3418, %v3417
        %v3581 = vpack.c.bf16 %v3420, %v3419
        %v3582 = vpack.c.bf16 %v3422, %v3421
        %v3583 = vpack.c.bf16 %v3424, %v3423
        %v3584 = vpack.c.bf16 %v3426, %v3425
        %v3585 = vpack.c.bf16 %v3428, %v3427
        %v3586 = vpack.c.bf16 %v3430, %v3429
        %v3587 = vpack.c.bf16 %v3432, %v3431
        %v3588 = vpack.c.bf16 %v3434, %v3433
        %v3589 = vpack.c.bf16 %v3436, %v3435
        %v3590 = vpack.c.bf16 %v3438, %v3437
        %v3591 = vpack.c.bf16 %v3440, %v3439
        %v3592 = vpack.c.bf16 %v3442, %v3441
        %v3593 = vpack.c.bf16 %v3444, %v3443
        %v3594 = vpack.c.bf16 %v3446, %v3445
        %v3595 = vpack.c.bf16 %v3448, %v3447
        %v3596 = vpack.c.bf16 %v3450, %v3449
        %v3597 = vpack.c.bf16 %v3452, %v3451
        %v3598 = vpack.c.bf16 %v3454, %v3453
        %v3599 = vrot.slane %v3407, 1
        %v3600 = vrot.slane %v3408, 1
        %v3601 = vrot.slane %v3409, 1
        %v3602 = vrot.slane %v3410, 1
        %v3603 = vrot.slane %v3411, 1
        %v3604 = vrot.slane %v3412, 1
        %v3605 = vrot.slane %v3413, 1
        %v3606 = vrot.slane %v3414, 1
        %v3607 = vrot.slane %v3415, 1
        %v3608 = vrot.slane %v3416, 1
        %v3609 = vrot.slane %v3417, 1
        %v3610 = vrot.slane %v3418, 1
        %v3611 = vrot.slane %v3419, 1
        %v3612 = vrot.slane %v3420, 1
        %v3613 = vrot.slane %v3421, 1
        %v3614 = vrot.slane %v3422, 1
        %v3615 = vrot.slane %v3423, 1
        %v3616 = vrot.slane %v3424, 1
        %v3617 = vrot.slane %v3425, 1
        %v3618 = vrot.slane %v3426, 1
        %v3619 = vrot.slane %v3427, 1
        %v3620 = vrot.slane %v3428, 1
        %v3621 = vrot.slane %v3429, 1
        %v3622 = vrot.slane %v3430, 1
        %v3623 = vrot.slane %v3431, 1
        %v3624 = vrot.slane %v3432, 1
        %v3625 = vrot.slane %v3433, 1
        %v3626 = vrot.slane %v3434, 1
        %v3627 = vrot.slane %v3435, 1
        %v3628 = vrot.slane %v3436, 1
        %v3629 = vrot.slane %v3437, 1
        %v3630 = vrot.slane %v3438, 1
        %v3631 = vrot.slane %v3439, 1
        %v3632 = vrot.slane %v3440, 1
        %v3633 = vrot.slane %v3441, 1
        %v3634 = vrot.slane %v3442, 1
        %v3635 = vrot.slane %v3443, 1
        %v3636 = vrot.slane %v3444, 1
        %v3637 = vrot.slane %v3445, 1
        %v3638 = vrot.slane %v3446, 1
        %v3639 = vrot.slane %v3447, 1
        %v3640 = vrot.slane %v3448, 1
        %v3641 = vrot.slane %v3449, 1
        %v3642 = vrot.slane %v3450, 1
        %v3643 = vrot.slane %v3451, 1
        %v3644 = vrot.slane %v3452, 1
        %v3645 = vrot.slane %v3453, 1
        %v3646 = vrot.slane %v3454, 1
        %v3647 = vsel %vm1875, %v3645, %v3646
        %v3648 = vsel %vm1875, %v3644, %v3645
        %v3649 = vsel %vm1875, %v3643, %v3644
        %v3650 = vsel %vm1875, %v3642, %v3643
        %v3651 = vsel %vm1875, %v3641, %v3642
        %v3652 = vsel %vm1875, %v3640, %v3641
        %v3653 = vsel %vm1875, %v3639, %v3640
        %v3654 = vsel %vm1875, %v3638, %v3639
        %v3655 = vsel %vm1875, %v3637, %v3638
        %v3656 = vsel %vm1875, %v3636, %v3637
        %v3657 = vsel %vm1875, %v3635, %v3636
        %v3658 = vsel %vm1875, %v3634, %v3635
        %v3659 = vsel %vm1875, %v3633, %v3634
        %v3660 = vsel %vm1875, %v3632, %v3633
        %v3661 = vsel %vm1875, %v3631, %v3632
        %v3662 = vsel %vm1875, %v3630, %v3631
        %v3663 = vsel %vm1875, %v3629, %v3630
        %v3664 = vsel %vm1875, %v3628, %v3629
        %v3665 = vsel %vm1875, %v3627, %v3628
        %v3666 = vsel %vm1875, %v3626, %v3627
        %v3667 = vsel %vm1875, %v3625, %v3626
        %v3668 = vsel %vm1875, %v3624, %v3625
        %v3669 = vsel %vm1875, %v3623, %v3624
        %v3670 = vsel %vm1875, %v3622, %v3623
        %v3671 = vsel %vm1875, %v3621, %v3622
        %v3672 = vsel %vm1875, %v3620, %v3621
        %v3673 = vsel %vm1875, %v3619, %v3620
        %v3674 = vsel %vm1875, %v3618, %v3619
        %v3675 = vsel %vm1875, %v3617, %v3618
        %v3676 = vsel %vm1875, %v3616, %v3617
        %v3677 = vsel %vm1875, %v3615, %v3616
        %v3678 = vsel %vm1875, %v3614, %v3615
        %v3679 = vsel %vm1875, %v3613, %v3614
        %v3680 = vsel %vm1875, %v3612, %v3613
        %v3681 = vsel %vm1875, %v3611, %v3612
        %v3682 = vsel %vm1875, %v3610, %v3611
        %v3683 = vsel %vm1875, %v3609, %v3610
        %v3684 = vsel %vm1875, %v3608, %v3609
        %v3685 = vsel %vm1875, %v3607, %v3608
        %v3686 = vsel %vm1875, %v3606, %v3607
        %v3687 = vsel %vm1875, %v3605, %v3606
        %v3688 = vsel %vm1875, %v3604, %v3605
        %v3689 = vsel %vm1875, %v3603, %v3604
        %v3690 = vsel %vm1875, %v3602, %v3603
        %v3691 = vsel %vm1875, %v3601, %v3602
        %v3692 = vsel %vm1875, %v3600, %v3601
        %v3693 = vsel %vm1875, %v3599, %v3600
        %v3694 = vsel %vm1875, %v3646, %v3599
        %v3695 = vpack.c.bf16 %v3692, %v3693
        %v3696 = vpack.c.bf16 %v3690, %v3691
        %v3697 = vpack.c.bf16 %v3688, %v3689
        %v3698 = vpack.c.bf16 %v3686, %v3687
        %v3699 = vpack.c.bf16 %v3684, %v3685
        %v3700 = vpack.c.bf16 %v3682, %v3683
        %v3701 = vpack.c.bf16 %v3680, %v3681
        %v3702 = vpack.c.bf16 %v3678, %v3679
        %v3703 = vpack.c.bf16 %v3676, %v3677
        %v3704 = vpack.c.bf16 %v3674, %v3675
        %v3705 = vpack.c.bf16 %v3672, %v3673
        %v3706 = vpack.c.bf16 %v3670, %v3671
        %v3707 = vpack.c.bf16 %v3668, %v3669
        %v3708 = vpack.c.bf16 %v3666, %v3667
        %v3709 = vpack.c.bf16 %v3664, %v3665
        %v3710 = vpack.c.bf16 %v3662, %v3663
        %v3711 = vpack.c.bf16 %v3660, %v3661
        %v3712 = vpack.c.bf16 %v3658, %v3659
        %v3713 = vpack.c.bf16 %v3656, %v3657
        %v3714 = vpack.c.bf16 %v3654, %v3655
        %v3715 = vpack.c.bf16 %v3652, %v3653
        %v3716 = vpack.c.bf16 %v3650, %v3651
        %v3717 = vpack.c.bf16 %v3648, %v3649
        %v3718 = vpack.c.bf16 %v3694, %v3647
        %v3719 = vld [vmem:[%s3] sm:$0xf]
        %v3720 = vld [vmem:[%s3 + $0x4] sm:$0xf]
        %v3721 = vld [vmem:[%s3 + $0x8] sm:$0xf]
        %v3722 = vld [vmem:[%s3 + $0xc] sm:$0xf]
        %v3723 = vld [vmem:[%s3 + $0x10] sm:$0xf]
        %v3724 = vld [vmem:[%s3 + $0x14] sm:$0xf]
        %v3725 = vld [vmem:[%s3 + $0x18] sm:$0xf]
        %v3726 = vld [vmem:[%s3 + $0x1c] sm:$0xf]
        %v3727 = vld [vmem:[%s3 + $0x20] sm:$0xf]
        %v3728 = vld [vmem:[%s3 + $0x24] sm:$0xf]
        %v3729 = vld [vmem:[%s3 + $0x28] sm:$0xf]
        %v3730 = vld [vmem:[%s3 + $0x2c] sm:$0xf]
        %v3731 = vld [vmem:[%s3 + $0x30] sm:$0xf]
        %v3732 = vld [vmem:[%s3 + $0x34] sm:$0xf]
        %v3733 = vld [vmem:[%s3 + $0x38] sm:$0xf]
        %v3734 = vld [vmem:[%s3 + $0x3c] sm:$0xf]
        %v3735 = vld [vmem:[%s3 + $0x40] sm:$0xf]
        %v3736 = vld [vmem:[%s3 + $0x44] sm:$0xf]
        %v3737 = vld [vmem:[%s3 + $0x48] sm:$0xf]
        %v3738 = vld [vmem:[%s3 + $0x4c] sm:$0xf]
        %v3739 = vld [vmem:[%s3 + $0x50] sm:$0xf]
        %v3740 = vld [vmem:[%s3 + $0x54] sm:$0xf]
        %v3741 = vld [vmem:[%s3 + $0x58] sm:$0xf]
        %v3742 = vld [vmem:[%s3 + $0x5c] sm:$0xf]
        %v3743 = vld [vmem:[%s3 + $0x60] sm:$0xf]
        %v3744 = vld [vmem:[%s3 + $0x64] sm:$0xf]
        %v3745 = vld [vmem:[%s3 + $0x68] sm:$0xf]
        %v3746 = vld [vmem:[%s3 + $0x6c] sm:$0xf]
        %v3747 = vld [vmem:[%s3 + $0x70] sm:$0xf]
        %v3748 = vld [vmem:[%s3 + $0x74] sm:$0xf]
        %v3749 = vld [vmem:[%s3 + $0x78] sm:$0xf]
        %v3750 = vld [vmem:[%s3 + $0x7c] sm:$0xf]
        %v3751 = vld [vmem:[%s3 + $0x80] sm:$0xf]
        %v3752 = vld [vmem:[%s3 + $0x84] sm:$0xf]
        %v3753 = vld [vmem:[%s3 + $0x88] sm:$0xf]
        %v3754 = vld [vmem:[%s3 + $0x8c] sm:$0xf]
        %v3755 = vld [vmem:[%s3 + $0x90] sm:$0xf]
        %v3756 = vld [vmem:[%s3 + $0x94] sm:$0xf]
        %v3757 = vld [vmem:[%s3 + $0x98] sm:$0xf]
        %v3758 = vld [vmem:[%s3 + $0x9c] sm:$0xf]
        %v3759 = vld [vmem:[%s3 + $0xa0] sm:$0xf]
        %v3760 = vld [vmem:[%s3 + $0xa4] sm:$0xf]
        %v3761 = vld [vmem:[%s3 + $0xa8] sm:$0xf]
        %v3762 = vld [vmem:[%s3 + $0xac] sm:$0xf]
        %v3763 = vld [vmem:[%s3 + $0xb0] sm:$0xf]
        %v3764 = vld [vmem:[%s3 + $0xb4] sm:$0xf]
        %v3765 = vld [vmem:[%s3 + $0xb8] sm:$0xf]
        %v3766 = vld [vmem:[%s3 + $0xbc] sm:$0xf]
        %v3767 = vld [vmem:[#allocation2 + $0x180] sm:$0xff]
        %v3768 = vld [vmem:[#allocation2 + $0x188] sm:$0xff]
        %v3769 = vld [vmem:[#allocation2 + $0x190] sm:$0xff]
        %v3770 = vrot.slane %v3767, 7
        %v3771 = vrot.slane %v3768, 7
        %v3772 = vrot.slane %v3769, 7
        %v3773 = vsel %vm1624, %v3771, %v3772
        %v3774 = vsel %vm1624, %v3770, %v3771
        %v3775 = vsel %vm1624, %v3502, %v3770
        %v3776 = vsel %vm1624, %v3772, %v3458
        %v3777 = vpack.c.bf16 %v3546, %v3776
        %v3778 = vpack.c.bf16 %v3544, %v3545
        %v3779 = vpack.c.bf16 %v3542, %v3543
        %v3780 = vpack.c.bf16 %v3540, %v3541
        %v3781 = vpack.c.bf16 %v3538, %v3539
        %v3782 = vpack.c.bf16 %v3536, %v3537
        %v3783 = vpack.c.bf16 %v3534, %v3535
        %v3784 = vpack.c.bf16 %v3532, %v3533
        %v3785 = vpack.c.bf16 %v3530, %v3531
        %v3786 = vpack.c.bf16 %v3528, %v3529
        %v3787 = vpack.c.bf16 %v3526, %v3527
        %v3788 = vpack.c.bf16 %v3524, %v3525
        %v3789 = vpack.c.bf16 %v3522, %v3523
        %v3790 = vpack.c.bf16 %v3520, %v3521
        %v3791 = vpack.c.bf16 %v3518, %v3519
        %v3792 = vpack.c.bf16 %v3516, %v3517
        %v3793 = vpack.c.bf16 %v3514, %v3515
        %v3794 = vpack.c.bf16 %v3512, %v3513
        %v3795 = vpack.c.bf16 %v3510, %v3511
        %v3796 = vpack.c.bf16 %v3508, %v3509
        %v3797 = vpack.c.bf16 %v3506, %v3507
        %v3798 = vpack.c.bf16 %v3504, %v3505
        %v3799 = vpack.c.bf16 %v3775, %v3503
        %v3800 = vpack.c.bf16 %v3773, %v3774
        %v3801 = vpack.c.bf16 %v3411, %v3410
        %v3802 = vpack.c.bf16 %v3413, %v3412
        %v3803 = vpack.c.bf16 %v3415, %v3414
        %v3804 = vpack.c.bf16 %v3417, %v3416
        %v3805 = vpack.c.bf16 %v3419, %v3418
        %v3806 = vpack.c.bf16 %v3421, %v3420
        %v3807 = vpack.c.bf16 %v3423, %v3422
        %v3808 = vpack.c.bf16 %v3425, %v3424
        %v3809 = vpack.c.bf16 %v3427, %v3426
        %v3810 = vpack.c.bf16 %v3429, %v3428
        %v3811 = vpack.c.bf16 %v3431, %v3430
        %v3812 = vpack.c.bf16 %v3433, %v3432
        %v3813 = vpack.c.bf16 %v3435, %v3434
        %v3814 = vpack.c.bf16 %v3437, %v3436
        %v3815 = vpack.c.bf16 %v3439, %v3438
        %v3816 = vpack.c.bf16 %v3441, %v3440
        %v3817 = vpack.c.bf16 %v3443, %v3442
        %v3818 = vpack.c.bf16 %v3445, %v3444
        %v3819 = vpack.c.bf16 %v3447, %v3446
        %v3820 = vpack.c.bf16 %v3449, %v3448
        %v3821 = vpack.c.bf16 %v3451, %v3450
        %v3822 = vpack.c.bf16 %v3453, %v3452
        %v3823 = vpack.c.bf16 %v3767, %v3454
        %v3824 = vpack.c.bf16 %v3769, %v3768
        %v3825 = vrot.slane %v3767, 1
        %v3826 = vrot.slane %v3768, 1
        %v3827 = vrot.slane %v3769, 1
        %v3828 = vsel %vm1875, %v3826, %v3827
        %v3829 = vsel %vm1875, %v3825, %v3826
        %v3830 = vsel %vm1875, %v3646, %v3825
        %v3831 = vsel %vm1875, %v3827, %v3602
        %v3832 = vpack.c.bf16 %v3689, %v3690
        %v3833 = vpack.c.bf16 %v3687, %v3688
        %v3834 = vpack.c.bf16 %v3685, %v3686
        %v3835 = vpack.c.bf16 %v3683, %v3684
        %v3836 = vpack.c.bf16 %v3681, %v3682
        %v3837 = vpack.c.bf16 %v3679, %v3680
        %v3838 = vpack.c.bf16 %v3677, %v3678
        %v3839 = vpack.c.bf16 %v3675, %v3676
        %v3840 = vpack.c.bf16 %v3673, %v3674
        %v3841 = vpack.c.bf16 %v3671, %v3672
        %v3842 = vpack.c.bf16 %v3669, %v3670
        %v3843 = vpack.c.bf16 %v3667, %v3668
        %v3844 = vpack.c.bf16 %v3665, %v3666
        %v3845 = vpack.c.bf16 %v3663, %v3664
        %v3846 = vpack.c.bf16 %v3661, %v3662
        %v3847 = vpack.c.bf16 %v3659, %v3660
        %v3848 = vpack.c.bf16 %v3657, %v3658
        %v3849 = vpack.c.bf16 %v3655, %v3656
        %v3850 = vpack.c.bf16 %v3653, %v3654
        %v3851 = vpack.c.bf16 %v3651, %v3652
        %v3852 = vpack.c.bf16 %v3649, %v3650
        %v3853 = vpack.c.bf16 %v3647, %v3648
        %v3854 = vpack.c.bf16 %v3829, %v3830
        %v3855 = vpack.c.bf16 %v3831, %v3828
        %v3856 = vld [vmem:[%s3 + $0xc0] sm:$0xf]
        %v3857 = vld [vmem:[%s3 + $0xc4] sm:$0xf]
        %v3858 = vld [vmem:[%s3 + $0xc8] sm:$0xf]
        %v3859 = vld [vmem:[%s3 + $0xcc] sm:$0xf]
        %v3860 = vld [vmem:[%s3 + $0xd0] sm:$0xf]
        %v3861 = vld [vmem:[%s3 + $0xd4] sm:$0xf]
        %v3862 = vld [vmem:[%s3 + $0xd8] sm:$0xf]
        %v3863 = vld [vmem:[%s3 + $0xdc] sm:$0xf]
        %v3864 = vld [vmem:[%s3 + $0xe0] sm:$0xf]
        %v3865 = vld [vmem:[%s3 + $0xe4] sm:$0xf]
        %v3866 = vld [vmem:[%s3 + $0xe8] sm:$0xf]
        %v3867 = vld [vmem:[%s3 + $0xec] sm:$0xf]
        %v3868 = vld [vmem:[%s3 + $0xf0] sm:$0xf]
        %v3869 = vld [vmem:[%s3 + $0xf4] sm:$0xf]
        %v3870 = vld [vmem:[%s3 + $0xf8] sm:$0xf]
        %v3871 = vld [vmem:[%s3 + $0xfc] sm:$0xf]
        %v3872 = vld [vmem:[%s3 + $0x100] sm:$0xf]
        %v3873 = vld [vmem:[%s3 + $0x104] sm:$0xf]
        %v3874 = vld [vmem:[%s3 + $0x108] sm:$0xf]
        %v3875 = vld [vmem:[%s3 + $0x10c] sm:$0xf]
        %v3876 = vld [vmem:[%s3 + $0x110] sm:$0xf]
        %v3877 = vld [vmem:[%s3 + $0x114] sm:$0xf]
        %v3878 = vld [vmem:[%s3 + $0x118] sm:$0xf]
        %v3879 = vld [vmem:[%s3 + $0x11c] sm:$0xf]
        %v3880 = vld [vmem:[%s3 + $0x120] sm:$0xf]
        %v3881 = vld [vmem:[%s3 + $0x124] sm:$0xf]
        %v3882 = vld [vmem:[%s3 + $0x128] sm:$0xf]
        %v3883 = vld [vmem:[%s3 + $0x12c] sm:$0xf]
        %v3884 = vld [vmem:[%s3 + $0x130] sm:$0xf]
        %v3885 = vld [vmem:[%s3 + $0x134] sm:$0xf]
        %v3886 = vld [vmem:[%s3 + $0x138] sm:$0xf]
        %v3887 = vld [vmem:[%s3 + $0x13c] sm:$0xf]
        %v3888 = vld [vmem:[%s3 + $0x140] sm:$0xf]
        %v3889 = vld [vmem:[%s3 + $0x144] sm:$0xf]
        %v3890 = vld [vmem:[%s3 + $0x148] sm:$0xf]
        %v3891 = vld [vmem:[%s3 + $0x14c] sm:$0xf]
        %v3892 = vld [vmem:[%s3 + $0x150] sm:$0xf]
        %v3893 = vld [vmem:[%s3 + $0x154] sm:$0xf]
        %v3894 = vld [vmem:[%s3 + $0x158] sm:$0xf]
        %v3895 = vld [vmem:[%s3 + $0x15c] sm:$0xf]
        %v3896 = vld [vmem:[%s3 + $0x160] sm:$0xf]
        %v3897 = vld [vmem:[%s3 + $0x164] sm:$0xf]
        %v3898 = vld [vmem:[%s3 + $0x168] sm:$0xf]
        %v3899 = vld [vmem:[%s3 + $0x16c] sm:$0xf]
        %v3900 = vld [vmem:[%s3 + $0x170] sm:$0xf]
        %v3901 = vld [vmem:[%s3 + $0x174] sm:$0xf]
        %v3902 = vld [vmem:[%s3 + $0x178] sm:$0xf]
        %v3903 = vld [vmem:[%s3 + $0x17c] sm:$0xf]
        %v3952 = vunpack.c.l.b16 %v3856
        %v3953 = vunpack.c.l.b16 %v3857
        %v3954 = vunpack.c.l.b16 %v3858
        %v3955 = vunpack.c.l.b16 %v3859
        %v3956 = vunpack.c.l.b16 %v3860
        %v3957 = vunpack.c.l.b16 %v3861
        %v3958 = vunpack.c.l.b16 %v3862
        %v3959 = vunpack.c.l.b16 %v3863
        %v3960 = vunpack.c.l.b16 %v3864
        %v3961 = vunpack.c.l.b16 %v3865
        %v3962 = vunpack.c.l.b16 %v3866
        %v3963 = vunpack.c.l.b16 %v3867
        %v3964 = vunpack.c.l.b16 %v3868
        %v3965 = vunpack.c.l.b16 %v3869
        %v3966 = vunpack.c.l.b16 %v3870
        %v3967 = vunpack.c.l.b16 %v3871
        %v3968 = vunpack.c.l.b16 %v3872
        %v3969 = vunpack.c.l.b16 %v3873
        %v3970 = vunpack.c.l.b16 %v3874
        %v3971 = vunpack.c.l.b16 %v3875
        %v3972 = vunpack.c.l.b16 %v3876
        %v3973 = vunpack.c.l.b16 %v3877
        %v3974 = vunpack.c.l.b16 %v3878
        %v3975 = vunpack.c.l.b16 %v3879
        %v3976 = vunpack.c.l.b16 %v3880
        %v3977 = vunpack.c.l.b16 %v3881
        %v3978 = vunpack.c.l.b16 %v3882
        %v3979 = vunpack.c.l.b16 %v3883
        %v3980 = vunpack.c.l.b16 %v3884
        %v3981 = vunpack.c.l.b16 %v3885
        %v3982 = vunpack.c.l.b16 %v3886
        %v3983 = vunpack.c.l.b16 %v3887
        %v3984 = vunpack.c.l.b16 %v3888
        %v3985 = vunpack.c.l.b16 %v3889
        %v3986 = vunpack.c.l.b16 %v3890
        %v3987 = vunpack.c.l.b16 %v3891
        %v3988 = vunpack.c.l.b16 %v3892
        %v3989 = vunpack.c.l.b16 %v3893
        %v3990 = vunpack.c.l.b16 %v3894
        %v3991 = vunpack.c.l.b16 %v3895
        %v3992 = vunpack.c.l.b16 %v3896
        %v3993 = vunpack.c.l.b16 %v3897
        %v3994 = vunpack.c.l.b16 %v3898
        %v3995 = vunpack.c.l.b16 %v3899
        %v3996 = vunpack.c.l.b16 %v3900
        %v3997 = vunpack.c.l.b16 %v3901
        %v3998 = vunpack.c.l.b16 %v3902
        %v3999 = vunpack.c.l.b16 %v3903
        %v4000 = vpack.c.b16 %v3953, %v3952
        %v4001 = vpack.c.b16 %v3955, %v3954
        %v4002 = vpack.c.b16 %v3957, %v3956
        %v4003 = vpack.c.b16 %v3959, %v3958
        %v4004 = vpack.c.b16 %v3961, %v3960
        %v4005 = vpack.c.b16 %v3963, %v3962
        %v4006 = vpack.c.b16 %v3965, %v3964
        %v4007 = vpack.c.b16 %v3967, %v3966
        %v4008 = vpack.c.b16 %v3969, %v3968
        %v4009 = vpack.c.b16 %v3971, %v3970
        %v4010 = vpack.c.b16 %v3973, %v3972
        %v4011 = vpack.c.b16 %v3975, %v3974
        %v4012 = vpack.c.b16 %v3977, %v3976
        %v4013 = vpack.c.b16 %v3979, %v3978
        %v4014 = vpack.c.b16 %v3981, %v3980
        %v4015 = vpack.c.b16 %v3983, %v3982
        %v4016 = vpack.c.b16 %v3985, %v3984
        %v4017 = vpack.c.b16 %v3987, %v3986
        %v4018 = vpack.c.b16 %v3989, %v3988
        %v4019 = vpack.c.b16 %v3991, %v3990
        %v4020 = vpack.c.b16 %v3993, %v3992
        %v4021 = vpack.c.b16 %v3995, %v3994
        %v4022 = vpack.c.b16 %v3997, %v3996
        %v4023 = vpack.c.b16 %v3999, %v3998
        %4048 = vmatprep.subr.bf16.mxu0 0
        %4049 = vmatpush1.bf16.msra.mxu0 %v4000
        %4050 = vmatprep.subr.bf16.mxu0 0
        %4051 = vmatpush1.bf16.msra.mxu0 %v4001
        %4052 = vmatprep.subr.bf16.mxu0 0
        %4053 = vmatpush1.bf16.msra.mxu0 %v4002
        %4054 = vmatprep.subr.bf16.mxu0 0
        %4055 = vmatpush1.bf16.msra.mxu0 %v4003
        %4056 = vmatprep.subr.bf16.mxu0 0
        %4057 = vmatpush1.bf16.msra.mxu0 %v4004
        %4058 = vmatprep.subr.bf16.mxu0 0
        %4059 = vmatpush1.bf16.msra.mxu0 %v4005
        %4060 = vmatprep.subr.bf16.mxu0 0
        %4061 = vmatpush1.bf16.msra.mxu0 %v4006
        %4062 = vmatprep.subr.bf16.mxu0 0
        %4063 = vmatpush1.bf16.msra.mxu0 %v4007
        %4064 = vmatprep.subr.bf16.mxu0 0
        %4065 = vmatpush1.bf16.msra.mxu0 %v4008
        %4066 = vmatprep.subr.bf16.mxu0 0
        %4067 = vmatpush1.bf16.msra.mxu0 %v4009
        %4068 = vmatprep.subr.bf16.mxu0 0
        %4069 = vmatpush1.bf16.msra.mxu0 %v4010
        %4070 = vmatprep.subr.bf16.mxu0 0
        %4071 = vmatpush1.bf16.msra.mxu0 %v4011
        %4072 = vmatprep.subr.bf16.mxu0 0
        %4073 = vmatpush1.bf16.msra.mxu0 %v4012
        %4074 = vmatprep.subr.bf16.mxu0 0
        %4075 = vmatpush1.bf16.msra.mxu0 %v4013
        %4076 = vmatprep.subr.bf16.mxu0 0
        %4077 = vmatpush1.bf16.msra.mxu0 %v4014
        %4078 = vmatprep.subr.bf16.mxu0 0
        %4079 = vmatpush1.bf16.msra.mxu0 %v4015
        %4080 = vmatprep.mubr.bf16.mxu0 %v3801
        %4081 = vmatmul.mubr.bf16.gmra.mrb[0].mxu0 %v3777
        %v4082 = vpop.f32.mrb[0].mxu0
        %v4083 = vadd.f32 0.0, %v4082
        %v4084 = vpop.f32.mrb[0].mxu0
        %v4085 = vpop.f32.mrb[0].mxu0
        %v4086 = vadd.f32 0.0, %v4085
        %v4087 = vpop.f32.mrb[0].mxu0
        %4088 = vmatprep.mubr.bf16.mxu0 %v3802
        %4089 = vmatmul.mubr.bf16.gmra.mrb[0].mxu0 %v3778
        %v4090 = vpop.f32.mrb[0].mxu0
        %v4091 = vadd.f32 0.0, %v4090
        %v4092 = vpop.f32.mrb[0].mxu0
        %v4093 = vpop.f32.mrb[0].mxu0
        %v4094 = vadd.f32 0.0, %v4093
        %v4095 = vpop.f32.mrb[0].mxu0
        %4096 = vmatprep.mubr.bf16.mxu0 %v3803
        %4097 = vmatmul.mubr.bf16.gmra.mrb[0].mxu0 %v3779
        %v4098 = vpop.f32.mrb[0].mxu0
        %v4099 = vadd.f32 0.0, %v4098
        %v4100 = vpop.f32.mrb[0].mxu0
        %v4101 = vpop.f32.mrb[0].mxu0
        %v4102 = vadd.f32 0.0, %v4101
        %v4103 = vpop.f32.mrb[0].mxu0
        %4104 = vmatprep.mubr.bf16.mxu0 %v3804
        %4105 = vmatmul.mubr.bf16.gmra.mrb[0].mxu0 %v3780
        %v4106 = vpop.f32.mrb[0].mxu0
        %v4107 = vadd.f32 0.0, %v4106
        %v4108 = vpop.f32.mrb[0].mxu0
        %v4109 = vpop.f32.mrb[0].mxu0
        %v4110 = vadd.f32 0.0, %v4109
        %v4111 = vpop.f32.mrb[0].mxu0
        %4112 = vmatprep.mubr.bf16.mxu0 %v3805
        %4113 = vmatmul.mubr.bf16.gmra.mrb[0].mxu0 %v3781
        %v4114 = vpop.f32.mrb[0].mxu0
        %v4115 = vadd.f32 0.0, %v4114
        %v4116 = vpop.f32.mrb[0].mxu0
        %v4117 = vpop.f32.mrb[0].mxu0
        %v4118 = vadd.f32 0.0, %v4117
        %v4119 = vpop.f32.mrb[0].mxu0
        %4120 = vmatprep.mubr.bf16.mxu0 %v3806
        %4121 = vmatmul.mubr.bf16.gmra.mrb[0].mxu0 %v3782
        %v4122 = vpop.f32.mrb[0].mxu0
        %v4123 = vadd.f32 0.0, %v4122
        %v4124 = vpop.f32.mrb[0].mxu0
        %v4125 = vpop.f32.mrb[0].mxu0
        %v4126 = vadd.f32 0.0, %v4125
        %v4127 = vpop.f32.mrb[0].mxu0
        %4128 = vmatprep.mubr.bf16.mxu0 %v3807
        %4129 = vmatmul.mubr.bf16.gmra.mrb[0].mxu0 %v3783
        %v4130 = vpop.f32.mrb[0].mxu0
        %v4131 = vadd.f32 0.0, %v4130
        %v4132 = vpop.f32.mrb[0].mxu0
        %v4133 = vpop.f32.mrb[0].mxu0
        %v4134 = vadd.f32 0.0, %v4133
        %v4135 = vpop.f32.mrb[0].mxu0
        %4136 = vmatprep.mubr.bf16.mxu0 %v3808
        %4137 = vmatmul.mubr.bf16.gmra.mrb[0].mxu0 %v3784
        %v4138 = vpop.f32.mrb[0].mxu0
        %v4139 = vadd.f32 0.0, %v4138
        %v4140 = vpop.f32.mrb[0].mxu0
        %v4141 = vpop.f32.mrb[0].mxu0
        %v4142 = vadd.f32 0.0, %v4141
        %v4143 = vpop.f32.mrb[0].mxu0
        %4144 = vmatprep.mubr.bf16.mxu0 %v3809
        %4145 = vmatmul.mubr.bf16.gmra.mrb[0].mxu0 %v3785
        %v4146 = vpop.f32.mrb[0].mxu0
        %v4147 = vadd.f32 0.0, %v4146
        %v4148 = vpop.f32.mrb[0].mxu0
        %v4149 = vpop.f32.mrb[0].mxu0
        %v4150 = vadd.f32 0.0, %v4149
        %v4151 = vpop.f32.mrb[0].mxu0
        %4152 = vmatprep.mubr.bf16.mxu0 %v3810
        %4153 = vmatmul.mubr.bf16.gmra.mrb[0].mxu0 %v3786
        %v4154 = vpop.f32.mrb[0].mxu0
        %v4155 = vadd.f32 0.0, %v4154
        %v4156 = vpop.f32.mrb[0].mxu0
        %v4157 = vpop.f32.mrb[0].mxu0
        %v4158 = vadd.f32 0.0, %v4157
        %v4159 = vpop.f32.mrb[0].mxu0
        %4160 = vmatprep.mubr.bf16.mxu0 %v3811
        %4161 = vmatmul.mubr.bf16.gmra.mrb[0].mxu0 %v3787
        %v4162 = vpop.f32.mrb[0].mxu0
        %v4163 = vadd.f32 0.0, %v4162
        %v4164 = vpop.f32.mrb[0].mxu0
        %v4165 = vpop.f32.mrb[0].mxu0
        %v4166 = vadd.f32 0.0, %v4165
        %v4167 = vpop.f32.mrb[0].mxu0
        %4168 = vmatprep.mubr.bf16.mxu0 %v3812
        %4169 = vmatmul.mubr.bf16.gmra.mrb[0].mxu0 %v3788
        %v4170 = vpop.f32.mrb[0].mxu0
        %v4171 = vadd.f32 0.0, %v4170
        %v4172 = vpop.f32.mrb[0].mxu0
        %v4173 = vpop.f32.mrb[0].mxu0
        %v4174 = vadd.f32 0.0, %v4173
        %v4175 = vpop.f32.mrb[0].mxu0
        %4176 = vmatprep.mubr.bf16.mxu0 %v3813
        %4177 = vmatmul.mubr.bf16.gmra.mrb[0].mxu0 %v3789
        %v4178 = vpop.f32.mrb[0].mxu0
        %v4179 = vadd.f32 0.0, %v4178
        %v4180 = vpop.f32.mrb[0].mxu0
        %v4181 = vpop.f32.mrb[0].mxu0
        %v4182 = vadd.f32 0.0, %v4181
        %v4183 = vpop.f32.mrb[0].mxu0
        %4184 = vmatprep.mubr.bf16.mxu0 %v3814
        %4185 = vmatmul.mubr.bf16.gmra.mrb[0].mxu0 %v3790
        %v4186 = vpop.f32.mrb[0].mxu0
        %v4187 = vadd.f32 0.0, %v4186
        %v4188 = vpop.f32.mrb[0].mxu0
        %v4189 = vpop.f32.mrb[0].mxu0
        %v4190 = vadd.f32 0.0, %v4189
        %v4191 = vpop.f32.mrb[0].mxu0
        %4192 = vmatprep.mubr.bf16.mxu0 %v3815
        %4193 = vmatmul.mubr.bf16.gmra.mrb[0].mxu0 %v3791
        %v4194 = vpop.f32.mrb[0].mxu0
        %v4195 = vadd.f32 0.0, %v4194
        %v4196 = vpop.f32.mrb[0].mxu0
        %v4197 = vpop.f32.mrb[0].mxu0
        %v4198 = vadd.f32 0.0, %v4197
        %v4199 = vpop.f32.mrb[0].mxu0
        %4200 = vmatprep.mubr.bf16.mxu0 %v3816
        %4201 = vmatmul.mubr.bf16.gmra.mrb[0].mxu0 %v3792
        %v4202 = vpop.f32.mrb[0].mxu0
        %v4203 = vadd.f32 0.0, %v4202
        %v4204 = vpop.f32.mrb[0].mxu0
        %v4205 = vpop.f32.mrb[0].mxu0
        %v4206 = vadd.f32 0.0, %v4205
        %v4207 = vpop.f32.mrb[0].mxu0
        %4208 = vmatprep.mubr.bf16.mxu0 %v3817
        %4209 = vmatmul.mubr.bf16.gmra.mrb[0].mxu0 %v3793
        %v4210 = vpop.f32.mrb[0].mxu0
        %v4211 = vadd.f32 0.0, %v4210
        %v4212 = vpop.f32.mrb[0].mxu0
        %v4213 = vpop.f32.mrb[0].mxu0
        %v4214 = vadd.f32 0.0, %v4213
        %v4215 = vpop.f32.mrb[0].mxu0
        %4216 = vmatprep.mubr.bf16.mxu0 %v3818
        %4217 = vmatmul.mubr.bf16.gmra.mrb[0].mxu0 %v3794
        %v4218 = vpop.f32.mrb[0].mxu0
        %v4219 = vadd.f32 0.0, %v4218
        %v4220 = vpop.f32.mrb[0].mxu0
        %v4221 = vpop.f32.mrb[0].mxu0
        %v4222 = vadd.f32 0.0, %v4221
        %v4223 = vpop.f32.mrb[0].mxu0
        %4224 = vmatprep.mubr.bf16.mxu0 %v3819
        %4225 = vmatmul.mubr.bf16.gmra.mrb[0].mxu0 %v3795
        %v4226 = vpop.f32.mrb[0].mxu0
        %v4227 = vadd.f32 0.0, %v4226
        %v4228 = vpop.f32.mrb[0].mxu0
        %v4229 = vpop.f32.mrb[0].mxu0
        %v4230 = vadd.f32 0.0, %v4229
        %v4231 = vpop.f32.mrb[0].mxu0
        %4232 = vmatprep.mubr.bf16.mxu0 %v3820
        %4233 = vmatmul.mubr.bf16.gmra.mrb[0].mxu0 %v3796
        %v4234 = vpop.f32.mrb[0].mxu0
        %v4235 = vadd.f32 0.0, %v4234
        %v4236 = vpop.f32.mrb[0].mxu0
        %v4237 = vpop.f32.mrb[0].mxu0
        %v4238 = vadd.f32 0.0, %v4237
        %v4239 = vpop.f32.mrb[0].mxu0
        %4240 = vmatprep.mubr.bf16.mxu0 %v3821
        %4241 = vmatmul.mubr.bf16.gmra.mrb[0].mxu0 %v3797
        %v4242 = vpop.f32.mrb[0].mxu0
        %v4243 = vadd.f32 0.0, %v4242
        %v4244 = vpop.f32.mrb[0].mxu0
        %v4245 = vpop.f32.mrb[0].mxu0
        %v4246 = vadd.f32 0.0, %v4245
        %v4247 = vpop.f32.mrb[0].mxu0
        %4248 = vmatprep.mubr.bf16.mxu0 %v3822
        %4249 = vmatmul.mubr.bf16.gmra.mrb[0].mxu0 %v3798
        %v4250 = vpop.f32.mrb[0].mxu0
        %v4251 = vadd.f32 0.0, %v4250
        %v4252 = vpop.f32.mrb[0].mxu0
        %v4253 = vpop.f32.mrb[0].mxu0
        %v4254 = vadd.f32 0.0, %v4253
        %v4255 = vpop.f32.mrb[0].mxu0
        %4256 = vmatprep.mubr.bf16.mxu0 %v3823
        %4257 = vmatmul.mubr.bf16.gmra.mrb[0].mxu0 %v3799
        %v4258 = vpop.f32.mrb[0].mxu0
        %v4259 = vadd.f32 0.0, %v4258
        %v4260 = vpop.f32.mrb[0].mxu0
        %v4261 = vpop.f32.mrb[0].mxu0
        %v4262 = vadd.f32 0.0, %v4261
        %v4263 = vpop.f32.mrb[0].mxu0
        %4264 = vmatprep.mubr.bf16.mxu0 %v3824
        %4265 = vmatmul.mubr.bf16.gmra.mrb[0].mxu0 %v3800
        %v4266 = vpop.f32.mrb[0].mxu0
        %v4267 = vadd.f32 0.0, %v4266
        %v4268 = vpop.f32.mrb[0].mxu0
        %v4269 = vpop.f32.mrb[0].mxu0
        %v4270 = vadd.f32 0.0, %v4269
        %v4271 = vpop.f32.mrb[0].mxu0
        %4272 = vdwg.mxu0
        %4273 = vmatprep.subr.bf16.mxu0 0
        %4274 = vmatpush1.bf16.msra.mxu0 %v4016
        %4275 = vmatprep.subr.bf16.mxu0 0
        %4276 = vmatpush1.bf16.msra.mxu0 %v4017
        %4277 = vmatprep.subr.bf16.mxu0 0
        %4278 = vmatpush1.bf16.msra.mxu0 %v4018
        %4279 = vmatprep.subr.bf16.mxu0 0
        %4280 = vmatpush1.bf16.msra.mxu0 %v4019
        %4281 = vmatprep.subr.bf16.mxu0 0
        %4282 = vmatpush1.bf16.msra.mxu0 %v4020
        %4283 = vmatprep.subr.bf16.mxu0 0
        %4284 = vmatpush1.bf16.msra.mxu0 %v4021
        %4285 = vmatprep.subr.bf16.mxu0 0
        %4286 = vmatpush1.bf16.msra.mxu0 %v4022
        %4287 = vmatprep.subr.bf16.mxu0 0
        %4288 = vmatpush1.bf16.msra.mxu0 %v4023
        %4289 = vmatprep.subr.bf16.mxu0 0
        %4290 = vmatpush1.bf16.msra.mxu0 0
        %4291 = vmatprep.subr.bf16.mxu0 0
        %4292 = vmatpush1.bf16.msra.mxu0 0
        %4293 = vmatprep.subr.bf16.mxu0 0
        %4294 = vmatpush1.bf16.msra.mxu0 0
        %4295 = vmatprep.subr.bf16.mxu0 0
        %4296 = vmatpush1.bf16.msra.mxu0 0
        %4297 = vmatprep.subr.bf16.mxu0 0
        %4298 = vmatpush1.bf16.msra.mxu0 0
        %4299 = vmatprep.subr.bf16.mxu0 0
        %4300 = vmatpush1.bf16.msra.mxu0 0
        %4301 = vmatprep.subr.bf16.mxu0 0
        %4302 = vmatpush1.bf16.msra.mxu0 0
        %4303 = vmatprep.subr.bf16.mxu0 0
        %4304 = vmatpush1.bf16.msra.mxu0 0
        %4305 = vmatprep.mubr.bf16.mxu0 0
        %4306 = vmatmul.mubr.bf16.gmra.mrb[0].mxu0 %v3832
        %v4307 = vpop.f32.mrb[0].mxu0
        %v4308 = vadd.f32 %v4083, %v4307
        %v4309 = vpop.f32.mrb[0].mxu0
        %v4310 = vpop.f32.mrb[0].mxu0
        %v4311 = vadd.f32 %v4086, %v4310
        %v4312 = vpop.f32.mrb[0].mxu0
        %4313 = vmatprep.mubr.bf16.mxu0 0
        %4314 = vmatmul.mubr.bf16.gmra.mrb[0].mxu0 %v3833
        %v4315 = vpop.f32.mrb[0].mxu0
        %v4316 = vadd.f32 %v4091, %v4315
        %v4317 = vpop.f32.mrb[0].mxu0
        %v4318 = vpop.f32.mrb[0].mxu0
        %v4319 = vadd.f32 %v4094, %v4318
        %v4320 = vpop.f32.mrb[0].mxu0
        %4321 = vmatprep.mubr.bf16.mxu0 0
        %4322 = vmatmul.mubr.bf16.gmra.mrb[0].mxu0 %v3834
        %v4323 = vpop.f32.mrb[0].mxu0
        %v4324 = vadd.f32 %v4099, %v4323
        %v4325 = vpop.f32.mrb[0].mxu0
        %v4326 = vpop.f32.mrb[0].mxu0
        %v4327 = vadd.f32 %v4102, %v4326
        %v4328 = vpop.f32.mrb[0].mxu0
        %4329 = vmatprep.mubr.bf16.mxu0 0
        %4330 = vmatmul.mubr.bf16.gmra.mrb[0].mxu0 %v3835
        %v4331 = vpop.f32.mrb[0].mxu0
        %v4332 = vadd.f32 %v4107, %v4331
        %v4333 = vpop.f32.mrb[0].mxu0
        %v4334 = vpop.f32.mrb[0].mxu0
        %v4335 = vadd.f32 %v4110, %v4334
        %v4336 = vpop.f32.mrb[0].mxu0
        %4337 = vmatprep.mubr.bf16.mxu0 0
        %4338 = vmatmul.mubr.bf16.gmra.mrb[0].mxu0 %v3836
        %v4339 = vpop.f32.mrb[0].mxu0
        %v4340 = vadd.f32 %v4115, %v4339
        %v4341 = vpop.f32.mrb[0].mxu0
        %v4342 = vpop.f32.mrb[0].mxu0
        %v4343 = vadd.f32 %v4118, %v4342
        %v4344 = vpop.f32.mrb[0].mxu0
        %4345 = vmatprep.mubr.bf16.mxu0 0
        %4346 = vmatmul.mubr.bf16.gmra.mrb[0].mxu0 %v3837
        %v4347 = vpop.f32.mrb[0].mxu0
        %v4348 = vadd.f32 %v4123, %v4347
        %v4349 = vpop.f32.mrb[0].mxu0
        %v4350 = vpop.f32.mrb[0].mxu0
        %v4351 = vadd.f32 %v4126, %v4350
        %v4352 = vpop.f32.mrb[0].mxu0
        %4353 = vmatprep.mubr.bf16.mxu0 0
        %4354 = vmatmul.mubr.bf16.gmra.mrb[0].mxu0 %v3838
        %v4355 = vpop.f32.mrb[0].mxu0
        %v4356 = vadd.f32 %v4131, %v4355
        %v4357 = vpop.f32.mrb[0].mxu0
        %v4358 = vpop.f32.mrb[0].mxu0
        %v4359 = vadd.f32 %v4134, %v4358
        %v4360 = vpop.f32.mrb[0].mxu0
        %4361 = vmatprep.mubr.bf16.mxu0 0
        %4362 = vmatmul.mubr.bf16.gmra.mrb[0].mxu0 %v3839
        %v4363 = vpop.f32.mrb[0].mxu0
        %v4364 = vadd.f32 %v4139, %v4363
        %v4365 = vpop.f32.mrb[0].mxu0
        %v4366 = vpop.f32.mrb[0].mxu0
        %v4367 = vadd.f32 %v4142, %v4366
        %v4368 = vpop.f32.mrb[0].mxu0
        %4369 = vmatprep.mubr.bf16.mxu0 0
        %4370 = vmatmul.mubr.bf16.gmra.mrb[0].mxu0 %v3840
        %v4371 = vpop.f32.mrb[0].mxu0
        %v4372 = vadd.f32 %v4147, %v4371
        %v4373 = vpop.f32.mrb[0].mxu0
        %v4374 = vpop.f32.mrb[0].mxu0
        %v4375 = vadd.f32 %v4150, %v4374
        %v4376 = vpop.f32.mrb[0].mxu0
        %4377 = vmatprep.mubr.bf16.mxu0 0
        %4378 = vmatmul.mubr.bf16.gmra.mrb[0].mxu0 %v3841
        %v4379 = vpop.f32.mrb[0].mxu0
        %v4380 = vadd.f32 %v4155, %v4379
        %v4381 = vpop.f32.mrb[0].mxu0
        %v4382 = vpop.f32.mrb[0].mxu0
        %v4383 = vadd.f32 %v4158, %v4382
        %v4384 = vpop.f32.mrb[0].mxu0
        %4385 = vmatprep.mubr.bf16.mxu0 0
        %4386 = vmatmul.mubr.bf16.gmra.mrb[0].mxu0 %v3842
        %v4387 = vpop.f32.mrb[0].mxu0
        %v4388 = vadd.f32 %v4163, %v4387
        %v4389 = vpop.f32.mrb[0].mxu0
        %v4390 = vpop.f32.mrb[0].mxu0
        %v4391 = vadd.f32 %v4166, %v4390
        %v4392 = vpop.f32.mrb[0].mxu0
        %4393 = vmatprep.mubr.bf16.mxu0 0
        %4394 = vmatmul.mubr.bf16.gmra.mrb[0].mxu0 %v3843
        %v4395 = vpop.f32.mrb[0].mxu0
        %v4396 = vadd.f32 %v4171, %v4395
        %v4397 = vpop.f32.mrb[0].mxu0
        %v4398 = vpop.f32.mrb[0].mxu0
        %v4399 = vadd.f32 %v4174, %v4398
        %v4400 = vpop.f32.mrb[0].mxu0
        %4401 = vmatprep.mubr.bf16.mxu0 0
        %4402 = vmatmul.mubr.bf16.gmra.mrb[0].mxu0 %v3844
        %v4403 = vpop.f32.mrb[0].mxu0
        %v4404 = vadd.f32 %v4179, %v4403
        %v4405 = vpop.f32.mrb[0].mxu0
        %v4406 = vpop.f32.mrb[0].mxu0
        %v4407 = vadd.f32 %v4182, %v4406
        %v4408 = vpop.f32.mrb[0].mxu0
        %4409 = vmatprep.mubr.bf16.mxu0 0
        %4410 = vmatmul.mubr.bf16.gmra.mrb[0].mxu0 %v3845
        %v4411 = vpop.f32.mrb[0].mxu0
        %v4412 = vadd.f32 %v4187, %v4411
        %v4413 = vpop.f32.mrb[0].mxu0
        %v4414 = vpop.f32.mrb[0].mxu0
        %v4415 = vadd.f32 %v4190, %v4414
        %v4416 = vpop.f32.mrb[0].mxu0
        %4417 = vmatprep.mubr.bf16.mxu0 0
        %4418 = vmatmul.mubr.bf16.gmra.mrb[0].mxu0 %v3846
        %v4419 = vpop.f32.mrb[0].mxu0
        %v4420 = vadd.f32 %v4195, %v4419
        %v4421 = vpop.f32.mrb[0].mxu0
        %v4422 = vpop.f32.mrb[0].mxu0
        %v4423 = vadd.f32 %v4198, %v4422
        %v4424 = vpop.f32.mrb[0].mxu0
        %4425 = vmatprep.mubr.bf16.mxu0 0
        %4426 = vmatmul.mubr.bf16.gmra.mrb[0].mxu0 %v3847
        %v4427 = vpop.f32.mrb[0].mxu0
        %v4428 = vadd.f32 %v4203, %v4427
        %v4429 = vpop.f32.mrb[0].mxu0
        %v4430 = vpop.f32.mrb[0].mxu0
        %v4431 = vadd.f32 %v4206, %v4430
        %v4432 = vpop.f32.mrb[0].mxu0
        %4433 = vmatprep.mubr.bf16.mxu0 0
        %4434 = vmatmul.mubr.bf16.gmra.mrb[0].mxu0 %v3848
        %v4435 = vpop.f32.mrb[0].mxu0
        %v4436 = vadd.f32 %v4211, %v4435
        %v4437 = vpop.f32.mrb[0].mxu0
        %v4438 = vpop.f32.mrb[0].mxu0
        %v4439 = vadd.f32 %v4214, %v4438
        %v4440 = vpop.f32.mrb[0].mxu0
        %4441 = vmatprep.mubr.bf16.mxu0 0
        %4442 = vmatmul.mubr.bf16.gmra.mrb[0].mxu0 %v3849
        %v4443 = vpop.f32.mrb[0].mxu0
        %v4444 = vadd.f32 %v4219, %v4443
        %v4445 = vpop.f32.mrb[0].mxu0
        %v4446 = vpop.f32.mrb[0].mxu0
        %v4447 = vadd.f32 %v4222, %v4446
        %v4448 = vpop.f32.mrb[0].mxu0
        %4449 = vmatprep.mubr.bf16.mxu0 0
        %4450 = vmatmul.mubr.bf16.gmra.mrb[0].mxu0 %v3850
        %v4451 = vpop.f32.mrb[0].mxu0
        %v4452 = vadd.f32 %v4227, %v4451
        %v4453 = vpop.f32.mrb[0].mxu0
        %v4454 = vpop.f32.mrb[0].mxu0
        %v4455 = vadd.f32 %v4230, %v4454
        %v4456 = vpop.f32.mrb[0].mxu0
        %4457 = vmatprep.mubr.bf16.mxu0 0
        %4458 = vmatmul.mubr.bf16.gmra.mrb[0].mxu0 %v3851
        %v4459 = vpop.f32.mrb[0].mxu0
        %v4460 = vadd.f32 %v4235, %v4459
        %v4461 = vpop.f32.mrb[0].mxu0
        %v4462 = vpop.f32.mrb[0].mxu0
        %v4463 = vadd.f32 %v4238, %v4462
        %v4464 = vpop.f32.mrb[0].mxu0
        %4465 = vmatprep.mubr.bf16.mxu0 0
        %4466 = vmatmul.mubr.bf16.gmra.mrb[0].mxu0 %v3852
        %v4467 = vpop.f32.mrb[0].mxu0
        %v4468 = vadd.f32 %v4243, %v4467
        %v4469 = vpop.f32.mrb[0].mxu0
        %v4470 = vpop.f32.mrb[0].mxu0
        %v4471 = vadd.f32 %v4246, %v4470
        %v4472 = vpop.f32.mrb[0].mxu0
        %4473 = vmatprep.mubr.bf16.mxu0 0
        %4474 = vmatmul.mubr.bf16.gmra.mrb[0].mxu0 %v3853
        %v4475 = vpop.f32.mrb[0].mxu0
        %v4476 = vadd.f32 %v4251, %v4475
        %v4477 = vpop.f32.mrb[0].mxu0
        %v4478 = vpop.f32.mrb[0].mxu0
        %v4479 = vadd.f32 %v4254, %v4478
        %v4480 = vpop.f32.mrb[0].mxu0
        %4481 = vmatprep.mubr.bf16.mxu0 0
        %4482 = vmatmul.mubr.bf16.gmra.mrb[0].mxu0 %v3854
        %v4483 = vpop.f32.mrb[0].mxu0
        %v4484 = vadd.f32 %v4259, %v4483
        %v4485 = vpop.f32.mrb[0].mxu0
        %v4486 = vpop.f32.mrb[0].mxu0
        %v4487 = vadd.f32 %v4262, %v4486
        %v4488 = vpop.f32.mrb[0].mxu0
        %4489 = vmatprep.mubr.bf16.mxu0 0
        %4490 = vmatmul.mubr.bf16.gmra.mrb[0].mxu0 %v3855
        %v4491 = vpop.f32.mrb[0].mxu0
        %v4492 = vadd.f32 %v4267, %v4491
        %v4493 = vpop.f32.mrb[0].mxu0
        %v4494 = vpop.f32.mrb[0].mxu0
        %v4495 = vadd.f32 %v4270, %v4494
        %v4496 = vpop.f32.mrb[0].mxu0
        %4497 = vdwg.mxu0
        %v4546 = vunpack.c.l.b16 %v3719
        %v4547 = vunpack.c.l.b16 %v3720
        %v4548 = vunpack.c.l.b16 %v3721
        %v4549 = vunpack.c.l.b16 %v3722
        %v4550 = vunpack.c.l.b16 %v3723
        %v4551 = vunpack.c.l.b16 %v3724
        %v4552 = vunpack.c.l.b16 %v3725
        %v4553 = vunpack.c.l.b16 %v3726
        %v4554 = vunpack.c.l.b16 %v3727
        %v4555 = vunpack.c.l.b16 %v3728
        %v4556 = vunpack.c.l.b16 %v3729
        %v4557 = vunpack.c.l.b16 %v3730
        %v4558 = vunpack.c.l.b16 %v3731
        %v4559 = vunpack.c.l.b16 %v3732
        %v4560 = vunpack.c.l.b16 %v3733
        %v4561 = vunpack.c.l.b16 %v3734
        %v4562 = vunpack.c.l.b16 %v3735
        %v4563 = vunpack.c.l.b16 %v3736
        %v4564 = vunpack.c.l.b16 %v3737
        %v4565 = vunpack.c.l.b16 %v3738
        %v4566 = vunpack.c.l.b16 %v3739
        %v4567 = vunpack.c.l.b16 %v3740
        %v4568 = vunpack.c.l.b16 %v3741
        %v4569 = vunpack.c.l.b16 %v3742
        %v4570 = vunpack.c.l.b16 %v3743
        %v4571 = vunpack.c.l.b16 %v3744
        %v4572 = vunpack.c.l.b16 %v3745
        %v4573 = vunpack.c.l.b16 %v3746
        %v4574 = vunpack.c.l.b16 %v3747
        %v4575 = vunpack.c.l.b16 %v3748
        %v4576 = vunpack.c.l.b16 %v3749
        %v4577 = vunpack.c.l.b16 %v3750
        %v4578 = vunpack.c.l.b16 %v3751
        %v4579 = vunpack.c.l.b16 %v3752
        %v4580 = vunpack.c.l.b16 %v3753
        %v4581 = vunpack.c.l.b16 %v3754
        %v4582 = vunpack.c.l.b16 %v3755
        %v4583 = vunpack.c.l.b16 %v3756
        %v4584 = vunpack.c.l.b16 %v3757
        %v4585 = vunpack.c.l.b16 %v3758
        %v4586 = vunpack.c.l.b16 %v3759
        %v4587 = vunpack.c.l.b16 %v3760
        %v4588 = vunpack.c.l.b16 %v3761
        %v4589 = vunpack.c.l.b16 %v3762
        %v4590 = vunpack.c.l.b16 %v3763
        %v4591 = vunpack.c.l.b16 %v3764
        %v4592 = vunpack.c.l.b16 %v3765
        %v4593 = vunpack.c.l.b16 %v3766
        %v4594 = vpack.c.b16 %v4547, %v4546
        %v4595 = vpack.c.b16 %v4549, %v4548
        %v4596 = vpack.c.b16 %v4551, %v4550
        %v4597 = vpack.c.b16 %v4553, %v4552
        %v4598 = vpack.c.b16 %v4555, %v4554
        %v4599 = vpack.c.b16 %v4557, %v4556
        %v4600 = vpack.c.b16 %v4559, %v4558
        %v4601 = vpack.c.b16 %v4561, %v4560
        %v4602 = vpack.c.b16 %v4563, %v4562
        %v4603 = vpack.c.b16 %v4565, %v4564
        %v4604 = vpack.c.b16 %v4567, %v4566
        %v4605 = vpack.c.b16 %v4569, %v4568
        %v4606 = vpack.c.b16 %v4571, %v4570
        %v4607 = vpack.c.b16 %v4573, %v4572
        %v4608 = vpack.c.b16 %v4575, %v4574
        %v4609 = vpack.c.b16 %v4577, %v4576
        %v4610 = vpack.c.b16 %v4579, %v4578
        %v4611 = vpack.c.b16 %v4581, %v4580
        %v4612 = vpack.c.b16 %v4583, %v4582
        %v4613 = vpack.c.b16 %v4585, %v4584
        %v4614 = vpack.c.b16 %v4587, %v4586
        %v4615 = vpack.c.b16 %v4589, %v4588
        %v4616 = vpack.c.b16 %v4591, %v4590
        %v4617 = vpack.c.b16 %v4593, %v4592
        %4642 = vmatprep.subr.bf16.mxu0 0
        %4643 = vmatpush1.bf16.msra.mxu0 %v4594
        %4644 = vmatprep.subr.bf16.mxu0 0
        %4645 = vmatpush1.bf16.msra.mxu0 %v4595
        %4646 = vmatprep.subr.bf16.mxu0 0
        %4647 = vmatpush1.bf16.msra.mxu0 %v4596
        %4648 = vmatprep.subr.bf16.mxu0 0
        %4649 = vmatpush1.bf16.msra.mxu0 %v4597
        %4650 = vmatprep.subr.bf16.mxu0 0
        %4651 = vmatpush1.bf16.msra.mxu0 %v4598
        %4652 = vmatprep.subr.bf16.mxu0 0
        %4653 = vmatpush1.bf16.msra.mxu0 %v4599
        %4654 = vmatprep.subr.bf16.mxu0 0
        %4655 = vmatpush1.bf16.msra.mxu0 %v4600
        %4656 = vmatprep.subr.bf16.mxu0 0
        %4657 = vmatpush1.bf16.msra.mxu0 %v4601
        %4658 = vmatprep.subr.bf16.mxu0 0
        %4659 = vmatpush1.bf16.msra.mxu0 %v4602
        %4660 = vmatprep.subr.bf16.mxu0 0
        %4661 = vmatpush1.bf16.msra.mxu0 %v4603
        %4662 = vmatprep.subr.bf16.mxu0 0
        %4663 = vmatpush1.bf16.msra.mxu0 %v4604
        %4664 = vmatprep.subr.bf16.mxu0 0
        %4665 = vmatpush1.bf16.msra.mxu0 %v4605
        %4666 = vmatprep.subr.bf16.mxu0 0
        %4667 = vmatpush1.bf16.msra.mxu0 %v4606
        %4668 = vmatprep.subr.bf16.mxu0 0
        %4669 = vmatpush1.bf16.msra.mxu0 %v4607
        %4670 = vmatprep.subr.bf16.mxu0 0
        %4671 = vmatpush1.bf16.msra.mxu0 %v4608
        %4672 = vmatprep.subr.bf16.mxu0 0
        %4673 = vmatpush1.bf16.msra.mxu0 %v4609
        %4674 = vmatprep.mubr.bf16.mxu0 %v3575
        %4675 = vmatmul.mubr.bf16.gmra.mrb[0].mxu0 %v3551
        %v4676 = vpop.f32.mrb[0].mxu0
        %v4677 = vadd.f32 %v4308, %v4676
        %v4678 = vpop.f32.mrb[0].mxu0
        %v4679 = vpop.f32.mrb[0].mxu0
        %v4680 = vadd.f32 %v4311, %v4679
        %v4681 = vpop.f32.mrb[0].mxu0
        %4682 = vmatprep.mubr.bf16.mxu0 %v3576
        %4683 = vmatmul.mubr.bf16.gmra.mrb[0].mxu0 %v3552
        %v4684 = vpop.f32.mrb[0].mxu0
        %v4685 = vadd.f32 %v4316, %v4684
        %v4686 = vpop.f32.mrb[0].mxu0
        %v4687 = vpop.f32.mrb[0].mxu0
        %v4688 = vadd.f32 %v4319, %v4687
        %v4689 = vpop.f32.mrb[0].mxu0
        %4690 = vmatprep.mubr.bf16.mxu0 %v3577
        %4691 = vmatmul.mubr.bf16.gmra.mrb[0].mxu0 %v3553
        %v4692 = vpop.f32.mrb[0].mxu0
        %v4693 = vadd.f32 %v4324, %v4692
        %v4694 = vpop.f32.mrb[0].mxu0
        %v4695 = vpop.f32.mrb[0].mxu0
        %v4696 = vadd.f32 %v4327, %v4695
        %v4697 = vpop.f32.mrb[0].mxu0
        %4698 = vmatprep.mubr.bf16.mxu0 %v3578
        %4699 = vmatmul.mubr.bf16.gmra.mrb[0].mxu0 %v3554
        %v4700 = vpop.f32.mrb[0].mxu0
        %v4701 = vadd.f32 %v4332, %v4700
        %v4702 = vpop.f32.mrb[0].mxu0
        %v4703 = vpop.f32.mrb[0].mxu0
        %v4704 = vadd.f32 %v4335, %v4703
        %v4705 = vpop.f32.mrb[0].mxu0
        %4706 = vmatprep.mubr.bf16.mxu0 %v3579
        %4707 = vmatmul.mubr.bf16.gmra.mrb[0].mxu0 %v3555
        %v4708 = vpop.f32.mrb[0].mxu0
        %v4709 = vadd.f32 %v4340, %v4708
        %v4710 = vpop.f32.mrb[0].mxu0
        %v4711 = vpop.f32.mrb[0].mxu0
        %v4712 = vadd.f32 %v4343, %v4711
        %v4713 = vpop.f32.mrb[0].mxu0
        %4714 = vmatprep.mubr.bf16.mxu0 %v3580
        %4715 = vmatmul.mubr.bf16.gmra.mrb[0].mxu0 %v3556
        %v4716 = vpop.f32.mrb[0].mxu0
        %v4717 = vadd.f32 %v4348, %v4716
        %v4718 = vpop.f32.mrb[0].mxu0
        %v4719 = vpop.f32.mrb[0].mxu0
        %v4720 = vadd.f32 %v4351, %v4719
        %v4721 = vpop.f32.mrb[0].mxu0
        %4722 = vmatprep.mubr.bf16.mxu0 %v3581
        %4723 = vmatmul.mubr.bf16.gmra.mrb[0].mxu0 %v3557
        %v4724 = vpop.f32.mrb[0].mxu0
        %v4725 = vadd.f32 %v4356, %v4724
        %v4726 = vpop.f32.mrb[0].mxu0
        %v4727 = vpop.f32.mrb[0].mxu0
        %v4728 = vadd.f32 %v4359, %v4727
        %v4729 = vpop.f32.mrb[0].mxu0
        %4730 = vmatprep.mubr.bf16.mxu0 %v3582
        %4731 = vmatmul.mubr.bf16.gmra.mrb[0].mxu0 %v3558
        %v4732 = vpop.f32.mrb[0].mxu0
        %v4733 = vadd.f32 %v4364, %v4732
        %v4734 = vpop.f32.mrb[0].mxu0
        %v4735 = vpop.f32.mrb[0].mxu0
        %v4736 = vadd.f32 %v4367, %v4735
        %v4737 = vpop.f32.mrb[0].mxu0
        %4738 = vmatprep.mubr.bf16.mxu0 %v3583
        %4739 = vmatmul.mubr.bf16.gmra.mrb[0].mxu0 %v3559
        %v4740 = vpop.f32.mrb[0].mxu0
        %v4741 = vadd.f32 %v4372, %v4740
        %v4742 = vpop.f32.mrb[0].mxu0
        %v4743 = vpop.f32.mrb[0].mxu0
        %v4744 = vadd.f32 %v4375, %v4743
        %v4745 = vpop.f32.mrb[0].mxu0
        %4746 = vmatprep.mubr.bf16.mxu0 %v3584
        %4747 = vmatmul.mubr.bf16.gmra.mrb[0].mxu0 %v3560
        %v4748 = vpop.f32.mrb[0].mxu0
        %v4749 = vadd.f32 %v4380, %v4748
        %v4750 = vpop.f32.mrb[0].mxu0
        %v4751 = vpop.f32.mrb[0].mxu0
        %v4752 = vadd.f32 %v4383, %v4751
        %v4753 = vpop.f32.mrb[0].mxu0
        %4754 = vmatprep.mubr.bf16.mxu0 %v3585
        %4755 = vmatmul.mubr.bf16.gmra.mrb[0].mxu0 %v3561
        %v4756 = vpop.f32.mrb[0].mxu0
        %v4757 = vadd.f32 %v4388, %v4756
        %v4758 = vpop.f32.mrb[0].mxu0
        %v4759 = vpop.f32.mrb[0].mxu0
        %v4760 = vadd.f32 %v4391, %v4759
        %v4761 = vpop.f32.mrb[0].mxu0
        %4762 = vmatprep.mubr.bf16.mxu0 %v3586
        %4763 = vmatmul.mubr.bf16.gmra.mrb[0].mxu0 %v3562
        %v4764 = vpop.f32.mrb[0].mxu0
        %v4765 = vadd.f32 %v4396, %v4764
        %v4766 = vpop.f32.mrb[0].mxu0
        %v4767 = vpop.f32.mrb[0].mxu0
        %v4768 = vadd.f32 %v4399, %v4767
        %v4769 = vpop.f32.mrb[0].mxu0
        %4770 = vmatprep.mubr.bf16.mxu0 %v3587
        %4771 = vmatmul.mubr.bf16.gmra.mrb[0].mxu0 %v3563
        %v4772 = vpop.f32.mrb[0].mxu0
        %v4773 = vadd.f32 %v4404, %v4772
        %v4774 = vpop.f32.mrb[0].mxu0
        %v4775 = vpop.f32.mrb[0].mxu0
        %v4776 = vadd.f32 %v4407, %v4775
        %v4777 = vpop.f32.mrb[0].mxu0
        %4778 = vmatprep.mubr.bf16.mxu0 %v3588
        %4779 = vmatmul.mubr.bf16.gmra.mrb[0].mxu0 %v3564
        %v4780 = vpop.f32.mrb[0].mxu0
        %v4781 = vadd.f32 %v4412, %v4780
        %v4782 = vpop.f32.mrb[0].mxu0
        %v4783 = vpop.f32.mrb[0].mxu0
        %v4784 = vadd.f32 %v4415, %v4783
        %v4785 = vpop.f32.mrb[0].mxu0
        %4786 = vmatprep.mubr.bf16.mxu0 %v3589
        %4787 = vmatmul.mubr.bf16.gmra.mrb[0].mxu0 %v3565
        %v4788 = vpop.f32.mrb[0].mxu0
        %v4789 = vadd.f32 %v4420, %v4788
        %v4790 = vpop.f32.mrb[0].mxu0
        %v4791 = vpop.f32.mrb[0].mxu0
        %v4792 = vadd.f32 %v4423, %v4791
        %v4793 = vpop.f32.mrb[0].mxu0
        %4794 = vmatprep.mubr.bf16.mxu0 %v3590
        %4795 = vmatmul.mubr.bf16.gmra.mrb[0].mxu0 %v3566
        %v4796 = vpop.f32.mrb[0].mxu0
        %v4797 = vadd.f32 %v4428, %v4796
        %v4798 = vpop.f32.mrb[0].mxu0
        %v4799 = vpop.f32.mrb[0].mxu0
        %v4800 = vadd.f32 %v4431, %v4799
        %v4801 = vpop.f32.mrb[0].mxu0
        %4802 = vmatprep.mubr.bf16.mxu0 %v3591
        %4803 = vmatmul.mubr.bf16.gmra.mrb[0].mxu0 %v3567
        %v4804 = vpop.f32.mrb[0].mxu0
        %v4805 = vadd.f32 %v4436, %v4804
        %v4806 = vpop.f32.mrb[0].mxu0
        %v4807 = vpop.f32.mrb[0].mxu0
        %v4808 = vadd.f32 %v4439, %v4807
        %v4809 = vpop.f32.mrb[0].mxu0
        %4810 = vmatprep.mubr.bf16.mxu0 %v3592
        %4811 = vmatmul.mubr.bf16.gmra.mrb[0].mxu0 %v3568
        %v4812 = vpop.f32.mrb[0].mxu0
        %v4813 = vadd.f32 %v4444, %v4812
        %v4814 = vpop.f32.mrb[0].mxu0
        %v4815 = vpop.f32.mrb[0].mxu0
        %v4816 = vadd.f32 %v4447, %v4815
        %v4817 = vpop.f32.mrb[0].mxu0
        %4818 = vmatprep.mubr.bf16.mxu0 %v3593
        %4819 = vmatmul.mubr.bf16.gmra.mrb[0].mxu0 %v3569
        %v4820 = vpop.f32.mrb[0].mxu0
        %v4821 = vadd.f32 %v4452, %v4820
        %v4822 = vpop.f32.mrb[0].mxu0
        %v4823 = vpop.f32.mrb[0].mxu0
        %v4824 = vadd.f32 %v4455, %v4823
        %v4825 = vpop.f32.mrb[0].mxu0
        %4826 = vmatprep.mubr.bf16.mxu0 %v3594
        %4827 = vmatmul.mubr.bf16.gmra.mrb[0].mxu0 %v3570
        %v4828 = vpop.f32.mrb[0].mxu0
        %v4829 = vadd.f32 %v4460, %v4828
        %v4830 = vpop.f32.mrb[0].mxu0
        %v4831 = vpop.f32.mrb[0].mxu0
        %v4832 = vadd.f32 %v4463, %v4831
        %v4833 = vpop.f32.mrb[0].mxu0
        %4834 = vmatprep.mubr.bf16.mxu0 %v3595
        %4835 = vmatmul.mubr.bf16.gmra.mrb[0].mxu0 %v3571
        %v4836 = vpop.f32.mrb[0].mxu0
        %v4837 = vadd.f32 %v4468, %v4836
        %v4838 = vpop.f32.mrb[0].mxu0
        %v4839 = vpop.f32.mrb[0].mxu0
        %v4840 = vadd.f32 %v4471, %v4839
        %v4841 = vpop.f32.mrb[0].mxu0
        %4842 = vmatprep.mubr.bf16.mxu0 %v3596
        %4843 = vmatmul.mubr.bf16.gmra.mrb[0].mxu0 %v3572
        %v4844 = vpop.f32.mrb[0].mxu0
        %v4845 = vadd.f32 %v4476, %v4844
        %v4846 = vpop.f32.mrb[0].mxu0
        %v4847 = vpop.f32.mrb[0].mxu0
        %v4848 = vadd.f32 %v4479, %v4847
        %v4849 = vpop.f32.mrb[0].mxu0
        %4850 = vmatprep.mubr.bf16.mxu0 %v3597
        %4851 = vmatmul.mubr.bf16.gmra.mrb[0].mxu0 %v3573
        %v4852 = vpop.f32.mrb[0].mxu0
        %v4853 = vadd.f32 %v4484, %v4852
        %v4854 = vpop.f32.mrb[0].mxu0
        %v4855 = vpop.f32.mrb[0].mxu0
        %v4856 = vadd.f32 %v4487, %v4855
        %v4857 = vpop.f32.mrb[0].mxu0
        %4858 = vmatprep.mubr.bf16.mxu0 %v3598
        %4859 = vmatmul.mubr.bf16.gmra.mrb[0].mxu0 %v3574
        %v4860 = vpop.f32.mrb[0].mxu0
        %v4861 = vadd.f32 %v4492, %v4860
        %v4862 = vpop.f32.mrb[0].mxu0
        %v4863 = vpop.f32.mrb[0].mxu0
        %v4864 = vadd.f32 %v4495, %v4863
        %v4865 = vpop.f32.mrb[0].mxu0
        %4866 = vdwg.mxu0
        %4867 = vmatprep.subr.bf16.mxu0 0
        %4868 = vmatpush1.bf16.msra.mxu0 %v4610
        %4869 = vmatprep.subr.bf16.mxu0 0
        %4870 = vmatpush1.bf16.msra.mxu0 %v4611
        %4871 = vmatprep.subr.bf16.mxu0 0
        %4872 = vmatpush1.bf16.msra.mxu0 %v4612
        %4873 = vmatprep.subr.bf16.mxu0 0
        %4874 = vmatpush1.bf16.msra.mxu0 %v4613
        %4875 = vmatprep.subr.bf16.mxu0 0
        %4876 = vmatpush1.bf16.msra.mxu0 %v4614
        %4877 = vmatprep.subr.bf16.mxu0 0
        %4878 = vmatpush1.bf16.msra.mxu0 %v4615
        %4879 = vmatprep.subr.bf16.mxu0 0
        %4880 = vmatpush1.bf16.msra.mxu0 %v4616
        %4881 = vmatprep.subr.bf16.mxu0 0
        %4882 = vmatpush1.bf16.msra.mxu0 %v4617
        %4883 = vmatprep.subr.bf16.mxu0 0
        %4884 = vmatpush1.bf16.msra.mxu0 0
        %4885 = vmatprep.subr.bf16.mxu0 0
        %4886 = vmatpush1.bf16.msra.mxu0 0
        %4887 = vmatprep.subr.bf16.mxu0 0
        %4888 = vmatpush1.bf16.msra.mxu0 0
        %4889 = vmatprep.subr.bf16.mxu0 0
        %4890 = vmatpush1.bf16.msra.mxu0 0
        %4891 = vmatprep.subr.bf16.mxu0 0
        %4892 = vmatpush1.bf16.msra.mxu0 0
        %4893 = vmatprep.subr.bf16.mxu0 0
        %4894 = vmatpush1.bf16.msra.mxu0 0
        %4895 = vmatprep.subr.bf16.mxu0 0
        %4896 = vmatpush1.bf16.msra.mxu0 0
        %4897 = vmatprep.subr.bf16.mxu0 0
        %4898 = vmatpush1.bf16.msra.mxu0 0
        %4899 = vmatprep.mubr.bf16.mxu0 0
        %4900 = vmatmul.mubr.bf16.gmra.mrb[0].mxu0 %v3695
        %v4901 = vpop.f32.mrb[0].mxu0
        %v4902 = vadd.f32 %v4677, %v4901
        %v4903 = vpop.f32.mrb[0].mxu0
        %v4904 = vpop.f32.mrb[0].mxu0
        %v4905 = vadd.f32 %v4680, %v4904
        %v4906 = vpop.f32.mrb[0].mxu0
        %4907 = vmatprep.mubr.bf16.mxu0 0
        %4908 = vmatmul.mubr.bf16.gmra.mrb[0].mxu0 %v3696
        %v4909 = vpop.f32.mrb[0].mxu0
        %v4910 = vadd.f32 %v4685, %v4909
        %v4911 = vpop.f32.mrb[0].mxu0
        %v4912 = vpop.f32.mrb[0].mxu0
        %v4913 = vadd.f32 %v4688, %v4912
        %v4914 = vpop.f32.mrb[0].mxu0
        %4915 = vmatprep.mubr.bf16.mxu0 0
        %4916 = vmatmul.mubr.bf16.gmra.mrb[0].mxu0 %v3697
        %v4917 = vpop.f32.mrb[0].mxu0
        %v4918 = vadd.f32 %v4693, %v4917
        %v4919 = vpop.f32.mrb[0].mxu0
        %v4920 = vpop.f32.mrb[0].mxu0
        %v4921 = vadd.f32 %v4696, %v4920
        %v4922 = vpop.f32.mrb[0].mxu0
        %4923 = vmatprep.mubr.bf16.mxu0 0
        %4924 = vmatmul.mubr.bf16.gmra.mrb[0].mxu0 %v3698
        %v4925 = vpop.f32.mrb[0].mxu0
        %v4926 = vadd.f32 %v4701, %v4925
        %v4927 = vpop.f32.mrb[0].mxu0
        %v4928 = vpop.f32.mrb[0].mxu0
        %v4929 = vadd.f32 %v4704, %v4928
        %v4930 = vpop.f32.mrb[0].mxu0
        %4931 = vmatprep.mubr.bf16.mxu0 0
        %4932 = vmatmul.mubr.bf16.gmra.mrb[0].mxu0 %v3699
        %v4933 = vpop.f32.mrb[0].mxu0
        %v4934 = vadd.f32 %v4709, %v4933
        %v4935 = vpop.f32.mrb[0].mxu0
        %v4936 = vpop.f32.mrb[0].mxu0
        %v4937 = vadd.f32 %v4712, %v4936
        %v4938 = vpop.f32.mrb[0].mxu0
        %4939 = vmatprep.mubr.bf16.mxu0 0
        %4940 = vmatmul.mubr.bf16.gmra.mrb[0].mxu0 %v3700
        %v4941 = vpop.f32.mrb[0].mxu0
        %v4942 = vadd.f32 %v4717, %v4941
        %v4943 = vpop.f32.mrb[0].mxu0
        %v4944 = vpop.f32.mrb[0].mxu0
        %v4945 = vadd.f32 %v4720, %v4944
        %v4946 = vpop.f32.mrb[0].mxu0
        %4947 = vmatprep.mubr.bf16.mxu0 0
        %4948 = vmatmul.mubr.bf16.gmra.mrb[0].mxu0 %v3701
        %v4949 = vpop.f32.mrb[0].mxu0
        %v4950 = vadd.f32 %v4725, %v4949
        %v4951 = vpop.f32.mrb[0].mxu0
        %v4952 = vpop.f32.mrb[0].mxu0
        %v4953 = vadd.f32 %v4728, %v4952
        %v4954 = vpop.f32.mrb[0].mxu0
        %4955 = vmatprep.mubr.bf16.mxu0 0
        %4956 = vmatmul.mubr.bf16.gmra.mrb[0].mxu0 %v3702
        %v4957 = vpop.f32.mrb[0].mxu0
        %v4958 = vadd.f32 %v4733, %v4957
        %v4959 = vpop.f32.mrb[0].mxu0
        %v4960 = vpop.f32.mrb[0].mxu0
        %v4961 = vadd.f32 %v4736, %v4960
        %v4962 = vpop.f32.mrb[0].mxu0
        %4963 = vmatprep.mubr.bf16.mxu0 0
        %4964 = vmatmul.mubr.bf16.gmra.mrb[0].mxu0 %v3703
        %v4965 = vpop.f32.mrb[0].mxu0
        %v4966 = vadd.f32 %v4741, %v4965
        %v4967 = vpop.f32.mrb[0].mxu0
        %v4968 = vpop.f32.mrb[0].mxu0
        %v4969 = vadd.f32 %v4744, %v4968
        %v4970 = vpop.f32.mrb[0].mxu0
        %4971 = vmatprep.mubr.bf16.mxu0 0
        %4972 = vmatmul.mubr.bf16.gmra.mrb[0].mxu0 %v3704
        %v4973 = vpop.f32.mrb[0].mxu0
        %v4974 = vadd.f32 %v4749, %v4973
        %v4975 = vpop.f32.mrb[0].mxu0
        %v4976 = vpop.f32.mrb[0].mxu0
        %v4977 = vadd.f32 %v4752, %v4976
        %v4978 = vpop.f32.mrb[0].mxu0
        %4979 = vmatprep.mubr.bf16.mxu0 0
        %4980 = vmatmul.mubr.bf16.gmra.mrb[0].mxu0 %v3705
        %v4981 = vpop.f32.mrb[0].mxu0
        %v4982 = vadd.f32 %v4757, %v4981
        %v4983 = vpop.f32.mrb[0].mxu0
        %v4984 = vpop.f32.mrb[0].mxu0
        %v4985 = vadd.f32 %v4760, %v4984
        %v4986 = vpop.f32.mrb[0].mxu0
        %4987 = vmatprep.mubr.bf16.mxu0 0
        %4988 = vmatmul.mubr.bf16.gmra.mrb[0].mxu0 %v3706
        %v4989 = vpop.f32.mrb[0].mxu0
        %v4990 = vadd.f32 %v4765, %v4989
        %v4991 = vpop.f32.mrb[0].mxu0
        %v4992 = vpop.f32.mrb[0].mxu0
        %v4993 = vadd.f32 %v4768, %v4992
        %v4994 = vpop.f32.mrb[0].mxu0
        %4995 = vmatprep.mubr.bf16.mxu0 0
        %4996 = vmatmul.mubr.bf16.gmra.mrb[0].mxu0 %v3707
        %v4997 = vpop.f32.mrb[0].mxu0
        %v4998 = vadd.f32 %v4773, %v4997
        %v4999 = vpop.f32.mrb[0].mxu0
        %v5000 = vpop.f32.mrb[0].mxu0
        %v5001 = vadd.f32 %v4776, %v5000
        %v5002 = vpop.f32.mrb[0].mxu0
        %5003 = vmatprep.mubr.bf16.mxu0 0
        %5004 = vmatmul.mubr.bf16.gmra.mrb[0].mxu0 %v3708
        %v5005 = vpop.f32.mrb[0].mxu0
        %v5006 = vadd.f32 %v4781, %v5005
        %v5007 = vpop.f32.mrb[0].mxu0
        %v5008 = vpop.f32.mrb[0].mxu0
        %v5009 = vadd.f32 %v4784, %v5008
        %v5010 = vpop.f32.mrb[0].mxu0
        %5011 = vmatprep.mubr.bf16.mxu0 0
        %5012 = vmatmul.mubr.bf16.gmra.mrb[0].mxu0 %v3709
        %v5013 = vpop.f32.mrb[0].mxu0
        %v5014 = vadd.f32 %v4789, %v5013
        %v5015 = vpop.f32.mrb[0].mxu0
        %v5016 = vpop.f32.mrb[0].mxu0
        %v5017 = vadd.f32 %v4792, %v5016
        %v5018 = vpop.f32.mrb[0].mxu0
        %5019 = vmatprep.mubr.bf16.mxu0 0
        %5020 = vmatmul.mubr.bf16.gmra.mrb[0].mxu0 %v3710
        %v5021 = vpop.f32.mrb[0].mxu0
        %v5022 = vadd.f32 %v4797, %v5021
        %v5023 = vpop.f32.mrb[0].mxu0
        %v5024 = vpop.f32.mrb[0].mxu0
        %v5025 = vadd.f32 %v4800, %v5024
        %v5026 = vpop.f32.mrb[0].mxu0
        %5027 = vmatprep.mubr.bf16.mxu0 0
        %5028 = vmatmul.mubr.bf16.gmra.mrb[0].mxu0 %v3711
        %v5029 = vpop.f32.mrb[0].mxu0
        %v5030 = vadd.f32 %v4805, %v5029
        %v5031 = vpop.f32.mrb[0].mxu0
        %v5032 = vpop.f32.mrb[0].mxu0
        %v5033 = vadd.f32 %v4808, %v5032
        %v5034 = vpop.f32.mrb[0].mxu0
        %5035 = vmatprep.mubr.bf16.mxu0 0
        %5036 = vmatmul.mubr.bf16.gmra.mrb[0].mxu0 %v3712
        %v5037 = vpop.f32.mrb[0].mxu0
        %v5038 = vadd.f32 %v4813, %v5037
        %v5039 = vpop.f32.mrb[0].mxu0
        %v5040 = vpop.f32.mrb[0].mxu0
        %v5041 = vadd.f32 %v4816, %v5040
        %v5042 = vpop.f32.mrb[0].mxu0
        %5043 = vmatprep.mubr.bf16.mxu0 0
        %5044 = vmatmul.mubr.bf16.gmra.mrb[0].mxu0 %v3713
        %v5045 = vpop.f32.mrb[0].mxu0
        %v5046 = vadd.f32 %v4821, %v5045
        %v5047 = vpop.f32.mrb[0].mxu0
        %v5048 = vpop.f32.mrb[0].mxu0
        %v5049 = vadd.f32 %v4824, %v5048
        %v5050 = vpop.f32.mrb[0].mxu0
        %5051 = vmatprep.mubr.bf16.mxu0 0
        %5052 = vmatmul.mubr.bf16.gmra.mrb[0].mxu0 %v3714
        %v5053 = vpop.f32.mrb[0].mxu0
        %v5054 = vadd.f32 %v4829, %v5053
        %v5055 = vpop.f32.mrb[0].mxu0
        %v5056 = vpop.f32.mrb[0].mxu0
        %v5057 = vadd.f32 %v4832, %v5056
        %v5058 = vpop.f32.mrb[0].mxu0
        %5059 = vmatprep.mubr.bf16.mxu0 0
        %5060 = vmatmul.mubr.bf16.gmra.mrb[0].mxu0 %v3715
        %v5061 = vpop.f32.mrb[0].mxu0
        %v5062 = vadd.f32 %v4837, %v5061
        %v5063 = vpop.f32.mrb[0].mxu0
        %v5064 = vpop.f32.mrb[0].mxu0
        %v5065 = vadd.f32 %v4840, %v5064
        %v5066 = vpop.f32.mrb[0].mxu0
        %5067 = vmatprep.mubr.bf16.mxu0 0
        %5068 = vmatmul.mubr.bf16.gmra.mrb[0].mxu0 %v3716
        %v5069 = vpop.f32.mrb[0].mxu0
        %v5070 = vadd.f32 %v4845, %v5069
        %v5071 = vpop.f32.mrb[0].mxu0
        %v5072 = vpop.f32.mrb[0].mxu0
        %v5073 = vadd.f32 %v4848, %v5072
        %v5074 = vpop.f32.mrb[0].mxu0
        %5075 = vmatprep.mubr.bf16.mxu0 0
        %5076 = vmatmul.mubr.bf16.gmra.mrb[0].mxu0 %v3717
        %v5077 = vpop.f32.mrb[0].mxu0
        %v5078 = vadd.f32 %v4853, %v5077
        %v5079 = vpop.f32.mrb[0].mxu0
        %v5080 = vpop.f32.mrb[0].mxu0
        %v5081 = vadd.f32 %v4856, %v5080
        %v5082 = vpop.f32.mrb[0].mxu0
        %5083 = vmatprep.mubr.bf16.mxu0 0
        %5084 = vmatmul.mubr.bf16.gmra.mrb[0].mxu0 %v3718
        %v5085 = vpop.f32.mrb[0].mxu0
        %v5086 = vadd.f32 %v4861, %v5085
        %v5087 = vpop.f32.mrb[0].mxu0
        %v5088 = vpop.f32.mrb[0].mxu0
        %v5089 = vadd.f32 %v4864, %v5088
        %v5090 = vpop.f32.mrb[0].mxu0
        %5091 = vdwg.mxu0
        %v5092 = vld [vmem:[#allocation2 + $0x30] sm:$0xff]
        %v5093 = vld [vmem:[#allocation2 + $0x38] sm:$0xff]
        %v5094 = vld [vmem:[#allocation2 + $0x40] sm:$0xff]
        %v5095 = vld [vmem:[#allocation2 + $0x48] sm:$0xff]
        %v5096 = vld [vmem:[#allocation2 + $0x50] sm:$0xff]
        %v5097 = vld [vmem:[#allocation2 + $0x58] sm:$0xff]
        %v5098 = vld [vmem:[#allocation2 + $0x60] sm:$0xff]
        %v5099 = vld [vmem:[#allocation2 + $0x68] sm:$0xff]
        %v5100 = vld [vmem:[#allocation2 + $0x70] sm:$0xff]
        %v5101 = vld [vmem:[#allocation2 + $0x78] sm:$0xff]
        %v5102 = vld [vmem:[#allocation2 + $0x80] sm:$0xff]
        %v5103 = vld [vmem:[#allocation2 + $0x88] sm:$0xff]
        %v5104 = vld [vmem:[#allocation2 + $0x90] sm:$0xff]
        %v5105 = vld [vmem:[#allocation2 + $0x98] sm:$0xff]
        %v5106 = vld [vmem:[#allocation2 + $0xa0] sm:$0xff]
        %v5107 = vld [vmem:[#allocation2 + $0xa8] sm:$0xff]
        %v5108 = vld [vmem:[#allocation2 + $0xb0] sm:$0xff]
        %v5109 = vld [vmem:[#allocation2 + $0xb8] sm:$0xff]
        %v5110 = vld [vmem:[#allocation2 + $0xc0] sm:$0xff]
        %v5111 = vld [vmem:[#allocation2 + $0xc8] sm:$0xff]
        %v5112 = vld [vmem:[#allocation2 + $0xd0] sm:$0xff]
        %v5113 = vld [vmem:[#allocation2 + $0xd8] sm:$0xff]
        %v5114 = vld [vmem:[#allocation2 + $0xe0] sm:$0xff]
        %v5115 = vld [vmem:[#allocation2 + $0xe8] sm:$0xff]
        %v5116 = vld [vmem:[#allocation2 + $0xf0] sm:$0xff]
        %v5117 = vld [vmem:[#allocation2 + $0xf8] sm:$0xff]
        %v5118 = vld [vmem:[#allocation2 + $0x100] sm:$0xff]
        %v5119 = vld [vmem:[#allocation2 + $0x108] sm:$0xff]
        %v5120 = vld [vmem:[#allocation2 + $0x110] sm:$0xff]
        %v5121 = vld [vmem:[#allocation2 + $0x118] sm:$0xff]
        %v5122 = vld [vmem:[#allocation2 + $0x120] sm:$0xff]
        %v5123 = vld [vmem:[#allocation2 + $0x128] sm:$0xff]
        %v5124 = vld [vmem:[#allocation2 + $0x130] sm:$0xff]
        %v5125 = vld [vmem:[#allocation2 + $0x138] sm:$0xff]
        %v5126 = vld [vmem:[#allocation2 + $0x140] sm:$0xff]
        %v5127 = vld [vmem:[#allocation2 + $0x148] sm:$0xff]
        %v5128 = vld [vmem:[#allocation2 + $0x150] sm:$0xff]
        %v5129 = vld [vmem:[#allocation2 + $0x158] sm:$0xff]
        %v5130 = vld [vmem:[#allocation2 + $0x160] sm:$0xff]
        %v5131 = vld [vmem:[#allocation2 + $0x168] sm:$0xff]
        %v5132 = vld [vmem:[#allocation2 + $0x170] sm:$0xff]
        %v5133 = vld [vmem:[#allocation2 + $0x178] sm:$0xff]
        %v5134 = vld [vmem:[#allocation2 + $0x180] sm:$0xff]
        %v5135 = vld [vmem:[#allocation2 + $0x188] sm:$0xff]
        %v5136 = vld [vmem:[#allocation2 + $0x190] sm:$0xff]
        %v5137 = vld [vmem:[#allocation2 + $0x198] sm:$0xff]
        %v5138 = vld [vmem:[#allocation2 + $0x1a0] sm:$0xff]
        %v5139 = vld [vmem:[#allocation2 + $0x1a8] sm:$0xff]
        %v5140 = vrot.slane %v5092, 7
        %v5141 = vrot.slane %v5093, 7
        %v5142 = vrot.slane %v5094, 7
        %v5143 = vrot.slane %v5095, 7
        %v5144 = vrot.slane %v5096, 7
        %v5145 = vrot.slane %v5097, 7
        %v5146 = vrot.slane %v5098, 7
        %v5147 = vrot.slane %v5099, 7
        %v5148 = vrot.slane %v5100, 7
        %v5149 = vrot.slane %v5101, 7
        %v5150 = vrot.slane %v5102, 7
        %v5151 = vrot.slane %v5103, 7
        %v5152 = vrot.slane %v5104, 7
        %v5153 = vrot.slane %v5105, 7
        %v5154 = vrot.slane %v5106, 7
        %v5155 = vrot.slane %v5107, 7
        %v5156 = vrot.slane %v5108, 7
        %v5157 = vrot.slane %v5109, 7
        %v5158 = vrot.slane %v5110, 7
        %v5159 = vrot.slane %v5111, 7
        %v5160 = vrot.slane %v5112, 7
        %v5161 = vrot.slane %v5113, 7
        %v5162 = vrot.slane %v5114, 7
        %v5163 = vrot.slane %v5115, 7
        %v5164 = vrot.slane %v5116, 7
        %v5165 = vrot.slane %v5117, 7
        %v5166 = vrot.slane %v5118, 7
        %v5167 = vrot.slane %v5119, 7
        %v5168 = vrot.slane %v5120, 7
        %v5169 = vrot.slane %v5121, 7
        %v5170 = vrot.slane %v5122, 7
        %v5171 = vrot.slane %v5123, 7
        %v5172 = vrot.slane %v5124, 7
        %v5173 = vrot.slane %v5125, 7
        %v5174 = vrot.slane %v5126, 7
        %v5175 = vrot.slane %v5127, 7
        %v5176 = vrot.slane %v5128, 7
        %v5177 = vrot.slane %v5129, 7
        %v5178 = vrot.slane %v5130, 7
        %v5179 = vrot.slane %v5131, 7
        %v5180 = vrot.slane %v5132, 7
        %v5181 = vrot.slane %v5133, 7
        %v5182 = vrot.slane %v5134, 7
        %v5183 = vrot.slane %v5135, 7
        %v5184 = vrot.slane %v5136, 7
        %v5185 = vrot.slane %v5137, 7
        %v5186 = vrot.slane %v5138, 7
        %v5187 = vrot.slane %v5139, 7
        %v5188 = vsel %vm1624, %v5186, %v5187
        %v5189 = vsel %vm1624, %v5185, %v5186
        %v5190 = vsel %vm1624, %v5184, %v5185
        %v5191 = vsel %vm1624, %v5183, %v5184
        %v5192 = vsel %vm1624, %v5182, %v5183
        %v5193 = vsel %vm1624, %v5181, %v5182
        %v5194 = vsel %vm1624, %v5180, %v5181
        %v5195 = vsel %vm1624, %v5179, %v5180
        %v5196 = vsel %vm1624, %v5178, %v5179
        %v5197 = vsel %vm1624, %v5177, %v5178
        %v5198 = vsel %vm1624, %v5176, %v5177
        %v5199 = vsel %vm1624, %v5175, %v5176
        %v5200 = vsel %vm1624, %v5174, %v5175
        %v5201 = vsel %vm1624, %v5173, %v5174
        %v5202 = vsel %vm1624, %v5172, %v5173
        %v5203 = vsel %vm1624, %v5171, %v5172
        %v5204 = vsel %vm1624, %v5170, %v5171
        %v5205 = vsel %vm1624, %v5169, %v5170
        %v5206 = vsel %vm1624, %v5168, %v5169
        %v5207 = vsel %vm1624, %v5167, %v5168
        %v5208 = vsel %vm1624, %v5166, %v5167
        %v5209 = vsel %vm1624, %v5165, %v5166
        %v5210 = vsel %vm1624, %v5164, %v5165
        %v5211 = vsel %vm1624, %v5163, %v5164
        %v5212 = vsel %vm1624, %v5162, %v5163
        %v5213 = vsel %vm1624, %v5161, %v5162
        %v5214 = vsel %vm1624, %v5160, %v5161
        %v5215 = vsel %vm1624, %v5159, %v5160
        %v5216 = vsel %vm1624, %v5158, %v5159
        %v5217 = vsel %vm1624, %v5157, %v5158
        %v5218 = vsel %vm1624, %v5156, %v5157
        %v5219 = vsel %vm1624, %v5155, %v5156
        %v5220 = vsel %vm1624, %v5154, %v5155
        %v5221 = vsel %vm1624, %v5153, %v5154
        %v5222 = vsel %vm1624, %v5152, %v5153
        %v5223 = vsel %vm1624, %v5151, %v5152
        %v5224 = vsel %vm1624, %v5150, %v5151
        %v5225 = vsel %vm1624, %v5149, %v5150
        %v5226 = vsel %vm1624, %v5148, %v5149
        %v5227 = vsel %vm1624, %v5147, %v5148
        %v5228 = vsel %vm1624, %v5146, %v5147
        %v5229 = vsel %vm1624, %v5145, %v5146
        %v5230 = vsel %vm1624, %v5144, %v5145
        %v5231 = vsel %vm1624, %v5143, %v5144
        %v5232 = vsel %vm1624, %v5142, %v5143
        %v5233 = vsel %vm1624, %v5141, %v5142
        %v5234 = vsel %vm1624, %v5140, %v5141
        %v5235 = vsel %vm1624, %v5187, %v5140
        %v5236 = vpack.c.bf16 %v5234, %v5235
        %v5237 = vpack.c.bf16 %v5232, %v5233
        %v5238 = vpack.c.bf16 %v5230, %v5231
        %v5239 = vpack.c.bf16 %v5228, %v5229
        %v5240 = vpack.c.bf16 %v5226, %v5227
        %v5241 = vpack.c.bf16 %v5224, %v5225
        %v5242 = vpack.c.bf16 %v5222, %v5223
        %v5243 = vpack.c.bf16 %v5220, %v5221
        %v5244 = vpack.c.bf16 %v5218, %v5219
        %v5245 = vpack.c.bf16 %v5216, %v5217
        %v5246 = vpack.c.bf16 %v5214, %v5215
        %v5247 = vpack.c.bf16 %v5212, %v5213
        %v5248 = vpack.c.bf16 %v5210, %v5211
        %v5249 = vpack.c.bf16 %v5208, %v5209
        %v5250 = vpack.c.bf16 %v5206, %v5207
        %v5251 = vpack.c.bf16 %v5204, %v5205
        %v5252 = vpack.c.bf16 %v5202, %v5203
        %v5253 = vpack.c.bf16 %v5200, %v5201
        %v5254 = vpack.c.bf16 %v5198, %v5199
        %v5255 = vpack.c.bf16 %v5196, %v5197
        %v5256 = vpack.c.bf16 %v5194, %v5195
        %v5257 = vpack.c.bf16 %v5192, %v5193
        %v5258 = vpack.c.bf16 %v5190, %v5191
        %v5259 = vpack.c.bf16 %v5188, %v5189
        %v5260 = vpack.c.bf16 %v5093, %v5092
        %v5261 = vpack.c.bf16 %v5095, %v5094
        %v5262 = vpack.c.bf16 %v5097, %v5096
        %v5263 = vpack.c.bf16 %v5099, %v5098
        %v5264 = vpack.c.bf16 %v5101, %v5100
        %v5265 = vpack.c.bf16 %v5103, %v5102
        %v5266 = vpack.c.bf16 %v5105, %v5104
        %v5267 = vpack.c.bf16 %v5107, %v5106
        %v5268 = vpack.c.bf16 %v5109, %v5108
        %v5269 = vpack.c.bf16 %v5111, %v5110
        %v5270 = vpack.c.bf16 %v5113, %v5112
        %v5271 = vpack.c.bf16 %v5115, %v5114
        %v5272 = vpack.c.bf16 %v5117, %v5116
        %v5273 = vpack.c.bf16 %v5119, %v5118
        %v5274 = vpack.c.bf16 %v5121, %v5120
        %v5275 = vpack.c.bf16 %v5123, %v5122
        %v5276 = vpack.c.bf16 %v5125, %v5124
        %v5277 = vpack.c.bf16 %v5127, %v5126
        %v5278 = vpack.c.bf16 %v5129, %v5128
        %v5279 = vpack.c.bf16 %v5131, %v5130
        %v5280 = vpack.c.bf16 %v5133, %v5132
        %v5281 = vpack.c.bf16 %v5135, %v5134
        %v5282 = vpack.c.bf16 %v5137, %v5136
        %v5283 = vpack.c.bf16 %v5139, %v5138
        %v5284 = vrot.slane %v5092, 1
        %v5285 = vrot.slane %v5093, 1
        %v5286 = vrot.slane %v5094, 1
        %v5287 = vrot.slane %v5095, 1
        %v5288 = vrot.slane %v5096, 1
        %v5289 = vrot.slane %v5097, 1
        %v5290 = vrot.slane %v5098, 1
        %v5291 = vrot.slane %v5099, 1
        %v5292 = vrot.slane %v5100, 1
        %v5293 = vrot.slane %v5101, 1
        %v5294 = vrot.slane %v5102, 1
        %v5295 = vrot.slane %v5103, 1
        %v5296 = vrot.slane %v5104, 1
        %v5297 = vrot.slane %v5105, 1
        %v5298 = vrot.slane %v5106, 1
        %v5299 = vrot.slane %v5107, 1
        %v5300 = vrot.slane %v5108, 1
        %v5301 = vrot.slane %v5109, 1
        %v5302 = vrot.slane %v5110, 1
        %v5303 = vrot.slane %v5111, 1
        %v5304 = vrot.slane %v5112, 1
        %v5305 = vrot.slane %v5113, 1
        %v5306 = vrot.slane %v5114, 1
        %v5307 = vrot.slane %v5115, 1
        %v5308 = vrot.slane %v5116, 1
        %v5309 = vrot.slane %v5117, 1
        %v5310 = vrot.slane %v5118, 1
        %v5311 = vrot.slane %v5119, 1
        %v5312 = vrot.slane %v5120, 1
        %v5313 = vrot.slane %v5121, 1
        %v5314 = vrot.slane %v5122, 1
        %v5315 = vrot.slane %v5123, 1
        %v5316 = vrot.slane %v5124, 1
        %v5317 = vrot.slane %v5125, 1
        %v5318 = vrot.slane %v5126, 1
        %v5319 = vrot.slane %v5127, 1
        %v5320 = vrot.slane %v5128, 1
        %v5321 = vrot.slane %v5129, 1
        %v5322 = vrot.slane %v5130, 1
        %v5323 = vrot.slane %v5131, 1
        %v5324 = vrot.slane %v5132, 1
        %v5325 = vrot.slane %v5133, 1
        %v5326 = vrot.slane %v5134, 1
        %v5327 = vrot.slane %v5135, 1
        %v5328 = vrot.slane %v5136, 1
        %v5329 = vrot.slane %v5137, 1
        %v5330 = vrot.slane %v5138, 1
        %v5331 = vrot.slane %v5139, 1
        %v5332 = vsel %vm1875, %v5330, %v5331
        %v5333 = vsel %vm1875, %v5329, %v5330
        %v5334 = vsel %vm1875, %v5328, %v5329
        %v5335 = vsel %vm1875, %v5327, %v5328
        %v5336 = vsel %vm1875, %v5326, %v5327
        %v5337 = vsel %vm1875, %v5325, %v5326
        %v5338 = vsel %vm1875, %v5324, %v5325
        %v5339 = vsel %vm1875, %v5323, %v5324
        %v5340 = vsel %vm1875, %v5322, %v5323
        %v5341 = vsel %vm1875, %v5321, %v5322
        %v5342 = vsel %vm1875, %v5320, %v5321
        %v5343 = vsel %vm1875, %v5319, %v5320
        %v5344 = vsel %vm1875, %v5318, %v5319
        %v5345 = vsel %vm1875, %v5317, %v5318
        %v5346 = vsel %vm1875, %v5316, %v5317
        %v5347 = vsel %vm1875, %v5315, %v5316
        %v5348 = vsel %vm1875, %v5314, %v5315
        %v5349 = vsel %vm1875, %v5313, %v5314
        %v5350 = vsel %vm1875, %v5312, %v5313
        %v5351 = vsel %vm1875, %v5311, %v5312
        %v5352 = vsel %vm1875, %v5310, %v5311
        %v5353 = vsel %vm1875, %v5309, %v5310
        %v5354 = vsel %vm1875, %v5308, %v5309
        %v5355 = vsel %vm1875, %v5307, %v5308
        %v5356 = vsel %vm1875, %v5306, %v5307
        %v5357 = vsel %vm1875, %v5305, %v5306
        %v5358 = vsel %vm1875, %v5304, %v5305
        %v5359 = vsel %vm1875, %v5303, %v5304
        %v5360 = vsel %vm1875, %v5302, %v5303
        %v5361 = vsel %vm1875, %v5301, %v5302
        %v5362 = vsel %vm1875, %v5300, %v5301
        %v5363 = vsel %vm1875, %v5299, %v5300
        %v5364 = vsel %vm1875, %v5298, %v5299
        %v5365 = vsel %vm1875, %v5297, %v5298
        %v5366 = vsel %vm1875, %v5296, %v5297
        %v5367 = vsel %vm1875, %v5295, %v5296
        %v5368 = vsel %vm1875, %v5294, %v5295
        %v5369 = vsel %vm1875, %v5293, %v5294
        %v5370 = vsel %vm1875, %v5292, %v5293
        %v5371 = vsel %vm1875, %v5291, %v5292
        %v5372 = vsel %vm1875, %v5290, %v5291
        %v5373 = vsel %vm1875, %v5289, %v5290
        %v5374 = vsel %vm1875, %v5288, %v5289
        %v5375 = vsel %vm1875, %v5287, %v5288
        %v5376 = vsel %vm1875, %v5286, %v5287
        %v5377 = vsel %vm1875, %v5285, %v5286
        %v5378 = vsel %vm1875, %v5284, %v5285
        %v5379 = vsel %vm1875, %v5331, %v5284
        %v5380 = vpack.c.bf16 %v5377, %v5378
        %v5381 = vpack.c.bf16 %v5375, %v5376
        %v5382 = vpack.c.bf16 %v5373, %v5374
        %v5383 = vpack.c.bf16 %v5371, %v5372
        %v5384 = vpack.c.bf16 %v5369, %v5370
        %v5385 = vpack.c.bf16 %v5367, %v5368
        %v5386 = vpack.c.bf16 %v5365, %v5366
        %v5387 = vpack.c.bf16 %v5363, %v5364
        %v5388 = vpack.c.bf16 %v5361, %v5362
        %v5389 = vpack.c.bf16 %v5359, %v5360
        %v5390 = vpack.c.bf16 %v5357, %v5358
        %v5391 = vpack.c.bf16 %v5355, %v5356
        %v5392 = vpack.c.bf16 %v5353, %v5354
        %v5393 = vpack.c.bf16 %v5351, %v5352
        %v5394 = vpack.c.bf16 %v5349, %v5350
        %v5395 = vpack.c.bf16 %v5347, %v5348
        %v5396 = vpack.c.bf16 %v5345, %v5346
        %v5397 = vpack.c.bf16 %v5343, %v5344
        %v5398 = vpack.c.bf16 %v5341, %v5342
        %v5399 = vpack.c.bf16 %v5339, %v5340
        %v5400 = vpack.c.bf16 %v5337, %v5338
        %v5401 = vpack.c.bf16 %v5335, %v5336
        %v5402 = vpack.c.bf16 %v5333, %v5334
        %v5403 = vpack.c.bf16 %v5379, %v5332
        %v5404 = vld [vmem:[%s3 + $0x180] sm:$0xf]
        %v5405 = vld [vmem:[%s3 + $0x184] sm:$0xf]
        %v5406 = vld [vmem:[%s3 + $0x188] sm:$0xf]
        %v5407 = vld [vmem:[%s3 + $0x18c] sm:$0xf]
        %v5408 = vld [vmem:[%s3 + $0x190] sm:$0xf]
        %v5409 = vld [vmem:[%s3 + $0x194] sm:$0xf]
        %v5410 = vld [vmem:[%s3 + $0x198] sm:$0xf]
        %v5411 = vld [vmem:[%s3 + $0x19c] sm:$0xf]
        %v5412 = vld [vmem:[%s3 + $0x1a0] sm:$0xf]
        %v5413 = vld [vmem:[%s3 + $0x1a4] sm:$0xf]
        %v5414 = vld [vmem:[%s3 + $0x1a8] sm:$0xf]
        %v5415 = vld [vmem:[%s3 + $0x1ac] sm:$0xf]
        %v5416 = vld [vmem:[%s3 + $0x1b0] sm:$0xf]
        %v5417 = vld [vmem:[%s3 + $0x1b4] sm:$0xf]
        %v5418 = vld [vmem:[%s3 + $0x1b8] sm:$0xf]
        %v5419 = vld [vmem:[%s3 + $0x1bc] sm:$0xf]
        %v5420 = vld [vmem:[%s3 + $0x1c0] sm:$0xf]
        %v5421 = vld [vmem:[%s3 + $0x1c4] sm:$0xf]
        %v5422 = vld [vmem:[%s3 + $0x1c8] sm:$0xf]
        %v5423 = vld [vmem:[%s3 + $0x1cc] sm:$0xf]
        %v5424 = vld [vmem:[%s3 + $0x1d0] sm:$0xf]
        %v5425 = vld [vmem:[%s3 + $0x1d4] sm:$0xf]
        %v5426 = vld [vmem:[%s3 + $0x1d8] sm:$0xf]
        %v5427 = vld [vmem:[%s3 + $0x1dc] sm:$0xf]
        %v5428 = vld [vmem:[%s3 + $0x1e0] sm:$0xf]
        %v5429 = vld [vmem:[%s3 + $0x1e4] sm:$0xf]
        %v5430 = vld [vmem:[%s3 + $0x1e8] sm:$0xf]
        %v5431 = vld [vmem:[%s3 + $0x1ec] sm:$0xf]
        %v5432 = vld [vmem:[%s3 + $0x1f0] sm:$0xf]
        %v5433 = vld [vmem:[%s3 + $0x1f4] sm:$0xf]
        %v5434 = vld [vmem:[%s3 + $0x1f8] sm:$0xf]
        %v5435 = vld [vmem:[%s3 + $0x1fc] sm:$0xf]
        %v5436 = vld [vmem:[%s3 + $0x200] sm:$0xf]
        %v5437 = vld [vmem:[%s3 + $0x204] sm:$0xf]
        %v5438 = vld [vmem:[%s3 + $0x208] sm:$0xf]
        %v5439 = vld [vmem:[%s3 + $0x20c] sm:$0xf]
        %v5440 = vld [vmem:[%s3 + $0x210] sm:$0xf]
        %v5441 = vld [vmem:[%s3 + $0x214] sm:$0xf]
        %v5442 = vld [vmem:[%s3 + $0x218] sm:$0xf]
        %v5443 = vld [vmem:[%s3 + $0x21c] sm:$0xf]
        %v5444 = vld [vmem:[%s3 + $0x220] sm:$0xf]
        %v5445 = vld [vmem:[%s3 + $0x224] sm:$0xf]
        %v5446 = vld [vmem:[%s3 + $0x228] sm:$0xf]
        %v5447 = vld [vmem:[%s3 + $0x22c] sm:$0xf]
        %v5448 = vld [vmem:[%s3 + $0x230] sm:$0xf]
        %v5449 = vld [vmem:[%s3 + $0x234] sm:$0xf]
        %v5450 = vld [vmem:[%s3 + $0x238] sm:$0xf]
        %v5451 = vld [vmem:[%s3 + $0x23c] sm:$0xf]
        %v5500 = vunpack.c.l.b16 %v5404
        %v5501 = vunpack.c.l.b16 %v5405
        %v5502 = vunpack.c.l.b16 %v5406
        %v5503 = vunpack.c.l.b16 %v5407
        %v5504 = vunpack.c.l.b16 %v5408
        %v5505 = vunpack.c.l.b16 %v5409
        %v5506 = vunpack.c.l.b16 %v5410
        %v5507 = vunpack.c.l.b16 %v5411
        %v5508 = vunpack.c.l.b16 %v5412
        %v5509 = vunpack.c.l.b16 %v5413
        %v5510 = vunpack.c.l.b16 %v5414
        %v5511 = vunpack.c.l.b16 %v5415
        %v5512 = vunpack.c.l.b16 %v5416
        %v5513 = vunpack.c.l.b16 %v5417
        %v5514 = vunpack.c.l.b16 %v5418
        %v5515 = vunpack.c.l.b16 %v5419
        %v5516 = vunpack.c.l.b16 %v5420
        %v5517 = vunpack.c.l.b16 %v5421
        %v5518 = vunpack.c.l.b16 %v5422
        %v5519 = vunpack.c.l.b16 %v5423
        %v5520 = vunpack.c.l.b16 %v5424
        %v5521 = vunpack.c.l.b16 %v5425
        %v5522 = vunpack.c.l.b16 %v5426
        %v5523 = vunpack.c.l.b16 %v5427
        %v5524 = vunpack.c.l.b16 %v5428
        %v5525 = vunpack.c.l.b16 %v5429
        %v5526 = vunpack.c.l.b16 %v5430
        %v5527 = vunpack.c.l.b16 %v5431
        %v5528 = vunpack.c.l.b16 %v5432
        %v5529 = vunpack.c.l.b16 %v5433
        %v5530 = vunpack.c.l.b16 %v5434
        %v5531 = vunpack.c.l.b16 %v5435
        %v5532 = vunpack.c.l.b16 %v5436
        %v5533 = vunpack.c.l.b16 %v5437
        %v5534 = vunpack.c.l.b16 %v5438
        %v5535 = vunpack.c.l.b16 %v5439
        %v5536 = vunpack.c.l.b16 %v5440
        %v5537 = vunpack.c.l.b16 %v5441
        %v5538 = vunpack.c.l.b16 %v5442
        %v5539 = vunpack.c.l.b16 %v5443
        %v5540 = vunpack.c.l.b16 %v5444
        %v5541 = vunpack.c.l.b16 %v5445
        %v5542 = vunpack.c.l.b16 %v5446
        %v5543 = vunpack.c.l.b16 %v5447
        %v5544 = vunpack.c.l.b16 %v5448
        %v5545 = vunpack.c.l.b16 %v5449
        %v5546 = vunpack.c.l.b16 %v5450
        %v5547 = vunpack.c.l.b16 %v5451
        %v5548 = vpack.c.b16 %v5501, %v5500
        %v5549 = vpack.c.b16 %v5503, %v5502
        %v5550 = vpack.c.b16 %v5505, %v5504
        %v5551 = vpack.c.b16 %v5507, %v5506
        %v5552 = vpack.c.b16 %v5509, %v5508
        %v5553 = vpack.c.b16 %v5511, %v5510
        %v5554 = vpack.c.b16 %v5513, %v5512
        %v5555 = vpack.c.b16 %v5515, %v5514
        %v5556 = vpack.c.b16 %v5517, %v5516
        %v5557 = vpack.c.b16 %v5519, %v5518
        %v5558 = vpack.c.b16 %v5521, %v5520
        %v5559 = vpack.c.b16 %v5523, %v5522
        %v5560 = vpack.c.b16 %v5525, %v5524
        %v5561 = vpack.c.b16 %v5527, %v5526
        %v5562 = vpack.c.b16 %v5529, %v5528
        %v5563 = vpack.c.b16 %v5531, %v5530
        %v5564 = vpack.c.b16 %v5533, %v5532
        %v5565 = vpack.c.b16 %v5535, %v5534
        %v5566 = vpack.c.b16 %v5537, %v5536
        %v5567 = vpack.c.b16 %v5539, %v5538
        %v5568 = vpack.c.b16 %v5541, %v5540
        %v5569 = vpack.c.b16 %v5543, %v5542
        %v5570 = vpack.c.b16 %v5545, %v5544
        %v5571 = vpack.c.b16 %v5547, %v5546
        %5596 = vmatprep.subr.bf16.mxu0 0
        %5597 = vmatpush1.bf16.msra.mxu0 %v5548
        %5598 = vmatprep.subr.bf16.mxu0 0
        %5599 = vmatpush1.bf16.msra.mxu0 %v5549
        %5600 = vmatprep.subr.bf16.mxu0 0
        %5601 = vmatpush1.bf16.msra.mxu0 %v5550
        %5602 = vmatprep.subr.bf16.mxu0 0
        %5603 = vmatpush1.bf16.msra.mxu0 %v5551
        %5604 = vmatprep.subr.bf16.mxu0 0
        %5605 = vmatpush1.bf16.msra.mxu0 %v5552
        %5606 = vmatprep.subr.bf16.mxu0 0
        %5607 = vmatpush1.bf16.msra.mxu0 %v5553
        %5608 = vmatprep.subr.bf16.mxu0 0
        %5609 = vmatpush1.bf16.msra.mxu0 %v5554
        %5610 = vmatprep.subr.bf16.mxu0 0
        %5611 = vmatpush1.bf16.msra.mxu0 %v5555
        %5612 = vmatprep.subr.bf16.mxu0 0
        %5613 = vmatpush1.bf16.msra.mxu0 %v5556
        %5614 = vmatprep.subr.bf16.mxu0 0
        %5615 = vmatpush1.bf16.msra.mxu0 %v5557
        %5616 = vmatprep.subr.bf16.mxu0 0
        %5617 = vmatpush1.bf16.msra.mxu0 %v5558
        %5618 = vmatprep.subr.bf16.mxu0 0
        %5619 = vmatpush1.bf16.msra.mxu0 %v5559
        %5620 = vmatprep.subr.bf16.mxu0 0
        %5621 = vmatpush1.bf16.msra.mxu0 %v5560
        %5622 = vmatprep.subr.bf16.mxu0 0
        %5623 = vmatpush1.bf16.msra.mxu0 %v5561
        %5624 = vmatprep.subr.bf16.mxu0 0
        %5625 = vmatpush1.bf16.msra.mxu0 %v5562
        %5626 = vmatprep.subr.bf16.mxu0 0
        %5627 = vmatpush1.bf16.msra.mxu0 %v5563
        %5628 = vmatprep.mubr.bf16.mxu0 %v5260
        %5629 = vmatmul.mubr.bf16.gmra.mrb[0].mxu0 %v5236
        %v5630 = vpop.f32.mrb[0].mxu0
        %v5631 = vadd.f32 0.0, %v5630
        %v5632 = vpop.f32.mrb[0].mxu0
        %v5633 = vpop.f32.mrb[0].mxu0
        %v5634 = vadd.f32 0.0, %v5633
        %v5635 = vpop.f32.mrb[0].mxu0
        %5636 = vmatprep.mubr.bf16.mxu0 %v5261
        %5637 = vmatmul.mubr.bf16.gmra.mrb[0].mxu0 %v5237
        %v5638 = vpop.f32.mrb[0].mxu0
        %v5639 = vadd.f32 0.0, %v5638
        %v5640 = vpop.f32.mrb[0].mxu0
        %v5641 = vpop.f32.mrb[0].mxu0
        %v5642 = vadd.f32 0.0, %v5641
        %v5643 = vpop.f32.mrb[0].mxu0
        %5644 = vmatprep.mubr.bf16.mxu0 %v5262
        %5645 = vmatmul.mubr.bf16.gmra.mrb[0].mxu0 %v5238
        %v5646 = vpop.f32.mrb[0].mxu0
        %v5647 = vadd.f32 0.0, %v5646
        %v5648 = vpop.f32.mrb[0].mxu0
        %v5649 = vpop.f32.mrb[0].mxu0
        %v5650 = vadd.f32 0.0, %v5649
        %v5651 = vpop.f32.mrb[0].mxu0
        %5652 = vmatprep.mubr.bf16.mxu0 %v5263
        %5653 = vmatmul.mubr.bf16.gmra.mrb[0].mxu0 %v5239
        %v5654 = vpop.f32.mrb[0].mxu0
        %v5655 = vadd.f32 0.0, %v5654
        %v5656 = vpop.f32.mrb[0].mxu0
        %v5657 = vpop.f32.mrb[0].mxu0
        %v5658 = vadd.f32 0.0, %v5657
        %v5659 = vpop.f32.mrb[0].mxu0
        %5660 = vmatprep.mubr.bf16.mxu0 %v5264
        %5661 = vmatmul.mubr.bf16.gmra.mrb[0].mxu0 %v5240
        %v5662 = vpop.f32.mrb[0].mxu0
        %v5663 = vadd.f32 0.0, %v5662
        %v5664 = vpop.f32.mrb[0].mxu0
        %v5665 = vpop.f32.mrb[0].mxu0
        %v5666 = vadd.f32 0.0, %v5665
        %v5667 = vpop.f32.mrb[0].mxu0
        %5668 = vmatprep.mubr.bf16.mxu0 %v5265
        %5669 = vmatmul.mubr.bf16.gmra.mrb[0].mxu0 %v5241
        %v5670 = vpop.f32.mrb[0].mxu0
        %v5671 = vadd.f32 0.0, %v5670
        %v5672 = vpop.f32.mrb[0].mxu0
        %v5673 = vpop.f32.mrb[0].mxu0
        %v5674 = vadd.f32 0.0, %v5673
        %v5675 = vpop.f32.mrb[0].mxu0
        %5676 = vmatprep.mubr.bf16.mxu0 %v5266
        %5677 = vmatmul.mubr.bf16.gmra.mrb[0].mxu0 %v5242
        %v5678 = vpop.f32.mrb[0].mxu0
        %v5679 = vadd.f32 0.0, %v5678
        %v5680 = vpop.f32.mrb[0].mxu0
        %v5681 = vpop.f32.mrb[0].mxu0
        %v5682 = vadd.f32 0.0, %v5681
        %v5683 = vpop.f32.mrb[0].mxu0
        %5684 = vmatprep.mubr.bf16.mxu0 %v5267
        %5685 = vmatmul.mubr.bf16.gmra.mrb[0].mxu0 %v5243
        %v5686 = vpop.f32.mrb[0].mxu0
        %v5687 = vadd.f32 0.0, %v5686
        %v5688 = vpop.f32.mrb[0].mxu0
        %v5689 = vpop.f32.mrb[0].mxu0
        %v5690 = vadd.f32 0.0, %v5689
        %v5691 = vpop.f32.mrb[0].mxu0
        %5692 = vmatprep.mubr.bf16.mxu0 %v5268
        %5693 = vmatmul.mubr.bf16.gmra.mrb[0].mxu0 %v5244
        %v5694 = vpop.f32.mrb[0].mxu0
        %v5695 = vadd.f32 0.0, %v5694
        %v5696 = vpop.f32.mrb[0].mxu0
        %v5697 = vpop.f32.mrb[0].mxu0
        %v5698 = vadd.f32 0.0, %v5697
        %v5699 = vpop.f32.mrb[0].mxu0
        %5700 = vmatprep.mubr.bf16.mxu0 %v5269
        %5701 = vmatmul.mubr.bf16.gmra.mrb[0].mxu0 %v5245
        %v5702 = vpop.f32.mrb[0].mxu0
        %v5703 = vadd.f32 0.0, %v5702
        %v5704 = vpop.f32.mrb[0].mxu0
        %v5705 = vpop.f32.mrb[0].mxu0
        %v5706 = vadd.f32 0.0, %v5705
        %v5707 = vpop.f32.mrb[0].mxu0
        %5708 = vmatprep.mubr.bf16.mxu0 %v5270
        %5709 = vmatmul.mubr.bf16.gmra.mrb[0].mxu0 %v5246
        %v5710 = vpop.f32.mrb[0].mxu0
        %v5711 = vadd.f32 0.0, %v5710
        %v5712 = vpop.f32.mrb[0].mxu0
        %v5713 = vpop.f32.mrb[0].mxu0
        %v5714 = vadd.f32 0.0, %v5713
        %v5715 = vpop.f32.mrb[0].mxu0
        %5716 = vmatprep.mubr.bf16.mxu0 %v5271
        %5717 = vmatmul.mubr.bf16.gmra.mrb[0].mxu0 %v5247
        %v5718 = vpop.f32.mrb[0].mxu0
        %v5719 = vadd.f32 0.0, %v5718
        %v5720 = vpop.f32.mrb[0].mxu0
        %v5721 = vpop.f32.mrb[0].mxu0
        %v5722 = vadd.f32 0.0, %v5721
        %v5723 = vpop.f32.mrb[0].mxu0
        %5724 = vmatprep.mubr.bf16.mxu0 %v5272
        %5725 = vmatmul.mubr.bf16.gmra.mrb[0].mxu0 %v5248
        %v5726 = vpop.f32.mrb[0].mxu0
        %v5727 = vadd.f32 0.0, %v5726
        %v5728 = vpop.f32.mrb[0].mxu0
        %v5729 = vpop.f32.mrb[0].mxu0
        %v5730 = vadd.f32 0.0, %v5729
        %v5731 = vpop.f32.mrb[0].mxu0
        %5732 = vmatprep.mubr.bf16.mxu0 %v5273
        %5733 = vmatmul.mubr.bf16.gmra.mrb[0].mxu0 %v5249
        %v5734 = vpop.f32.mrb[0].mxu0
        %v5735 = vadd.f32 0.0, %v5734
        %v5736 = vpop.f32.mrb[0].mxu0
        %v5737 = vpop.f32.mrb[0].mxu0
        %v5738 = vadd.f32 0.0, %v5737
        %v5739 = vpop.f32.mrb[0].mxu0
        %5740 = vmatprep.mubr.bf16.mxu0 %v5274
        %5741 = vmatmul.mubr.bf16.gmra.mrb[0].mxu0 %v5250
        %v5742 = vpop.f32.mrb[0].mxu0
        %v5743 = vadd.f32 0.0, %v5742
        %v5744 = vpop.f32.mrb[0].mxu0
        %v5745 = vpop.f32.mrb[0].mxu0
        %v5746 = vadd.f32 0.0, %v5745
        %v5747 = vpop.f32.mrb[0].mxu0
        %5748 = vmatprep.mubr.bf16.mxu0 %v5275
        %5749 = vmatmul.mubr.bf16.gmra.mrb[0].mxu0 %v5251
        %v5750 = vpop.f32.mrb[0].mxu0
        %v5751 = vadd.f32 0.0, %v5750
        %v5752 = vpop.f32.mrb[0].mxu0
        %v5753 = vpop.f32.mrb[0].mxu0
        %v5754 = vadd.f32 0.0, %v5753
        %v5755 = vpop.f32.mrb[0].mxu0
        %5756 = vmatprep.mubr.bf16.mxu0 %v5276
        %5757 = vmatmul.mubr.bf16.gmra.mrb[0].mxu0 %v5252
        %v5758 = vpop.f32.mrb[0].mxu0
        %v5759 = vadd.f32 0.0, %v5758
        %v5760 = vpop.f32.mrb[0].mxu0
        %v5761 = vpop.f32.mrb[0].mxu0
        %v5762 = vadd.f32 0.0, %v5761
        %v5763 = vpop.f32.mrb[0].mxu0
        %5764 = vmatprep.mubr.bf16.mxu0 %v5277
        %5765 = vmatmul.mubr.bf16.gmra.mrb[0].mxu0 %v5253
        %v5766 = vpop.f32.mrb[0].mxu0
        %v5767 = vadd.f32 0.0, %v5766
        %v5768 = vpop.f32.mrb[0].mxu0
        %v5769 = vpop.f32.mrb[0].mxu0
        %v5770 = vadd.f32 0.0, %v5769
        %v5771 = vpop.f32.mrb[0].mxu0
        %5772 = vmatprep.mubr.bf16.mxu0 %v5278
        %5773 = vmatmul.mubr.bf16.gmra.mrb[0].mxu0 %v5254
        %v5774 = vpop.f32.mrb[0].mxu0
        %v5775 = vadd.f32 0.0, %v5774
        %v5776 = vpop.f32.mrb[0].mxu0
        %v5777 = vpop.f32.mrb[0].mxu0
        %v5778 = vadd.f32 0.0, %v5777
        %v5779 = vpop.f32.mrb[0].mxu0
        %5780 = vmatprep.mubr.bf16.mxu0 %v5279
        %5781 = vmatmul.mubr.bf16.gmra.mrb[0].mxu0 %v5255
        %v5782 = vpop.f32.mrb[0].mxu0
        %v5783 = vadd.f32 0.0, %v5782
        %v5784 = vpop.f32.mrb[0].mxu0
        %v5785 = vpop.f32.mrb[0].mxu0
        %v5786 = vadd.f32 0.0, %v5785
        %v5787 = vpop.f32.mrb[0].mxu0
        %5788 = vmatprep.mubr.bf16.mxu0 %v5280
        %5789 = vmatmul.mubr.bf16.gmra.mrb[0].mxu0 %v5256
        %v5790 = vpop.f32.mrb[0].mxu0
        %v5791 = vadd.f32 0.0, %v5790
        %v5792 = vpop.f32.mrb[0].mxu0
        %v5793 = vpop.f32.mrb[0].mxu0
        %v5794 = vadd.f32 0.0, %v5793
        %v5795 = vpop.f32.mrb[0].mxu0
        %5796 = vmatprep.mubr.bf16.mxu0 %v5281
        %5797 = vmatmul.mubr.bf16.gmra.mrb[0].mxu0 %v5257
        %v5798 = vpop.f32.mrb[0].mxu0
        %v5799 = vadd.f32 0.0, %v5798
        %v5800 = vpop.f32.mrb[0].mxu0
        %v5801 = vpop.f32.mrb[0].mxu0
        %v5802 = vadd.f32 0.0, %v5801
        %v5803 = vpop.f32.mrb[0].mxu0
        %5804 = vmatprep.mubr.bf16.mxu0 %v5282
        %5805 = vmatmul.mubr.bf16.gmra.mrb[0].mxu0 %v5258
        %v5806 = vpop.f32.mrb[0].mxu0
        %v5807 = vadd.f32 0.0, %v5806
        %v5808 = vpop.f32.mrb[0].mxu0
        %v5809 = vpop.f32.mrb[0].mxu0
        %v5810 = vadd.f32 0.0, %v5809
        %v5811 = vpop.f32.mrb[0].mxu0
        %5812 = vmatprep.mubr.bf16.mxu0 %v5283
        %5813 = vmatmul.mubr.bf16.gmra.mrb[0].mxu0 %v5259
        %v5814 = vpop.f32.mrb[0].mxu0
        %v5815 = vadd.f32 0.0, %v5814
        %v5816 = vpop.f32.mrb[0].mxu0
        %v5817 = vpop.f32.mrb[0].mxu0
        %v5818 = vadd.f32 0.0, %v5817
        %v5819 = vpop.f32.mrb[0].mxu0
        %5820 = vdwg.mxu0
        %5821 = vmatprep.subr.bf16.mxu0 0
        %5822 = vmatpush1.bf16.msra.mxu0 %v5564
        %5823 = vmatprep.subr.bf16.mxu0 0
        %5824 = vmatpush1.bf16.msra.mxu0 %v5565
        %5825 = vmatprep.subr.bf16.mxu0 0
        %5826 = vmatpush1.bf16.msra.mxu0 %v5566
        %5827 = vmatprep.subr.bf16.mxu0 0
        %5828 = vmatpush1.bf16.msra.mxu0 %v5567
        %5829 = vmatprep.subr.bf16.mxu0 0
        %5830 = vmatpush1.bf16.msra.mxu0 %v5568
        %5831 = vmatprep.subr.bf16.mxu0 0
        %5832 = vmatpush1.bf16.msra.mxu0 %v5569
        %5833 = vmatprep.subr.bf16.mxu0 0
        %5834 = vmatpush1.bf16.msra.mxu0 %v5570
        %5835 = vmatprep.subr.bf16.mxu0 0
        %5836 = vmatpush1.bf16.msra.mxu0 %v5571
        %5837 = vmatprep.subr.bf16.mxu0 0
        %5838 = vmatpush1.bf16.msra.mxu0 0
        %5839 = vmatprep.subr.bf16.mxu0 0
        %5840 = vmatpush1.bf16.msra.mxu0 0
        %5841 = vmatprep.subr.bf16.mxu0 0
        %5842 = vmatpush1.bf16.msra.mxu0 0
        %5843 = vmatprep.subr.bf16.mxu0 0
        %5844 = vmatpush1.bf16.msra.mxu0 0
        %5845 = vmatprep.subr.bf16.mxu0 0
        %5846 = vmatpush1.bf16.msra.mxu0 0
        %5847 = vmatprep.subr.bf16.mxu0 0
        %5848 = vmatpush1.bf16.msra.mxu0 0
        %5849 = vmatprep.subr.bf16.mxu0 0
        %5850 = vmatpush1.bf16.msra.mxu0 0
        %5851 = vmatprep.subr.bf16.mxu0 0
        %5852 = vmatpush1.bf16.msra.mxu0 0
        %5853 = vmatprep.mubr.bf16.mxu0 0
        %5854 = vmatmul.mubr.bf16.gmra.mrb[0].mxu0 %v5380
        %v5855 = vpop.f32.mrb[0].mxu0
        %v5856 = vadd.f32 %v5631, %v5855
        %v5857 = vpop.f32.mrb[0].mxu0
        %v5858 = vpop.f32.mrb[0].mxu0
        %v5859 = vadd.f32 %v5634, %v5858
        %v5860 = vpop.f32.mrb[0].mxu0
        %5861 = vmatprep.mubr.bf16.mxu0 0
        %5862 = vmatmul.mubr.bf16.gmra.mrb[0].mxu0 %v5381
        %v5863 = vpop.f32.mrb[0].mxu0
        %v5864 = vadd.f32 %v5639, %v5863
        %v5865 = vpop.f32.mrb[0].mxu0
        %v5866 = vpop.f32.mrb[0].mxu0
        %v5867 = vadd.f32 %v5642, %v5866
        %v5868 = vpop.f32.mrb[0].mxu0
        %5869 = vmatprep.mubr.bf16.mxu0 0
        %5870 = vmatmul.mubr.bf16.gmra.mrb[0].mxu0 %v5382
        %v5871 = vpop.f32.mrb[0].mxu0
        %v5872 = vadd.f32 %v5647, %v5871
        %v5873 = vpop.f32.mrb[0].mxu0
        %v5874 = vpop.f32.mrb[0].mxu0
        %v5875 = vadd.f32 %v5650, %v5874
        %v5876 = vpop.f32.mrb[0].mxu0
        %5877 = vmatprep.mubr.bf16.mxu0 0
        %5878 = vmatmul.mubr.bf16.gmra.mrb[0].mxu0 %v5383
        %v5879 = vpop.f32.mrb[0].mxu0
        %v5880 = vadd.f32 %v5655, %v5879
        %v5881 = vpop.f32.mrb[0].mxu0
        %v5882 = vpop.f32.mrb[0].mxu0
        %v5883 = vadd.f32 %v5658, %v5882
        %v5884 = vpop.f32.mrb[0].mxu0
        %5885 = vmatprep.mubr.bf16.mxu0 0
        %5886 = vmatmul.mubr.bf16.gmra.mrb[0].mxu0 %v5384
        %v5887 = vpop.f32.mrb[0].mxu0
        %v5888 = vadd.f32 %v5663, %v5887
        %v5889 = vpop.f32.mrb[0].mxu0
        %v5890 = vpop.f32.mrb[0].mxu0
        %v5891 = vadd.f32 %v5666, %v5890
        %v5892 = vpop.f32.mrb[0].mxu0
        %5893 = vmatprep.mubr.bf16.mxu0 0
        %5894 = vmatmul.mubr.bf16.gmra.mrb[0].mxu0 %v5385
        %v5895 = vpop.f32.mrb[0].mxu0
        %v5896 = vadd.f32 %v5671, %v5895
        %v5897 = vpop.f32.mrb[0].mxu0
        %v5898 = vpop.f32.mrb[0].mxu0
        %v5899 = vadd.f32 %v5674, %v5898
        %v5900 = vpop.f32.mrb[0].mxu0
        %5901 = vmatprep.mubr.bf16.mxu0 0
        %5902 = vmatmul.mubr.bf16.gmra.mrb[0].mxu0 %v5386
        %v5903 = vpop.f32.mrb[0].mxu0
        %v5904 = vadd.f32 %v5679, %v5903
        %v5905 = vpop.f32.mrb[0].mxu0
        %v5906 = vpop.f32.mrb[0].mxu0
        %v5907 = vadd.f32 %v5682, %v5906
        %v5908 = vpop.f32.mrb[0].mxu0
        %5909 = vmatprep.mubr.bf16.mxu0 0
        %5910 = vmatmul.mubr.bf16.gmra.mrb[0].mxu0 %v5387
        %v5911 = vpop.f32.mrb[0].mxu0
        %v5912 = vadd.f32 %v5687, %v5911
        %v5913 = vpop.f32.mrb[0].mxu0
        %v5914 = vpop.f32.mrb[0].mxu0
        %v5915 = vadd.f32 %v5690, %v5914
        %v5916 = vpop.f32.mrb[0].mxu0
        %5917 = vmatprep.mubr.bf16.mxu0 0
        %5918 = vmatmul.mubr.bf16.gmra.mrb[0].mxu0 %v5388
        %v5919 = vpop.f32.mrb[0].mxu0
        %v5920 = vadd.f32 %v5695, %v5919
        %v5921 = vpop.f32.mrb[0].mxu0
        %v5922 = vpop.f32.mrb[0].mxu0
        %v5923 = vadd.f32 %v5698, %v5922
        %v5924 = vpop.f32.mrb[0].mxu0
        %5925 = vmatprep.mubr.bf16.mxu0 0
        %5926 = vmatmul.mubr.bf16.gmra.mrb[0].mxu0 %v5389
        %v5927 = vpop.f32.mrb[0].mxu0
        %v5928 = vadd.f32 %v5703, %v5927
        %v5929 = vpop.f32.mrb[0].mxu0
        %v5930 = vpop.f32.mrb[0].mxu0
        %v5931 = vadd.f32 %v5706, %v5930
        %v5932 = vpop.f32.mrb[0].mxu0
        %5933 = vmatprep.mubr.bf16.mxu0 0
        %5934 = vmatmul.mubr.bf16.gmra.mrb[0].mxu0 %v5390
        %v5935 = vpop.f32.mrb[0].mxu0
        %v5936 = vadd.f32 %v5711, %v5935
        %v5937 = vpop.f32.mrb[0].mxu0
        %v5938 = vpop.f32.mrb[0].mxu0
        %v5939 = vadd.f32 %v5714, %v5938
        %v5940 = vpop.f32.mrb[0].mxu0
        %5941 = vmatprep.mubr.bf16.mxu0 0
        %5942 = vmatmul.mubr.bf16.gmra.mrb[0].mxu0 %v5391
        %v5943 = vpop.f32.mrb[0].mxu0
        %v5944 = vadd.f32 %v5719, %v5943
        %v5945 = vpop.f32.mrb[0].mxu0
        %v5946 = vpop.f32.mrb[0].mxu0
        %v5947 = vadd.f32 %v5722, %v5946
        %v5948 = vpop.f32.mrb[0].mxu0
        %5949 = vmatprep.mubr.bf16.mxu0 0
        %5950 = vmatmul.mubr.bf16.gmra.mrb[0].mxu0 %v5392
        %v5951 = vpop.f32.mrb[0].mxu0
        %v5952 = vadd.f32 %v5727, %v5951
        %v5953 = vpop.f32.mrb[0].mxu0
        %v5954 = vpop.f32.mrb[0].mxu0
        %v5955 = vadd.f32 %v5730, %v5954
        %v5956 = vpop.f32.mrb[0].mxu0
        %5957 = vmatprep.mubr.bf16.mxu0 0
        %5958 = vmatmul.mubr.bf16.gmra.mrb[0].mxu0 %v5393
        %v5959 = vpop.f32.mrb[0].mxu0
        %v5960 = vadd.f32 %v5735, %v5959
        %v5961 = vpop.f32.mrb[0].mxu0
        %v5962 = vpop.f32.mrb[0].mxu0
        %v5963 = vadd.f32 %v5738, %v5962
        %v5964 = vpop.f32.mrb[0].mxu0
        %5965 = vmatprep.mubr.bf16.mxu0 0
        %5966 = vmatmul.mubr.bf16.gmra.mrb[0].mxu0 %v5394
        %v5967 = vpop.f32.mrb[0].mxu0
        %v5968 = vadd.f32 %v5743, %v5967
        %v5969 = vpop.f32.mrb[0].mxu0
        %v5970 = vpop.f32.mrb[0].mxu0
        %v5971 = vadd.f32 %v5746, %v5970
        %v5972 = vpop.f32.mrb[0].mxu0
        %5973 = vmatprep.mubr.bf16.mxu0 0
        %5974 = vmatmul.mubr.bf16.gmra.mrb[0].mxu0 %v5395
        %v5975 = vpop.f32.mrb[0].mxu0
        %v5976 = vadd.f32 %v5751, %v5975
        %v5977 = vpop.f32.mrb[0].mxu0
        %v5978 = vpop.f32.mrb[0].mxu0
        %v5979 = vadd.f32 %v5754, %v5978
        %v5980 = vpop.f32.mrb[0].mxu0
        %5981 = vmatprep.mubr.bf16.mxu0 0
        %5982 = vmatmul.mubr.bf16.gmra.mrb[0].mxu0 %v5396
        %v5983 = vpop.f32.mrb[0].mxu0
        %v5984 = vadd.f32 %v5759, %v5983
        %v5985 = vpop.f32.mrb[0].mxu0
        %v5986 = vpop.f32.mrb[0].mxu0
        %v5987 = vadd.f32 %v5762, %v5986
        %v5988 = vpop.f32.mrb[0].mxu0
        %5989 = vmatprep.mubr.bf16.mxu0 0
        %5990 = vmatmul.mubr.bf16.gmra.mrb[0].mxu0 %v5397
        %v5991 = vpop.f32.mrb[0].mxu0
        %v5992 = vadd.f32 %v5767, %v5991
        %v5993 = vpop.f32.mrb[0].mxu0
        %v5994 = vpop.f32.mrb[0].mxu0
        %v5995 = vadd.f32 %v5770, %v5994
        %v5996 = vpop.f32.mrb[0].mxu0
        %5997 = vmatprep.mubr.bf16.mxu0 0
        %5998 = vmatmul.mubr.bf16.gmra.mrb[0].mxu0 %v5398
        %v5999 = vpop.f32.mrb[0].mxu0
        %v6000 = vadd.f32 %v5775, %v5999
        %v6001 = vpop.f32.mrb[0].mxu0
        %v6002 = vpop.f32.mrb[0].mxu0
        %v6003 = vadd.f32 %v5778, %v6002
        %v6004 = vpop.f32.mrb[0].mxu0
        %6005 = vmatprep.mubr.bf16.mxu0 0
        %6006 = vmatmul.mubr.bf16.gmra.mrb[0].mxu0 %v5399
        %v6007 = vpop.f32.mrb[0].mxu0
        %v6008 = vadd.f32 %v5783, %v6007
        %v6009 = vpop.f32.mrb[0].mxu0
        %v6010 = vpop.f32.mrb[0].mxu0
        %v6011 = vadd.f32 %v5786, %v6010
        %v6012 = vpop.f32.mrb[0].mxu0
        %6013 = vmatprep.mubr.bf16.mxu0 0
        %6014 = vmatmul.mubr.bf16.gmra.mrb[0].mxu0 %v5400
        %v6015 = vpop.f32.mrb[0].mxu0
        %v6016 = vadd.f32 %v5791, %v6015
        %v6017 = vpop.f32.mrb[0].mxu0
        %v6018 = vpop.f32.mrb[0].mxu0
        %v6019 = vadd.f32 %v5794, %v6018
        %v6020 = vpop.f32.mrb[0].mxu0
        %6021 = vmatprep.mubr.bf16.mxu0 0
        %6022 = vmatmul.mubr.bf16.gmra.mrb[0].mxu0 %v5401
        %v6023 = vpop.f32.mrb[0].mxu0
        %v6024 = vadd.f32 %v5799, %v6023
        %v6025 = vpop.f32.mrb[0].mxu0
        %v6026 = vpop.f32.mrb[0].mxu0
        %v6027 = vadd.f32 %v5802, %v6026
        %v6028 = vpop.f32.mrb[0].mxu0
        %6029 = vmatprep.mubr.bf16.mxu0 0
        %6030 = vmatmul.mubr.bf16.gmra.mrb[0].mxu0 %v5402
        %v6031 = vpop.f32.mrb[0].mxu0
        %v6032 = vadd.f32 %v5807, %v6031
        %v6033 = vpop.f32.mrb[0].mxu0
        %v6034 = vpop.f32.mrb[0].mxu0
        %v6035 = vadd.f32 %v5810, %v6034
        %v6036 = vpop.f32.mrb[0].mxu0
        %6037 = vmatprep.mubr.bf16.mxu0 0
        %6038 = vmatmul.mubr.bf16.gmra.mrb[0].mxu0 %v5403
        %v6039 = vpop.f32.mrb[0].mxu0
        %v6040 = vadd.f32 %v5815, %v6039
        %v6041 = vpop.f32.mrb[0].mxu0
        %v6042 = vpop.f32.mrb[0].mxu0
        %v6043 = vadd.f32 %v5818, %v6042
        %v6044 = vpop.f32.mrb[0].mxu0
        %6045 = vdwg.mxu0
        %v6046 = vadd.f32 %v4902, %v5856
        %v6047 = vadd.f32 %v4905, %v5859
        %v6048 = vadd.f32 %v4910, %v5864
        %v6049 = vadd.f32 %v4913, %v5867
        %v6050 = vadd.f32 %v4918, %v5872
        %v6051 = vadd.f32 %v4921, %v5875
        %v6052 = vadd.f32 %v4926, %v5880
        %v6053 = vadd.f32 %v4929, %v5883
        %v6054 = vadd.f32 %v4934, %v5888
        %v6055 = vadd.f32 %v4937, %v5891
        %v6056 = vadd.f32 %v4942, %v5896
        %v6057 = vadd.f32 %v4945, %v5899
        %v6058 = vadd.f32 %v4950, %v5904
        %v6059 = vadd.f32 %v4953, %v5907
        %v6060 = vadd.f32 %v4958, %v5912
        %v6061 = vadd.f32 %v4961, %v5915
        %v6062 = vadd.f32 %v4966, %v5920
        %v6063 = vadd.f32 %v4969, %v5923
        %v6064 = vadd.f32 %v4974, %v5928
        %v6065 = vadd.f32 %v4977, %v5931
        %v6066 = vadd.f32 %v4982, %v5936
        %v6067 = vadd.f32 %v4985, %v5939
        %v6068 = vadd.f32 %v4990, %v5944
        %v6069 = vadd.f32 %v4993, %v5947
        %v6070 = vadd.f32 %v4998, %v5952
        %v6071 = vadd.f32 %v5001, %v5955
        %v6072 = vadd.f32 %v5006, %v5960
        %v6073 = vadd.f32 %v5009, %v5963
        %v6074 = vadd.f32 %v5014, %v5968
        %v6075 = vadd.f32 %v5017, %v5971
        %v6076 = vadd.f32 %v5022, %v5976
        %v6077 = vadd.f32 %v5025, %v5979
        %v6078 = vadd.f32 %v5030, %v5984
        %v6079 = vadd.f32 %v5033, %v5987
        %v6080 = vadd.f32 %v5038, %v5992
        %v6081 = vadd.f32 %v5041, %v5995
        %v6082 = vadd.f32 %v5046, %v6000
        %v6083 = vadd.f32 %v5049, %v6003
        %v6084 = vadd.f32 %v5054, %v6008
        %v6085 = vadd.f32 %v5057, %v6011
        %v6086 = vadd.f32 %v5062, %v6016
        %v6087 = vadd.f32 %v5065, %v6019
        %v6088 = vadd.f32 %v5070, %v6024
        %v6089 = vadd.f32 %v5073, %v6027
        %v6090 = vadd.f32 %v5078, %v6032
        %v6091 = vadd.f32 %v5081, %v6035
        %v6092 = vadd.f32 %v5086, %v6040
        %v6093 = vadd.f32 %v5089, %v6043
        %v6094 = vlaneseq
        %v6095 = vshrl.u32 %v6094, 7
        %v6096 = vsub.s32 4, %v6095
        %v6097 = vrot.slane %v305, %v6096
        %v6098 = vmul.f32 %v6046, %v6097
        %v6099 = vmul.f32 %v6047, %v6097
        %v6100 = vmul.f32 %v6048, %v6097
        %v6101 = vmul.f32 %v6049, %v6097
        %v6102 = vmul.f32 %v6050, %v6097
        %v6103 = vmul.f32 %v6051, %v6097
        %v6104 = vmul.f32 %v6052, %v6097
        %v6105 = vmul.f32 %v6053, %v6097
        %v6106 = vmul.f32 %v6054, %v6097
        %v6107 = vmul.f32 %v6055, %v6097
        %v6108 = vmul.f32 %v6056, %v6097
        %v6109 = vmul.f32 %v6057, %v6097
        %v6110 = vmul.f32 %v6058, %v6097
        %v6111 = vmul.f32 %v6059, %v6097
        %v6112 = vmul.f32 %v6060, %v6097
        %v6113 = vmul.f32 %v6061, %v6097
        %v6114 = vmul.f32 %v6062, %v6097
        %v6115 = vmul.f32 %v6063, %v6097
        %v6116 = vmul.f32 %v6064, %v6097
        %v6117 = vmul.f32 %v6065, %v6097
        %v6118 = vmul.f32 %v6066, %v6097
        %v6119 = vmul.f32 %v6067, %v6097
        %v6120 = vmul.f32 %v6068, %v6097
        %v6121 = vmul.f32 %v6069, %v6097
        %v6122 = vmul.f32 %v6070, %v6097
        %v6123 = vmul.f32 %v6071, %v6097
        %v6124 = vmul.f32 %v6072, %v6097
        %v6125 = vmul.f32 %v6073, %v6097
        %v6126 = vmul.f32 %v6074, %v6097
        %v6127 = vmul.f32 %v6075, %v6097
        %v6128 = vmul.f32 %v6076, %v6097
        %v6129 = vmul.f32 %v6077, %v6097
        %v6130 = vmul.f32 %v6078, %v6097
        %v6131 = vmul.f32 %v6079, %v6097
        %v6132 = vmul.f32 %v6080, %v6097
        %v6133 = vmul.f32 %v6081, %v6097
        %v6134 = vmul.f32 %v6082, %v6097
        %v6135 = vmul.f32 %v6083, %v6097
        %v6136 = vmul.f32 %v6084, %v6097
        %v6137 = vmul.f32 %v6085, %v6097
        %v6138 = vmul.f32 %v6086, %v6097
        %v6139 = vmul.f32 %v6087, %v6097
        %v6140 = vmul.f32 %v6088, %v6097
        %v6141 = vmul.f32 %v6089, %v6097
        %v6142 = vmul.f32 %v6090, %v6097
        %v6143 = vmul.f32 %v6091, %v6097
        %v6144 = vmul.f32 %v6092, %v6097
        %v6145 = vmul.f32 %v6093, %v6097
        %v6146 = vlaneseq
        %v6147 = vshrl.u32 %v6146, 7
        %v6148 = vsub.s32 5, %v6147
        %v6149 = vrot.slane %v305, %v6148
        %v6150 = vadd.f32 %v6098, %v6149
        %v6151 = vadd.f32 %v6099, %v6149
        %v6152 = vadd.f32 %v6100, %v6149
        %v6153 = vadd.f32 %v6101, %v6149
        %v6154 = vadd.f32 %v6102, %v6149
        %v6155 = vadd.f32 %v6103, %v6149
        %v6156 = vadd.f32 %v6104, %v6149
        %v6157 = vadd.f32 %v6105, %v6149
        %v6158 = vadd.f32 %v6106, %v6149
        %v6159 = vadd.f32 %v6107, %v6149
        %v6160 = vadd.f32 %v6108, %v6149
        %v6161 = vadd.f32 %v6109, %v6149
        %v6162 = vadd.f32 %v6110, %v6149
        %v6163 = vadd.f32 %v6111, %v6149
        %v6164 = vadd.f32 %v6112, %v6149
        %v6165 = vadd.f32 %v6113, %v6149
        %v6166 = vadd.f32 %v6114, %v6149
        %v6167 = vadd.f32 %v6115, %v6149
        %v6168 = vadd.f32 %v6116, %v6149
        %v6169 = vadd.f32 %v6117, %v6149
        %v6170 = vadd.f32 %v6118, %v6149
        %v6171 = vadd.f32 %v6119, %v6149
        %v6172 = vadd.f32 %v6120, %v6149
        %v6173 = vadd.f32 %v6121, %v6149
        %v6174 = vadd.f32 %v6122, %v6149
        %v6175 = vadd.f32 %v6123, %v6149
        %v6176 = vadd.f32 %v6124, %v6149
        %v6177 = vadd.f32 %v6125, %v6149
        %v6178 = vadd.f32 %v6126, %v6149
        %v6179 = vadd.f32 %v6127, %v6149
        %v6180 = vadd.f32 %v6128, %v6149
        %v6181 = vadd.f32 %v6129, %v6149
        %v6182 = vadd.f32 %v6130, %v6149
        %v6183 = vadd.f32 %v6131, %v6149
        %v6184 = vadd.f32 %v6132, %v6149
        %v6185 = vadd.f32 %v6133, %v6149
        %v6186 = vadd.f32 %v6134, %v6149
        %v6187 = vadd.f32 %v6135, %v6149
        %v6188 = vadd.f32 %v6136, %v6149
        %v6189 = vadd.f32 %v6137, %v6149
        %v6190 = vadd.f32 %v6138, %v6149
        %v6191 = vadd.f32 %v6139, %v6149
        %v6192 = vadd.f32 %v6140, %v6149
        %v6193 = vadd.f32 %v6141, %v6149
        %v6194 = vadd.f32 %v6142, %v6149
        %v6195 = vadd.f32 %v6143, %v6149
        %v6196 = vadd.f32 %v6144, %v6149
        %v6197 = vadd.f32 %v6145, %v6149
        %v6198 = vmul.f32 %v6150, %v1083
        %v6199 = vmul.f32 %v6151, %v1088
        %v6200 = vmul.f32 %v6152, %v1093
        %v6201 = vmul.f32 %v6153, %v1098
        %v6202 = vmul.f32 %v6154, %v1103
        %v6203 = vmul.f32 %v6155, %v1108
        %v6204 = vmul.f32 %v6156, %v1113
        %v6205 = vmul.f32 %v6157, %v1118
        %v6206 = vmul.f32 %v6158, %v1123
        %v6207 = vmul.f32 %v6159, %v1128
        %v6208 = vmul.f32 %v6160, %v1133
        %v6209 = vmul.f32 %v6161, %v1138
        %v6210 = vmul.f32 %v6162, %v1143
        %v6211 = vmul.f32 %v6163, %v1148
        %v6212 = vmul.f32 %v6164, %v1153
        %v6213 = vmul.f32 %v6165, %v1158
        %v6214 = vmul.f32 %v6166, %v1163
        %v6215 = vmul.f32 %v6167, %v1168
        %v6216 = vmul.f32 %v6168, %v1173
        %v6217 = vmul.f32 %v6169, %v1178
        %v6218 = vmul.f32 %v6170, %v1183
        %v6219 = vmul.f32 %v6171, %v1188
        %v6220 = vmul.f32 %v6172, %v1193
        %v6221 = vmul.f32 %v6173, %v1198
        %v6222 = vmul.f32 %v6174, %v1203
        %v6223 = vmul.f32 %v6175, %v1208
        %v6224 = vmul.f32 %v6176, %v1213
        %v6225 = vmul.f32 %v6177, %v1218
        %v6226 = vmul.f32 %v6178, %v1223
        %v6227 = vmul.f32 %v6179, %v1228
        %v6228 = vmul.f32 %v6180, %v1233
        %v6229 = vmul.f32 %v6181, %v1238
        %v6230 = vmul.f32 %v6182, %v1243
        %v6231 = vmul.f32 %v6183, %v1248
        %v6232 = vmul.f32 %v6184, %v1253
        %v6233 = vmul.f32 %v6185, %v1258
        %v6234 = vmul.f32 %v6186, %v1263
        %v6235 = vmul.f32 %v6187, %v1268
        %v6236 = vmul.f32 %v6188, %v1273
        %v6237 = vmul.f32 %v6189, %v1278
        %v6238 = vmul.f32 %v6190, %v1283
        %v6239 = vmul.f32 %v6191, %v1288
        %v6240 = vmul.f32 %v6192, %v1293
        %v6241 = vmul.f32 %v6193, %v1298
        %v6242 = vmul.f32 %v6194, %v1303
        %v6243 = vmul.f32 %v6195, %v1308
        %v6244 = vmul.f32 %v6196, %v1313
        %v6245 = vmul.f32 %v6197, %v1318
        %v6246 = vadd.f32 %v6198, %v6199
        %v6247 = vadd.f32 %v6246, %v6200
        %v6248 = vadd.f32 %v6247, %v6201
        %v6249 = vadd.f32 %v6248, %v6202
        %v6250 = vadd.f32 %v6249, %v6203
        %v6251 = vadd.f32 %v6250, %v6204
        %v6252 = vadd.f32 %v6251, %v6205
        %v6253 = vadd.f32 %v6252, %v6206
        %v6254 = vadd.f32 %v6253, %v6207
        %v6255 = vadd.f32 %v6254, %v6208
        %v6256 = vadd.f32 %v6255, %v6209
        %v6257 = vadd.f32 %v6256, %v6210
        %v6258 = vadd.f32 %v6257, %v6211
        %v6259 = vadd.f32 %v6258, %v6212
        %v6260 = vadd.f32 %v6259, %v6213
        %v6261 = vadd.f32 %v6260, %v6214
        %v6262 = vadd.f32 %v6261, %v6215
        %v6263 = vadd.f32 %v6262, %v6216
        %v6264 = vadd.f32 %v6263, %v6217
        %v6265 = vadd.f32 %v6264, %v6218
        %v6266 = vadd.f32 %v6265, %v6219
        %v6267 = vadd.f32 %v6266, %v6220
        %v6268 = vadd.f32 %v6267, %v6221
        %v6269 = vadd.f32 %v6268, %v6222
        %v6270 = vadd.f32 %v6269, %v6223
        %v6271 = vadd.f32 %v6270, %v6224
        %v6272 = vadd.f32 %v6271, %v6225
        %v6273 = vadd.f32 %v6272, %v6226
        %v6274 = vadd.f32 %v6273, %v6227
        %v6275 = vadd.f32 %v6274, %v6228
        %v6276 = vadd.f32 %v6275, %v6229
        %v6277 = vadd.f32 %v6276, %v6230
        %v6278 = vadd.f32 %v6277, %v6231
        %v6279 = vadd.f32 %v6278, %v6232
        %v6280 = vadd.f32 %v6279, %v6233
        %v6281 = vadd.f32 %v6280, %v6234
        %v6282 = vadd.f32 %v6281, %v6235
        %v6283 = vadd.f32 %v6282, %v6236
        %v6284 = vadd.f32 %v6283, %v6237
        %v6285 = vadd.f32 %v6284, %v6238
        %v6286 = vadd.f32 %v6285, %v6239
        %v6287 = vadd.f32 %v6286, %v6240
        %v6288 = vadd.f32 %v6287, %v6241
        %v6289 = vadd.f32 %v6288, %v6242
        %v6290 = vadd.f32 %v6289, %v6243
        %v6291 = vadd.f32 %v6290, %v6244
        %v6292 = vadd.f32 %v6291, %v6245
        %v6293 = vrot.slane %v6292, 4
        %v6294 = vadd.f32 %v6292, %v6293
        %v6295 = vrot.slane %v6294, 2
        %v6296 = vadd.f32 %v6294, %v6295
        %v6297 = vrot.slane %v6296, 1
        %v6298 = vadd.f32 %v6296, %v6297
        %v6299 = vmul.f32 %v6298, 0.00390625
        %v6300 = vpack.c.bf16 %v6299, %v6299
        %v6301 = vld [vmem:[%s4] sm:$0xf]
        %v6302 = vld [vmem:[%s4 + $0x4] sm:$0xf]
        %v6303 = vld [vmem:[%s4 + $0x8] sm:$0xf]
        %v6304 = vld [vmem:[%s4 + $0xc] sm:$0xf]
        %v6305 = vld [vmem:[%s4 + $0x10] sm:$0xf]
        %v6306 = vld [vmem:[%s4 + $0x14] sm:$0xf]
        %v6307 = vld [vmem:[%s4 + $0x18] sm:$0xf]
        %v6308 = vld [vmem:[%s4 + $0x1c] sm:$0xf]
        %v6309 = vld [vmem:[%s4 + $0x20] sm:$0xf]
        %v6310 = vld [vmem:[%s4 + $0x24] sm:$0xf]
        %v6311 = vld [vmem:[%s4 + $0x28] sm:$0xf]
        %v6312 = vld [vmem:[%s4 + $0x2c] sm:$0xf]
        %v6313 = vld [vmem:[%s4 + $0x30] sm:$0xf]
        %v6314 = vld [vmem:[%s4 + $0x34] sm:$0xf]
        %v6315 = vld [vmem:[%s4 + $0x38] sm:$0xf]
        %v6316 = vld [vmem:[%s4 + $0x3c] sm:$0xf]
        %v6333 = vunpack.c.l.b16 %v6301
        %v6334 = vunpack.c.l.b16 %v6302
        %v6335 = vunpack.c.l.b16 %v6303
        %v6336 = vunpack.c.l.b16 %v6304
        %v6337 = vunpack.c.l.b16 %v6305
        %v6338 = vunpack.c.l.b16 %v6306
        %v6339 = vunpack.c.l.b16 %v6307
        %v6340 = vunpack.c.l.b16 %v6308
        %v6341 = vunpack.c.l.b16 %v6309
        %v6342 = vunpack.c.l.b16 %v6310
        %v6343 = vunpack.c.l.b16 %v6311
        %v6344 = vunpack.c.l.b16 %v6312
        %v6345 = vunpack.c.l.b16 %v6313
        %v6346 = vunpack.c.l.b16 %v6314
        %v6347 = vunpack.c.l.b16 %v6315
        %v6348 = vunpack.c.l.b16 %v6316
        %v6349 = vpack.c.b16 %v6334, %v6333
        %v6350 = vpack.c.b16 %v6336, %v6335
        %v6351 = vpack.c.b16 %v6338, %v6337
        %v6352 = vpack.c.b16 %v6340, %v6339
        %v6353 = vpack.c.b16 %v6342, %v6341
        %v6354 = vpack.c.b16 %v6344, %v6343
        %v6355 = vpack.c.b16 %v6346, %v6345
        %v6356 = vpack.c.b16 %v6348, %v6347
        %6365 = vmatprep.subr.bf16.mxu0 0
        %6366 = vmatpush1.bf16.msra.mxu0 %v6349
        %6367 = vmatprep.subr.bf16.mxu0 0
        %6368 = vmatpush1.bf16.msra.mxu0 %v6350
        %6369 = vmatprep.subr.bf16.mxu0 0
        %6370 = vmatpush1.bf16.msra.mxu0 %v6351
        %6371 = vmatprep.subr.bf16.mxu0 0
        %6372 = vmatpush1.bf16.msra.mxu0 %v6352
        %6373 = vmatprep.subr.bf16.mxu0 0
        %6374 = vmatpush1.bf16.msra.mxu0 %v6353
        %6375 = vmatprep.subr.bf16.mxu0 0
        %6376 = vmatpush1.bf16.msra.mxu0 %v6354
        %6377 = vmatprep.subr.bf16.mxu0 0
        %6378 = vmatpush1.bf16.msra.mxu0 %v6355
        %6379 = vmatprep.subr.bf16.mxu0 0
        %6380 = vmatpush1.bf16.msra.mxu0 %v6356
        %6381 = vmatprep.subr.bf16.mxu0 0
        %6382 = vmatpush1.bf16.msra.mxu0 0
        %6383 = vmatprep.subr.bf16.mxu0 0
        %6384 = vmatpush1.bf16.msra.mxu0 0
        %6385 = vmatprep.subr.bf16.mxu0 0
        %6386 = vmatpush1.bf16.msra.mxu0 0
        %6387 = vmatprep.subr.bf16.mxu0 0
        %6388 = vmatpush1.bf16.msra.mxu0 0
        %6389 = vmatprep.subr.bf16.mxu0 0
        %6390 = vmatpush1.bf16.msra.mxu0 0
        %6391 = vmatprep.subr.bf16.mxu0 0
        %6392 = vmatpush1.bf16.msra.mxu0 0
        %6393 = vmatprep.subr.bf16.mxu0 0
        %6394 = vmatpush1.bf16.msra.mxu0 0
        %6395 = vmatprep.subr.bf16.mxu0 0
        %6396 = vmatpush1.bf16.msra.mxu0 0
        %6397 = vmatprep.mubr.bf16.mxu0 0
        %6398 = vmatmul.mubr.bf16.gmra.mrb[0].mxu0 %v6300
        %v6399 = vpop.f32.mrb[0].mxu0
        %v6400 = vadd.f32 0.0, %v6399
        %v6401 = vpop.f32.mrb[0].mxu0
        %v6402 = vpop.f32.mrb[0].mxu0
        %v6403 = vpop.f32.mrb[0].mxu0
        %6404 = vdwg.mxu0
        %v6405 = vmax.f32 %v6400, 0.0
        %v6406 = vpack.c.bf16 %v6405, %v6405
        %v6407 = vld [vmem:[%s5] sm:$0xf]
        %v6408 = vld [vmem:[%s5 + $0x4] sm:$0xf]
        %v6409 = vld [vmem:[%s5 + $0x8] sm:$0xf]
        %v6410 = vld [vmem:[%s5 + $0xc] sm:$0xf]
        %v6411 = vld [vmem:[%s5 + $0x10] sm:$0xf]
        %v6412 = vld [vmem:[%s5 + $0x14] sm:$0xf]
        %v6413 = vld [vmem:[%s5 + $0x18] sm:$0xf]
        %v6414 = vld [vmem:[%s5 + $0x1c] sm:$0xf]
        %v6415 = vld [vmem:[%s5 + $0x20] sm:$0xf]
        %v6416 = vld [vmem:[%s5 + $0x24] sm:$0xf]
        %v6417 = vld [vmem:[%s5 + $0x28] sm:$0xf]
        %v6418 = vld [vmem:[%s5 + $0x2c] sm:$0xf]
        %v6419 = vld [vmem:[%s5 + $0x30] sm:$0xf]
        %v6420 = vld [vmem:[%s5 + $0x34] sm:$0xf]
        %v6421 = vld [vmem:[%s5 + $0x38] sm:$0xf]
        %v6422 = vld [vmem:[%s5 + $0x3c] sm:$0xf]
        %v6439 = vunpack.c.l.b16 %v6407
        %v6440 = vunpack.c.l.b16 %v6408
        %v6441 = vunpack.c.l.b16 %v6409
        %v6442 = vunpack.c.l.b16 %v6410
        %v6443 = vunpack.c.l.b16 %v6411
        %v6444 = vunpack.c.l.b16 %v6412
        %v6445 = vunpack.c.l.b16 %v6413
        %v6446 = vunpack.c.l.b16 %v6414
        %v6447 = vunpack.c.l.b16 %v6415
        %v6448 = vunpack.c.l.b16 %v6416
        %v6449 = vunpack.c.l.b16 %v6417
        %v6450 = vunpack.c.l.b16 %v6418
        %v6451 = vunpack.c.l.b16 %v6419
        %v6452 = vunpack.c.l.b16 %v6420
        %v6453 = vunpack.c.l.b16 %v6421
        %v6454 = vunpack.c.l.b16 %v6422
        %v6455 = vpack.c.b16 %v6440, %v6439
        %v6456 = vpack.c.b16 %v6442, %v6441
        %v6457 = vpack.c.b16 %v6444, %v6443
        %v6458 = vpack.c.b16 %v6446, %v6445
        %v6459 = vpack.c.b16 %v6448, %v6447
        %v6460 = vpack.c.b16 %v6450, %v6449
        %v6461 = vpack.c.b16 %v6452, %v6451
        %v6462 = vpack.c.b16 %v6454, %v6453
        %6471 = vmatprep.subr.bf16.mxu0 0
        %6472 = vmatpush1.bf16.msra.mxu0 %v6455
        %6473 = vmatprep.subr.bf16.mxu0 0
        %6474 = vmatpush1.bf16.msra.mxu0 %v6456
        %6475 = vmatprep.subr.bf16.mxu0 0
        %6476 = vmatpush1.bf16.msra.mxu0 %v6457
        %6477 = vmatprep.subr.bf16.mxu0 0
        %6478 = vmatpush1.bf16.msra.mxu0 %v6458
        %6479 = vmatprep.subr.bf16.mxu0 0
        %6480 = vmatpush1.bf16.msra.mxu0 %v6459
        %6481 = vmatprep.subr.bf16.mxu0 0
        %6482 = vmatpush1.bf16.msra.mxu0 %v6460
        %6483 = vmatprep.subr.bf16.mxu0 0
        %6484 = vmatpush1.bf16.msra.mxu0 %v6461
        %6485 = vmatprep.subr.bf16.mxu0 0
        %6486 = vmatpush1.bf16.msra.mxu0 %v6462
        %6487 = vmatprep.subr.bf16.mxu0 0
        %6488 = vmatpush1.bf16.msra.mxu0 0
        %6489 = vmatprep.subr.bf16.mxu0 0
        %6490 = vmatpush1.bf16.msra.mxu0 0
        %6491 = vmatprep.subr.bf16.mxu0 0
        %6492 = vmatpush1.bf16.msra.mxu0 0
        %6493 = vmatprep.subr.bf16.mxu0 0
        %6494 = vmatpush1.bf16.msra.mxu0 0
        %6495 = vmatprep.subr.bf16.mxu0 0
        %6496 = vmatpush1.bf16.msra.mxu0 0
        %6497 = vmatprep.subr.bf16.mxu0 0
        %6498 = vmatpush1.bf16.msra.mxu0 0
        %6499 = vmatprep.subr.bf16.mxu0 0
        %6500 = vmatpush1.bf16.msra.mxu0 0
        %6501 = vmatprep.subr.bf16.mxu0 0
        %6502 = vmatpush1.bf16.msra.mxu0 0
        %6503 = vmatprep.mubr.bf16.mxu0 0
        %6504 = vmatmul.mubr.bf16.gmra.mrb[0].mxu0 %v6406
        %v6505 = vpop.f32.mrb[0].mxu0
        %v6506 = vadd.f32 0.0, %v6505
        %v6507 = vpop.f32.mrb[0].mxu0
        %v6508 = vpop.f32.mrb[0].mxu0
        %v6509 = vpop.f32.mrb[0].mxu0
        %6510 = vdwg.mxu0
        %v6511 = vxor.u32 %v6506, 2147483648
        %v6512 = vmul.f32 %v6511, 1.442695
        %v6513 = vpow.pop %v6512
        %v6514 = vadd.f32 %v6513, 1.0
        %v6515 = vrcp.pop %v6514
        %v6516 = vmul.f32 1.0, %v6515
        %v6517 = vlaneseq
        %v6518 = vshrl.u32 %v6517, 7
        %v6519 = vsub.s32 0, %v6518
        %v6520 = vrot.slane %v6516, %v6519
        %v6521 = vmul.f32 %v6150, %v6520
        %v6522 = vmul.f32 %v6151, %v6520
        %v6523 = vmul.f32 %v6152, %v6520
        %v6524 = vmul.f32 %v6153, %v6520
        %v6525 = vmul.f32 %v6154, %v6520
        %v6526 = vmul.f32 %v6155, %v6520
        %v6527 = vmul.f32 %v6156, %v6520
        %v6528 = vmul.f32 %v6157, %v6520
        %v6529 = vmul.f32 %v6158, %v6520
        %v6530 = vmul.f32 %v6159, %v6520
        %v6531 = vmul.f32 %v6160, %v6520
        %v6532 = vmul.f32 %v6161, %v6520
        %v6533 = vmul.f32 %v6162, %v6520
        %v6534 = vmul.f32 %v6163, %v6520
        %v6535 = vmul.f32 %v6164, %v6520
        %v6536 = vmul.f32 %v6165, %v6520
        %v6537 = vmul.f32 %v6166, %v6520
        %v6538 = vmul.f32 %v6167, %v6520
        %v6539 = vmul.f32 %v6168, %v6520
        %v6540 = vmul.f32 %v6169, %v6520
        %v6541 = vmul.f32 %v6170, %v6520
        %v6542 = vmul.f32 %v6171, %v6520
        %v6543 = vmul.f32 %v6172, %v6520
        %v6544 = vmul.f32 %v6173, %v6520
        %v6545 = vmul.f32 %v6174, %v6520
        %v6546 = vmul.f32 %v6175, %v6520
        %v6547 = vmul.f32 %v6176, %v6520
        %v6548 = vmul.f32 %v6177, %v6520
        %v6549 = vmul.f32 %v6178, %v6520
        %v6550 = vmul.f32 %v6179, %v6520
        %v6551 = vmul.f32 %v6180, %v6520
        %v6552 = vmul.f32 %v6181, %v6520
        %v6553 = vmul.f32 %v6182, %v6520
        %v6554 = vmul.f32 %v6183, %v6520
        %v6555 = vmul.f32 %v6184, %v6520
        %v6556 = vmul.f32 %v6185, %v6520
        %v6557 = vmul.f32 %v6186, %v6520
        %v6558 = vmul.f32 %v6187, %v6520
        %v6559 = vmul.f32 %v6188, %v6520
        %v6560 = vmul.f32 %v6189, %v6520
        %v6561 = vmul.f32 %v6190, %v6520
        %v6562 = vmul.f32 %v6191, %v6520
        %v6563 = vmul.f32 %v6192, %v6520
        %v6564 = vmul.f32 %v6193, %v6520
        %v6565 = vmul.f32 %v6194, %v6520
        %v6566 = vmul.f32 %v6195, %v6520
        %v6567 = vmul.f32 %v6196, %v6520
        %v6568 = vmul.f32 %v6197, %v6520
        %v6569 = vmul.f32 %v6150, %v6521
        %v6570 = vmul.f32 %v6151, %v6522
        %v6571 = vmul.f32 %v6152, %v6523
        %v6572 = vmul.f32 %v6153, %v6524
        %v6573 = vmul.f32 %v6154, %v6525
        %v6574 = vmul.f32 %v6155, %v6526
        %v6575 = vmul.f32 %v6156, %v6527
        %v6576 = vmul.f32 %v6157, %v6528
        %v6577 = vmul.f32 %v6158, %v6529
        %v6578 = vmul.f32 %v6159, %v6530
        %v6579 = vmul.f32 %v6160, %v6531
        %v6580 = vmul.f32 %v6161, %v6532
        %v6581 = vmul.f32 %v6162, %v6533
        %v6582 = vmul.f32 %v6163, %v6534
        %v6583 = vmul.f32 %v6164, %v6535
        %v6584 = vmul.f32 %v6165, %v6536
        %v6585 = vmul.f32 %v6166, %v6537
        %v6586 = vmul.f32 %v6167, %v6538
        %v6587 = vmul.f32 %v6168, %v6539
        %v6588 = vmul.f32 %v6169, %v6540
        %v6589 = vmul.f32 %v6170, %v6541
        %v6590 = vmul.f32 %v6171, %v6542
        %v6591 = vmul.f32 %v6172, %v6543
        %v6592 = vmul.f32 %v6173, %v6544
        %v6593 = vmul.f32 %v6174, %v6545
        %v6594 = vmul.f32 %v6175, %v6546
        %v6595 = vmul.f32 %v6176, %v6547
        %v6596 = vmul.f32 %v6177, %v6548
        %v6597 = vmul.f32 %v6178, %v6549
        %v6598 = vmul.f32 %v6179, %v6550
        %v6599 = vmul.f32 %v6180, %v6551
        %v6600 = vmul.f32 %v6181, %v6552
        %v6601 = vmul.f32 %v6182, %v6553
        %v6602 = vmul.f32 %v6183, %v6554
        %v6603 = vmul.f32 %v6184, %v6555
        %v6604 = vmul.f32 %v6185, %v6556
        %v6605 = vmul.f32 %v6186, %v6557
        %v6606 = vmul.f32 %v6187, %v6558
        %v6607 = vmul.f32 %v6188, %v6559
        %v6608 = vmul.f32 %v6189, %v6560
        %v6609 = vmul.f32 %v6190, %v6561
        %v6610 = vmul.f32 %v6191, %v6562
        %v6611 = vmul.f32 %v6192, %v6563
        %v6612 = vmul.f32 %v6193, %v6564
        %v6613 = vmul.f32 %v6194, %v6565
        %v6614 = vmul.f32 %v6195, %v6566
        %v6615 = vmul.f32 %v6196, %v6567
        %v6616 = vmul.f32 %v6197, %v6568
        %v6617 = vadd.f32 %v6569, %v1424
        %v6618 = vadd.f32 %v6570, %v1425
        %v6619 = vadd.f32 %v6571, %v1426
        %v6620 = vadd.f32 %v6572, %v1427
        %v6621 = vadd.f32 %v6573, %v1428
        %v6622 = vadd.f32 %v6574, %v1429
        %v6623 = vadd.f32 %v6575, %v1430
        %v6624 = vadd.f32 %v6576, %v1431
        %v6625 = vadd.f32 %v6577, %v1432
        %v6626 = vadd.f32 %v6578, %v1433
        %v6627 = vadd.f32 %v6579, %v1434
        %v6628 = vadd.f32 %v6580, %v1435
        %v6629 = vadd.f32 %v6581, %v1436
        %v6630 = vadd.f32 %v6582, %v1437
        %v6631 = vadd.f32 %v6583, %v1438
        %v6632 = vadd.f32 %v6584, %v1439
        %v6633 = vadd.f32 %v6585, %v1440
        %v6634 = vadd.f32 %v6586, %v1441
        %v6635 = vadd.f32 %v6587, %v1442
        %v6636 = vadd.f32 %v6588, %v1443
        %v6637 = vadd.f32 %v6589, %v1444
        %v6638 = vadd.f32 %v6590, %v1445
        %v6639 = vadd.f32 %v6591, %v1446
        %v6640 = vadd.f32 %v6592, %v1447
        %v6641 = vadd.f32 %v6593, %v1448
        %v6642 = vadd.f32 %v6594, %v1449
        %v6643 = vadd.f32 %v6595, %v1450
        %v6644 = vadd.f32 %v6596, %v1451
        %v6645 = vadd.f32 %v6597, %v1452
        %v6646 = vadd.f32 %v6598, %v1453
        %v6647 = vadd.f32 %v6599, %v1454
        %v6648 = vadd.f32 %v6600, %v1455
        %v6649 = vadd.f32 %v6601, %v1456
        %v6650 = vadd.f32 %v6602, %v1457
        %v6651 = vadd.f32 %v6603, %v1458
        %v6652 = vadd.f32 %v6604, %v1459
        %v6653 = vadd.f32 %v6605, %v1460
        %v6654 = vadd.f32 %v6606, %v1461
        %v6655 = vadd.f32 %v6607, %v1462
        %v6656 = vadd.f32 %v6608, %v1463
        %v6657 = vadd.f32 %v6609, %v1464
        %v6658 = vadd.f32 %v6610, %v1465
        %v6659 = vadd.f32 %v6611, %v1466
        %v6660 = vadd.f32 %v6612, %v1467
        %v6661 = vadd.f32 %v6613, %v1468
        %v6662 = vadd.f32 %v6614, %v1469
        %v6663 = vadd.f32 %v6615, %v1470
        %v6664 = vadd.f32 %v6616, %v1471
        %v6665 = vmax.f32 %v6617, 0.0
        %v6666 = vmax.f32 %v6618, 0.0
        %v6667 = vmax.f32 %v6619, 0.0
        %v6668 = vmax.f32 %v6620, 0.0
        %v6669 = vmax.f32 %v6621, 0.0
        %v6670 = vmax.f32 %v6622, 0.0
        %v6671 = vmax.f32 %v6623, 0.0
        %v6672 = vmax.f32 %v6624, 0.0
        %v6673 = vmax.f32 %v6625, 0.0
        %v6674 = vmax.f32 %v6626, 0.0
        %v6675 = vmax.f32 %v6627, 0.0
        %v6676 = vmax.f32 %v6628, 0.0
        %v6677 = vmax.f32 %v6629, 0.0
        %v6678 = vmax.f32 %v6630, 0.0
        %v6679 = vmax.f32 %v6631, 0.0
        %v6680 = vmax.f32 %v6632, 0.0
        %v6681 = vmax.f32 %v6633, 0.0
        %v6682 = vmax.f32 %v6634, 0.0
        %v6683 = vmax.f32 %v6635, 0.0
        %v6684 = vmax.f32 %v6636, 0.0
        %v6685 = vmax.f32 %v6637, 0.0
        %v6686 = vmax.f32 %v6638, 0.0
        %v6687 = vmax.f32 %v6639, 0.0
        %v6688 = vmax.f32 %v6640, 0.0
        %v6689 = vmax.f32 %v6641, 0.0
        %v6690 = vmax.f32 %v6642, 0.0
        %v6691 = vmax.f32 %v6643, 0.0
        %v6692 = vmax.f32 %v6644, 0.0
        %v6693 = vmax.f32 %v6645, 0.0
        %v6694 = vmax.f32 %v6646, 0.0
        %v6695 = vmax.f32 %v6647, 0.0
        %v6696 = vmax.f32 %v6648, 0.0
        %v6697 = vmax.f32 %v6649, 0.0
        %v6698 = vmax.f32 %v6650, 0.0
        %v6699 = vmax.f32 %v6651, 0.0
        %v6700 = vmax.f32 %v6652, 0.0
        %v6701 = vmax.f32 %v6653, 0.0
        %v6702 = vmax.f32 %v6654, 0.0
        %v6703 = vmax.f32 %v6655, 0.0
        %v6704 = vmax.f32 %v6656, 0.0
        %v6705 = vmax.f32 %v6657, 0.0
        %v6706 = vmax.f32 %v6658, 0.0
        %v6707 = vmax.f32 %v6659, 0.0
        %v6708 = vmax.f32 %v6660, 0.0
        %v6709 = vmax.f32 %v6661, 0.0
        %v6710 = vmax.f32 %v6662, 0.0
        %v6711 = vmax.f32 %v6663, 0.0
        %v6712 = vmax.f32 %v6664, 0.0
        %v6713 = vmin.f32 %v6665, 6.0
        %v6714 = vmin.f32 %v6666, 6.0
        %v6715 = vmin.f32 %v6667, 6.0
        %v6716 = vmin.f32 %v6668, 6.0
        %v6717 = vmin.f32 %v6669, 6.0
        %v6718 = vmin.f32 %v6670, 6.0
        %v6719 = vmin.f32 %v6671, 6.0
        %v6720 = vmin.f32 %v6672, 6.0
        %v6721 = vmin.f32 %v6673, 6.0
        %v6722 = vmin.f32 %v6674, 6.0
        %v6723 = vmin.f32 %v6675, 6.0
        %v6724 = vmin.f32 %v6676, 6.0
        %v6725 = vmin.f32 %v6677, 6.0
        %v6726 = vmin.f32 %v6678, 6.0
        %v6727 = vmin.f32 %v6679, 6.0
        %v6728 = vmin.f32 %v6680, 6.0
        %v6729 = vmin.f32 %v6681, 6.0
        %v6730 = vmin.f32 %v6682, 6.0
        %v6731 = vmin.f32 %v6683, 6.0
        %v6732 = vmin.f32 %v6684, 6.0
        %v6733 = vmin.f32 %v6685, 6.0
        %v6734 = vmin.f32 %v6686, 6.0
        %v6735 = vmin.f32 %v6687, 6.0
        %v6736 = vmin.f32 %v6688, 6.0
        %v6737 = vmin.f32 %v6689, 6.0
        %v6738 = vmin.f32 %v6690, 6.0
        %v6739 = vmin.f32 %v6691, 6.0
        %v6740 = vmin.f32 %v6692, 6.0
        %v6741 = vmin.f32 %v6693, 6.0
        %v6742 = vmin.f32 %v6694, 6.0
        %v6743 = vmin.f32 %v6695, 6.0
        %v6744 = vmin.f32 %v6696, 6.0
        %v6745 = vmin.f32 %v6697, 6.0
        %v6746 = vmin.f32 %v6698, 6.0
        %v6747 = vmin.f32 %v6699, 6.0
        %v6748 = vmin.f32 %v6700, 6.0
        %v6749 = vmin.f32 %v6701, 6.0
        %v6750 = vmin.f32 %v6702, 6.0
        %v6751 = vmin.f32 %v6703, 6.0
        %v6752 = vmin.f32 %v6704, 6.0
        %v6753 = vmin.f32 %v6705, 6.0
        %v6754 = vmin.f32 %v6706, 6.0
        %v6755 = vmin.f32 %v6707, 6.0
        %v6756 = vmin.f32 %v6708, 6.0
        %v6757 = vmin.f32 %v6709, 6.0
        %v6758 = vmin.f32 %v6710, 6.0
        %v6759 = vmin.f32 %v6711, 6.0
        %v6760 = vmin.f32 %v6712, 6.0
        %v6761 = vpack.c.bf16 %v6714, %v6713
        %v6762 = vpack.c.bf16 %v6716, %v6715
        %v6763 = vpack.c.bf16 %v6718, %v6717
        %v6764 = vpack.c.bf16 %v6720, %v6719
        %v6765 = vpack.c.bf16 %v6722, %v6721
        %v6766 = vpack.c.bf16 %v6724, %v6723
        %v6767 = vpack.c.bf16 %v6726, %v6725
        %v6768 = vpack.c.bf16 %v6728, %v6727
        %v6769 = vpack.c.bf16 %v6730, %v6729
        %v6770 = vpack.c.bf16 %v6732, %v6731
        %v6771 = vpack.c.bf16 %v6734, %v6733
        %v6772 = vpack.c.bf16 %v6736, %v6735
        %v6773 = vpack.c.bf16 %v6738, %v6737
        %v6774 = vpack.c.bf16 %v6740, %v6739
        %v6775 = vpack.c.bf16 %v6742, %v6741
        %v6776 = vpack.c.bf16 %v6744, %v6743
        %v6777 = vpack.c.bf16 %v6746, %v6745
        %v6778 = vpack.c.bf16 %v6748, %v6747
        %v6779 = vpack.c.bf16 %v6750, %v6749
        %v6780 = vpack.c.bf16 %v6752, %v6751
        %v6781 = vpack.c.bf16 %v6754, %v6753
        %v6782 = vpack.c.bf16 %v6756, %v6755
        %v6783 = vpack.c.bf16 %v6758, %v6757
        %v6784 = vpack.c.bf16 %v6760, %v6759
        %v6809 = vunpack.c.l.b16 %v6761
        %v6810 = vunpack.c.h.b16 %v6761
        %v6811 = vunpack.c.l.b16 %v6762
        %v6812 = vunpack.c.h.b16 %v6762
        %v6813 = vunpack.c.l.b16 %v6763
        %v6814 = vunpack.c.h.b16 %v6763
        %v6815 = vunpack.c.l.b16 %v6764
        %v6816 = vunpack.c.h.b16 %v6764
        %v6817 = vunpack.c.l.b16 %v6765
        %v6818 = vunpack.c.h.b16 %v6765
        %v6819 = vunpack.c.l.b16 %v6766
        %v6820 = vunpack.c.h.b16 %v6766
        %v6821 = vunpack.c.l.b16 %v6767
        %v6822 = vunpack.c.h.b16 %v6767
        %v6823 = vunpack.c.l.b16 %v6768
        %v6824 = vunpack.c.h.b16 %v6768
        %v6825 = vunpack.c.l.b16 %v6769
        %v6826 = vunpack.c.h.b16 %v6769
        %v6827 = vunpack.c.l.b16 %v6770
        %v6828 = vunpack.c.h.b16 %v6770
        %v6829 = vunpack.c.l.b16 %v6771
        %v6830 = vunpack.c.h.b16 %v6771
        %v6831 = vunpack.c.l.b16 %v6772
        %v6832 = vunpack.c.h.b16 %v6772
        %v6833 = vunpack.c.l.b16 %v6773
        %v6834 = vunpack.c.h.b16 %v6773
        %v6835 = vunpack.c.l.b16 %v6774
        %v6836 = vunpack.c.h.b16 %v6774
        %v6837 = vunpack.c.l.b16 %v6775
        %v6838 = vunpack.c.h.b16 %v6775
        %v6839 = vunpack.c.l.b16 %v6776
        %v6840 = vunpack.c.h.b16 %v6776
        %v6841 = vunpack.c.l.b16 %v6777
        %v6842 = vunpack.c.h.b16 %v6777
        %v6843 = vunpack.c.l.b16 %v6778
        %v6844 = vunpack.c.h.b16 %v6778
        %v6845 = vunpack.c.l.b16 %v6779
        %v6846 = vunpack.c.h.b16 %v6779
        %v6847 = vunpack.c.l.b16 %v6780
        %v6848 = vunpack.c.h.b16 %v6780
        %v6849 = vunpack.c.l.b16 %v6781
        %v6850 = vunpack.c.h.b16 %v6781
        %v6851 = vunpack.c.l.b16 %v6782
        %v6852 = vunpack.c.h.b16 %v6782
        %v6853 = vunpack.c.l.b16 %v6783
        %v6854 = vunpack.c.h.b16 %v6783
        %v6855 = vunpack.c.l.b16 %v6784
        %v6856 = vunpack.c.h.b16 %v6784
        %v6857 = vpack.c.b16 %v6809, %v6809
        %v6858 = vpack.c.b16 %v6810, %v6810
        %v6859 = vpack.c.b16 %v6811, %v6811
        %v6860 = vpack.c.b16 %v6812, %v6812
        %v6861 = vpack.c.b16 %v6813, %v6813
        %v6862 = vpack.c.b16 %v6814, %v6814
        %v6863 = vpack.c.b16 %v6815, %v6815
        %v6864 = vpack.c.b16 %v6816, %v6816
        %v6865 = vpack.c.b16 %v6817, %v6817
        %v6866 = vpack.c.b16 %v6818, %v6818
        %v6867 = vpack.c.b16 %v6819, %v6819
        %v6868 = vpack.c.b16 %v6820, %v6820
        %v6869 = vpack.c.b16 %v6821, %v6821
        %v6870 = vpack.c.b16 %v6822, %v6822
        %v6871 = vpack.c.b16 %v6823, %v6823
        %v6872 = vpack.c.b16 %v6824, %v6824
        %v6873 = vpack.c.b16 %v6825, %v6825
        %v6874 = vpack.c.b16 %v6826, %v6826
        %v6875 = vpack.c.b16 %v6827, %v6827
        %v6876 = vpack.c.b16 %v6828, %v6828
        %v6877 = vpack.c.b16 %v6829, %v6829
        %v6878 = vpack.c.b16 %v6830, %v6830
        %v6879 = vpack.c.b16 %v6831, %v6831
        %v6880 = vpack.c.b16 %v6832, %v6832
        %v6881 = vpack.c.b16 %v6833, %v6833
        %v6882 = vpack.c.b16 %v6834, %v6834
        %v6883 = vpack.c.b16 %v6835, %v6835
        %v6884 = vpack.c.b16 %v6836, %v6836
        %v6885 = vpack.c.b16 %v6837, %v6837
        %v6886 = vpack.c.b16 %v6838, %v6838
        %v6887 = vpack.c.b16 %v6839, %v6839
        %v6888 = vpack.c.b16 %v6840, %v6840
        %v6889 = vpack.c.b16 %v6841, %v6841
        %v6890 = vpack.c.b16 %v6842, %v6842
        %v6891 = vpack.c.b16 %v6843, %v6843
        %v6892 = vpack.c.b16 %v6844, %v6844
        %v6893 = vpack.c.b16 %v6845, %v6845
        %v6894 = vpack.c.b16 %v6846, %v6846
        %v6895 = vpack.c.b16 %v6847, %v6847
        %v6896 = vpack.c.b16 %v6848, %v6848
        %v6897 = vpack.c.b16 %v6849, %v6849
        %v6898 = vpack.c.b16 %v6850, %v6850
        %v6899 = vpack.c.b16 %v6851, %v6851
        %v6900 = vpack.c.b16 %v6852, %v6852
        %v6901 = vpack.c.b16 %v6853, %v6853
        %v6902 = vpack.c.b16 %v6854, %v6854
        %v6903 = vpack.c.b16 %v6855, %v6855
        %v6904 = vpack.c.b16 %v6856, %v6856
        %6953 = vst [vmem:[%s298] sm:$0xf] %v6857
        %6954 = vst [vmem:[%s298 + $0x4] sm:$0xf] %v6858
        %6955 = vst [vmem:[%s298 + $0x8] sm:$0xf] %v6859
        %6956 = vst [vmem:[%s298 + $0xc] sm:$0xf] %v6860
        %6957 = vst [vmem:[%s298 + $0x10] sm:$0xf] %v6861
        %6958 = vst [vmem:[%s298 + $0x14] sm:$0xf] %v6862
        %6959 = vst [vmem:[%s298 + $0x18] sm:$0xf] %v6863
        %6960 = vst [vmem:[%s298 + $0x1c] sm:$0xf] %v6864
        %6961 = vst [vmem:[%s298 + $0x20] sm:$0xf] %v6865
        %6962 = vst [vmem:[%s298 + $0x24] sm:$0xf] %v6866
        %6963 = vst [vmem:[%s298 + $0x28] sm:$0xf] %v6867
        %6964 = vst [vmem:[%s298 + $0x2c] sm:$0xf] %v6868
        %6965 = vst [vmem:[%s298 + $0x30] sm:$0xf] %v6869
        %6966 = vst [vmem:[%s298 + $0x34] sm:$0xf] %v6870
        %6967 = vst [vmem:[%s298 + $0x38] sm:$0xf] %v6871
        %6968 = vst [vmem:[%s298 + $0x3c] sm:$0xf] %v6872
        %6969 = vst [vmem:[%s298 + $0x40] sm:$0xf] %v6873
        %6970 = vst [vmem:[%s298 + $0x44] sm:$0xf] %v6874
        %6971 = vst [vmem:[%s298 + $0x48] sm:$0xf] %v6875
        %6972 = vst [vmem:[%s298 + $0x4c] sm:$0xf] %v6876
        %6973 = vst [vmem:[%s298 + $0x50] sm:$0xf] %v6877
        %6974 = vst [vmem:[%s298 + $0x54] sm:$0xf] %v6878
        %6975 = vst [vmem:[%s298 + $0x58] sm:$0xf] %v6879
        %6976 = vst [vmem:[%s298 + $0x5c] sm:$0xf] %v6880
        %6977 = vst [vmem:[%s298 + $0x60] sm:$0xf] %v6881
        %6978 = vst [vmem:[%s298 + $0x64] sm:$0xf] %v6882
        %6979 = vst [vmem:[%s298 + $0x68] sm:$0xf] %v6883
        %6980 = vst [vmem:[%s298 + $0x6c] sm:$0xf] %v6884
        %6981 = vst [vmem:[%s298 + $0x70] sm:$0xf] %v6885
        %6982 = vst [vmem:[%s298 + $0x74] sm:$0xf] %v6886
        %6983 = vst [vmem:[%s298 + $0x78] sm:$0xf] %v6887
        %6984 = vst [vmem:[%s298 + $0x7c] sm:$0xf] %v6888
        %6985 = vst [vmem:[%s298 + $0x80] sm:$0xf] %v6889
        %6986 = vst [vmem:[%s298 + $0x84] sm:$0xf] %v6890
        %6987 = vst [vmem:[%s298 + $0x88] sm:$0xf] %v6891
        %6988 = vst [vmem:[%s298 + $0x8c] sm:$0xf] %v6892
        %6989 = vst [vmem:[%s298 + $0x90] sm:$0xf] %v6893
        %6990 = vst [vmem:[%s298 + $0x94] sm:$0xf] %v6894
        %6991 = vst [vmem:[%s298 + $0x98] sm:$0xf] %v6895
        %6992 = vst [vmem:[%s298 + $0x9c] sm:$0xf] %v6896
        %6993 = vst [vmem:[%s298 + $0xa0] sm:$0xf] %v6897
        %6994 = vst [vmem:[%s298 + $0xa4] sm:$0xf] %v6898
        %6995 = vst [vmem:[%s298 + $0xa8] sm:$0xf] %v6899
        %6996 = vst [vmem:[%s298 + $0xac] sm:$0xf] %v6900
        %6997 = vst [vmem:[%s298 + $0xb0] sm:$0xf] %v6901
        %6998 = vst [vmem:[%s298 + $0xb4] sm:$0xf] %v6902
        %6999 = vst [vmem:[%s298 + $0xb8] sm:$0xf] %v6903
        %7000 = vst [vmem:[%s298 + $0xbc] sm:$0xf] %v6904
        %s7001 = sand.u32 %s203, 1
        %s7002 = scalar_lea.sflag [#allocation4], %s7001
        %s7003 = sand.u32 %s203, 1
        %s7004 = smul.addr %s7003, 192
        %s7005 = scalar_lea.vmem [#allocation3], %s7004
        // Predicated region
        $region53: #{tpu_custom_call.1} parent=51 // pred_check
          %p7006 = pneg %p213
        $region54: #{tpu_custom_call.1} parent=51 // pred_check_branch
          %7008 = sbr.rel (%p7006) target = $region56
        $region55: #{tpu_custom_call.1} parent=51 // pred_region
          %s7010 = ssub.s32 3072, 3072
          %7011 = vsyncadd %s7002, %s7010
          %s7012 = smul.addr %s22, 48
          %s7013 = smul.addr %s7012, 64
          %s7014 = scalar_lea.hbm %s8, %s7013
          %s7015 = sshll.u32 %s7005, 4
          %s7016 = int_to_ptr.vmem [resolvable:$true] %s7015
          %7021 = dma.vmem_to_hbm [thread:$0]  %s7016, 3072, %s7014, %s7002, 64, 64, 4
        $region56: #{tpu_custom_call.1} parent=51 // pred_fallthru
          _
      $region52: #{tpu_custom_call.1} parent=5 // pred_fallthru
        _
      %p7022 = scmp.le.s32.totalorder 2, %s17
      // Predicated region
      $region57: #{tpu_custom_call.1} parent=5 // pred_check
        %p7023 = pneg %p7022
      $region58: #{tpu_custom_call.1} parent=5 // pred_check_branch
        %7025 = sbr.rel (%p7023) target = $region60
      $region59: #{tpu_custom_call.1} parent=5 // pred_region
        %s7026 = ssub.s32 %s17, 2
        // Predicated region
        $region61: #{tpu_custom_call.1} parent=59 // pred_check
          %p7027 = pneg %p219
        $region62: #{tpu_custom_call.1} parent=59 // pred_check_branch
          %7029 = sbr.rel (%p7027) target = $region64
        $region63: #{tpu_custom_call.1} parent=59 // pred_region
          %s7030 = sand.u32 %s204, 1
          %s7031 = scalar_lea.sflag [#allocation4], %s7030
          %s7032 = sand.u32 %s204, 1
          %s7033 = smul.addr %s7032, 192
          %s7034 = scalar_lea.vmem [#allocation3], %s7033
          %7035 = dma.done %s7031, 3072
        $region64: #{tpu_custom_call.1} parent=59 // pred_fallthru
          _
      $region60: #{tpu_custom_call.1} parent=5 // pred_fallthru
        _
    $region6: #{tpu_custom_call.1} parent=1 // loop_footer
      %s21 = sadd.s32 1, %s17
    $region7: #{tpu_custom_call.1} parent=1 // loop_footer_branch
      %16 = sbr.rel target = $region3
    $region8: #{tpu_custom_call.1} parent=1 // loop_exit
      _
    %7036 = vsyncpa [#allocation4], 1
    %s7037 = scalar_lea.sflag [#allocation4], 1
    %7038 = vsyncpa %s7037, 1

</llo_original>
